<compile_context>
chip_gen: v5e
topology: v5e:2x2
jax: 0.10.0
libtpu: 0.0.40
codegen_flags: <defaults>
</compile_context>

<pallas_src>
import functools

import jax
import jax.numpy as jnp
import numpy as np
from jax.experimental import pallas as pl
from jax.experimental.pallas import tpu as pltpu

VMEM_SPEC = pl.BlockSpec(memory_space=pltpu.MemorySpace.VMEM)
VMEM_LIMIT_BYTES = 32 * 1024 * 1024  # safe on v5e/v6e (128 MiB) and v7x (64 MiB/TC)
NEG_INF = -1e30


def _round_up(x, m):
    return (x + m - 1) // m * m


# ----------------------------------------------------------------------------
# Pallas kernels
# ----------------------------------------------------------------------------
def _mm_bias_kernel(a_ref, w_ref, b_ref, o_ref, *, apply_relu):
    """o = relu?(A @ W + b); A:[tm,K] bf16, W:[K,N] bf16 (resident), b:[1,N] f32."""
    acc = jnp.dot(a_ref[...], w_ref[...], preferred_element_type=jnp.float32)
    acc = acc + b_ref[...]
    if apply_relu:
        acc = jnp.maximum(acc, 0.0)
    o_ref[...] = acc


def _mm_bias_res_kernel(a_ref, w_ref, b_ref, r_ref, o_ref, *, apply_relu):
    """o = relu?(A @ W + b + residual); residual streamed in f32."""
    acc = jnp.dot(a_ref[...], w_ref[...], preferred_element_type=jnp.float32)
    acc = acc + b_ref[...] + r_ref[...]
    if apply_relu:
        acc = jnp.maximum(acc, 0.0)
    o_ref[...] = acc


def matmul_bias_act(a, w, b, relu, residual=None, use_pallas=True, tile_m=512):
    """relu?(a @ w + b [+ residual]) with an M-tiled, pipelined MXU kernel."""
    M, K = a.shape
    N = w.shape[1]
    a = a.astype(jnp.bfloat16)          # matmul operands in bf16 (f32 accumulate)
    w = w.astype(jnp.bfloat16)
    b = b.astype(jnp.float32)
    if not use_pallas:                  # pure-JAX reference with identical numerics
        acc = jnp.dot(a, w, preferred_element_type=jnp.float32) + b
        if residual is not None:
            acc = acc + residual
        return jnp.maximum(acc, 0.0) if relu else acc

    # Zero-pad K to a sublane multiple (numerically exact) for aligned loads.
    kp = _round_up(K, 8)
    if kp != K:
        a = jnp.pad(a, ((0, 0), (0, kp - K)))
        w = jnp.pad(w, ((0, kp - K), (0, 0)))

    # Tile M with big tiles; pad M up to a tile multiple (extra rows sliced off).
    tm = min(tile_m, _round_up(M, 8))
    mp = _round_up(M, tm)
    if mp != M:
        a = jnp.pad(a, ((0, mp - M), (0, 0)))
        if residual is not None:
            residual = jnp.pad(residual, ((0, mp - M), (0, 0)))
    grid = (mp // tm,)

    a_spec = pl.BlockSpec((tm, kp), lambda i: (i, 0))    # streamed / double-buffered
    w_spec = pl.BlockSpec((kp, N), lambda i: (0, 0))     # resident across the grid
    b_spec = pl.BlockSpec((1, N), lambda i: (0, 0))      # resident
    o_spec = pl.BlockSpec((tm, N), lambda i: (i, 0))

    flops = 2 * mp * kp * N
    bytes_accessed = mp * kp * 2 + kp * N * 2 + N * 4 + mp * N * 4
    if residual is None:
        kern = functools.partial(_mm_bias_kernel, apply_relu=relu)
        in_specs = [a_spec, w_spec, b_spec]
        args = (a, w, b)
    else:
        residual = residual.astype(jnp.float32)
        kern = functools.partial(_mm_bias_res_kernel, apply_relu=relu)
        in_specs = [a_spec, w_spec, b_spec, pl.BlockSpec((tm, N), lambda i: (i, 0))]
        args = (a, w, b, residual)
        bytes_accessed += mp * N * 4

    out = pl.pallas_call(
        kern,
        out_shape=jax.ShapeDtypeStruct((mp, N), jnp.float32),
        grid=grid,
        in_specs=in_specs,
        out_specs=o_spec,
        compiler_params=pltpu.CompilerParams(
            dimension_semantics=("parallel",),   # shard M tiles across TCs (v7x)
            vmem_limit_bytes=VMEM_LIMIT_BYTES),
        cost_estimate=pl.CostEstimate(flops=flops, transcendentals=0,
                                      bytes_accessed=bytes_accessed),
    )(*args)
    return out[:M] if mp != M else out


def _maxpool_kernel(ee_ref, eo_ref, oe_ref, oo_ref, o_ref, *, c):
    """Separable 3x3/stride-2 max on parity-split inputs; lane-dense OW*C layout."""
    _, oh, l = o_ref.shape
    # Column max (over the 3 taps along W) per row-parity.
    cme = jnp.maximum(jnp.maximum(ee_ref[:, :, :l], ee_ref[:, :, c:c + l]),
                      eo_ref[...])                     # even rows  [B, OH+1, OW*C]
    cmo = jnp.maximum(jnp.maximum(oe_ref[:, :, :l], oe_ref[:, :, c:c + l]),
                      oo_ref[...])                     # odd rows   [B, OH,   OW*C]
    # Row max (over the 3 taps along H).
    o_ref[...] = jnp.maximum(jnp.maximum(cme[:, :oh, :], cme[:, 1:, :]), cmo)


def _head_kernel(f_ref, wcat_ref, bcat_ref, w2_ref, b2_ref, logits_ref, conf_ref,
                 *, num_classes):
    """Global avgpool -> fused (fc || conf1) matmul -> logits + confidence."""
    pooled = jnp.mean(f_ref[...], axis=1)              # [B, C]
    z = jnp.dot(pooled, wcat_ref[...],
                preferred_element_type=jnp.float32) + bcat_ref[...]
    logits_ref[...] = z[:, :num_classes]
    # w2 is zero-padded over the logits columns, so relu(z) @ w2 only picks up
    # the confidence-hidden activations.
    conf_ref[...] = jnp.dot(jnp.maximum(z, 0.0), w2_ref[...],
                            preferred_element_type=jnp.float32) + b2_ref[...]


# ----------------------------------------------------------------------------
# Plain-JAX glue: patch extraction / BN folding / block wiring
# ----------------------------------------------------------------------------
def im2col(x_nhwc, kh, kw, stride, pad, pad_value=0.0):
    B, H, W, C = x_nhwc.shape
    xp = jnp.pad(x_nhwc, ((0, 0), (pad, pad), (pad, pad), (0, 0)),
                 constant_values=pad_value)
    OH = (H + 2 * pad - kh) // stride + 1
    OW = (W + 2 * pad - kw) // stride + 1
    cols = []
    for i in range(kh):
        for j in range(kw):
            cols.append(xp[:, i:i + stride * OH:stride,
                           j:j + stride * OW:stride, :])
    patches = jnp.stack(cols, axis=3)  # [B, OH, OW, kh*kw, C]
    return patches, (B, OH, OW)


def conv_bn(x_nhwc, w, bn, stride, pad, relu, residual=None, use_pallas=True):
    """conv (PyTorch weight layout [Cout,Cin,KH,KW]) + folded BN (+res) (+ReLU)."""
    gamma, beta, mean, var = bn
    cout, cin, kh, kw = w.shape
    scale = gamma / jnp.sqrt(var + 1e-5)
    w_f = w * scale[:, None, None, None]
    b_f = (beta - mean * scale).reshape(1, cout)
    if kh == 1 and kw == 1 and pad == 0:
        # 1x1 conv: no patch extraction needed, just a (strided) channel matmul.
        xs = x_nhwc[:, ::stride, ::stride, :]
        B, OH, OW, _ = xs.shape
        a = xs.reshape(B * OH * OW, cin)
    else:
        # TODO(synk): fuse patch extraction into the matmul kernel (tap-reduction
        # grid axis + halo reads) to avoid materializing kh*kw-inflated patches.
        patches, (B, OH, OW) = im2col(x_nhwc, kh, kw, stride, pad)
        a = patches.reshape(B * OH * OW, kh * kw * cin)
    wm = jnp.transpose(w_f, (2, 3, 1, 0)).reshape(kh * kw * cin, cout)
    r = None if residual is None else residual.reshape(B * OH * OW, cout)
    out = matmul_bias_act(a, wm, b_f, relu, residual=r, use_pallas=use_pallas)
    return out.reshape(B, OH, OW, cout)


def maxpool3x3s2p1(x_nhwc, use_pallas=True):
    B, H, W, C = x_nhwc.shape
    OH = (H - 1) // 2 + 1
    OW = (W - 1) // 2 + 1
    if not use_pallas:  # straightforward im2col reference (ground-truth semantics)
        patches, _ = im2col(x_nhwc, 3, 3, 2, 1, pad_value=NEG_INF)
        return jnp.max(patches, axis=3)
    xp = jnp.pad(x_nhwc, ((0, 0), (1, 1), (1, 1), (0, 0)),
                 constant_values=NEG_INF)
    # Parity de-interleave (total bytes ~1x of the input, vs 9/4x for im2col).
    ee = xp[:, 0:2 * OH + 1:2, 0:2 * OW + 1:2, :].reshape(B, OH + 1, (OW + 1) * C)
    eo = xp[:, 0:2 * OH + 1:2, 1:2 * OW:2, :].reshape(B, OH + 1, OW * C)
    oe = xp[:, 1:2 * OH:2, 0:2 * OW + 1:2, :].reshape(B, OH, (OW + 1) * C)
    oo = xp[:, 1:2 * OH:2, 1:2 * OW:2, :].reshape(B, OH, OW * C)
    out = pl.pallas_call(
        functools.partial(_maxpool_kernel, c=C),
        out_shape=jax.ShapeDtypeStruct((B, OH, OW * C), jnp.float32),
        in_specs=[VMEM_SPEC] * 4,
        out_specs=VMEM_SPEC,
    )(ee, eo, oe, oo)
    return out.reshape(B, OH, OW, C)


def head(feats, wfc, bfc, w1, b1, w2, b2, use_pallas=True):
    if not use_pallas:
        pooled = jnp.mean(feats, axis=1)
        logits = pooled @ wfc + bfc
        h = jnp.maximum(pooled @ w1 + b1, 0.0)
        conf = h @ w2 + b2
        return logits, conf
    B = feats.shape[0]
    nc = wfc.shape[1]
    wcat = jnp.concatenate([wfc, w1], axis=1)                      # [C, nc+nh]
    bcat = jnp.concatenate([bfc, b1], axis=1)                      # [1, nc+nh]
    w2p = jnp.concatenate([jnp.zeros((nc, 1), jnp.float32), w2], axis=0)
    logits, conf = pl.pallas_call(
        functools.partial(_head_kernel, num_classes=nc),
        out_shape=(jax.ShapeDtypeStruct((B, nc), jnp.float32),
                   jax.ShapeDtypeStruct((B, 1), jnp.float32)),
        in_specs=[VMEM_SPEC] * 5,
        out_specs=(VMEM_SPEC, VMEM_SPEC),
    )(feats, wcat, bcat, w2p, b2)
    return logits, conf


def basic_block(x, p, stride, use_pallas=True):
    out = conv_bn(x, p['conv1_w'], p['bn1'], stride=stride, pad=1, relu=True,
                  use_pallas=use_pallas)
    if 'down_w' in p:
        identity = conv_bn(x, p['down_w'], p['down_bn'], stride=stride, pad=0,
                           relu=False, use_pallas=use_pallas)
    else:
        identity = x
    out = conv_bn(out, p['conv2_w'], p['bn2'], stride=1, pad=1, relu=True,
                  residual=identity, use_pallas=use_pallas)
    return out


_LAYER_STRIDES = (('layer1', 1), ('layer2', 2), ('layer3', 2), ('layer4', 2))


def confidence_network_forward(x_nchw, params, use_pallas=True):
    """Returns (confidences [B,1], logits [B,num_classes]) like the PyTorch module."""
    x = jnp.transpose(x_nchw, (0, 2, 3, 1)).astype(jnp.float32)  # NCHW -> NHWC
    x = conv_bn(x, params['conv1_w'], params['bn1'], stride=2, pad=3, relu=True,
                use_pallas=use_pallas)
    x = maxpool3x3s2p1(x, use_pallas)
    for name, stride in _LAYER_STRIDES:
        x = basic_block(x, params[name], stride, use_pallas)
    B, H, W, C = x.shape
    feats = x.reshape(B, H * W, C)
    wfc, bfc = params['fc']
    w1, b1 = params['conf1']
    w2, b2 = params['conf2']
    logits, conf = head(feats, wfc, bfc, w1, b1, w2, b2, use_pallas)
    return conf, logits


# ----------------------------------------------------------------------------
# Deterministic parameter initialization (synthetic; no checkpoints)
# ----------------------------------------------------------------------------
def init_params(key):
    keys = iter(jax.random.split(key, 96))

    def conv_w(cout, cin, k):
        fan_in = cin * k * k
        return jax.random.normal(next(keys), (cout, cin, k, k),
                                 jnp.float32) * (1.0 / np.sqrt(fan_in))

    def bn_p(c):
        return (1.0 + 0.1 * jax.random.normal(next(keys), (c,), jnp.float32),
                0.1 * jax.random.normal(next(keys), (c,), jnp.float32),
                0.1 * jax.random.normal(next(keys), (c,), jnp.float32),
                0.9 + 0.2 * jax.random.uniform(next(keys), (c,), jnp.float32))

    def linear_p(cin, cout):
        w = jax.random.normal(next(keys), (cin, cout),
                              jnp.float32) * (1.0 / np.sqrt(cin))
        b = 0.1 * jax.random.normal(next(keys), (1, cout), jnp.float32)
        return (w, b)

    def block_p(cin, cout, downsample):
        p = {'conv1_w': conv_w(cout, cin, 3), 'bn1': bn_p(cout),
             'conv2_w': conv_w(cout, cout, 3), 'bn2': bn_p(cout)}
        if downsample:
            p['down_w'] = conv_w(cout, cin, 1)
            p['down_bn'] = bn_p(cout)
        return p

    in_features = 128                   # model.fc.in_features
    num_features = in_features // 4     # confidence hidden width
    num_classes = 10
    return {
        'conv1_w': conv_w(16, 3, 7), 'bn1': bn_p(16),
        'layer1': block_p(16, 16, False),
        'layer2': block_p(16, 32, True),
        'layer3': block_p(32, 64, True),
        'layer4': block_p(64, in_features, True),
        'fc': linear_p(in_features, num_classes),
        'conf1': linear_p(in_features, num_features),
        'conf2': linear_p(num_features, 1),
    }


# ----------------------------------------------------------------------------
if __name__ == "__main__":
    key = jax.random.PRNGKey(0)
    pkey, xkey = jax.random.split(key)
    params = init_params(pkey)

    # PyTorch-style NCHW input: batch=2, channels=3, spatial=64
    x = jax.random.normal(xkey, (2, 3, 64, 64), jnp.float32)

    fwd = jax.jit(confidence_network_forward)
    conf, logits = fwd(x, params)
    jax.block_until_ready((conf, logits))

    # Pure-JAX reference of the same computation graph (same bf16-operand
    # numerics, ground-truth maxpool / head) for a sanity check.
    conf_ref, logits_ref = confidence_network_forward(x, params, use_pallas=False)
    np.testing.assert_allclose(np.asarray(conf), np.asarray(conf_ref),
                               rtol=1e-2, atol=1e-2)
    np.testing.assert_allclose(np.asarray(logits), np.asarray(logits_ref),
                               rtol=1e-2, atol=1e-2)

    assert conf.shape == (2, 1) and logits.shape == (2, 10)
    print("KERNEL_OK")
</pallas_src>

<mosaic_0001>
module attributes {stable_mosaic.version = 11 : i64} {
  func.func @_mm_bias_kernel(%arg0: i32, %arg1: memref<512x152xbf16, #tpu.memory_space<vmem>>, %arg2: memref<152x16xbf16, #tpu.memory_space<vmem>>, %arg3: memref<1x16xf32, #tpu.memory_space<vmem>>, %arg4: memref<512x16xf32, #tpu.memory_space<vmem>>) attributes {dimension_semantics = [#tpu.dimension_semantics<parallel>], iteration_bounds = array<i64: 4>, scalar_prefetch = 0 : i64, scratch_operands = 0 : i64, tpu.core_type = #tpu.core_type<tc>, window_params = [{transform_indices = @transform_0, window_bounds = array<i64: 512, 152>}, {pipeline_mode = #tpu.pipeline_mode<synchronous>, transform_indices = @transform_1, window_bounds = array<i64: 152, 16>}, {pipeline_mode = #tpu.pipeline_mode<synchronous>, transform_indices = @transform_2, window_bounds = array<i64: 1, 16>}, {transform_indices = @transform_3, window_bounds = array<i64: 512, 16>}]} {
    %c0 = arith.constant 0 : index
    %c0_0 = arith.constant 0 : index
    %0 = vector.load %arg1[%c0, %c0_0] : memref<512x152xbf16, #tpu.memory_space<vmem>>, vector<512x152xbf16>
    %c0_1 = arith.constant 0 : index
    %c0_2 = arith.constant 0 : index
    %1 = vector.load %arg2[%c0_1, %c0_2] : memref<152x16xbf16, #tpu.memory_space<vmem>>, vector<152x16xbf16>
    %cst = arith.constant dense<0.000000e+00> : vector<512x16xf32>
    %2 = tpu.matmul %0, %1, %cst {dimension_numbers = #tpu.dot_dimension_numbers<[1], [0], [0], [1], [0, 0, 1, 1], [], []>} : vector<512x152xbf16>, vector<152x16xbf16>, vector<512x16xf32> -> vector<512x16xf32>
    %c0_3 = arith.constant 0 : index
    %c0_4 = arith.constant 0 : index
    %3 = vector.load %arg3[%c0_3, %c0_4] : memref<1x16xf32, #tpu.memory_space<vmem>>, vector<1x16xf32>
    %4 = vector.broadcast %3 : vector<1x16xf32> to vector<512x16xf32>
    %5 = arith.addf %2, %4 : vector<512x16xf32>
    %cst_5 = arith.constant 0.000000e+00 : f32
    %6 = vector.broadcast %cst_5 : f32 to vector<512x16xf32>
    %7 = arith.maximumf %5, %6 : vector<512x16xf32>
    %c0_6 = arith.constant 0 : index
    %c0_7 = arith.constant 0 : index
    %8 = vector.load %arg4[%c0_6, %c0_7] : memref<512x16xf32, #tpu.memory_space<vmem>>, vector<512x16xf32>
    tpu.vector_store %arg4[%c0_6, %c0_7], %7 {strides = array<i32>} : memref<512x16xf32, #tpu.memory_space<vmem>>, vector<512x16xf32>,
    return
  }
  func.func @transform_0(%arg0: i32) -> (i32, i32) {
    %c0_i32 = arith.constant 0 : i32
    %c0_i32_0 = arith.constant 0 : i32
    return %arg0, %c0_i32 : i32, i32
  }
  func.func @transform_1(%arg0: i32) -> (i32, i32) {
    %c0_i32 = arith.constant 0 : i32
    %c0_i32_0 = arith.constant 0 : i32
    %c0_i32_1 = arith.constant 0 : i32
    return %c0_i32, %c0_i32_0 : i32, i32
  }
  func.func @transform_2(%arg0: i32) -> (i32, i32) {
    %c0_i32 = arith.constant 0 : i32
    %c0_i32_0 = arith.constant 0 : i32
    %c0_i32_1 = arith.constant 0 : i32
    return %c0_i32, %c0_i32_0 : i32, i32
  }
  func.func @transform_3(%arg0: i32) -> (i32, i32) {
    %c0_i32 = arith.constant 0 : i32
    %c0_i32_0 = arith.constant 0 : i32
    return %arg0, %c0_i32 : i32, i32
  }
}

module attributes {stable_mosaic.version = 11 : i64} {
  func.func @_maxpool_kernel(%arg0: memref<2x17x272xf32, #tpu.memory_space<vmem>>, %arg1: memref<2x17x256xf32, #tpu.memory_space<vmem>>, %arg2: memref<2x16x272xf32, #tpu.memory_space<vmem>>, %arg3: memref<2x16x256xf32, #tpu.memory_space<vmem>>, %arg4: memref<2x16x256xf32, #tpu.memory_space<vmem>>) attributes {dimension_semantics = [], scalar_prefetch = 0 : i64, scratch_operands = 0 : i64, tpu.core_type = #tpu.core_type<tc>} {
    %c0 = arith.constant 0 : index
    %c0_0 = arith.constant 0 : index
    %c0_1 = arith.constant 0 : index
    %0 = vector.load %arg0[%c0, %c0_0, %c0_1] : memref<2x17x272xf32, #tpu.memory_space<vmem>>, vector<2x17x256xf32>
    %c0_2 = arith.constant 0 : index
    %c0_3 = arith.constant 0 : index
    %c16 = arith.constant 16 : index
    %1 = vector.load %arg0[%c0_2, %c0_3, %c16] : memref<2x17x272xf32, #tpu.memory_space<vmem>>, vector<2x17x256xf32>
    %2 = arith.maximumf %0, %1 : vector<2x17x256xf32>
    %c0_4 = arith.constant 0 : index
    %c0_5 = arith.constant 0 : index
    %c0_6 = arith.constant 0 : index
    %3 = vector.load %arg1[%c0_4, %c0_5, %c0_6] : memref<2x17x256xf32, #tpu.memory_space<vmem>>, vector<2x17x256xf32>
    %4 = arith.maximumf %2, %3 : vector<2x17x256xf32>
    %c0_7 = arith.constant 0 : index
    %c0_8 = arith.constant 0 : index
    %c0_9 = arith.constant 0 : index
    %5 = vector.load %arg2[%c0_7, %c0_8, %c0_9] : memref<2x16x272xf32, #tpu.memory_space<vmem>>, vector<2x16x256xf32>
    %c0_10 = arith.constant 0 : index
    %c0_11 = arith.constant 0 : index
    %c16_12 = arith.constant 16 : index
    %6 = vector.load %arg2[%c0_10, %c0_11, %c16_12] : memref<2x16x272xf32, #tpu.memory_space<vmem>>, vector<2x16x256xf32>
    %7 = arith.maximumf %5, %6 : vector<2x16x256xf32>
    %c0_13 = arith.constant 0 : index
    %c0_14 = arith.constant 0 : index
    %c0_15 = arith.constant 0 : index
    %8 = vector.load %arg3[%c0_13, %c0_14, %c0_15] : memref<2x16x256xf32, #tpu.memory_space<vmem>>, vector<2x16x256xf32>
    %9 = arith.maximumf %7, %8 : vector<2x16x256xf32>
    %10 = vector.extract_strided_slice %4 {offsets = [0, 0, 0], sizes = [2, 16, 256], strides = [1, 1, 1]} : vector<2x17x256xf32> to vector<2x16x256xf32>
    %11 = vector.extract_strided_slice %4 {offsets = [0, 1, 0], sizes = [2, 16, 256], strides = [1, 1, 1]} : vector<2x17x256xf32> to vector<2x16x256xf32>
    %12 = arith.maximumf %10, %11 : vector<2x16x256xf32>
    %13 = arith.maximumf %12, %9 : vector<2x16x256xf32>
    %c0_16 = arith.constant 0 : index
    %c0_17 = arith.constant 0 : index
    %c0_18 = arith.constant 0 : index
    %14 = vector.load %arg4[%c0_16, %c0_17, %c0_18] : memref<2x16x256xf32, #tpu.memory_space<vmem>>, vector<2x16x256xf32>
    tpu.vector_store %arg4[%c0_16, %c0_17, %c0_18], %13 {strides = array<i32>} : memref<2x16x256xf32, #tpu.memory_space<vmem>>, vector<2x16x256xf32>,
    return
  }
}

module attributes {stable_mosaic.version = 11 : i64} {
  func.func @_mm_bias_kernel(%arg0: i32, %arg1: memref<512x144xbf16, #tpu.memory_space<vmem>>, %arg2: memref<144x16xbf16, #tpu.memory_space<vmem>>, %arg3: memref<1x16xf32, #tpu.memory_space<vmem>>, %arg4: memref<512x16xf32, #tpu.memory_space<vmem>>) attributes {dimension_semantics = [#tpu.dimension_semantics<parallel>], iteration_bounds = array<i64: 1>, scalar_prefetch = 0 : i64, scratch_operands = 0 : i64, tpu.core_type = #tpu.core_type<tc>, window_params = [{transform_indices = @transform_0, window_bounds = array<i64: 512, 144>}, {pipeline_mode = #tpu.pipeline_mode<synchronous>, transform_indices = @transform_1, window_bounds = array<i64: 144, 16>}, {pipeline_mode = #tpu.pipeline_mode<synchronous>, transform_indices = @transform_2, window_bounds = array<i64: 1, 16>}, {transform_indices = @transform_3, window_bounds = array<i64: 512, 16>}]} {
    %c0 = arith.constant 0 : index
    %c0_0 = arith.constant 0 : index
    %0 = vector.load %arg1[%c0, %c0_0] : memref<512x144xbf16, #tpu.memory_space<vmem>>, vector<512x144xbf16>
    %c0_1 = arith.constant 0 : index
    %c0_2 = arith.constant 0 : index
    %1 = vector.load %arg2[%c0_1, %c0_2] : memref<144x16xbf16, #tpu.memory_space<vmem>>, vector<144x16xbf16>
    %cst = arith.constant dense<0.000000e+00> : vector<512x16xf32>
    %2 = tpu.matmul %0, %1, %cst {dimension_numbers = #tpu.dot_dimension_numbers<[1], [0], [0], [1], [0, 0, 1, 1], [], []>} : vector<512x144xbf16>, vector<144x16xbf16>, vector<512x16xf32> -> vector<512x16xf32>
    %c0_3 = arith.constant 0 : index
    %c0_4 = arith.constant 0 : index
    %3 = vector.load %arg3[%c0_3, %c0_4] : memref<1x16xf32, #tpu.memory_space<vmem>>, vector<1x16xf32>
    %4 = vector.broadcast %3 : vector<1x16xf32> to vector<512x16xf32>
    %5 = arith.addf %2, %4 : vector<512x16xf32>
    %cst_5 = arith.constant 0.000000e+00 : f32
    %6 = vector.broadcast %cst_5 : f32 to vector<512x16xf32>
    %7 = arith.maximumf %5, %6 : vector<512x16xf32>
    %c0_6 = arith.constant 0 : index
    %c0_7 = arith.constant 0 : index
    %8 = vector.load %arg4[%c0_6, %c0_7] : memref<512x16xf32, #tpu.memory_space<vmem>>, vector<512x16xf32>
    tpu.vector_store %arg4[%c0_6, %c0_7], %7 {strides = array<i32>} : memref<512x16xf32, #tpu.memory_space<vmem>>, vector<512x16xf32>,
    return
  }
  func.func @transform_0(%arg0: i32) -> (i32, i32) {
    %c0_i32 = arith.constant 0 : i32
    %c0_i32_0 = arith.constant 0 : i32
    return %arg0, %c0_i32 : i32, i32
  }
  func.func @transform_1(%arg0: i32) -> (i32, i32) {
    %c0_i32 = arith.constant 0 : i32
    %c0_i32_0 = arith.constant 0 : i32
    %c0_i32_1 = arith.constant 0 : i32
    return %c0_i32, %c0_i32_0 : i32, i32
  }
  func.func @transform_2(%arg0: i32) -> (i32, i32) {
    %c0_i32 = arith.constant 0 : i32
    %c0_i32_0 = arith.constant 0 : i32
    %c0_i32_1 = arith.constant 0 : i32
    return %c0_i32, %c0_i32_0 : i32, i32
  }
  func.func @transform_3(%arg0: i32) -> (i32, i32) {
    %c0_i32 = arith.constant 0 : i32
    %c0_i32_0 = arith.constant 0 : i32
    return %arg0, %c0_i32 : i32, i32
  }
}

module attributes {stable_mosaic.version = 11 : i64} {
  func.func @_mm_bias_res_kernel(%arg0: i32, %arg1: memref<512x144xbf16, #tpu.memory_space<vmem>>, %arg2: memref<144x16xbf16, #tpu.memory_space<vmem>>, %arg3: memref<1x16xf32, #tpu.memory_space<vmem>>, %arg4: memref<512x16xf32, #tpu.memory_space<vmem>>, %arg5: memref<512x16xf32, #tpu.memory_space<vmem>>) attributes {dimension_semantics = [#tpu.dimension_semantics<parallel>], iteration_bounds = array<i64: 1>, scalar_prefetch = 0 : i64, scratch_operands = 0 : i64, tpu.core_type = #tpu.core_type<tc>, window_params = [{transform_indices = @transform_0, window_bounds = array<i64: 512, 144>}, {pipeline_mode = #tpu.pipeline_mode<synchronous>, transform_indices = @transform_1, window_bounds = array<i64: 144, 16>}, {pipeline_mode = #tpu.pipeline_mode<synchronous>, transform_indices = @transform_2, window_bounds = array<i64: 1, 16>}, {transform_indices = @transform_3, window_bounds = array<i64: 512, 16>}, {transform_indices = @transform_4, window_bounds = array<i64: 512, 16>}]} {
    %c0 = arith.constant 0 : index
    %c0_0 = arith.constant 0 : index
    %0 = vector.load %arg1[%c0, %c0_0] : memref<512x144xbf16, #tpu.memory_space<vmem>>, vector<512x144xbf16>
    %c0_1 = arith.constant 0 : index
    %c0_2 = arith.constant 0 : index
    %1 = vector.load %arg2[%c0_1, %c0_2] : memref<144x16xbf16, #tpu.memory_space<vmem>>, vector<144x16xbf16>
    %cst = arith.constant dense<0.000000e+00> : vector<512x16xf32>
    %2 = tpu.matmul %0, %1, %cst {dimension_numbers = #tpu.dot_dimension_numbers<[1], [0], [0], [1], [0, 0, 1, 1], [], []>} : vector<512x144xbf16>, vector<144x16xbf16>, vector<512x16xf32> -> vector<512x16xf32>
    %c0_3 = arith.constant 0 : index
    %c0_4 = arith.constant 0 : index
    %3 = vector.load %arg3[%c0_3, %c0_4] : memref<1x16xf32, #tpu.memory_space<vmem>>, vector<1x16xf32>
    %4 = vector.broadcast %3 : vector<1x16xf32> to vector<512x16xf32>
    %5 = arith.addf %2, %4 : vector<512x16xf32>
    %c0_5 = arith.constant 0 : index
    %c0_6 = arith.constant 0 : index
    %6 = vector.load %arg4[%c0_5, %c0_6] : memref<512x16xf32, #tpu.memory_space<vmem>>, vector<512x16xf32>
    %7 = arith.addf %5, %6 : vector<512x16xf32>
    %cst_7 = arith.constant 0.000000e+00 : f32
    %8 = vector.broadcast %cst_7 : f32 to vector<512x16xf32>
    %9 = arith.maximumf %7, %8 : vector<512x16xf32>
    %c0_8 = arith.constant 0 : index
    %c0_9 = arith.constant 0 : index
    %10 = vector.load %arg5[%c0_8, %c0_9] : memref<512x16xf32, #tpu.memory_space<vmem>>, vector<512x16xf32>
    tpu.vector_store %arg5[%c0_8, %c0_9], %9 {strides = array<i32>} : memref<512x16xf32, #tpu.memory_space<vmem>>, vector<512x16xf32>,
    return
  }
  func.func @transform_0(%arg0: i32) -> (i32, i32) {
    %c0_i32 = arith.constant 0 : i32
    %c0_i32_0 = arith.constant 0 : i32
    return %arg0, %c0_i32 : i32, i32
  }
  func.func @transform_1(%arg0: i32) -> (i32, i32) {
    %c0_i32 = arith.constant 0 : i32
    %c0_i32_0 = arith.constant 0 : i32
    %c0_i32_1 = arith.constant 0 : i32
    return %c0_i32, %c0_i32_0 : i32, i32
  }
  func.func @transform_2(%arg0: i32) -> (i32, i32) {
    %c0_i32 = arith.constant 0 : i32
    %c0_i32_0 = arith.constant 0 : i32
    %c0_i32_1 = arith.constant 0 : i32
    return %c0_i32, %c0_i32_0 : i32, i32
  }
  func.func @transform_3(%arg0: i32) -> (i32, i32) {
    %c0_i32 = arith.constant 0 : i32
    %c0_i32_0 = arith.constant 0 : i32
    return %arg0, %c0_i32 : i32, i32
  }
  func.func @transform_4(%arg0: i32) -> (i32, i32) {
    %c0_i32 = arith.constant 0 : i32
    %c0_i32_0 = arith.constant 0 : i32
    return %arg0, %c0_i32 : i32, i32
  }
}

module attributes {stable_mosaic.version = 11 : i64} {
  func.func @_mm_bias_kernel(%arg0: i32, %arg1: memref<128x144xbf16, #tpu.memory_space<vmem>>, %arg2: memref<144x32xbf16, #tpu.memory_space<vmem>>, %arg3: memref<1x32xf32, #tpu.memory_space<vmem>>, %arg4: memref<128x32xf32, #tpu.memory_space<vmem>>) attributes {dimension_semantics = [#tpu.dimension_semantics<parallel>], iteration_bounds = array<i64: 1>, scalar_prefetch = 0 : i64, scratch_operands = 0 : i64, tpu.core_type = #tpu.core_type<tc>, window_params = [{transform_indices = @transform_0, window_bounds = array<i64: 128, 144>}, {pipeline_mode = #tpu.pipeline_mode<synchronous>, transform_indices = @transform_1, window_bounds = array<i64: 144, 32>}, {pipeline_mode = #tpu.pipeline_mode<synchronous>, transform_indices = @transform_2, window_bounds = array<i64: 1, 32>}, {transform_indices = @transform_3, window_bounds = array<i64: 128, 32>}]} {
    %c0 = arith.constant 0 : index
    %c0_0 = arith.constant 0 : index
    %0 = vector.load %arg1[%c0, %c0_0] : memref<128x144xbf16, #tpu.memory_space<vmem>>, vector<128x144xbf16>
    %c0_1 = arith.constant 0 : index
    %c0_2 = arith.constant 0 : index
    %1 = vector.load %arg2[%c0_1, %c0_2] : memref<144x32xbf16, #tpu.memory_space<vmem>>, vector<144x32xbf16>
    %cst = arith.constant dense<0.000000e+00> : vector<128x32xf32>
    %2 = tpu.matmul %0, %1, %cst {dimension_numbers = #tpu.dot_dimension_numbers<[1], [0], [0], [1], [0, 0, 1, 1], [], []>} : vector<128x144xbf16>, vector<144x32xbf16>, vector<128x32xf32> -> vector<128x32xf32>
    %c0_3 = arith.constant 0 : index
    %c0_4 = arith.constant 0 : index
    %3 = vector.load %arg3[%c0_3, %c0_4] : memref<1x32xf32, #tpu.memory_space<vmem>>, vector<1x32xf32>
    %4 = vector.broadcast %3 : vector<1x32xf32> to vector<128x32xf32>
    %5 = arith.addf %2, %4 : vector<128x32xf32>
    %cst_5 = arith.constant 0.000000e+00 : f32
    %6 = vector.broadcast %cst_5 : f32 to vector<128x32xf32>
    %7 = arith.maximumf %5, %6 : vector<128x32xf32>
    %c0_6 = arith.constant 0 : index
    %c0_7 = arith.constant 0 : index
    %8 = vector.load %arg4[%c0_6, %c0_7] : memref<128x32xf32, #tpu.memory_space<vmem>>, vector<128x32xf32>
    tpu.vector_store %arg4[%c0_6, %c0_7], %7 {strides = array<i32>} : memref<128x32xf32, #tpu.memory_space<vmem>>, vector<128x32xf32>,
    return
  }
  func.func @transform_0(%arg0: i32) -> (i32, i32) {
    %c0_i32 = arith.constant 0 : i32
    %c0_i32_0 = arith.constant 0 : i32
    return %arg0, %c0_i32 : i32, i32
  }
  func.func @transform_1(%arg0: i32) -> (i32, i32) {
    %c0_i32 = arith.constant 0 : i32
    %c0_i32_0 = arith.constant 0 : i32
    %c0_i32_1 = arith.constant 0 : i32
    return %c0_i32, %c0_i32_0 : i32, i32
  }
  func.func @transform_2(%arg0: i32) -> (i32, i32) {
    %c0_i32 = arith.constant 0 : i32
    %c0_i32_0 = arith.constant 0 : i32
    %c0_i32_1 = arith.constant 0 : i32
    return %c0_i32, %c0_i32_0 : i32, i32
  }
  func.func @transform_3(%arg0: i32) -> (i32, i32) {
    %c0_i32 = arith.constant 0 : i32
    %c0_i32_0 = arith.constant 0 : i32
    return %arg0, %c0_i32 : i32, i32
  }
}

module attributes {stable_mosaic.version = 11 : i64} {
  func.func @_mm_bias_kernel(%arg0: i32, %arg1: memref<128x16xbf16, #tpu.memory_space<vmem>>, %arg2: memref<16x32xbf16, #tpu.memory_space<vmem>>, %arg3: memref<1x32xf32, #tpu.memory_space<vmem>>, %arg4: memref<128x32xf32, #tpu.memory_space<vmem>>) attributes {dimension_semantics = [#tpu.dimension_semantics<parallel>], iteration_bounds = array<i64: 1>, scalar_prefetch = 0 : i64, scratch_operands = 0 : i64, tpu.core_type = #tpu.core_type<tc>, window_params = [{transform_indices = @transform_0, window_bounds = array<i64: 128, 16>}, {pipeline_mode = #tpu.pipeline_mode<synchronous>, transform_indices = @transform_1, window_bounds = array<i64: 16, 32>}, {pipeline_mode = #tpu.pipeline_mode<synchronous>, transform_indices = @transform_2, window_bounds = array<i64: 1, 32>}, {transform_indices = @transform_3, window_bounds = array<i64: 128, 32>}]} {
    %c0 = arith.constant 0 : index
    %c0_0 = arith.constant 0 : index
    %0 = vector.load %arg1[%c0, %c0_0] : memref<128x16xbf16, #tpu.memory_space<vmem>>, vector<128x16xbf16>
    %c0_1 = arith.constant 0 : index
    %c0_2 = arith.constant 0 : index
    %1 = vector.load %arg2[%c0_1, %c0_2] : memref<16x32xbf16, #tpu.memory_space<vmem>>, vector<16x32xbf16>
    %cst = arith.constant dense<0.000000e+00> : vector<128x32xf32>
    %2 = tpu.matmul %0, %1, %cst {dimension_numbers = #tpu.dot_dimension_numbers<[1], [0], [0], [1], [0, 0, 1, 1], [], []>} : vector<128x16xbf16>, vector<16x32xbf16>, vector<128x32xf32> -> vector<128x32xf32>
    %c0_3 = arith.constant 0 : index
    %c0_4 = arith.constant 0 : index
    %3 = vector.load %arg3[%c0_3, %c0_4] : memref<1x32xf32, #tpu.memory_space<vmem>>, vector<1x32xf32>
    %4 = vector.broadcast %3 : vector<1x32xf32> to vector<128x32xf32>
    %5 = arith.addf %2, %4 : vector<128x32xf32>
    %c0_5 = arith.constant 0 : index
    %c0_6 = arith.constant 0 : index
    %6 = vector.load %arg4[%c0_5, %c0_6] : memref<128x32xf32, #tpu.memory_space<vmem>>, vector<128x32xf32>
    tpu.vector_store %arg4[%c0_5, %c0_6], %5 {strides = array<i32>} : memref<128x32xf32, #tpu.memory_space<vmem>>, vector<128x32xf32>,
    return
  }
  func.func @transform_0(%arg0: i32) -> (i32, i32) {
    %c0_i32 = arith.constant 0 : i32
    %c0_i32_0 = arith.constant 0 : i32
    return %arg0, %c0_i32 : i32, i32
  }
  func.func @transform_1(%arg0: i32) -> (i32, i32) {
    %c0_i32 = arith.constant 0 : i32
    %c0_i32_0 = arith.constant 0 : i32
    %c0_i32_1 = arith.constant 0 : i32
    return %c0_i32, %c0_i32_0 : i32, i32
  }
  func.func @transform_2(%arg0: i32) -> (i32, i32) {
    %c0_i32 = arith.constant 0 : i32
    %c0_i32_0 = arith.constant 0 : i32
    %c0_i32_1 = arith.constant 0 : i32
    return %c0_i32, %c0_i32_0 : i32, i32
  }
  func.func @transform_3(%arg0: i32) -> (i32, i32) {
    %c0_i32 = arith.constant 0 : i32
    %c0_i32_0 = arith.constant 0 : i32
    return %arg0, %c0_i32 : i32, i32
  }
}

module attributes {stable_mosaic.version = 11 : i64} {
  func.func @_mm_bias_res_kernel(%arg0: i32, %arg1: memref<128x288xbf16, #tpu.memory_space<vmem>>, %arg2: memref<288x32xbf16, #tpu.memory_space<vmem>>, %arg3: memref<1x32xf32, #tpu.memory_space<vmem>>, %arg4: memref<128x32xf32, #tpu.memory_space<vmem>>, %arg5: memref<128x32xf32, #tpu.memory_space<vmem>>) attributes {dimension_semantics = [#tpu.dimension_semantics<parallel>], iteration_bounds = array<i64: 1>, scalar_prefetch = 0 : i64, scratch_operands = 0 : i64, tpu.core_type = #tpu.core_type<tc>, window_params = [{transform_indices = @transform_0, window_bounds = array<i64: 128, 288>}, {pipeline_mode = #tpu.pipeline_mode<synchronous>, transform_indices = @transform_1, window_bounds = array<i64: 288, 32>}, {pipeline_mode = #tpu.pipeline_mode<synchronous>, transform_indices = @transform_2, window_bounds = array<i64: 1, 32>}, {transform_indices = @transform_3, window_bounds = array<i64: 128, 32>}, {transform_indices = @transform_4, window_bounds = array<i64: 128, 32>}]} {
    %c0 = arith.constant 0 : index
    %c0_0 = arith.constant 0 : index
    %0 = vector.load %arg1[%c0, %c0_0] : memref<128x288xbf16, #tpu.memory_space<vmem>>, vector<128x288xbf16>
    %c0_1 = arith.constant 0 : index
    %c0_2 = arith.constant 0 : index
    %1 = vector.load %arg2[%c0_1, %c0_2] : memref<288x32xbf16, #tpu.memory_space<vmem>>, vector<288x32xbf16>
    %cst = arith.constant dense<0.000000e+00> : vector<128x32xf32>
    %2 = tpu.matmul %0, %1, %cst {dimension_numbers = #tpu.dot_dimension_numbers<[1], [0], [0], [1], [0, 0, 1, 1], [], []>} : vector<128x288xbf16>, vector<288x32xbf16>, vector<128x32xf32> -> vector<128x32xf32>
    %c0_3 = arith.constant 0 : index
    %c0_4 = arith.constant 0 : index
    %3 = vector.load %arg3[%c0_3, %c0_4] : memref<1x32xf32, #tpu.memory_space<vmem>>, vector<1x32xf32>
    %4 = vector.broadcast %3 : vector<1x32xf32> to vector<128x32xf32>
    %5 = arith.addf %2, %4 : vector<128x32xf32>
    %c0_5 = arith.constant 0 : index
    %c0_6 = arith.constant 0 : index
    %6 = vector.load %arg4[%c0_5, %c0_6] : memref<128x32xf32, #tpu.memory_space<vmem>>, vector<128x32xf32>
    %7 = arith.addf %5, %6 : vector<128x32xf32>
    %cst_7 = arith.constant 0.000000e+00 : f32
    %8 = vector.broadcast %cst_7 : f32 to vector<128x32xf32>
    %9 = arith.maximumf %7, %8 : vector<128x32xf32>
    %c0_8 = arith.constant 0 : index
    %c0_9 = arith.constant 0 : index
    %10 = vector.load %arg5[%c0_8, %c0_9] : memref<128x32xf32, #tpu.memory_space<vmem>>, vector<128x32xf32>
    tpu.vector_store %arg5[%c0_8, %c0_9], %9 {strides = array<i32>} : memref<128x32xf32, #tpu.memory_space<vmem>>, vector<128x32xf32>,
    return
  }
  func.func @transform_0(%arg0: i32) -> (i32, i32) {
    %c0_i32 = arith.constant 0 : i32
    %c0_i32_0 = arith.constant 0 : i32
    return %arg0, %c0_i32 : i32, i32
  }
  func.func @transform_1(%arg0: i32) -> (i32, i32) {
    %c0_i32 = arith.constant 0 : i32
    %c0_i32_0 = arith.constant 0 : i32
    %c0_i32_1 = arith.constant 0 : i32
    return %c0_i32, %c0_i32_0 : i32, i32
  }
  func.func @transform_2(%arg0: i32) -> (i32, i32) {
    %c0_i32 = arith.constant 0 : i32
    %c0_i32_0 = arith.constant 0 : i32
    %c0_i32_1 = arith.constant 0 : i32
    return %c0_i32, %c0_i32_0 : i32, i32
  }
  func.func @transform_3(%arg0: i32) -> (i32, i32) {
    %c0_i32 = arith.constant 0 : i32
    %c0_i32_0 = arith.constant 0 : i32
    return %arg0, %c0_i32 : i32, i32
  }
  func.func @transform_4(%arg0: i32) -> (i32, i32) {
    %c0_i32 = arith.constant 0 : i32
    %c0_i32_0 = arith.constant 0 : i32
    return %arg0, %c0_i32 : i32, i32
  }
}

module attributes {stable_mosaic.version = 11 : i64} {
  func.func @_mm_bias_kernel(%arg0: i32, %arg1: memref<32x288xbf16, #tpu.memory_space<vmem>>, %arg2: memref<288x64xbf16, #tpu.memory_space<vmem>>, %arg3: memref<1x64xf32, #tpu.memory_space<vmem>>, %arg4: memref<32x64xf32, #tpu.memory_space<vmem>>) attributes {dimension_semantics = [#tpu.dimension_semantics<parallel>], iteration_bounds = array<i64: 1>, scalar_prefetch = 0 : i64, scratch_operands = 0 : i64, tpu.core_type = #tpu.core_type<tc>, window_params = [{transform_indices = @transform_0, window_bounds = array<i64: 32, 288>}, {pipeline_mode = #tpu.pipeline_mode<synchronous>, transform_indices = @transform_1, window_bounds = array<i64: 288, 64>}, {pipeline_mode = #tpu.pipeline_mode<synchronous>, transform_indices = @transform_2, window_bounds = array<i64: 1, 64>}, {transform_indices = @transform_3, window_bounds = array<i64: 32, 64>}]} {
    %c0 = arith.constant 0 : index
    %c0_0 = arith.constant 0 : index
    %0 = vector.load %arg1[%c0, %c0_0] : memref<32x288xbf16, #tpu.memory_space<vmem>>, vector<32x288xbf16>
    %c0_1 = arith.constant 0 : index
    %c0_2 = arith.constant 0 : index
    %1 = vector.load %arg2[%c0_1, %c0_2] : memref<288x64xbf16, #tpu.memory_space<vmem>>, vector<288x64xbf16>
    %cst = arith.constant dense<0.000000e+00> : vector<32x64xf32>
    %2 = tpu.matmul %0, %1, %cst {dimension_numbers = #tpu.dot_dimension_numbers<[1], [0], [0], [1], [0, 0, 1, 1], [], []>} : vector<32x288xbf16>, vector<288x64xbf16>, vector<32x64xf32> -> vector<32x64xf32>
    %c0_3 = arith.constant 0 : index
    %c0_4 = arith.constant 0 : index
    %3 = vector.load %arg3[%c0_3, %c0_4] : memref<1x64xf32, #tpu.memory_space<vmem>>, vector<1x64xf32>
    %4 = vector.broadcast %3 : vector<1x64xf32> to vector<32x64xf32>
    %5 = arith.addf %2, %4 : vector<32x64xf32>
    %cst_5 = arith.constant 0.000000e+00 : f32
    %6 = vector.broadcast %cst_5 : f32 to vector<32x64xf32>
    %7 = arith.maximumf %5, %6 : vector<32x64xf32>
    %c0_6 = arith.constant 0 : index
    %c0_7 = arith.constant 0 : index
    %8 = vector.load %arg4[%c0_6, %c0_7] : memref<32x64xf32, #tpu.memory_space<vmem>>, vector<32x64xf32>
    tpu.vector_store %arg4[%c0_6, %c0_7], %7 {strides = array<i32>} : memref<32x64xf32, #tpu.memory_space<vmem>>, vector<32x64xf32>,
    return
  }
  func.func @transform_0(%arg0: i32) -> (i32, i32) {
    %c0_i32 = arith.constant 0 : i32
    %c0_i32_0 = arith.constant 0 : i32
    return %arg0, %c0_i32 : i32, i32
  }
  func.func @transform_1(%arg0: i32) -> (i32, i32) {
    %c0_i32 = arith.constant 0 : i32
    %c0_i32_0 = arith.constant 0 : i32
    %c0_i32_1 = arith.constant 0 : i32
    return %c0_i32, %c0_i32_0 : i32, i32
  }
  func.func @transform_2(%arg0: i32) -> (i32, i32) {
    %c0_i32 = arith.constant 0 : i32
    %c0_i32_0 = arith.constant 0 : i32
    %c0_i32_1 = arith.constant 0 : i32
    return %c0_i32, %c0_i32_0 : i32, i32
  }
  func.func @transform_3(%arg0: i32) -> (i32, i32) {
    %c0_i32 = arith.constant 0 : i32
    %c0_i32_0 = arith.constant 0 : i32
    return %arg0, %c0_i32 : i32, i32
  }
}

module attributes {stable_mosaic.version = 11 : i64} {
  func.func @_mm_bias_kernel(%arg0: i32, %arg1: memref<32x32xbf16, #tpu.memory_space<vmem>>, %arg2: memref<32x64xbf16, #tpu.memory_space<vmem>>, %arg3: memref<1x64xf32, #tpu.memory_space<vmem>>, %arg4: memref<32x64xf32, #tpu.memory_space<vmem>>) attributes {dimension_semantics = [#tpu.dimension_semantics<parallel>], iteration_bounds = array<i64: 1>, scalar_prefetch = 0 : i64, scratch_operands = 0 : i64, tpu.core_type = #tpu.core_type<tc>, window_params = [{transform_indices = @transform_0, window_bounds = array<i64: 32, 32>}, {pipeline_mode = #tpu.pipeline_mode<synchronous>, transform_indices = @transform_1, window_bounds = array<i64: 32, 64>}, {pipeline_mode = #tpu.pipeline_mode<synchronous>, transform_indices = @transform_2, window_bounds = array<i64: 1, 64>}, {transform_indices = @transform_3, window_bounds = array<i64: 32, 64>}]} {
    %c0 = arith.constant 0 : index
    %c0_0 = arith.constant 0 : index
    %0 = vector.load %arg1[%c0, %c0_0] : memref<32x32xbf16, #tpu.memory_space<vmem>>, vector<32x32xbf16>
    %c0_1 = arith.constant 0 : index
    %c0_2 = arith.constant 0 : index
    %1 = vector.load %arg2[%c0_1, %c0_2] : memref<32x64xbf16, #tpu.memory_space<vmem>>, vector<32x64xbf16>
    %cst = arith.constant dense<0.000000e+00> : vector<32x64xf32>
    %2 = tpu.matmul %0, %1, %cst {dimension_numbers = #tpu.dot_dimension_numbers<[1], [0], [0], [1], [0, 0, 1, 1], [], []>} : vector<32x32xbf16>, vector<32x64xbf16>, vector<32x64xf32> -> vector<32x64xf32>
    %c0_3 = arith.constant 0 : index
    %c0_4 = arith.constant 0 : index
    %3 = vector.load %arg3[%c0_3, %c0_4] : memref<1x64xf32, #tpu.memory_space<vmem>>, vector<1x64xf32>
    %4 = vector.broadcast %3 : vector<1x64xf32> to vector<32x64xf32>
    %5 = arith.addf %2, %4 : vector<32x64xf32>
    %c0_5 = arith.constant 0 : index
    %c0_6 = arith.constant 0 : index
    %6 = vector.load %arg4[%c0_5, %c0_6] : memref<32x64xf32, #tpu.memory_space<vmem>>, vector<32x64xf32>
    tpu.vector_store %arg4[%c0_5, %c0_6], %5 {strides = array<i32>} : memref<32x64xf32, #tpu.memory_space<vmem>>, vector<32x64xf32>,
    return
  }
  func.func @transform_0(%arg0: i32) -> (i32, i32) {
    %c0_i32 = arith.constant 0 : i32
    %c0_i32_0 = arith.constant 0 : i32
    return %arg0, %c0_i32 : i32, i32
  }
  func.func @transform_1(%arg0: i32) -> (i32, i32) {
    %c0_i32 = arith.constant 0 : i32
    %c0_i32_0 = arith.constant 0 : i32
    %c0_i32_1 = arith.constant 0 : i32
    return %c0_i32, %c0_i32_0 : i32, i32
  }
  func.func @transform_2(%arg0: i32) -> (i32, i32) {
    %c0_i32 = arith.constant 0 : i32
    %c0_i32_0 = arith.constant 0 : i32
    %c0_i32_1 = arith.constant 0 : i32
    return %c0_i32, %c0_i32_0 : i32, i32
  }
  func.func @transform_3(%arg0: i32) -> (i32, i32) {
    %c0_i32 = arith.constant 0 : i32
    %c0_i32_0 = arith.constant 0 : i32
    return %arg0, %c0_i32 : i32, i32
  }
}

module attributes {stable_mosaic.version = 11 : i64} {
  func.func @_mm_bias_res_kernel(%arg0: i32, %arg1: memref<32x576xbf16, #tpu.memory_space<vmem>>, %arg2: memref<576x64xbf16, #tpu.memory_space<vmem>>, %arg3: memref<1x64xf32, #tpu.memory_space<vmem>>, %arg4: memref<32x64xf32, #tpu.memory_space<vmem>>, %arg5: memref<32x64xf32, #tpu.memory_space<vmem>>) attributes {dimension_semantics = [#tpu.dimension_semantics<parallel>], iteration_bounds = array<i64: 1>, scalar_prefetch = 0 : i64, scratch_operands = 0 : i64, tpu.core_type = #tpu.core_type<tc>, window_params = [{transform_indices = @transform_0, window_bounds = array<i64: 32, 576>}, {pipeline_mode = #tpu.pipeline_mode<synchronous>, transform_indices = @transform_1, window_bounds = array<i64: 576, 64>}, {pipeline_mode = #tpu.pipeline_mode<synchronous>, transform_indices = @transform_2, window_bounds = array<i64: 1, 64>}, {transform_indices = @transform_3, window_bounds = array<i64: 32, 64>}, {transform_indices = @transform_4, window_bounds = array<i64: 32, 64>}]} {
    %c0 = arith.constant 0 : index
    %c0_0 = arith.constant 0 : index
    %0 = vector.load %arg1[%c0, %c0_0] : memref<32x576xbf16, #tpu.memory_space<vmem>>, vector<32x576xbf16>
    %c0_1 = arith.constant 0 : index
    %c0_2 = arith.constant 0 : index
    %1 = vector.load %arg2[%c0_1, %c0_2] : memref<576x64xbf16, #tpu.memory_space<vmem>>, vector<576x64xbf16>
    %cst = arith.constant dense<0.000000e+00> : vector<32x64xf32>
    %2 = tpu.matmul %0, %1, %cst {dimension_numbers = #tpu.dot_dimension_numbers<[1], [0], [0], [1], [0, 0, 1, 1], [], []>} : vector<32x576xbf16>, vector<576x64xbf16>, vector<32x64xf32> -> vector<32x64xf32>
    %c0_3 = arith.constant 0 : index
    %c0_4 = arith.constant 0 : index
    %3 = vector.load %arg3[%c0_3, %c0_4] : memref<1x64xf32, #tpu.memory_space<vmem>>, vector<1x64xf32>
    %4 = vector.broadcast %3 : vector<1x64xf32> to vector<32x64xf32>
    %5 = arith.addf %2, %4 : vector<32x64xf32>
    %c0_5 = arith.constant 0 : index
    %c0_6 = arith.constant 0 : index
    %6 = vector.load %arg4[%c0_5, %c0_6] : memref<32x64xf32, #tpu.memory_space<vmem>>, vector<32x64xf32>
    %7 = arith.addf %5, %6 : vector<32x64xf32>
    %cst_7 = arith.constant 0.000000e+00 : f32
    %8 = vector.broadcast %cst_7 : f32 to vector<32x64xf32>
    %9 = arith.maximumf %7, %8 : vector<32x64xf32>
    %c0_8 = arith.constant 0 : index
    %c0_9 = arith.constant 0 : index
    %10 = vector.load %arg5[%c0_8, %c0_9] : memref<32x64xf32, #tpu.memory_space<vmem>>, vector<32x64xf32>
    tpu.vector_store %arg5[%c0_8, %c0_9], %9 {strides = array<i32>} : memref<32x64xf32, #tpu.memory_space<vmem>>, vector<32x64xf32>,
    return
  }
  func.func @transform_0(%arg0: i32) -> (i32, i32) {
    %c0_i32 = arith.constant 0 : i32
    %c0_i32_0 = arith.constant 0 : i32
    return %arg0, %c0_i32 : i32, i32
  }
  func.func @transform_1(%arg0: i32) -> (i32, i32) {
    %c0_i32 = arith.constant 0 : i32
    %c0_i32_0 = arith.constant 0 : i32
    %c0_i32_1 = arith.constant 0 : i32
    return %c0_i32, %c0_i32_0 : i32, i32
  }
  func.func @transform_2(%arg0: i32) -> (i32, i32) {
    %c0_i32 = arith.constant 0 : i32
    %c0_i32_0 = arith.constant 0 : i32
    %c0_i32_1 = arith.constant 0 : i32
    return %c0_i32, %c0_i32_0 : i32, i32
  }
  func.func @transform_3(%arg0: i32) -> (i32, i32) {
    %c0_i32 = arith.constant 0 : i32
    %c0_i32_0 = arith.constant 0 : i32
    return %arg0, %c0_i32 : i32, i32
  }
  func.func @transform_4(%arg0: i32) -> (i32, i32) {
    %c0_i32 = arith.constant 0 : i32
    %c0_i32_0 = arith.constant 0 : i32
    return %arg0, %c0_i32 : i32, i32
  }
}

module attributes {stable_mosaic.version = 11 : i64} {
  func.func @_mm_bias_kernel(%arg0: i32, %arg1: memref<8x576xbf16, #tpu.memory_space<vmem>>, %arg2: memref<576x128xbf16, #tpu.memory_space<vmem>>, %arg3: memref<1x128xf32, #tpu.memory_space<vmem>>, %arg4: memref<8x128xf32, #tpu.memory_space<vmem>>) attributes {dimension_semantics = [#tpu.dimension_semantics<parallel>], iteration_bounds = array<i64: 1>, scalar_prefetch = 0 : i64, scratch_operands = 0 : i64, tpu.core_type = #tpu.core_type<tc>, window_params = [{transform_indices = @transform_0, window_bounds = array<i64: 8, 576>}, {pipeline_mode = #tpu.pipeline_mode<synchronous>, transform_indices = @transform_1, window_bounds = array<i64: 576, 128>}, {pipeline_mode = #tpu.pipeline_mode<synchronous>, transform_indices = @transform_2, window_bounds = array<i64: 1, 128>}, {transform_indices = @transform_3, window_bounds = array<i64: 8, 128>}]} {
    %c0 = arith.constant 0 : index
    %c0_0 = arith.constant 0 : index
    %0 = vector.load %arg1[%c0, %c0_0] : memref<8x576xbf16, #tpu.memory_space<vmem>>, vector<8x576xbf16>
    %c0_1 = arith.constant 0 : index
    %c0_2 = arith.constant 0 : index
    %1 = vector.load %arg2[%c0_1, %c0_2] : memref<576x128xbf16, #tpu.memory_space<vmem>>, vector<576x128xbf16>
    %cst = arith.constant dense<0.000000e+00> : vector<8x128xf32>
    %2 = tpu.matmul %0, %1, %cst {dimension_numbers = #tpu.dot_dimension_numbers<[1], [0], [0], [1], [0, 0, 1, 1], [], []>} : vector<8x576xbf16>, vector<576x128xbf16>, vector<8x128xf32> -> vector<8x128xf32>
    %c0_3 = arith.constant 0 : index
    %c0_4 = arith.constant 0 : index
    %3 = vector.load %arg3[%c0_3, %c0_4] : memref<1x128xf32, #tpu.memory_space<vmem>>, vector<1x128xf32>
    %4 = vector.broadcast %3 : vector<1x128xf32> to vector<8x128xf32>
    %5 = arith.addf %2, %4 : vector<8x128xf32>
    %cst_5 = arith.constant 0.000000e+00 : f32
    %6 = vector.broadcast %cst_5 : f32 to vector<8x128xf32>
    %7 = arith.maximumf %5, %6 : vector<8x128xf32>
    %c0_6 = arith.constant 0 : index
    %c0_7 = arith.constant 0 : index
    %8 = vector.load %arg4[%c0_6, %c0_7] : memref<8x128xf32, #tpu.memory_space<vmem>>, vector<8x128xf32>
    tpu.vector_store %arg4[%c0_6, %c0_7], %7 {strides = array<i32>} : memref<8x128xf32, #tpu.memory_space<vmem>>, vector<8x128xf32>,
    return
  }
  func.func @transform_0(%arg0: i32) -> (i32, i32) {
    %c0_i32 = arith.constant 0 : i32
    %c0_i32_0 = arith.constant 0 : i32
    return %arg0, %c0_i32 : i32, i32
  }
  func.func @transform_1(%arg0: i32) -> (i32, i32) {
    %c0_i32 = arith.constant 0 : i32
    %c0_i32_0 = arith.constant 0 : i32
    %c0_i32_1 = arith.constant 0 : i32
    return %c0_i32, %c0_i32_0 : i32, i32
  }
  func.func @transform_2(%arg0: i32) -> (i32, i32) {
    %c0_i32 = arith.constant 0 : i32
    %c0_i32_0 = arith.constant 0 : i32
    %c0_i32_1 = arith.constant 0 : i32
    return %c0_i32, %c0_i32_0 : i32, i32
  }
  func.func @transform_3(%arg0: i32) -> (i32, i32) {
    %c0_i32 = arith.constant 0 : i32
    %c0_i32_0 = arith.constant 0 : i32
    return %arg0, %c0_i32 : i32, i32
  }
}

module attributes {stable_mosaic.version = 11 : i64} {
  func.func @_mm_bias_kernel(%arg0: i32, %arg1: memref<8x64xbf16, #tpu.memory_space<vmem>>, %arg2: memref<64x128xbf16, #tpu.memory_space<vmem>>, %arg3: memref<1x128xf32, #tpu.memory_space<vmem>>, %arg4: memref<8x128xf32, #tpu.memory_space<vmem>>) attributes {dimension_semantics = [#tpu.dimension_semantics<parallel>], iteration_bounds = array<i64: 1>, scalar_prefetch = 0 : i64, scratch_operands = 0 : i64, tpu.core_type = #tpu.core_type<tc>, window_params = [{transform_indices = @transform_0, window_bounds = array<i64: 8, 64>}, {pipeline_mode = #tpu.pipeline_mode<synchronous>, transform_indices = @transform_1, window_bounds = array<i64: 64, 128>}, {pipeline_mode = #tpu.pipeline_mode<synchronous>, transform_indices = @transform_2, window_bounds = array<i64: 1, 128>}, {transform_indices = @transform_3, window_bounds = array<i64: 8, 128>}]} {
    %c0 = arith.constant 0 : index
    %c0_0 = arith.constant 0 : index
    %0 = vector.load %arg1[%c0, %c0_0] : memref<8x64xbf16, #tpu.memory_space<vmem>>, vector<8x64xbf16>
    %c0_1 = arith.constant 0 : index
    %c0_2 = arith.constant 0 : index
    %1 = vector.load %arg2[%c0_1, %c0_2] : memref<64x128xbf16, #tpu.memory_space<vmem>>, vector<64x128xbf16>
    %cst = arith.constant dense<0.000000e+00> : vector<8x128xf32>
    %2 = tpu.matmul %0, %1, %cst {dimension_numbers = #tpu.dot_dimension_numbers<[1], [0], [0], [1], [0, 0, 1, 1], [], []>} : vector<8x64xbf16>, vector<64x128xbf16>, vector<8x128xf32> -> vector<8x128xf32>
    %c0_3 = arith.constant 0 : index
    %c0_4 = arith.constant 0 : index
    %3 = vector.load %arg3[%c0_3, %c0_4] : memref<1x128xf32, #tpu.memory_space<vmem>>, vector<1x128xf32>
    %4 = vector.broadcast %3 : vector<1x128xf32> to vector<8x128xf32>
    %5 = arith.addf %2, %4 : vector<8x128xf32>
    %c0_5 = arith.constant 0 : index
    %c0_6 = arith.constant 0 : index
    %6 = vector.load %arg4[%c0_5, %c0_6] : memref<8x128xf32, #tpu.memory_space<vmem>>, vector<8x128xf32>
    tpu.vector_store %arg4[%c0_5, %c0_6], %5 {strides = array<i32>} : memref<8x128xf32, #tpu.memory_space<vmem>>, vector<8x128xf32>,
    return
  }
  func.func @transform_0(%arg0: i32) -> (i32, i32) {
    %c0_i32 = arith.constant 0 : i32
    %c0_i32_0 = arith.constant 0 : i32
    return %arg0, %c0_i32 : i32, i32
  }
  func.func @transform_1(%arg0: i32) -> (i32, i32) {
    %c0_i32 = arith.constant 0 : i32
    %c0_i32_0 = arith.constant 0 : i32
    %c0_i32_1 = arith.constant 0 : i32
    return %c0_i32, %c0_i32_0 : i32, i32
  }
  func.func @transform_2(%arg0: i32) -> (i32, i32) {
    %c0_i32 = arith.constant 0 : i32
    %c0_i32_0 = arith.constant 0 : i32
    %c0_i32_1 = arith.constant 0 : i32
    return %c0_i32, %c0_i32_0 : i32, i32
  }
  func.func @transform_3(%arg0: i32) -> (i32, i32) {
    %c0_i32 = arith.constant 0 : i32
    %c0_i32_0 = arith.constant 0 : i32
    return %arg0, %c0_i32 : i32, i32
  }
}

module attributes {stable_mosaic.version = 11 : i64} {
  func.func @_mm_bias_res_kernel(%arg0: i32, %arg1: memref<8x1152xbf16, #tpu.memory_space<vmem>>, %arg2: memref<1152x128xbf16, #tpu.memory_space<vmem>>, %arg3: memref<1x128xf32, #tpu.memory_space<vmem>>, %arg4: memref<8x128xf32, #tpu.memory_space<vmem>>, %arg5: memref<8x128xf32, #tpu.memory_space<vmem>>) attributes {dimension_semantics = [#tpu.dimension_semantics<parallel>], iteration_bounds = array<i64: 1>, scalar_prefetch = 0 : i64, scratch_operands = 0 : i64, tpu.core_type = #tpu.core_type<tc>, window_params = [{transform_indices = @transform_0, window_bounds = array<i64: 8, 1152>}, {pipeline_mode = #tpu.pipeline_mode<synchronous>, transform_indices = @transform_1, window_bounds = array<i64: 1152, 128>}, {pipeline_mode = #tpu.pipeline_mode<synchronous>, transform_indices = @transform_2, window_bounds = array<i64: 1, 128>}, {transform_indices = @transform_3, window_bounds = array<i64: 8, 128>}, {transform_indices = @transform_4, window_bounds = array<i64: 8, 128>}]} {
    %c0 = arith.constant 0 : index
    %c0_0 = arith.constant 0 : index
    %0 = vector.load %arg1[%c0, %c0_0] : memref<8x1152xbf16, #tpu.memory_space<vmem>>, vector<8x1152xbf16>
    %c0_1 = arith.constant 0 : index
    %c0_2 = arith.constant 0 : index
    %1 = vector.load %arg2[%c0_1, %c0_2] : memref<1152x128xbf16, #tpu.memory_space<vmem>>, vector<1152x128xbf16>
    %cst = arith.constant dense<0.000000e+00> : vector<8x128xf32>
    %2 = tpu.matmul %0, %1, %cst {dimension_numbers = #tpu.dot_dimension_numbers<[1], [0], [0], [1], [0, 0, 1, 1], [], []>} : vector<8x1152xbf16>, vector<1152x128xbf16>, vector<8x128xf32> -> vector<8x128xf32>
    %c0_3 = arith.constant 0 : index
    %c0_4 = arith.constant 0 : index
    %3 = vector.load %arg3[%c0_3, %c0_4] : memref<1x128xf32, #tpu.memory_space<vmem>>, vector<1x128xf32>
    %4 = vector.broadcast %3 : vector<1x128xf32> to vector<8x128xf32>
    %5 = arith.addf %2, %4 : vector<8x128xf32>
    %c0_5 = arith.constant 0 : index
    %c0_6 = arith.constant 0 : index
    %6 = vector.load %arg4[%c0_5, %c0_6] : memref<8x128xf32, #tpu.memory_space<vmem>>, vector<8x128xf32>
    %7 = arith.addf %5, %6 : vector<8x128xf32>
    %cst_7 = arith.constant 0.000000e+00 : f32
    %8 = vector.broadcast %cst_7 : f32 to vector<8x128xf32>
    %9 = arith.maximumf %7, %8 : vector<8x128xf32>
    %c0_8 = arith.constant 0 : index
    %c0_9 = arith.constant 0 : index
    %10 = vector.load %arg5[%c0_8, %c0_9] : memref<8x128xf32, #tpu.memory_space<vmem>>, vector<8x128xf32>
    tpu.vector_store %arg5[%c0_8, %c0_9], %9 {strides = array<i32>} : memref<8x128xf32, #tpu.memory_space<vmem>>, vector<8x128xf32>,
    return
  }
  func.func @transform_0(%arg0: i32) -> (i32, i32) {
    %c0_i32 = arith.constant 0 : i32
    %c0_i32_0 = arith.constant 0 : i32
    return %arg0, %c0_i32 : i32, i32
  }
  func.func @transform_1(%arg0: i32) -> (i32, i32) {
    %c0_i32 = arith.constant 0 : i32
    %c0_i32_0 = arith.constant 0 : i32
    %c0_i32_1 = arith.constant 0 : i32
    return %c0_i32, %c0_i32_0 : i32, i32
  }
  func.func @transform_2(%arg0: i32) -> (i32, i32) {
    %c0_i32 = arith.constant 0 : i32
    %c0_i32_0 = arith.constant 0 : i32
    %c0_i32_1 = arith.constant 0 : i32
    return %c0_i32, %c0_i32_0 : i32, i32
  }
  func.func @transform_3(%arg0: i32) -> (i32, i32) {
    %c0_i32 = arith.constant 0 : i32
    %c0_i32_0 = arith.constant 0 : i32
    return %arg0, %c0_i32 : i32, i32
  }
  func.func @transform_4(%arg0: i32) -> (i32, i32) {
    %c0_i32 = arith.constant 0 : i32
    %c0_i32_0 = arith.constant 0 : i32
    return %arg0, %c0_i32 : i32, i32
  }
}

module attributes {stable_mosaic.version = 11 : i64} {
  func.func @_head_kernel(%arg0: memref<2x4x128xf32, #tpu.memory_space<vmem>>, %arg1: memref<128x42xf32, #tpu.memory_space<vmem>>, %arg2: memref<1x42xf32, #tpu.memory_space<vmem>>, %arg3: memref<42x1xf32, #tpu.memory_space<vmem>>, %arg4: memref<1x1xf32, #tpu.memory_space<vmem>>, %arg5: memref<2x10xf32, #tpu.memory_space<vmem>>, %arg6: memref<2x1xf32, #tpu.memory_space<vmem>>) attributes {dimension_semantics = [], scalar_prefetch = 0 : i64, scratch_operands = 0 : i64, tpu.core_type = #tpu.core_type<tc>} {
    %c0 = arith.constant 0 : index
    %c0_0 = arith.constant 0 : index
    %c0_1 = arith.constant 0 : index
    %0 = vector.load %arg0[%c0, %c0_0, %c0_1] : memref<2x4x128xf32, #tpu.memory_space<vmem>>, vector<2x4x128xf32>
    %cst = arith.constant dense<0.000000e+00> : vector<2x128xf32>
    %1 = vector.multi_reduction <add>, %0, %cst [1] : vector<2x4x128xf32> to vector<2x128xf32>
    %cst_2 = arith.constant 4.000000e+00 : f32
    %2 = vector.broadcast %cst_2 : f32 to vector<2x128xf32>
    %3 = arith.divf %1, %2 : vector<2x128xf32>
    %c0_3 = arith.constant 0 : index
    %c0_4 = arith.constant 0 : index
    %4 = vector.load %arg1[%c0_3, %c0_4] : memref<128x42xf32, #tpu.memory_space<vmem>>, vector<128x42xf32>
    %cst_5 = arith.constant dense<0.000000e+00> : vector<2x42xf32>
    %5 = tpu.matmul %3, %4, %cst_5 {dimension_numbers = #tpu.dot_dimension_numbers<[1], [0], [0], [1], [0, 0, 1, 1], [], []>} : vector<2x128xf32>, vector<128x42xf32>, vector<2x42xf32> -> vector<2x42xf32>
    %c0_6 = arith.constant 0 : index
    %c0_7 = arith.constant 0 : index
    %6 = vector.load %arg2[%c0_6, %c0_7] : memref<1x42xf32, #tpu.memory_space<vmem>>, vector<1x42xf32>
    %7 = vector.broadcast %6 : vector<1x42xf32> to vector<2x42xf32>
    %8 = arith.addf %5, %7 : vector<2x42xf32>
    %9 = vector.extract_strided_slice %8 {offsets = [0, 0], sizes = [2, 10], strides = [1, 1]} : vector<2x42xf32> to vector<2x10xf32>
    %c0_8 = arith.constant 0 : index
    %c0_9 = arith.constant 0 : index
    %10 = vector.load %arg5[%c0_8, %c0_9] : memref<2x10xf32, #tpu.memory_space<vmem>>, vector<2x10xf32>
    tpu.vector_store %arg5[%c0_8, %c0_9], %9 {strides = array<i32>} : memref<2x10xf32, #tpu.memory_space<vmem>>, vector<2x10xf32>,
    %cst_10 = arith.constant 0.000000e+00 : f32
    %11 = vector.broadcast %cst_10 : f32 to vector<2x42xf32>
    %12 = arith.maximumf %8, %11 : vector<2x42xf32>
    %c0_11 = arith.constant 0 : index
    %c0_12 = arith.constant 0 : index
    %13 = vector.load %arg3[%c0_11, %c0_12] : memref<42x1xf32, #tpu.memory_space<vmem>>, vector<42x1xf32>
    %cst_13 = arith.constant dense<0.000000e+00> : vector<2x1xf32>
    %14 = tpu.matmul %12, %13, %cst_13 {dimension_numbers = #tpu.dot_dimension_numbers<[1], [0], [0], [1], [0, 0, 1, 1], [], []>} : vector<2x42xf32>, vector<42x1xf32>, vector<2x1xf32> -> vector<2x1xf32>
    %c0_14 = arith.constant 0 : index
    %c0_15 = arith.constant 0 : index
    %15 = vector.load %arg4[%c0_14, %c0_15] : memref<1x1xf32, #tpu.memory_space<vmem>>, vector<1x1xf32>
    %16 = vector.broadcast %15 : vector<1x1xf32> to vector<2x1xf32>
    %17 = arith.addf %14, %16 : vector<2x1xf32>
    %c0_16 = arith.constant 0 : index
    %c0_17 = arith.constant 0 : index
    %18 = vector.load %arg6[%c0_16, %c0_17] : memref<2x1xf32, #tpu.memory_space<vmem>>, vector<2x1xf32>
    tpu.vector_store %arg6[%c0_16, %c0_17], %17 {strides = array<i32>} : memref<2x1xf32, #tpu.memory_space<vmem>>, vector<2x1xf32>,
    return
  }
}

</mosaic_0001>

<llo_original>
// kernel: confidence_network_forward.14
$region0: #{confidence_network_forward.14}
  #allocation0 [shape = 'u32[]', space=smem, size = 0x4, offset = 0x4, fixed_abs, tag = 'smem constant byte address 0x4 - core index']
  #allocation1 [shape = 'u32[72,128]{1,0:T(1,128)}', space=vmem, size = 0x9000, scoped, tag = 'internal scratch']
  %s0 = inlined_call_operand.vmem [shape: bf16[2048,152], index: 0, kind: input, shape index: {}]
  %s1 = inlined_call_operand.vmem [shape: bf16[152,16], index: 1, kind: input, shape index: {}]
  %s2 = inlined_call_operand.vmem [shape: f32[1,16], index: 2, kind: input, shape index: {}]
  %s3 = inlined_call_operand.vmem [shape: f32[2048,16], index: 3, kind: output, shape index: {}]
  %s4 = sld [smem:[#allocation0]]
  $region45: #{confidence_network_forward.14} parent=0
    _
  %s6 = ssub.s32 1, %s4
  %s7 = scalar_select 0, %s6, %s4
  loop: start=0, step=1, limit=6
  $region2: #{confidence_network_forward.14} parent=0 // loop_pre_header
    _
  $region3: #{confidence_network_forward.14} parent=0 // loop_header
    %s9 = sphi 0, %s13
    %p10 = scmp.ge.s32.totalorder %s9, 6
    %s19 = sphi 0, %s21
    %s22 = sphi 0, %s19
    %s23 = sphi 0, %s22
    %s39 = sphi 0, %s23
    %s43 = sphi 0, %s43
    %s45 = sphi 0, %s43
    %s46 = sphi 0, %s45
    %s60 = sphi 0, %s46
    %s64 = sphi 0, %s64
    %s66 = sphi 0, %s64
    %s67 = sphi 0, %s66
    %s81 = sphi 0, %s67
    %s87 = sphi 0, %s89
    %s90 = sphi 0, %s87
    %s91 = sphi 0, %s90
    %s107 = sphi 0, %s91
  $region4: #{confidence_network_forward.14} parent=0 // loop_header_branch
    %12 = sbr.rel (%p10) target = $region8
  $region5: #{confidence_network_forward.14} parent=0 // loop_body
    %s14 = ssub.s32 %s9, 1
    %s15 = ssub.s32 %s9, 2
    %s16 = sadd.s32 %s9, 1
    %s17 = ssub.s32 %s9, %s16
    %p18 = scmp.eq.s32.totalorder %s17, 0
    %s20 = sadd.s32 %s19, 1
    %s21 = scalar_select %p18, %s19, %s20
    %p24 = pneg %p18
    %p25 = scmp.eq.s32.totalorder %s9, 3
    %p26 = por %p24, %p25
    %p27 = scmp.ne.s32.totalorder %s19, %s22
    %p28 = scmp.eq.s32.totalorder %s9, 0
    %p29 = por %p27, %p28
    %p30 = scmp.ne.s32.totalorder %s19, %s22
    %p31 = scmp.eq.s32.totalorder %s14, 3
    %p32 = por %p30, %p31
    %p33 = scmp.ne.s32.totalorder %s22, %s23
    %p34 = scmp.eq.s32.totalorder %s14, 0
    %p35 = por %p33, %p34
    %p36 = scmp.ne.s32.totalorder %s22, %s23
    %p37 = scmp.eq.s32.totalorder %s15, 3
    %p38 = por %p36, %p37
    %p40 = scmp.ne.s32.totalorder %s23, %s39
    %p41 = scmp.eq.s32.totalorder %s15, 0
    %p42 = por %p40, %p41
    %s44 = sadd.s32 %s43, 1
    %p47 = scmp.eq.s32.totalorder %s9, 3
    %p48 = scmp.ne.s32.totalorder %s43, %s45
    %p49 = scmp.eq.s32.totalorder %s9, 0
    %p50 = por %p48, %p49
    %p51 = scmp.ne.s32.totalorder %s43, %s45
    %p52 = scmp.eq.s32.totalorder %s14, 3
    %p53 = por %p51, %p52
    %p54 = scmp.ne.s32.totalorder %s45, %s46
    %p55 = scmp.eq.s32.totalorder %s14, 0
    %p56 = por %p54, %p55
    %p57 = scmp.ne.s32.totalorder %s45, %s46
    %p58 = scmp.eq.s32.totalorder %s15, 3
    %p59 = por %p57, %p58
    %p61 = scmp.ne.s32.totalorder %s46, %s60
    %p62 = scmp.eq.s32.totalorder %s15, 0
    %p63 = por %p61, %p62
    %s65 = sadd.s32 %s64, 1
    %p68 = scmp.eq.s32.totalorder %s9, 3
    %p69 = scmp.ne.s32.totalorder %s64, %s66
    %p70 = scmp.eq.s32.totalorder %s9, 0
    %p71 = por %p69, %p70
    %p72 = scmp.ne.s32.totalorder %s64, %s66
    %p73 = scmp.eq.s32.totalorder %s14, 3
    %p74 = por %p72, %p73
    %p75 = scmp.ne.s32.totalorder %s66, %s67
    %p76 = scmp.eq.s32.totalorder %s14, 0
    %p77 = por %p75, %p76
    %p78 = scmp.ne.s32.totalorder %s66, %s67
    %p79 = scmp.eq.s32.totalorder %s15, 3
    %p80 = por %p78, %p79
    %p82 = scmp.ne.s32.totalorder %s67, %s81
    %p83 = scmp.eq.s32.totalorder %s15, 0
    %p84 = por %p82, %p83
    %s85 = ssub.s32 %s9, %s16
    %p86 = scmp.eq.s32.totalorder %s85, 0
    %s88 = sadd.s32 %s87, 1
    %s89 = scalar_select %p86, %s87, %s88
    %p92 = pneg %p86
    %p93 = scmp.eq.s32.totalorder %s9, 3
    %p94 = por %p92, %p93
    %p95 = scmp.ne.s32.totalorder %s87, %s90
    %p96 = scmp.eq.s32.totalorder %s9, 0
    %p97 = por %p95, %p96
    %p98 = scmp.ne.s32.totalorder %s87, %s90
    %p99 = scmp.eq.s32.totalorder %s14, 3
    %p100 = por %p98, %p99
    %p101 = scmp.ne.s32.totalorder %s90, %s91
    %p102 = scmp.eq.s32.totalorder %s14, 0
    %p103 = por %p101, %p102
    %p104 = scmp.ne.s32.totalorder %s90, %s91
    %p105 = scmp.eq.s32.totalorder %s15, 3
    %p106 = por %p104, %p105
    %p108 = scmp.ne.s32.totalorder %s91, %s107
    %p109 = scmp.eq.s32.totalorder %s15, 0
    %p110 = por %p108, %p109
    %p111 = scmp.le.s32.totalorder 1, %s9
    %p112 = scmp.lt.s32.totalorder %s9, 5
    %p113 = pnand %p111, %p112
    %p114 = pneg %p113
    // Predicated region
    $region9: #{confidence_network_forward.14} parent=5 // pred_check
      _
    $region10: #{confidence_network_forward.14} parent=5 // pred_check_branch
      %116 = sbr.rel (%p113) target = $region12
    $region11: #{confidence_network_forward.14} parent=5 // pred_region
      %s117 = ssub.s32 %s9, 1
      // Predicated region
      $region13: #{confidence_network_forward.14} parent=11 // pred_check
        %p118 = pneg %p56
      $region14: #{confidence_network_forward.14} parent=11 // pred_check_branch
        %120 = sbr.rel (%p118) target = $region16
      $region15: #{confidence_network_forward.14} parent=11 // pred_region
        _
      $region16: #{confidence_network_forward.14} parent=11 // pred_fallthru
        _
      // Predicated region
      $region17: #{confidence_network_forward.14} parent=11 // pred_check
        %p121 = pneg %p77
      $region18: #{confidence_network_forward.14} parent=11 // pred_check_branch
        %123 = sbr.rel (%p121) target = $region20
      $region19: #{confidence_network_forward.14} parent=11 // pred_region
        _
      $region20: #{confidence_network_forward.14} parent=11 // pred_fallthru
        _
    $region12: #{confidence_network_forward.14} parent=5 // pred_fallthru
      _
    %p124 = scmp.lt.s32.totalorder %s9, 4
    // Predicated region
    $region21: #{confidence_network_forward.14} parent=5 // pred_check
      %p125 = pneg %p124
    $region22: #{confidence_network_forward.14} parent=5 // pred_check_branch
      %127 = sbr.rel (%p125) target = $region24
    $region23: #{confidence_network_forward.14} parent=5 // pred_region
      // Predicated region
      $region25: #{confidence_network_forward.14} parent=23 // pred_check
        %p128 = pneg %p29
      $region26: #{confidence_network_forward.14} parent=23 // pred_check_branch
        %130 = sbr.rel (%p128) target = $region28
      $region27: #{confidence_network_forward.14} parent=23 // pred_region
        %s131 = smul.u32 64, %s9
        %p132 = scmp.lt.s32.totalorder %s131, 255
        %s133 = scalar_select %p132, %s131, 255
        %s134 = smul.addr %s133, 2
        %s135 = smul.addr %s134, 4
        %s136 = scalar_lea.vmem %s0, %s135
        %s137 = smul.u32 64, %s9
      $region28: #{confidence_network_forward.14} parent=23 // pred_fallthru
        _
    $region24: #{confidence_network_forward.14} parent=5 // pred_fallthru
      _
    %p138 = scmp.le.s32.totalorder 1, %s9
    %p139 = scmp.lt.s32.totalorder %s9, 5
    %p140 = pnand %p138, %p139
    %p141 = pneg %p140
    // Predicated region
    $region29: #{confidence_network_forward.14} parent=5 // pred_check
      _
    $region30: #{confidence_network_forward.14} parent=5 // pred_check_branch
      %143 = sbr.rel (%p140) target = $region32
    $region31: #{confidence_network_forward.14} parent=5 // pred_region
      %s144 = ssub.s32 %s9, 1
      %s145 = smul.u32 64, %s14
      %p146 = scmp.lt.s32.totalorder %s145, 255
      %s147 = scalar_select %p146, %s145, 255
      %s148 = smul.addr %s147, 2
      %s149 = smul.addr %s148, 4
      %s150 = scalar_lea.vmem %s0, %s149
      %p151 = pneg %p35
      %p152 = pneg %p32
      %p153 = pneg %p56
      %p154 = pneg %p53
      %p155 = pneg %p77
      %p156 = pneg %p74
      %p157 = pneg %p103
      %p158 = pneg %p100
      %s159 = smul.u32 64, %s14
      %p160 = scmp.lt.s32.totalorder %s159, 255
      %s161 = scalar_select %p160, %s159, 255
      %s162 = smul.addr %s161, 8
      %s163 = scalar_lea.vmem %s3, %s162
      %s164 = smul.u32 64, %s14
      %p165 = scmp.lt.s32.totalorder %s164, 255
      %s166 = scalar_select %p165, %s164, 255
      %s167 = smul.addr %s166, 2
      %s168 = smul.addr %s167, 4
      %s169 = scalar_lea.vmem %s0, %s168
      %s170 = smul.u32 64, %s14
      %s171 = smul.u32 64, %s14
      %p172 = scmp.lt.s32.totalorder %s171, 255
      %s173 = scalar_select %p172, %s171, 255
      %s174 = smul.addr %s173, 8
      %s175 = scalar_lea.vmem %s3, %s174
      %s176 = smul.u32 64, %s14
      %v178 = vld [vmem:[%s169] sm:$0xff]
      %v179 = vld [vmem:[%s169 + $0x8] sm:$0xff]
      %v180 = vld [vmem:[%s169 + $0x10] sm:$0xff]
      %v181 = vld [vmem:[%s169 + $0x18] sm:$0xff]
      %v182 = vld [vmem:[%s169 + $0x20] sm:$0xff]
      %v183 = vld [vmem:[%s169 + $0x28] sm:$0xff]
      %v184 = vld [vmem:[%s169 + $0x30] sm:$0xff]
      %v185 = vld [vmem:[%s169 + $0x38] sm:$0xff]
      %v186 = vld [vmem:[%s169 + $0x40] sm:$0xff]
      %v187 = vld [vmem:[%s169 + $0x48] sm:$0xff]
      %v188 = vld [vmem:[%s169 + $0x50] sm:$0xff]
      %v189 = vld [vmem:[%s169 + $0x58] sm:$0xff]
      %v190 = vld [vmem:[%s169 + $0x60] sm:$0xff]
      %v191 = vld [vmem:[%s169 + $0x68] sm:$0xff]
      %v192 = vld [vmem:[%s169 + $0x70] sm:$0xff]
      %v193 = vld [vmem:[%s169 + $0x78] sm:$0xff]
      %v194 = vld [vmem:[%s169 + $0x80] sm:$0xff]
      %v195 = vld [vmem:[%s169 + $0x88] sm:$0xff]
      %v196 = vld [vmem:[%s169 + $0x90] sm:$0xff]
      %v197 = vld [vmem:[%s169 + $0x98] sm:$0xff]
      %v198 = vld [vmem:[%s169 + $0xa0] sm:$0xff]
      %v199 = vld [vmem:[%s169 + $0xa8] sm:$0xff]
      %v200 = vld [vmem:[%s169 + $0xb0] sm:$0xff]
      %v201 = vld [vmem:[%s169 + $0xb8] sm:$0xff]
      %v202 = vld [vmem:[%s169 + $0xc0] sm:$0xff]
      %v203 = vld [vmem:[%s169 + $0xc8] sm:$0xff]
      %v204 = vld [vmem:[%s169 + $0xd0] sm:$0xff]
      %v205 = vld [vmem:[%s169 + $0xd8] sm:$0xff]
      %v206 = vld [vmem:[%s169 + $0xe0] sm:$0xff]
      %v207 = vld [vmem:[%s169 + $0xe8] sm:$0xff]
      %v208 = vld [vmem:[%s169 + $0xf0] sm:$0xff]
      %v209 = vld [vmem:[%s169 + $0xf8] sm:$0xff]
      %v210 = vld [vmem:[%s169 + $0x100] sm:$0xff]
      %v211 = vld [vmem:[%s169 + $0x108] sm:$0xff]
      %v212 = vld [vmem:[%s169 + $0x110] sm:$0xff]
      %v213 = vld [vmem:[%s169 + $0x118] sm:$0xff]
      %v214 = vld [vmem:[%s169 + $0x120] sm:$0xff]
      %v215 = vld [vmem:[%s169 + $0x128] sm:$0xff]
      %v216 = vld [vmem:[%s169 + $0x130] sm:$0xff]
      %v217 = vld [vmem:[%s169 + $0x138] sm:$0xff]
      %v218 = vld [vmem:[%s169 + $0x140] sm:$0xff]
      %v219 = vld [vmem:[%s169 + $0x148] sm:$0xff]
      %v220 = vld [vmem:[%s169 + $0x150] sm:$0xff]
      %v221 = vld [vmem:[%s169 + $0x158] sm:$0xff]
      %v222 = vld [vmem:[%s169 + $0x160] sm:$0xff]
      %v223 = vld [vmem:[%s169 + $0x168] sm:$0xff]
      %v224 = vld [vmem:[%s169 + $0x170] sm:$0xff]
      %v225 = vld [vmem:[%s169 + $0x178] sm:$0xff]
      %v226 = vld [vmem:[%s169 + $0x180] sm:$0xff]
      %v227 = vld [vmem:[%s169 + $0x188] sm:$0xff]
      %v228 = vld [vmem:[%s169 + $0x190] sm:$0xff]
      %v229 = vld [vmem:[%s169 + $0x198] sm:$0xff]
      %v230 = vld [vmem:[%s169 + $0x1a0] sm:$0xff]
      %v231 = vld [vmem:[%s169 + $0x1a8] sm:$0xff]
      %v232 = vld [vmem:[%s169 + $0x1b0] sm:$0xff]
      %v233 = vld [vmem:[%s169 + $0x1b8] sm:$0xff]
      %v234 = vld [vmem:[%s169 + $0x1c0] sm:$0xff]
      %v235 = vld [vmem:[%s169 + $0x1c8] sm:$0xff]
      %v236 = vld [vmem:[%s169 + $0x1d0] sm:$0xff]
      %v237 = vld [vmem:[%s169 + $0x1d8] sm:$0xff]
      %v238 = vld [vmem:[%s169 + $0x1e0] sm:$0xff]
      %v239 = vld [vmem:[%s169 + $0x1e8] sm:$0xff]
      %v240 = vld [vmem:[%s169 + $0x1f0] sm:$0xff]
      %v241 = vld [vmem:[%s169 + $0x1f8] sm:$0xff]
      %v242 = vld [vmem:[%s1] sm:$0xf]
      %v243 = vld [vmem:[%s1 + $0x4] sm:$0xf]
      %v244 = vld [vmem:[%s1 + $0x8] sm:$0xf]
      %v245 = vld [vmem:[%s1 + $0xc] sm:$0xf]
      %v246 = vld [vmem:[%s1 + $0x10] sm:$0xf]
      %v247 = vld [vmem:[%s1 + $0x14] sm:$0xf]
      %v248 = vld [vmem:[%s1 + $0x18] sm:$0xf]
      %v249 = vld [vmem:[%s1 + $0x1c] sm:$0xf]
      %v250 = vld [vmem:[%s1 + $0x20] sm:$0xf]
      %v251 = vld [vmem:[%s1 + $0x24] sm:$0xf]
      %v252 = vld [vmem:[%s1 + $0x28] sm:$0xf]
      %v253 = vld [vmem:[%s1 + $0x2c] sm:$0xf]
      %v254 = vld [vmem:[%s1 + $0x30] sm:$0xf]
      %v255 = vld [vmem:[%s1 + $0x34] sm:$0xf]
      %v256 = vld [vmem:[%s1 + $0x38] sm:$0xf]
      %v257 = vld [vmem:[%s1 + $0x3c] sm:$0xf]
      %v258 = vld [vmem:[%s1 + $0x40] sm:$0xf]
      %v259 = vld [vmem:[%s1 + $0x44] sm:$0xf]
      %v260 = vld [vmem:[%s1 + $0x48] sm:$0xf]
      %v261 = vld [vmem:[%s2] sm:$0x1]
      %v263 = vperm.slane %v261, 0
      %v329 = vunpack.c.l.b16 %v178
      %v330 = vunpack.c.h.b16 %v178
      %v331 = vunpack.c.l.b16 %v179
      %v332 = vunpack.c.h.b16 %v179
      %v333 = vunpack.c.l.b16 %v180
      %v334 = vunpack.c.h.b16 %v180
      %v335 = vunpack.c.l.b16 %v181
      %v336 = vunpack.c.h.b16 %v181
      %v337 = vunpack.c.l.b16 %v182
      %v338 = vunpack.c.h.b16 %v182
      %v339 = vunpack.c.l.b16 %v183
      %v340 = vunpack.c.h.b16 %v183
      %v341 = vunpack.c.l.b16 %v184
      %v342 = vunpack.c.h.b16 %v184
      %v343 = vunpack.c.l.b16 %v185
      %v344 = vunpack.c.h.b16 %v185
      %v345 = vunpack.c.l.b16 %v186
      %v346 = vunpack.c.h.b16 %v186
      %v347 = vunpack.c.l.b16 %v187
      %v348 = vunpack.c.h.b16 %v187
      %v349 = vunpack.c.l.b16 %v188
      %v350 = vunpack.c.h.b16 %v188
      %v351 = vunpack.c.l.b16 %v189
      %v352 = vunpack.c.h.b16 %v189
      %v353 = vunpack.c.l.b16 %v190
      %v354 = vunpack.c.h.b16 %v190
      %v355 = vunpack.c.l.b16 %v191
      %v356 = vunpack.c.h.b16 %v191
      %v357 = vunpack.c.l.b16 %v192
      %v358 = vunpack.c.h.b16 %v192
      %v359 = vunpack.c.l.b16 %v193
      %v360 = vunpack.c.h.b16 %v193
      %v361 = vunpack.c.l.b16 %v194
      %v362 = vunpack.c.h.b16 %v194
      %v363 = vunpack.c.l.b16 %v195
      %v364 = vunpack.c.h.b16 %v195
      %v365 = vunpack.c.l.b16 %v196
      %v366 = vunpack.c.h.b16 %v196
      %v367 = vunpack.c.l.b16 %v197
      %v368 = vunpack.c.h.b16 %v197
      %v369 = vunpack.c.l.b16 %v198
      %v370 = vunpack.c.h.b16 %v198
      %v371 = vunpack.c.l.b16 %v199
      %v372 = vunpack.c.h.b16 %v199
      %v373 = vunpack.c.l.b16 %v200
      %v374 = vunpack.c.h.b16 %v200
      %v375 = vunpack.c.l.b16 %v201
      %v376 = vunpack.c.h.b16 %v201
      %v377 = vunpack.c.l.b16 %v202
      %v378 = vunpack.c.h.b16 %v202
      %v379 = vunpack.c.l.b16 %v203
      %v380 = vunpack.c.h.b16 %v203
      %v381 = vunpack.c.l.b16 %v204
      %v382 = vunpack.c.h.b16 %v204
      %v383 = vunpack.c.l.b16 %v205
      %v384 = vunpack.c.h.b16 %v205
      %v385 = vunpack.c.l.b16 %v206
      %v386 = vunpack.c.h.b16 %v206
      %v387 = vunpack.c.l.b16 %v207
      %v388 = vunpack.c.h.b16 %v207
      %v389 = vunpack.c.l.b16 %v208
      %v390 = vunpack.c.h.b16 %v208
      %v391 = vunpack.c.l.b16 %v209
      %v392 = vunpack.c.h.b16 %v209
      %v393 = vunpack.c.l.b16 %v210
      %v394 = vunpack.c.h.b16 %v210
      %v395 = vunpack.c.l.b16 %v211
      %v396 = vunpack.c.h.b16 %v211
      %v397 = vunpack.c.l.b16 %v212
      %v398 = vunpack.c.h.b16 %v212
      %v399 = vunpack.c.l.b16 %v213
      %v400 = vunpack.c.h.b16 %v213
      %v401 = vunpack.c.l.b16 %v214
      %v402 = vunpack.c.h.b16 %v214
      %v403 = vunpack.c.l.b16 %v215
      %v404 = vunpack.c.h.b16 %v215
      %v405 = vunpack.c.l.b16 %v216
      %v406 = vunpack.c.h.b16 %v216
      %v407 = vunpack.c.l.b16 %v217
      %v408 = vunpack.c.h.b16 %v217
      %v409 = vunpack.c.l.b16 %v218
      %v410 = vunpack.c.h.b16 %v218
      %v411 = vunpack.c.l.b16 %v219
      %v412 = vunpack.c.h.b16 %v219
      %v413 = vunpack.c.l.b16 %v220
      %v414 = vunpack.c.h.b16 %v220
      %v415 = vunpack.c.l.b16 %v221
      %v416 = vunpack.c.h.b16 %v221
      %v417 = vunpack.c.l.b16 %v222
      %v418 = vunpack.c.h.b16 %v222
      %v419 = vunpack.c.l.b16 %v223
      %v420 = vunpack.c.h.b16 %v223
      %v421 = vunpack.c.l.b16 %v224
      %v422 = vunpack.c.h.b16 %v224
      %v423 = vunpack.c.l.b16 %v225
      %v424 = vunpack.c.h.b16 %v225
      %v425 = vunpack.c.l.b16 %v226
      %v426 = vunpack.c.h.b16 %v226
      %v427 = vunpack.c.l.b16 %v227
      %v428 = vunpack.c.h.b16 %v227
      %v429 = vunpack.c.l.b16 %v228
      %v430 = vunpack.c.h.b16 %v228
      %v431 = vunpack.c.l.b16 %v229
      %v432 = vunpack.c.h.b16 %v229
      %v433 = vunpack.c.l.b16 %v230
      %v434 = vunpack.c.h.b16 %v230
      %v435 = vunpack.c.l.b16 %v231
      %v436 = vunpack.c.h.b16 %v231
      %v437 = vunpack.c.l.b16 %v232
      %v438 = vunpack.c.h.b16 %v232
      %v439 = vunpack.c.l.b16 %v233
      %v440 = vunpack.c.h.b16 %v233
      %v441 = vunpack.c.l.b16 %v234
      %v442 = vunpack.c.h.b16 %v234
      %v443 = vunpack.c.l.b16 %v235
      %v444 = vunpack.c.h.b16 %v235
      %v445 = vunpack.c.l.b16 %v236
      %v446 = vunpack.c.h.b16 %v236
      %v447 = vunpack.c.l.b16 %v237
      %v448 = vunpack.c.h.b16 %v237
      %v449 = vunpack.c.l.b16 %v238
      %v450 = vunpack.c.h.b16 %v238
      %v451 = vunpack.c.l.b16 %v239
      %v452 = vunpack.c.h.b16 %v239
      %v453 = vunpack.c.l.b16 %v240
      %v454 = vunpack.c.h.b16 %v240
      %v455 = vunpack.c.l.b16 %v241
      %v456 = vunpack.c.h.b16 %v241
      %v457 = vpack.c.b16 %v331, %v329
      %v458 = vpack.c.b16 %v332, %v330
      %v459 = vpack.c.b16 %v335, %v333
      %v460 = vpack.c.b16 %v336, %v334
      %v461 = vpack.c.b16 %v339, %v337
      %v462 = vpack.c.b16 %v340, %v338
      %v463 = vpack.c.b16 %v343, %v341
      %v464 = vpack.c.b16 %v344, %v342
      %v465 = vpack.c.b16 %v347, %v345
      %v466 = vpack.c.b16 %v348, %v346
      %v467 = vpack.c.b16 %v351, %v349
      %v468 = vpack.c.b16 %v352, %v350
      %v469 = vpack.c.b16 %v355, %v353
      %v470 = vpack.c.b16 %v356, %v354
      %v471 = vpack.c.b16 %v359, %v357
      %v472 = vpack.c.b16 %v360, %v358
      %v473 = vpack.c.b16 %v363, %v361
      %v474 = vpack.c.b16 %v364, %v362
      %v475 = vpack.c.b16 %v367, %v365
      %v476 = vpack.c.b16 %v368, %v366
      %v477 = vpack.c.b16 %v371, %v369
      %v478 = vpack.c.b16 %v372, %v370
      %v479 = vpack.c.b16 %v375, %v373
      %v480 = vpack.c.b16 %v376, %v374
      %v481 = vpack.c.b16 %v379, %v377
      %v482 = vpack.c.b16 %v380, %v378
      %v483 = vpack.c.b16 %v383, %v381
      %v484 = vpack.c.b16 %v384, %v382
      %v485 = vpack.c.b16 %v387, %v385
      %v486 = vpack.c.b16 %v388, %v386
      %v487 = vpack.c.b16 %v391, %v389
      %v488 = vpack.c.b16 %v392, %v390
      %v489 = vpack.c.b16 %v395, %v393
      %v490 = vpack.c.b16 %v396, %v394
      %v491 = vpack.c.b16 %v399, %v397
      %v492 = vpack.c.b16 %v400, %v398
      %v493 = vpack.c.b16 %v403, %v401
      %v494 = vpack.c.b16 %v404, %v402
      %v495 = vpack.c.b16 %v407, %v405
      %v496 = vpack.c.b16 %v408, %v406
      %v497 = vpack.c.b16 %v411, %v409
      %v498 = vpack.c.b16 %v412, %v410
      %v499 = vpack.c.b16 %v415, %v413
      %v500 = vpack.c.b16 %v416, %v414
      %v501 = vpack.c.b16 %v419, %v417
      %v502 = vpack.c.b16 %v420, %v418
      %v503 = vpack.c.b16 %v423, %v421
      %v504 = vpack.c.b16 %v424, %v422
      %v505 = vpack.c.b16 %v427, %v425
      %v506 = vpack.c.b16 %v428, %v426
      %v507 = vpack.c.b16 %v431, %v429
      %v508 = vpack.c.b16 %v432, %v430
      %v509 = vpack.c.b16 %v435, %v433
      %v510 = vpack.c.b16 %v436, %v434
      %v511 = vpack.c.b16 %v439, %v437
      %v512 = vpack.c.b16 %v440, %v438
      %v513 = vpack.c.b16 %v443, %v441
      %v514 = vpack.c.b16 %v444, %v442
      %v515 = vpack.c.b16 %v447, %v445
      %v516 = vpack.c.b16 %v448, %v446
      %v517 = vpack.c.b16 %v451, %v449
      %v518 = vpack.c.b16 %v452, %v450
      %v519 = vpack.c.b16 %v455, %v453
      %v520 = vpack.c.b16 %v456, %v454
      %v572 = vunpack.c.l.b16 %v242
      %v573 = vunpack.c.l.b16 %v243
      %v574 = vunpack.c.l.b16 %v244
      %v575 = vunpack.c.l.b16 %v245
      %v576 = vunpack.c.l.b16 %v246
      %v577 = vunpack.c.l.b16 %v247
      %v578 = vunpack.c.l.b16 %v248
      %v579 = vunpack.c.l.b16 %v249
      %v580 = vunpack.c.l.b16 %v250
      %v581 = vunpack.c.l.b16 %v251
      %v582 = vunpack.c.l.b16 %v252
      %v583 = vunpack.c.l.b16 %v253
      %v584 = vunpack.c.l.b16 %v254
      %v585 = vunpack.c.l.b16 %v255
      %v586 = vunpack.c.l.b16 %v256
      %v587 = vunpack.c.l.b16 %v257
      %v588 = vunpack.c.l.b16 %v258
      %v589 = vunpack.c.l.b16 %v259
      %v590 = vunpack.c.l.b16 %v260
      %v591 = vpack.c.b16 %v573, %v572
      %v592 = vpack.c.b16 %v575, %v574
      %v593 = vpack.c.b16 %v577, %v576
      %v594 = vpack.c.b16 %v579, %v578
      %v595 = vpack.c.b16 %v581, %v580
      %v596 = vpack.c.b16 %v583, %v582
      %v597 = vpack.c.b16 %v585, %v584
      %v598 = vpack.c.b16 %v587, %v586
      %v599 = vpack.c.b16 %v589, %v588
      %v600 = vpack.c.b16 %v590, %v590
      %vm610 = vcmask 195584
      %v612 = vsel %vm610, %v458, 0
      %v615 = vsel %vm610, %v460, 0
      %v618 = vsel %vm610, %v462, 0
      %v621 = vsel %vm610, %v464, 0
      %v624 = vsel %vm610, %v466, 0
      %v627 = vsel %vm610, %v468, 0
      %v630 = vsel %vm610, %v470, 0
      %v633 = vsel %vm610, %v472, 0
      %v636 = vsel %vm610, %v474, 0
      %v639 = vsel %vm610, %v476, 0
      %v642 = vsel %vm610, %v478, 0
      %v645 = vsel %vm610, %v480, 0
      %v648 = vsel %vm610, %v482, 0
      %v651 = vsel %vm610, %v484, 0
      %v654 = vsel %vm610, %v486, 0
      %v657 = vsel %vm610, %v488, 0
      %v660 = vsel %vm610, %v490, 0
      %v663 = vsel %vm610, %v492, 0
      %v666 = vsel %vm610, %v494, 0
      %v669 = vsel %vm610, %v496, 0
      %v672 = vsel %vm610, %v498, 0
      %v675 = vsel %vm610, %v500, 0
      %v678 = vsel %vm610, %v502, 0
      %v681 = vsel %vm610, %v504, 0
      %v684 = vsel %vm610, %v506, 0
      %v687 = vsel %vm610, %v508, 0
      %v690 = vsel %vm610, %v510, 0
      %v693 = vsel %vm610, %v512, 0
      %v696 = vsel %vm610, %v514, 0
      %v699 = vsel %vm610, %v516, 0
      %v702 = vsel %vm610, %v518, 0
      %v705 = vsel %vm610, %v520, 0
      %vm707 = vcmask 1043456
      %v709 = vsel %vm707, %v600, 0
      %711 = vmatpush.bf16.msra.mxu0 %v598
      %712 = vmatpush.bf16.msra.mxu0 %v597
      %713 = vmatpush.bf16.msra.mxu0 %v596
      %714 = vmatpush.bf16.msra.mxu0 %v595
      %715 = vmatpush.bf16.msra.mxu0 %v594
      %716 = vmatpush.bf16.msra.mxu0 %v593
      %717 = vmatpush.bf16.msra.mxu0 %v592
      %718 = vmatpush.bf16.msra.mxu0 %v591
      %719 = vmatmul.bf16.gmra.mxu0 %v457
      %v720 = vpop.f32.mrf.mxu0
      %v721 = vadd.f32 %v263, %v720
      %v722 = vpop.f32.mrf.mxu0
      %v723 = vadd.f32 %v263, %v722
      %724 = vmatmul.bf16.gmra.mxu0 %v459
      %v725 = vpop.f32.mrf.mxu0
      %v726 = vadd.f32 %v263, %v725
      %v727 = vpop.f32.mrf.mxu0
      %v728 = vadd.f32 %v263, %v727
      %729 = vmatmul.bf16.gmra.mxu0 %v461
      %v730 = vpop.f32.mrf.mxu0
      %v731 = vadd.f32 %v263, %v730
      %v732 = vpop.f32.mrf.mxu0
      %v733 = vadd.f32 %v263, %v732
      %734 = vmatmul.bf16.gmra.mxu0 %v463
      %v735 = vpop.f32.mrf.mxu0
      %v736 = vadd.f32 %v263, %v735
      %v737 = vpop.f32.mrf.mxu0
      %v738 = vadd.f32 %v263, %v737
      %739 = vmatmul.bf16.gmra.mxu0 %v465
      %v740 = vpop.f32.mrf.mxu0
      %v741 = vadd.f32 %v263, %v740
      %v742 = vpop.f32.mrf.mxu0
      %v743 = vadd.f32 %v263, %v742
      %744 = vmatmul.bf16.gmra.mxu0 %v467
      %v745 = vpop.f32.mrf.mxu0
      %v746 = vadd.f32 %v263, %v745
      %v747 = vpop.f32.mrf.mxu0
      %v748 = vadd.f32 %v263, %v747
      %749 = vmatmul.bf16.gmra.mxu0 %v469
      %v750 = vpop.f32.mrf.mxu0
      %v751 = vadd.f32 %v263, %v750
      %v752 = vpop.f32.mrf.mxu0
      %v753 = vadd.f32 %v263, %v752
      %754 = vmatmul.bf16.gmra.mxu0 %v471
      %v755 = vpop.f32.mrf.mxu0
      %v756 = vadd.f32 %v263, %v755
      %v757 = vpop.f32.mrf.mxu0
      %v758 = vadd.f32 %v263, %v757
      %759 = vmatmul.bf16.gmra.mxu0 %v473
      %v760 = vpop.f32.mrf.mxu0
      %v761 = vadd.f32 %v263, %v760
      %v762 = vpop.f32.mrf.mxu0
      %v763 = vadd.f32 %v263, %v762
      %764 = vmatmul.bf16.gmra.mxu0 %v475
      %v765 = vpop.f32.mrf.mxu0
      %v766 = vadd.f32 %v263, %v765
      %v767 = vpop.f32.mrf.mxu0
      %v768 = vadd.f32 %v263, %v767
      %769 = vmatmul.bf16.gmra.mxu0 %v477
      %v770 = vpop.f32.mrf.mxu0
      %v771 = vadd.f32 %v263, %v770
      %v772 = vpop.f32.mrf.mxu0
      %v773 = vadd.f32 %v263, %v772
      %774 = vmatmul.bf16.gmra.mxu0 %v479
      %v775 = vpop.f32.mrf.mxu0
      %v776 = vadd.f32 %v263, %v775
      %v777 = vpop.f32.mrf.mxu0
      %v778 = vadd.f32 %v263, %v777
      %779 = vmatmul.bf16.gmra.mxu0 %v481
      %v780 = vpop.f32.mrf.mxu0
      %v781 = vadd.f32 %v263, %v780
      %v782 = vpop.f32.mrf.mxu0
      %v783 = vadd.f32 %v263, %v782
      %784 = vmatmul.bf16.gmra.mxu0 %v483
      %v785 = vpop.f32.mrf.mxu0
      %v786 = vadd.f32 %v263, %v785
      %v787 = vpop.f32.mrf.mxu0
      %v788 = vadd.f32 %v263, %v787
      %789 = vmatmul.bf16.gmra.mxu0 %v485
      %v790 = vpop.f32.mrf.mxu0
      %v791 = vadd.f32 %v263, %v790
      %v792 = vpop.f32.mrf.mxu0
      %v793 = vadd.f32 %v263, %v792
      %794 = vmatmul.bf16.gmra.mxu0 %v487
      %v795 = vpop.f32.mrf.mxu0
      %v796 = vadd.f32 %v263, %v795
      %v797 = vpop.f32.mrf.mxu0
      %v798 = vadd.f32 %v263, %v797
      %799 = vmatmul.bf16.gmra.mxu0 %v489
      %v800 = vpop.f32.mrf.mxu0
      %v801 = vadd.f32 %v263, %v800
      %v802 = vpop.f32.mrf.mxu0
      %v803 = vadd.f32 %v263, %v802
      %804 = vmatmul.bf16.gmra.mxu0 %v491
      %v805 = vpop.f32.mrf.mxu0
      %v806 = vadd.f32 %v263, %v805
      %v807 = vpop.f32.mrf.mxu0
      %v808 = vadd.f32 %v263, %v807
      %809 = vmatmul.bf16.gmra.mxu0 %v493
      %v810 = vpop.f32.mrf.mxu0
      %v811 = vadd.f32 %v263, %v810
      %v812 = vpop.f32.mrf.mxu0
      %v813 = vadd.f32 %v263, %v812
      %814 = vmatmul.bf16.gmra.mxu0 %v495
      %v815 = vpop.f32.mrf.mxu0
      %v816 = vadd.f32 %v263, %v815
      %v817 = vpop.f32.mrf.mxu0
      %v818 = vadd.f32 %v263, %v817
      %819 = vmatmul.bf16.gmra.mxu0 %v497
      %v820 = vpop.f32.mrf.mxu0
      %v821 = vadd.f32 %v263, %v820
      %v822 = vpop.f32.mrf.mxu0
      %v823 = vadd.f32 %v263, %v822
      %824 = vmatmul.bf16.gmra.mxu0 %v499
      %v825 = vpop.f32.mrf.mxu0
      %v826 = vadd.f32 %v263, %v825
      %v827 = vpop.f32.mrf.mxu0
      %v828 = vadd.f32 %v263, %v827
      %829 = vmatmul.bf16.gmra.mxu0 %v501
      %v830 = vpop.f32.mrf.mxu0
      %v831 = vadd.f32 %v263, %v830
      %v832 = vpop.f32.mrf.mxu0
      %v833 = vadd.f32 %v263, %v832
      %834 = vmatmul.bf16.gmra.mxu0 %v503
      %v835 = vpop.f32.mrf.mxu0
      %v836 = vadd.f32 %v263, %v835
      %v837 = vpop.f32.mrf.mxu0
      %v838 = vadd.f32 %v263, %v837
      %839 = vmatmul.bf16.gmra.mxu0 %v505
      %v840 = vpop.f32.mrf.mxu0
      %v841 = vadd.f32 %v263, %v840
      %v842 = vpop.f32.mrf.mxu0
      %v843 = vadd.f32 %v263, %v842
      %844 = vmatmul.bf16.gmra.mxu0 %v507
      %v845 = vpop.f32.mrf.mxu0
      %v846 = vadd.f32 %v263, %v845
      %v847 = vpop.f32.mrf.mxu0
      %v848 = vadd.f32 %v263, %v847
      %849 = vmatmul.bf16.gmra.mxu0 %v509
      %v850 = vpop.f32.mrf.mxu0
      %v851 = vadd.f32 %v263, %v850
      %v852 = vpop.f32.mrf.mxu0
      %v853 = vadd.f32 %v263, %v852
      %854 = vmatmul.bf16.gmra.mxu0 %v511
      %v855 = vpop.f32.mrf.mxu0
      %v856 = vadd.f32 %v263, %v855
      %v857 = vpop.f32.mrf.mxu0
      %v858 = vadd.f32 %v263, %v857
      %859 = vmatmul.bf16.gmra.mxu0 %v513
      %v860 = vpop.f32.mrf.mxu0
      %v861 = vadd.f32 %v263, %v860
      %v862 = vpop.f32.mrf.mxu0
      %v863 = vadd.f32 %v263, %v862
      %864 = vmatmul.bf16.gmra.mxu0 %v515
      %v865 = vpop.f32.mrf.mxu0
      %v866 = vadd.f32 %v263, %v865
      %v867 = vpop.f32.mrf.mxu0
      %v868 = vadd.f32 %v263, %v867
      %869 = vmatmul.bf16.gmra.mxu0 %v517
      %v870 = vpop.f32.mrf.mxu0
      %v871 = vadd.f32 %v263, %v870
      %v872 = vpop.f32.mrf.mxu0
      %v873 = vadd.f32 %v263, %v872
      %874 = vmatmul.bf16.gmra.mxu0 %v519
      %v875 = vpop.f32.mrf.mxu0
      %v876 = vadd.f32 %v263, %v875
      %v877 = vpop.f32.mrf.mxu0
      %v878 = vadd.f32 %v263, %v877
      %879 = vdwg.mxu0
      %880 = vmatpush.bf16.msra.mxu0 0
      %881 = vmatpush.bf16.msra.mxu0 0
      %882 = vmatpush.bf16.msra.mxu0 0
      %883 = vmatpush.bf16.msra.mxu0 0
      %884 = vmatpush.bf16.msra.mxu0 0
      %885 = vmatpush.bf16.msra.mxu0 0
      %886 = vmatpush.bf16.msra.mxu0 %v709
      %887 = vmatpush.bf16.msra.mxu0 %v599
      %888 = vmatmul.bf16.gmra.mxu0 %v612
      %v889 = vpop.f32.mrf.mxu0
      %v890 = vadd.f32 %v721, %v889
      %v891 = vpop.f32.mrf.mxu0
      %v892 = vadd.f32 %v723, %v891
      %893 = vmatmul.bf16.gmra.mxu0 %v615
      %v894 = vpop.f32.mrf.mxu0
      %v895 = vadd.f32 %v726, %v894
      %v896 = vpop.f32.mrf.mxu0
      %v897 = vadd.f32 %v728, %v896
      %898 = vmatmul.bf16.gmra.mxu0 %v618
      %v899 = vpop.f32.mrf.mxu0
      %v900 = vadd.f32 %v731, %v899
      %v901 = vpop.f32.mrf.mxu0
      %v902 = vadd.f32 %v733, %v901
      %903 = vmatmul.bf16.gmra.mxu0 %v621
      %v904 = vpop.f32.mrf.mxu0
      %v905 = vadd.f32 %v736, %v904
      %v906 = vpop.f32.mrf.mxu0
      %v907 = vadd.f32 %v738, %v906
      %908 = vmatmul.bf16.gmra.mxu0 %v624
      %v909 = vpop.f32.mrf.mxu0
      %v910 = vadd.f32 %v741, %v909
      %v911 = vpop.f32.mrf.mxu0
      %v912 = vadd.f32 %v743, %v911
      %913 = vmatmul.bf16.gmra.mxu0 %v627
      %v914 = vpop.f32.mrf.mxu0
      %v915 = vadd.f32 %v746, %v914
      %v916 = vpop.f32.mrf.mxu0
      %v917 = vadd.f32 %v748, %v916
      %918 = vmatmul.bf16.gmra.mxu0 %v630
      %v919 = vpop.f32.mrf.mxu0
      %v920 = vadd.f32 %v751, %v919
      %v921 = vpop.f32.mrf.mxu0
      %v922 = vadd.f32 %v753, %v921
      %923 = vmatmul.bf16.gmra.mxu0 %v633
      %v924 = vpop.f32.mrf.mxu0
      %v925 = vadd.f32 %v756, %v924
      %v926 = vpop.f32.mrf.mxu0
      %v927 = vadd.f32 %v758, %v926
      %928 = vmatmul.bf16.gmra.mxu0 %v636
      %v929 = vpop.f32.mrf.mxu0
      %v930 = vadd.f32 %v761, %v929
      %v931 = vpop.f32.mrf.mxu0
      %v932 = vadd.f32 %v763, %v931
      %933 = vmatmul.bf16.gmra.mxu0 %v639
      %v934 = vpop.f32.mrf.mxu0
      %v935 = vadd.f32 %v766, %v934
      %v936 = vpop.f32.mrf.mxu0
      %v937 = vadd.f32 %v768, %v936
      %938 = vmatmul.bf16.gmra.mxu0 %v642
      %v939 = vpop.f32.mrf.mxu0
      %v940 = vadd.f32 %v771, %v939
      %v941 = vpop.f32.mrf.mxu0
      %v942 = vadd.f32 %v773, %v941
      %943 = vmatmul.bf16.gmra.mxu0 %v645
      %v944 = vpop.f32.mrf.mxu0
      %v945 = vadd.f32 %v776, %v944
      %v946 = vpop.f32.mrf.mxu0
      %v947 = vadd.f32 %v778, %v946
      %948 = vmatmul.bf16.gmra.mxu0 %v648
      %v949 = vpop.f32.mrf.mxu0
      %v950 = vadd.f32 %v781, %v949
      %v951 = vpop.f32.mrf.mxu0
      %v952 = vadd.f32 %v783, %v951
      %953 = vmatmul.bf16.gmra.mxu0 %v651
      %v954 = vpop.f32.mrf.mxu0
      %v955 = vadd.f32 %v786, %v954
      %v956 = vpop.f32.mrf.mxu0
      %v957 = vadd.f32 %v788, %v956
      %958 = vmatmul.bf16.gmra.mxu0 %v654
      %v959 = vpop.f32.mrf.mxu0
      %v960 = vadd.f32 %v791, %v959
      %v961 = vpop.f32.mrf.mxu0
      %v962 = vadd.f32 %v793, %v961
      %963 = vmatmul.bf16.gmra.mxu0 %v657
      %v964 = vpop.f32.mrf.mxu0
      %v965 = vadd.f32 %v796, %v964
      %v966 = vpop.f32.mrf.mxu0
      %v967 = vadd.f32 %v798, %v966
      %968 = vmatmul.bf16.gmra.mxu0 %v660
      %v969 = vpop.f32.mrf.mxu0
      %v970 = vadd.f32 %v801, %v969
      %v971 = vpop.f32.mrf.mxu0
      %v972 = vadd.f32 %v803, %v971
      %973 = vmatmul.bf16.gmra.mxu0 %v663
      %v974 = vpop.f32.mrf.mxu0
      %v975 = vadd.f32 %v806, %v974
      %v976 = vpop.f32.mrf.mxu0
      %v977 = vadd.f32 %v808, %v976
      %978 = vmatmul.bf16.gmra.mxu0 %v666
      %v979 = vpop.f32.mrf.mxu0
      %v980 = vadd.f32 %v811, %v979
      %v981 = vpop.f32.mrf.mxu0
      %v982 = vadd.f32 %v813, %v981
      %983 = vmatmul.bf16.gmra.mxu0 %v669
      %v984 = vpop.f32.mrf.mxu0
      %v985 = vadd.f32 %v816, %v984
      %v986 = vpop.f32.mrf.mxu0
      %v987 = vadd.f32 %v818, %v986
      %988 = vmatmul.bf16.gmra.mxu0 %v672
      %v989 = vpop.f32.mrf.mxu0
      %v990 = vadd.f32 %v821, %v989
      %v991 = vpop.f32.mrf.mxu0
      %v992 = vadd.f32 %v823, %v991
      %993 = vmatmul.bf16.gmra.mxu0 %v675
      %v994 = vpop.f32.mrf.mxu0
      %v995 = vadd.f32 %v826, %v994
      %v996 = vpop.f32.mrf.mxu0
      %v997 = vadd.f32 %v828, %v996
      %998 = vmatmul.bf16.gmra.mxu0 %v678
      %v999 = vpop.f32.mrf.mxu0
      %v1000 = vadd.f32 %v831, %v999
      %v1001 = vpop.f32.mrf.mxu0
      %v1002 = vadd.f32 %v833, %v1001
      %1003 = vmatmul.bf16.gmra.mxu0 %v681
      %v1004 = vpop.f32.mrf.mxu0
      %v1005 = vadd.f32 %v836, %v1004
      %v1006 = vpop.f32.mrf.mxu0
      %v1007 = vadd.f32 %v838, %v1006
      %1008 = vmatmul.bf16.gmra.mxu0 %v684
      %v1009 = vpop.f32.mrf.mxu0
      %v1010 = vadd.f32 %v841, %v1009
      %v1011 = vpop.f32.mrf.mxu0
      %v1012 = vadd.f32 %v843, %v1011
      %1013 = vmatmul.bf16.gmra.mxu0 %v687
      %v1014 = vpop.f32.mrf.mxu0
      %v1015 = vadd.f32 %v846, %v1014
      %v1016 = vpop.f32.mrf.mxu0
      %v1017 = vadd.f32 %v848, %v1016
      %1018 = vmatmul.bf16.gmra.mxu0 %v690
      %v1019 = vpop.f32.mrf.mxu0
      %v1020 = vadd.f32 %v851, %v1019
      %v1021 = vpop.f32.mrf.mxu0
      %v1022 = vadd.f32 %v853, %v1021
      %1023 = vmatmul.bf16.gmra.mxu0 %v693
      %v1024 = vpop.f32.mrf.mxu0
      %v1025 = vadd.f32 %v856, %v1024
      %v1026 = vpop.f32.mrf.mxu0
      %v1027 = vadd.f32 %v858, %v1026
      %1028 = vmatmul.bf16.gmra.mxu0 %v696
      %v1029 = vpop.f32.mrf.mxu0
      %v1030 = vadd.f32 %v861, %v1029
      %v1031 = vpop.f32.mrf.mxu0
      %v1032 = vadd.f32 %v863, %v1031
      %1033 = vmatmul.bf16.gmra.mxu0 %v699
      %v1034 = vpop.f32.mrf.mxu0
      %v1035 = vadd.f32 %v866, %v1034
      %v1036 = vpop.f32.mrf.mxu0
      %v1037 = vadd.f32 %v868, %v1036
      %1038 = vmatmul.bf16.gmra.mxu0 %v702
      %v1039 = vpop.f32.mrf.mxu0
      %v1040 = vadd.f32 %v871, %v1039
      %v1041 = vpop.f32.mrf.mxu0
      %v1042 = vadd.f32 %v873, %v1041
      %1043 = vmatmul.bf16.gmra.mxu0 %v705
      %v1044 = vpop.f32.mrf.mxu0
      %v1045 = vadd.f32 %v876, %v1044
      %v1046 = vpop.f32.mrf.mxu0
      %v1047 = vadd.f32 %v878, %v1046
      %1048 = vdwg.mxu0
      %v1049 = vmax.f32 %v890, 0.0
      %v1050 = vmax.f32 %v892, 0.0
      %v1051 = vmax.f32 %v895, 0.0
      %v1052 = vmax.f32 %v897, 0.0
      %v1053 = vmax.f32 %v900, 0.0
      %v1054 = vmax.f32 %v902, 0.0
      %v1055 = vmax.f32 %v905, 0.0
      %v1056 = vmax.f32 %v907, 0.0
      %v1057 = vmax.f32 %v910, 0.0
      %v1058 = vmax.f32 %v912, 0.0
      %v1059 = vmax.f32 %v915, 0.0
      %v1060 = vmax.f32 %v917, 0.0
      %v1061 = vmax.f32 %v920, 0.0
      %v1062 = vmax.f32 %v922, 0.0
      %v1063 = vmax.f32 %v925, 0.0
      %v1064 = vmax.f32 %v927, 0.0
      %v1065 = vmax.f32 %v930, 0.0
      %v1066 = vmax.f32 %v932, 0.0
      %v1067 = vmax.f32 %v935, 0.0
      %v1068 = vmax.f32 %v937, 0.0
      %v1069 = vmax.f32 %v940, 0.0
      %v1070 = vmax.f32 %v942, 0.0
      %v1071 = vmax.f32 %v945, 0.0
      %v1072 = vmax.f32 %v947, 0.0
      %v1073 = vmax.f32 %v950, 0.0
      %v1074 = vmax.f32 %v952, 0.0
      %v1075 = vmax.f32 %v955, 0.0
      %v1076 = vmax.f32 %v957, 0.0
      %v1077 = vmax.f32 %v960, 0.0
      %v1078 = vmax.f32 %v962, 0.0
      %v1079 = vmax.f32 %v965, 0.0
      %v1080 = vmax.f32 %v967, 0.0
      %v1081 = vmax.f32 %v970, 0.0
      %v1082 = vmax.f32 %v972, 0.0
      %v1083 = vmax.f32 %v975, 0.0
      %v1084 = vmax.f32 %v977, 0.0
      %v1085 = vmax.f32 %v980, 0.0
      %v1086 = vmax.f32 %v982, 0.0
      %v1087 = vmax.f32 %v985, 0.0
      %v1088 = vmax.f32 %v987, 0.0
      %v1089 = vmax.f32 %v990, 0.0
      %v1090 = vmax.f32 %v992, 0.0
      %v1091 = vmax.f32 %v995, 0.0
      %v1092 = vmax.f32 %v997, 0.0
      %v1093 = vmax.f32 %v1000, 0.0
      %v1094 = vmax.f32 %v1002, 0.0
      %v1095 = vmax.f32 %v1005, 0.0
      %v1096 = vmax.f32 %v1007, 0.0
      %v1097 = vmax.f32 %v1010, 0.0
      %v1098 = vmax.f32 %v1012, 0.0
      %v1099 = vmax.f32 %v1015, 0.0
      %v1100 = vmax.f32 %v1017, 0.0
      %v1101 = vmax.f32 %v1020, 0.0
      %v1102 = vmax.f32 %v1022, 0.0
      %v1103 = vmax.f32 %v1025, 0.0
      %v1104 = vmax.f32 %v1027, 0.0
      %v1105 = vmax.f32 %v1030, 0.0
      %v1106 = vmax.f32 %v1032, 0.0
      %v1107 = vmax.f32 %v1035, 0.0
      %v1108 = vmax.f32 %v1037, 0.0
      %v1109 = vmax.f32 %v1040, 0.0
      %v1110 = vmax.f32 %v1042, 0.0
      %v1111 = vmax.f32 %v1045, 0.0
      %v1112 = vmax.f32 %v1047, 0.0
      %vm1113 = vcmask 130048
      %1114 = vst.msk [vmem:[%s175] sm:$0xff] %vm1113, %v1049
      %1115 = vst.msk [vmem:[%s175 + $0x8] sm:$0xff] %vm1113, %v1050
      %1116 = vst.msk [vmem:[%s175 + $0x10] sm:$0xff] %vm1113, %v1051
      %1117 = vst.msk [vmem:[%s175 + $0x18] sm:$0xff] %vm1113, %v1052
      %1118 = vst.msk [vmem:[%s175 + $0x20] sm:$0xff] %vm1113, %v1053
      %1119 = vst.msk [vmem:[%s175 + $0x28] sm:$0xff] %vm1113, %v1054
      %1120 = vst.msk [vmem:[%s175 + $0x30] sm:$0xff] %vm1113, %v1055
      %1121 = vst.msk [vmem:[%s175 + $0x38] sm:$0xff] %vm1113, %v1056
      %1122 = vst.msk [vmem:[%s175 + $0x40] sm:$0xff] %vm1113, %v1057
      %1123 = vst.msk [vmem:[%s175 + $0x48] sm:$0xff] %vm1113, %v1058
      %1124 = vst.msk [vmem:[%s175 + $0x50] sm:$0xff] %vm1113, %v1059
      %1125 = vst.msk [vmem:[%s175 + $0x58] sm:$0xff] %vm1113, %v1060
      %1126 = vst.msk [vmem:[%s175 + $0x60] sm:$0xff] %vm1113, %v1061
      %1127 = vst.msk [vmem:[%s175 + $0x68] sm:$0xff] %vm1113, %v1062
      %1128 = vst.msk [vmem:[%s175 + $0x70] sm:$0xff] %vm1113, %v1063
      %1129 = vst.msk [vmem:[%s175 + $0x78] sm:$0xff] %vm1113, %v1064
      %1130 = vst.msk [vmem:[%s175 + $0x80] sm:$0xff] %vm1113, %v1065
      %1131 = vst.msk [vmem:[%s175 + $0x88] sm:$0xff] %vm1113, %v1066
      %1132 = vst.msk [vmem:[%s175 + $0x90] sm:$0xff] %vm1113, %v1067
      %1133 = vst.msk [vmem:[%s175 + $0x98] sm:$0xff] %vm1113, %v1068
      %1134 = vst.msk [vmem:[%s175 + $0xa0] sm:$0xff] %vm1113, %v1069
      %1135 = vst.msk [vmem:[%s175 + $0xa8] sm:$0xff] %vm1113, %v1070
      %1136 = vst.msk [vmem:[%s175 + $0xb0] sm:$0xff] %vm1113, %v1071
      %1137 = vst.msk [vmem:[%s175 + $0xb8] sm:$0xff] %vm1113, %v1072
      %1138 = vst.msk [vmem:[%s175 + $0xc0] sm:$0xff] %vm1113, %v1073
      %1139 = vst.msk [vmem:[%s175 + $0xc8] sm:$0xff] %vm1113, %v1074
      %1140 = vst.msk [vmem:[%s175 + $0xd0] sm:$0xff] %vm1113, %v1075
      %1141 = vst.msk [vmem:[%s175 + $0xd8] sm:$0xff] %vm1113, %v1076
      %1142 = vst.msk [vmem:[%s175 + $0xe0] sm:$0xff] %vm1113, %v1077
      %1143 = vst.msk [vmem:[%s175 + $0xe8] sm:$0xff] %vm1113, %v1078
      %1144 = vst.msk [vmem:[%s175 + $0xf0] sm:$0xff] %vm1113, %v1079
      %1145 = vst.msk [vmem:[%s175 + $0xf8] sm:$0xff] %vm1113, %v1080
      %1146 = vst.msk [vmem:[%s175 + $0x100] sm:$0xff] %vm1113, %v1081
      %1147 = vst.msk [vmem:[%s175 + $0x108] sm:$0xff] %vm1113, %v1082
      %1148 = vst.msk [vmem:[%s175 + $0x110] sm:$0xff] %vm1113, %v1083
      %1149 = vst.msk [vmem:[%s175 + $0x118] sm:$0xff] %vm1113, %v1084
      %1150 = vst.msk [vmem:[%s175 + $0x120] sm:$0xff] %vm1113, %v1085
      %1151 = vst.msk [vmem:[%s175 + $0x128] sm:$0xff] %vm1113, %v1086
      %1152 = vst.msk [vmem:[%s175 + $0x130] sm:$0xff] %vm1113, %v1087
      %1153 = vst.msk [vmem:[%s175 + $0x138] sm:$0xff] %vm1113, %v1088
      %1154 = vst.msk [vmem:[%s175 + $0x140] sm:$0xff] %vm1113, %v1089
      %1155 = vst.msk [vmem:[%s175 + $0x148] sm:$0xff] %vm1113, %v1090
      %1156 = vst.msk [vmem:[%s175 + $0x150] sm:$0xff] %vm1113, %v1091
      %1157 = vst.msk [vmem:[%s175 + $0x158] sm:$0xff] %vm1113, %v1092
      %1158 = vst.msk [vmem:[%s175 + $0x160] sm:$0xff] %vm1113, %v1093
      %1159 = vst.msk [vmem:[%s175 + $0x168] sm:$0xff] %vm1113, %v1094
      %1160 = vst.msk [vmem:[%s175 + $0x170] sm:$0xff] %vm1113, %v1095
      %1161 = vst.msk [vmem:[%s175 + $0x178] sm:$0xff] %vm1113, %v1096
      %1162 = vst.msk [vmem:[%s175 + $0x180] sm:$0xff] %vm1113, %v1097
      %1163 = vst.msk [vmem:[%s175 + $0x188] sm:$0xff] %vm1113, %v1098
      %1164 = vst.msk [vmem:[%s175 + $0x190] sm:$0xff] %vm1113, %v1099
      %1165 = vst.msk [vmem:[%s175 + $0x198] sm:$0xff] %vm1113, %v1100
      %1166 = vst.msk [vmem:[%s175 + $0x1a0] sm:$0xff] %vm1113, %v1101
      %1167 = vst.msk [vmem:[%s175 + $0x1a8] sm:$0xff] %vm1113, %v1102
      %1168 = vst.msk [vmem:[%s175 + $0x1b0] sm:$0xff] %vm1113, %v1103
      %1169 = vst.msk [vmem:[%s175 + $0x1b8] sm:$0xff] %vm1113, %v1104
      %1170 = vst.msk [vmem:[%s175 + $0x1c0] sm:$0xff] %vm1113, %v1105
      %1171 = vst.msk [vmem:[%s175 + $0x1c8] sm:$0xff] %vm1113, %v1106
      %1172 = vst.msk [vmem:[%s175 + $0x1d0] sm:$0xff] %vm1113, %v1107
      %1173 = vst.msk [vmem:[%s175 + $0x1d8] sm:$0xff] %vm1113, %v1108
      %1174 = vst.msk [vmem:[%s175 + $0x1e0] sm:$0xff] %vm1113, %v1109
      %1175 = vst.msk [vmem:[%s175 + $0x1e8] sm:$0xff] %vm1113, %v1110
      %1176 = vst.msk [vmem:[%s175 + $0x1f0] sm:$0xff] %vm1113, %v1111
      %1177 = vst.msk [vmem:[%s175 + $0x1f8] sm:$0xff] %vm1113, %v1112
      %s1178 = smul.u32 64, %s14
      %p1179 = scmp.lt.s32.totalorder %s1178, 255
      %s1180 = scalar_select %p1179, %s1178, 255
      %s1181 = smul.addr %s1180, 8
      %s1182 = scalar_lea.vmem %s3, %s1181
      // Predicated region
      $region33: #{confidence_network_forward.14} parent=31 // pred_check
        %p1183 = pneg %p100
      $region34: #{confidence_network_forward.14} parent=31 // pred_check_branch
        %1185 = sbr.rel (%p1183) target = $region36
      $region35: #{confidence_network_forward.14} parent=31 // pred_region
        %s1186 = smul.u32 64, %s14
      $region36: #{confidence_network_forward.14} parent=31 // pred_fallthru
        _
    $region32: #{confidence_network_forward.14} parent=5 // pred_fallthru
      _
    %p1187 = scmp.le.s32.totalorder 2, %s9
    // Predicated region
    $region37: #{confidence_network_forward.14} parent=5 // pred_check
      %p1188 = pneg %p1187
    $region38: #{confidence_network_forward.14} parent=5 // pred_check_branch
      %1190 = sbr.rel (%p1188) target = $region40
    $region39: #{confidence_network_forward.14} parent=5 // pred_region
      %s1191 = ssub.s32 %s9, 2
      // Predicated region
      $region41: #{confidence_network_forward.14} parent=39 // pred_check
        %p1192 = pneg %p106
      $region42: #{confidence_network_forward.14} parent=39 // pred_check_branch
        %1194 = sbr.rel (%p1192) target = $region44
      $region43: #{confidence_network_forward.14} parent=39 // pred_region
        %s1195 = smul.u32 64, %s15
        %p1196 = scmp.lt.s32.totalorder %s1195, 255
        %s1197 = scalar_select %p1196, %s1195, 255
        %s1198 = smul.addr %s1197, 8
        %s1199 = scalar_lea.vmem %s3, %s1198
      $region44: #{confidence_network_forward.14} parent=39 // pred_fallthru
        _
    $region40: #{confidence_network_forward.14} parent=5 // pred_fallthru
      _
  $region6: #{confidence_network_forward.14} parent=0 // loop_footer
    %s13 = sadd.s32 1, %s9
  $region7: #{confidence_network_forward.14} parent=0 // loop_footer_branch
    %8 = sbr.rel target = $region3
  $region8: #{confidence_network_forward.14} parent=0 // loop_exit
    _

// kernel: confidence_network_forward.15
$region0: #{confidence_network_forward.15}
  #allocation0 [shape = 'u32[]', space=smem, size = 0x4, offset = 0x4, fixed_abs, tag = 'smem constant byte address 0x4 - core index']
  #allocation1 [shape = 'u32[72,128]{1,0:T(1,128)}', space=vmem, size = 0x9000, scoped, tag = 'internal scratch']
  %s0 = inlined_call_operand.vmem [shape: f32[2,17,272], index: 0, kind: input, shape index: {}]
  %s1 = inlined_call_operand.vmem [shape: f32[2,17,256], index: 1, kind: input, shape index: {}]
  %s2 = inlined_call_operand.vmem [shape: f32[2,16,272], index: 2, kind: input, shape index: {}]
  %s3 = inlined_call_operand.vmem [shape: f32[2,16,256], index: 3, kind: input, shape index: {}]
  %s4 = inlined_call_operand.vmem [shape: f32[2,16,256], index: 4, kind: output, shape index: {}]
  %s5 = sld [smem:[#allocation0]]
  $region26: #{confidence_network_forward.15} parent=0
    _
  %s7 = ssub.s32 1, %s5
  %s8 = scalar_select 0, %s7, %s5
  // Predicated region
  $region2: #{confidence_network_forward.15} parent=0 // pred_check
    _
  $region3: #{confidence_network_forward.15} parent=0 // pred_check_branch
    %10 = sbr.rel (0) target = $region5
  $region4: #{confidence_network_forward.15} parent=0 // pred_region
    _
  $region5: #{confidence_network_forward.15} parent=0 // pred_fallthru
    _
  // Predicated region
  $region6: #{confidence_network_forward.15} parent=0 // pred_check
    _
  $region7: #{confidence_network_forward.15} parent=0 // pred_check_branch
    %12 = sbr.rel (0) target = $region9
  $region8: #{confidence_network_forward.15} parent=0 // pred_region
    _
  $region9: #{confidence_network_forward.15} parent=0 // pred_fallthru
    _
  // Predicated region
  $region10: #{confidence_network_forward.15} parent=0 // pred_check
    _
  $region11: #{confidence_network_forward.15} parent=0 // pred_check_branch
    %14 = sbr.rel (0) target = $region13
  $region12: #{confidence_network_forward.15} parent=0 // pred_region
    _
  $region13: #{confidence_network_forward.15} parent=0 // pred_fallthru
    _
  // Predicated region
  $region14: #{confidence_network_forward.15} parent=0 // pred_check
    _
  $region15: #{confidence_network_forward.15} parent=0 // pred_check_branch
    %16 = sbr.rel (0) target = $region17
  $region16: #{confidence_network_forward.15} parent=0 // pred_region
    _
  $region17: #{confidence_network_forward.15} parent=0 // pred_fallthru
    _
  %v17 = vld [vmem:[%s0] sm:$0xff]
  %v18 = vld [vmem:[%s0 + $0x8] sm:$0xff]
  %v19 = vld [vmem:[%s0 + $0x18] sm:$0xff]
  %v20 = vld [vmem:[%s0 + $0x20] sm:$0xff]
  %v21 = vld [vmem:[%s0 + $0x30] sm:$0x1]
  %v22 = vld [vmem:[%s0 + $0x38] sm:$0x1]
  %v23 = vld [vmem:[%s0 + $0x48] sm:$0xff]
  %v24 = vld [vmem:[%s0 + $0x50] sm:$0xff]
  %v25 = vld [vmem:[%s0 + $0x60] sm:$0xff]
  %v26 = vld [vmem:[%s0 + $0x68] sm:$0xff]
  %v27 = vld [vmem:[%s0 + $0x78] sm:$0x1]
  %v28 = vld [vmem:[%s0 + $0x80] sm:$0x1]
  %v29 = vld [vmem:[%s0 + $0x10] sm:$0xff]
  %v30 = vld [vmem:[%s0 + $0x28] sm:$0xff]
  %v31 = vld [vmem:[%s0 + $0x40] sm:$0x1]
  %v32 = vld [vmem:[%s0 + $0x58] sm:$0xff]
  %v33 = vld [vmem:[%s0 + $0x70] sm:$0xff]
  %v34 = vld [vmem:[%s0 + $0x88] sm:$0x1]
  %53 = vrot.lane.b32.xlu0 %v17, 112
  %v54 = vpop.permute.xlu0 %53
  %55 = vrot.lane.b32.xlu0 %v18, 112
  %v56 = vpop.permute.xlu0 %55
  %57 = vrot.lane.b32.xlu0 %v29, 112
  %v58 = vpop.permute.xlu0 %57
  %59 = vrot.lane.b32.xlu0 %v19, 112
  %v60 = vpop.permute.xlu0 %59
  %61 = vrot.lane.b32.xlu0 %v20, 112
  %v62 = vpop.permute.xlu0 %61
  %63 = vrot.lane.b32.xlu0 %v30, 112
  %v64 = vpop.permute.xlu0 %63
  %65 = vrot.lane.b32.xlu0 %v21, 112
  %v66 = vpop.permute.xlu0 %65
  %67 = vrot.lane.b32.xlu0 %v22, 112
  %v68 = vpop.permute.xlu0 %67
  %69 = vrot.lane.b32.xlu0 %v31, 112
  %v70 = vpop.permute.xlu0 %69
  %71 = vrot.lane.b32.xlu0 %v23, 112
  %v72 = vpop.permute.xlu0 %71
  %73 = vrot.lane.b32.xlu0 %v24, 112
  %v74 = vpop.permute.xlu0 %73
  %75 = vrot.lane.b32.xlu0 %v32, 112
  %v76 = vpop.permute.xlu0 %75
  %77 = vrot.lane.b32.xlu0 %v25, 112
  %v78 = vpop.permute.xlu0 %77
  %79 = vrot.lane.b32.xlu0 %v26, 112
  %v80 = vpop.permute.xlu0 %79
  %81 = vrot.lane.b32.xlu0 %v33, 112
  %v82 = vpop.permute.xlu0 %81
  %83 = vrot.lane.b32.xlu0 %v27, 112
  %v84 = vpop.permute.xlu0 %83
  %85 = vrot.lane.b32.xlu0 %v28, 112
  %v86 = vpop.permute.xlu0 %85
  %87 = vrot.lane.b32.xlu0 %v34, 112
  %v88 = vpop.permute.xlu0 %87
  %vm89 = vcmask 916480
  %v90 = vsel %vm89, %v54, %v56
  %v91 = vsel %vm89, %v56, %v58
  %v92 = vsel %vm89, %v60, %v62
  %v93 = vsel %vm89, %v62, %v64
  %v94 = vsel %vm89, %v66, %v68
  %v95 = vsel %vm89, %v68, %v70
  %v96 = vsel %vm89, %v72, %v74
  %v97 = vsel %vm89, %v74, %v76
  %v98 = vsel %vm89, %v78, %v80
  %v99 = vsel %vm89, %v80, %v82
  %v100 = vsel %vm89, %v84, %v86
  %v101 = vsel %vm89, %v86, %v88
  %v114 = vmax.f32 %v17, %v90
  %v115 = vmax.f32 %v18, %v91
  %v116 = vmax.f32 %v19, %v92
  %v117 = vmax.f32 %v20, %v93
  %v118 = vmax.f32 %v21, %v94
  %v119 = vmax.f32 %v22, %v95
  %v120 = vmax.f32 %v23, %v96
  %v121 = vmax.f32 %v24, %v97
  %v122 = vmax.f32 %v25, %v98
  %v123 = vmax.f32 %v26, %v99
  %v124 = vmax.f32 %v27, %v100
  %v125 = vmax.f32 %v28, %v101
  %v126 = vld [vmem:[%s1] sm:$0xff]
  %v127 = vld [vmem:[%s1 + $0x8] sm:$0xff]
  %v128 = vld [vmem:[%s1 + $0x10] sm:$0xff]
  %v129 = vld [vmem:[%s1 + $0x18] sm:$0xff]
  %v130 = vld [vmem:[%s1 + $0x20] sm:$0x1]
  %v131 = vld [vmem:[%s1 + $0x28] sm:$0x1]
  %v132 = vld [vmem:[%s1 + $0x30] sm:$0xff]
  %v133 = vld [vmem:[%s1 + $0x38] sm:$0xff]
  %v134 = vld [vmem:[%s1 + $0x40] sm:$0xff]
  %v135 = vld [vmem:[%s1 + $0x48] sm:$0xff]
  %v136 = vld [vmem:[%s1 + $0x50] sm:$0x1]
  %v137 = vld [vmem:[%s1 + $0x58] sm:$0x1]
  %v138 = vmax.f32 %v114, %v126
  %v139 = vmax.f32 %v115, %v127
  %v140 = vmax.f32 %v116, %v128
  %v141 = vmax.f32 %v117, %v129
  %v142 = vmax.f32 %v118, %v130
  %v143 = vmax.f32 %v119, %v131
  %v144 = vmax.f32 %v120, %v132
  %v145 = vmax.f32 %v121, %v133
  %v146 = vmax.f32 %v122, %v134
  %v147 = vmax.f32 %v123, %v135
  %v148 = vmax.f32 %v124, %v136
  %v149 = vmax.f32 %v125, %v137
  %v150 = vld [vmem:[%s2] sm:$0xff]
  %v151 = vld [vmem:[%s2 + $0x8] sm:$0xff]
  %v152 = vld [vmem:[%s2 + $0x18] sm:$0xff]
  %v153 = vld [vmem:[%s2 + $0x20] sm:$0xff]
  %v154 = vld [vmem:[%s2 + $0x30] sm:$0xff]
  %v155 = vld [vmem:[%s2 + $0x38] sm:$0xff]
  %v156 = vld [vmem:[%s2 + $0x48] sm:$0xff]
  %v157 = vld [vmem:[%s2 + $0x50] sm:$0xff]
  %v158 = vld [vmem:[%s2 + $0x10] sm:$0xff]
  %v159 = vld [vmem:[%s2 + $0x28] sm:$0xff]
  %v160 = vld [vmem:[%s2 + $0x40] sm:$0xff]
  %v161 = vld [vmem:[%s2 + $0x58] sm:$0xff]
  %174 = vrot.lane.b32.xlu0 %v150, 112
  %v175 = vpop.permute.xlu0 %174
  %176 = vrot.lane.b32.xlu0 %v151, 112
  %v177 = vpop.permute.xlu0 %176
  %178 = vrot.lane.b32.xlu0 %v158, 112
  %v179 = vpop.permute.xlu0 %178
  %180 = vrot.lane.b32.xlu0 %v152, 112
  %v181 = vpop.permute.xlu0 %180
  %182 = vrot.lane.b32.xlu0 %v153, 112
  %v183 = vpop.permute.xlu0 %182
  %184 = vrot.lane.b32.xlu0 %v159, 112
  %v185 = vpop.permute.xlu0 %184
  %186 = vrot.lane.b32.xlu0 %v154, 112
  %v187 = vpop.permute.xlu0 %186
  %188 = vrot.lane.b32.xlu0 %v155, 112
  %v189 = vpop.permute.xlu0 %188
  %190 = vrot.lane.b32.xlu0 %v160, 112
  %v191 = vpop.permute.xlu0 %190
  %192 = vrot.lane.b32.xlu0 %v156, 112
  %v193 = vpop.permute.xlu0 %192
  %194 = vrot.lane.b32.xlu0 %v157, 112
  %v195 = vpop.permute.xlu0 %194
  %196 = vrot.lane.b32.xlu0 %v161, 112
  %v197 = vpop.permute.xlu0 %196
  %v198 = vsel %vm89, %v175, %v177
  %v199 = vsel %vm89, %v177, %v179
  %v200 = vsel %vm89, %v181, %v183
  %v201 = vsel %vm89, %v183, %v185
  %v202 = vsel %vm89, %v187, %v189
  %v203 = vsel %vm89, %v189, %v191
  %v204 = vsel %vm89, %v193, %v195
  %v205 = vsel %vm89, %v195, %v197
  %v214 = vmax.f32 %v150, %v198
  %v215 = vmax.f32 %v151, %v199
  %v216 = vmax.f32 %v152, %v200
  %v217 = vmax.f32 %v153, %v201
  %v218 = vmax.f32 %v154, %v202
  %v219 = vmax.f32 %v155, %v203
  %v220 = vmax.f32 %v156, %v204
  %v221 = vmax.f32 %v157, %v205
  %v222 = vld [vmem:[%s3] sm:$0xff]
  %v223 = vld [vmem:[%s3 + $0x8] sm:$0xff]
  %v224 = vld [vmem:[%s3 + $0x10] sm:$0xff]
  %v225 = vld [vmem:[%s3 + $0x18] sm:$0xff]
  %v226 = vld [vmem:[%s3 + $0x20] sm:$0xff]
  %v227 = vld [vmem:[%s3 + $0x28] sm:$0xff]
  %v228 = vld [vmem:[%s3 + $0x30] sm:$0xff]
  %v229 = vld [vmem:[%s3 + $0x38] sm:$0xff]
  %v230 = vmax.f32 %v214, %v222
  %v231 = vmax.f32 %v215, %v223
  %v232 = vmax.f32 %v216, %v224
  %v233 = vmax.f32 %v217, %v225
  %v234 = vmax.f32 %v218, %v226
  %v235 = vmax.f32 %v219, %v227
  %v236 = vmax.f32 %v220, %v228
  %v237 = vmax.f32 %v221, %v229
  %vm250 = vcmask 1046528
  %v251 = vrot.slane %v138, 1
  %v252 = vrot.slane %v140, 1
  %v253 = vsel %vm250, %v251, %v252
  %v254 = vrot.slane %v139, 1
  %v255 = vrot.slane %v141, 1
  %v256 = vsel %vm250, %v254, %v255
  %v257 = vrot.slane %v142, 1
  %v258 = vsel %vm250, %v252, %v257
  %v259 = vrot.slane %v143, 1
  %v260 = vsel %vm250, %v255, %v259
  %v261 = vrot.slane %v144, 1
  %v262 = vrot.slane %v146, 1
  %v263 = vsel %vm250, %v261, %v262
  %v264 = vrot.slane %v145, 1
  %v265 = vrot.slane %v147, 1
  %v266 = vsel %vm250, %v264, %v265
  %v267 = vrot.slane %v148, 1
  %v268 = vsel %vm250, %v262, %v267
  %v269 = vrot.slane %v149, 1
  %v270 = vsel %vm250, %v265, %v269
  %v279 = vmax.f32 %v138, %v253
  %v280 = vmax.f32 %v139, %v256
  %v281 = vmax.f32 %v140, %v258
  %v282 = vmax.f32 %v141, %v260
  %v283 = vmax.f32 %v144, %v263
  %v284 = vmax.f32 %v145, %v266
  %v285 = vmax.f32 %v146, %v268
  %v286 = vmax.f32 %v147, %v270
  %v287 = vmax.f32 %v279, %v230
  %v288 = vmax.f32 %v280, %v231
  %v289 = vmax.f32 %v281, %v232
  %v290 = vmax.f32 %v282, %v233
  %v291 = vmax.f32 %v283, %v234
  %v292 = vmax.f32 %v284, %v235
  %v293 = vmax.f32 %v285, %v236
  %v294 = vmax.f32 %v286, %v237
  %295 = vst [vmem:[%s4] sm:$0xff] %v287
  %296 = vst [vmem:[%s4 + $0x8] sm:$0xff] %v288
  %297 = vst [vmem:[%s4 + $0x10] sm:$0xff] %v289
  %298 = vst [vmem:[%s4 + $0x18] sm:$0xff] %v290
  %299 = vst [vmem:[%s4 + $0x20] sm:$0xff] %v291
  %300 = vst [vmem:[%s4 + $0x28] sm:$0xff] %v292
  %301 = vst [vmem:[%s4 + $0x30] sm:$0xff] %v293
  %302 = vst [vmem:[%s4 + $0x38] sm:$0xff] %v294
  // Predicated region
  $region18: #{confidence_network_forward.15} parent=0 // pred_check
    _
  $region19: #{confidence_network_forward.15} parent=0 // pred_check_branch
    %304 = sbr.rel (0) target = $region21
  $region20: #{confidence_network_forward.15} parent=0 // pred_region
    _
  $region21: #{confidence_network_forward.15} parent=0 // pred_fallthru
    _
  // Predicated region
  $region22: #{confidence_network_forward.15} parent=0 // pred_check
    _
  $region23: #{confidence_network_forward.15} parent=0 // pred_check_branch
    %306 = sbr.rel (0) target = $region25
  $region24: #{confidence_network_forward.15} parent=0 // pred_region
    _
  $region25: #{confidence_network_forward.15} parent=0 // pred_fallthru
    _

// kernel: confidence_network_forward.16
$region0: #{confidence_network_forward.16}
  #allocation0 [shape = 'u32[]', space=smem, size = 0x4, offset = 0x4, fixed_abs, tag = 'smem constant byte address 0x4 - core index']
  #allocation1 [shape = 'u32[72,128]{1,0:T(1,128)}', space=vmem, size = 0x9000, scoped, tag = 'internal scratch']
  %s0 = inlined_call_operand.vmem [shape: bf16[512,144], index: 0, kind: input, shape index: {}]
  %s1 = inlined_call_operand.vmem [shape: bf16[144,16], index: 1, kind: input, shape index: {}]
  %s2 = inlined_call_operand.vmem [shape: f32[1,16], index: 2, kind: input, shape index: {}]
  %s3 = inlined_call_operand.vmem [shape: f32[512,16], index: 3, kind: output, shape index: {}]
  %s4 = sld [smem:[#allocation0]]
  $region22: #{confidence_network_forward.16} parent=0
    _
  %s6 = ssub.s32 1, %s4
  %s7 = scalar_select 0, %s6, %s4
  // Predicated region
  $region2: #{confidence_network_forward.16} parent=0 // pred_check
    _
  $region3: #{confidence_network_forward.16} parent=0 // pred_check_branch
    %9 = sbr.rel (0) target = $region5
  $region4: #{confidence_network_forward.16} parent=0 // pred_region
    _
  $region5: #{confidence_network_forward.16} parent=0 // pred_fallthru
    _
  // Predicated region
  $region6: #{confidence_network_forward.16} parent=0 // pred_check
    _
  $region7: #{confidence_network_forward.16} parent=0 // pred_check_branch
    %11 = sbr.rel (0) target = $region9
  $region8: #{confidence_network_forward.16} parent=0 // pred_region
    _
  $region9: #{confidence_network_forward.16} parent=0 // pred_fallthru
    _
  // Predicated region
  $region10: #{confidence_network_forward.16} parent=0 // pred_check
    _
  $region11: #{confidence_network_forward.16} parent=0 // pred_check_branch
    %13 = sbr.rel (0) target = $region13
  $region12: #{confidence_network_forward.16} parent=0 // pred_region
    _
  $region13: #{confidence_network_forward.16} parent=0 // pred_fallthru
    _
  %v15 = vld [vmem:[%s0] sm:$0xff]
  %v16 = vld [vmem:[%s0 + $0x8] sm:$0xff]
  %v17 = vld [vmem:[%s0 + $0x10] sm:$0xff]
  %v18 = vld [vmem:[%s0 + $0x18] sm:$0xff]
  %v19 = vld [vmem:[%s0 + $0x20] sm:$0xff]
  %v20 = vld [vmem:[%s0 + $0x28] sm:$0xff]
  %v21 = vld [vmem:[%s0 + $0x30] sm:$0xff]
  %v22 = vld [vmem:[%s0 + $0x38] sm:$0xff]
  %v23 = vld [vmem:[%s0 + $0x40] sm:$0xff]
  %v24 = vld [vmem:[%s0 + $0x48] sm:$0xff]
  %v25 = vld [vmem:[%s0 + $0x50] sm:$0xff]
  %v26 = vld [vmem:[%s0 + $0x58] sm:$0xff]
  %v27 = vld [vmem:[%s0 + $0x60] sm:$0xff]
  %v28 = vld [vmem:[%s0 + $0x68] sm:$0xff]
  %v29 = vld [vmem:[%s0 + $0x70] sm:$0xff]
  %v30 = vld [vmem:[%s0 + $0x78] sm:$0xff]
  %v31 = vld [vmem:[%s0 + $0x80] sm:$0xff]
  %v32 = vld [vmem:[%s0 + $0x88] sm:$0xff]
  %v33 = vld [vmem:[%s0 + $0x90] sm:$0xff]
  %v34 = vld [vmem:[%s0 + $0x98] sm:$0xff]
  %v35 = vld [vmem:[%s0 + $0xa0] sm:$0xff]
  %v36 = vld [vmem:[%s0 + $0xa8] sm:$0xff]
  %v37 = vld [vmem:[%s0 + $0xb0] sm:$0xff]
  %v38 = vld [vmem:[%s0 + $0xb8] sm:$0xff]
  %v39 = vld [vmem:[%s0 + $0xc0] sm:$0xff]
  %v40 = vld [vmem:[%s0 + $0xc8] sm:$0xff]
  %v41 = vld [vmem:[%s0 + $0xd0] sm:$0xff]
  %v42 = vld [vmem:[%s0 + $0xd8] sm:$0xff]
  %v43 = vld [vmem:[%s0 + $0xe0] sm:$0xff]
  %v44 = vld [vmem:[%s0 + $0xe8] sm:$0xff]
  %v45 = vld [vmem:[%s0 + $0xf0] sm:$0xff]
  %v46 = vld [vmem:[%s0 + $0xf8] sm:$0xff]
  %v47 = vld [vmem:[%s0 + $0x100] sm:$0xff]
  %v48 = vld [vmem:[%s0 + $0x108] sm:$0xff]
  %v49 = vld [vmem:[%s0 + $0x110] sm:$0xff]
  %v50 = vld [vmem:[%s0 + $0x118] sm:$0xff]
  %v51 = vld [vmem:[%s0 + $0x120] sm:$0xff]
  %v52 = vld [vmem:[%s0 + $0x128] sm:$0xff]
  %v53 = vld [vmem:[%s0 + $0x130] sm:$0xff]
  %v54 = vld [vmem:[%s0 + $0x138] sm:$0xff]
  %v55 = vld [vmem:[%s0 + $0x140] sm:$0xff]
  %v56 = vld [vmem:[%s0 + $0x148] sm:$0xff]
  %v57 = vld [vmem:[%s0 + $0x150] sm:$0xff]
  %v58 = vld [vmem:[%s0 + $0x158] sm:$0xff]
  %v59 = vld [vmem:[%s0 + $0x160] sm:$0xff]
  %v60 = vld [vmem:[%s0 + $0x168] sm:$0xff]
  %v61 = vld [vmem:[%s0 + $0x170] sm:$0xff]
  %v62 = vld [vmem:[%s0 + $0x178] sm:$0xff]
  %v63 = vld [vmem:[%s0 + $0x180] sm:$0xff]
  %v64 = vld [vmem:[%s0 + $0x188] sm:$0xff]
  %v65 = vld [vmem:[%s0 + $0x190] sm:$0xff]
  %v66 = vld [vmem:[%s0 + $0x198] sm:$0xff]
  %v67 = vld [vmem:[%s0 + $0x1a0] sm:$0xff]
  %v68 = vld [vmem:[%s0 + $0x1a8] sm:$0xff]
  %v69 = vld [vmem:[%s0 + $0x1b0] sm:$0xff]
  %v70 = vld [vmem:[%s0 + $0x1b8] sm:$0xff]
  %v71 = vld [vmem:[%s0 + $0x1c0] sm:$0xff]
  %v72 = vld [vmem:[%s0 + $0x1c8] sm:$0xff]
  %v73 = vld [vmem:[%s0 + $0x1d0] sm:$0xff]
  %v74 = vld [vmem:[%s0 + $0x1d8] sm:$0xff]
  %v75 = vld [vmem:[%s0 + $0x1e0] sm:$0xff]
  %v76 = vld [vmem:[%s0 + $0x1e8] sm:$0xff]
  %v77 = vld [vmem:[%s0 + $0x1f0] sm:$0xff]
  %v78 = vld [vmem:[%s0 + $0x1f8] sm:$0xff]
  %v79 = vld [vmem:[%s1] sm:$0xf]
  %v80 = vld [vmem:[%s1 + $0x4] sm:$0xf]
  %v81 = vld [vmem:[%s1 + $0x8] sm:$0xf]
  %v82 = vld [vmem:[%s1 + $0xc] sm:$0xf]
  %v83 = vld [vmem:[%s1 + $0x10] sm:$0xf]
  %v84 = vld [vmem:[%s1 + $0x14] sm:$0xf]
  %v85 = vld [vmem:[%s1 + $0x18] sm:$0xf]
  %v86 = vld [vmem:[%s1 + $0x1c] sm:$0xf]
  %v87 = vld [vmem:[%s1 + $0x20] sm:$0xf]
  %v88 = vld [vmem:[%s1 + $0x24] sm:$0xf]
  %v89 = vld [vmem:[%s1 + $0x28] sm:$0xf]
  %v90 = vld [vmem:[%s1 + $0x2c] sm:$0xf]
  %v91 = vld [vmem:[%s1 + $0x30] sm:$0xf]
  %v92 = vld [vmem:[%s1 + $0x34] sm:$0xf]
  %v93 = vld [vmem:[%s1 + $0x38] sm:$0xf]
  %v94 = vld [vmem:[%s1 + $0x3c] sm:$0xf]
  %v95 = vld [vmem:[%s1 + $0x40] sm:$0xf]
  %v96 = vld [vmem:[%s1 + $0x44] sm:$0xf]
  %v97 = vld [vmem:[%s2] sm:$0x1]
  %v99 = vperm.slane %v97, 0
  %v165 = vunpack.c.l.b16 %v15
  %v166 = vunpack.c.h.b16 %v15
  %v167 = vunpack.c.l.b16 %v16
  %v168 = vunpack.c.h.b16 %v16
  %v169 = vunpack.c.l.b16 %v17
  %v170 = vunpack.c.h.b16 %v17
  %v171 = vunpack.c.l.b16 %v18
  %v172 = vunpack.c.h.b16 %v18
  %v173 = vunpack.c.l.b16 %v19
  %v174 = vunpack.c.h.b16 %v19
  %v175 = vunpack.c.l.b16 %v20
  %v176 = vunpack.c.h.b16 %v20
  %v177 = vunpack.c.l.b16 %v21
  %v178 = vunpack.c.h.b16 %v21
  %v179 = vunpack.c.l.b16 %v22
  %v180 = vunpack.c.h.b16 %v22
  %v181 = vunpack.c.l.b16 %v23
  %v182 = vunpack.c.h.b16 %v23
  %v183 = vunpack.c.l.b16 %v24
  %v184 = vunpack.c.h.b16 %v24
  %v185 = vunpack.c.l.b16 %v25
  %v186 = vunpack.c.h.b16 %v25
  %v187 = vunpack.c.l.b16 %v26
  %v188 = vunpack.c.h.b16 %v26
  %v189 = vunpack.c.l.b16 %v27
  %v190 = vunpack.c.h.b16 %v27
  %v191 = vunpack.c.l.b16 %v28
  %v192 = vunpack.c.h.b16 %v28
  %v193 = vunpack.c.l.b16 %v29
  %v194 = vunpack.c.h.b16 %v29
  %v195 = vunpack.c.l.b16 %v30
  %v196 = vunpack.c.h.b16 %v30
  %v197 = vunpack.c.l.b16 %v31
  %v198 = vunpack.c.h.b16 %v31
  %v199 = vunpack.c.l.b16 %v32
  %v200 = vunpack.c.h.b16 %v32
  %v201 = vunpack.c.l.b16 %v33
  %v202 = vunpack.c.h.b16 %v33
  %v203 = vunpack.c.l.b16 %v34
  %v204 = vunpack.c.h.b16 %v34
  %v205 = vunpack.c.l.b16 %v35
  %v206 = vunpack.c.h.b16 %v35
  %v207 = vunpack.c.l.b16 %v36
  %v208 = vunpack.c.h.b16 %v36
  %v209 = vunpack.c.l.b16 %v37
  %v210 = vunpack.c.h.b16 %v37
  %v211 = vunpack.c.l.b16 %v38
  %v212 = vunpack.c.h.b16 %v38
  %v213 = vunpack.c.l.b16 %v39
  %v214 = vunpack.c.h.b16 %v39
  %v215 = vunpack.c.l.b16 %v40
  %v216 = vunpack.c.h.b16 %v40
  %v217 = vunpack.c.l.b16 %v41
  %v218 = vunpack.c.h.b16 %v41
  %v219 = vunpack.c.l.b16 %v42
  %v220 = vunpack.c.h.b16 %v42
  %v221 = vunpack.c.l.b16 %v43
  %v222 = vunpack.c.h.b16 %v43
  %v223 = vunpack.c.l.b16 %v44
  %v224 = vunpack.c.h.b16 %v44
  %v225 = vunpack.c.l.b16 %v45
  %v226 = vunpack.c.h.b16 %v45
  %v227 = vunpack.c.l.b16 %v46
  %v228 = vunpack.c.h.b16 %v46
  %v229 = vunpack.c.l.b16 %v47
  %v230 = vunpack.c.h.b16 %v47
  %v231 = vunpack.c.l.b16 %v48
  %v232 = vunpack.c.h.b16 %v48
  %v233 = vunpack.c.l.b16 %v49
  %v234 = vunpack.c.h.b16 %v49
  %v235 = vunpack.c.l.b16 %v50
  %v236 = vunpack.c.h.b16 %v50
  %v237 = vunpack.c.l.b16 %v51
  %v238 = vunpack.c.h.b16 %v51
  %v239 = vunpack.c.l.b16 %v52
  %v240 = vunpack.c.h.b16 %v52
  %v241 = vunpack.c.l.b16 %v53
  %v242 = vunpack.c.h.b16 %v53
  %v243 = vunpack.c.l.b16 %v54
  %v244 = vunpack.c.h.b16 %v54
  %v245 = vunpack.c.l.b16 %v55
  %v246 = vunpack.c.h.b16 %v55
  %v247 = vunpack.c.l.b16 %v56
  %v248 = vunpack.c.h.b16 %v56
  %v249 = vunpack.c.l.b16 %v57
  %v250 = vunpack.c.h.b16 %v57
  %v251 = vunpack.c.l.b16 %v58
  %v252 = vunpack.c.h.b16 %v58
  %v253 = vunpack.c.l.b16 %v59
  %v254 = vunpack.c.h.b16 %v59
  %v255 = vunpack.c.l.b16 %v60
  %v256 = vunpack.c.h.b16 %v60
  %v257 = vunpack.c.l.b16 %v61
  %v258 = vunpack.c.h.b16 %v61
  %v259 = vunpack.c.l.b16 %v62
  %v260 = vunpack.c.h.b16 %v62
  %v261 = vunpack.c.l.b16 %v63
  %v262 = vunpack.c.h.b16 %v63
  %v263 = vunpack.c.l.b16 %v64
  %v264 = vunpack.c.h.b16 %v64
  %v265 = vunpack.c.l.b16 %v65
  %v266 = vunpack.c.h.b16 %v65
  %v267 = vunpack.c.l.b16 %v66
  %v268 = vunpack.c.h.b16 %v66
  %v269 = vunpack.c.l.b16 %v67
  %v270 = vunpack.c.h.b16 %v67
  %v271 = vunpack.c.l.b16 %v68
  %v272 = vunpack.c.h.b16 %v68
  %v273 = vunpack.c.l.b16 %v69
  %v274 = vunpack.c.h.b16 %v69
  %v275 = vunpack.c.l.b16 %v70
  %v276 = vunpack.c.h.b16 %v70
  %v277 = vunpack.c.l.b16 %v71
  %v278 = vunpack.c.h.b16 %v71
  %v279 = vunpack.c.l.b16 %v72
  %v280 = vunpack.c.h.b16 %v72
  %v281 = vunpack.c.l.b16 %v73
  %v282 = vunpack.c.h.b16 %v73
  %v283 = vunpack.c.l.b16 %v74
  %v284 = vunpack.c.h.b16 %v74
  %v285 = vunpack.c.l.b16 %v75
  %v286 = vunpack.c.h.b16 %v75
  %v287 = vunpack.c.l.b16 %v76
  %v288 = vunpack.c.h.b16 %v76
  %v289 = vunpack.c.l.b16 %v77
  %v290 = vunpack.c.h.b16 %v77
  %v291 = vunpack.c.l.b16 %v78
  %v292 = vunpack.c.h.b16 %v78
  %v293 = vpack.c.b16 %v167, %v165
  %v294 = vpack.c.b16 %v168, %v166
  %v295 = vpack.c.b16 %v171, %v169
  %v296 = vpack.c.b16 %v172, %v170
  %v297 = vpack.c.b16 %v175, %v173
  %v298 = vpack.c.b16 %v176, %v174
  %v299 = vpack.c.b16 %v179, %v177
  %v300 = vpack.c.b16 %v180, %v178
  %v301 = vpack.c.b16 %v183, %v181
  %v302 = vpack.c.b16 %v184, %v182
  %v303 = vpack.c.b16 %v187, %v185
  %v304 = vpack.c.b16 %v188, %v186
  %v305 = vpack.c.b16 %v191, %v189
  %v306 = vpack.c.b16 %v192, %v190
  %v307 = vpack.c.b16 %v195, %v193
  %v308 = vpack.c.b16 %v196, %v194
  %v309 = vpack.c.b16 %v199, %v197
  %v310 = vpack.c.b16 %v200, %v198
  %v311 = vpack.c.b16 %v203, %v201
  %v312 = vpack.c.b16 %v204, %v202
  %v313 = vpack.c.b16 %v207, %v205
  %v314 = vpack.c.b16 %v208, %v206
  %v315 = vpack.c.b16 %v211, %v209
  %v316 = vpack.c.b16 %v212, %v210
  %v317 = vpack.c.b16 %v215, %v213
  %v318 = vpack.c.b16 %v216, %v214
  %v319 = vpack.c.b16 %v219, %v217
  %v320 = vpack.c.b16 %v220, %v218
  %v321 = vpack.c.b16 %v223, %v221
  %v322 = vpack.c.b16 %v224, %v222
  %v323 = vpack.c.b16 %v227, %v225
  %v324 = vpack.c.b16 %v228, %v226
  %v325 = vpack.c.b16 %v231, %v229
  %v326 = vpack.c.b16 %v232, %v230
  %v327 = vpack.c.b16 %v235, %v233
  %v328 = vpack.c.b16 %v236, %v234
  %v329 = vpack.c.b16 %v239, %v237
  %v330 = vpack.c.b16 %v240, %v238
  %v331 = vpack.c.b16 %v243, %v241
  %v332 = vpack.c.b16 %v244, %v242
  %v333 = vpack.c.b16 %v247, %v245
  %v334 = vpack.c.b16 %v248, %v246
  %v335 = vpack.c.b16 %v251, %v249
  %v336 = vpack.c.b16 %v252, %v250
  %v337 = vpack.c.b16 %v255, %v253
  %v338 = vpack.c.b16 %v256, %v254
  %v339 = vpack.c.b16 %v259, %v257
  %v340 = vpack.c.b16 %v260, %v258
  %v341 = vpack.c.b16 %v263, %v261
  %v342 = vpack.c.b16 %v264, %v262
  %v343 = vpack.c.b16 %v267, %v265
  %v344 = vpack.c.b16 %v268, %v266
  %v345 = vpack.c.b16 %v271, %v269
  %v346 = vpack.c.b16 %v272, %v270
  %v347 = vpack.c.b16 %v275, %v273
  %v348 = vpack.c.b16 %v276, %v274
  %v349 = vpack.c.b16 %v279, %v277
  %v350 = vpack.c.b16 %v280, %v278
  %v351 = vpack.c.b16 %v283, %v281
  %v352 = vpack.c.b16 %v284, %v282
  %v353 = vpack.c.b16 %v287, %v285
  %v354 = vpack.c.b16 %v288, %v286
  %v355 = vpack.c.b16 %v291, %v289
  %v356 = vpack.c.b16 %v292, %v290
  %v407 = vunpack.c.l.b16 %v79
  %v408 = vunpack.c.l.b16 %v80
  %v409 = vunpack.c.l.b16 %v81
  %v410 = vunpack.c.l.b16 %v82
  %v411 = vunpack.c.l.b16 %v83
  %v412 = vunpack.c.l.b16 %v84
  %v413 = vunpack.c.l.b16 %v85
  %v414 = vunpack.c.l.b16 %v86
  %v415 = vunpack.c.l.b16 %v87
  %v416 = vunpack.c.l.b16 %v88
  %v417 = vunpack.c.l.b16 %v89
  %v418 = vunpack.c.l.b16 %v90
  %v419 = vunpack.c.l.b16 %v91
  %v420 = vunpack.c.l.b16 %v92
  %v421 = vunpack.c.l.b16 %v93
  %v422 = vunpack.c.l.b16 %v94
  %v423 = vunpack.c.l.b16 %v95
  %v424 = vunpack.c.l.b16 %v96
  %v425 = vpack.c.b16 %v408, %v407
  %v426 = vpack.c.b16 %v410, %v409
  %v427 = vpack.c.b16 %v412, %v411
  %v428 = vpack.c.b16 %v414, %v413
  %v429 = vpack.c.b16 %v416, %v415
  %v430 = vpack.c.b16 %v418, %v417
  %v431 = vpack.c.b16 %v420, %v419
  %v432 = vpack.c.b16 %v422, %v421
  %v433 = vpack.c.b16 %v424, %v423
  %vm443 = vcmask 130048
  %v445 = vsel %vm443, %v294, 0
  %v448 = vsel %vm443, %v296, 0
  %v451 = vsel %vm443, %v298, 0
  %v454 = vsel %vm443, %v300, 0
  %v457 = vsel %vm443, %v302, 0
  %v460 = vsel %vm443, %v304, 0
  %v463 = vsel %vm443, %v306, 0
  %v466 = vsel %vm443, %v308, 0
  %v469 = vsel %vm443, %v310, 0
  %v472 = vsel %vm443, %v312, 0
  %v475 = vsel %vm443, %v314, 0
  %v478 = vsel %vm443, %v316, 0
  %v481 = vsel %vm443, %v318, 0
  %v484 = vsel %vm443, %v320, 0
  %v487 = vsel %vm443, %v322, 0
  %v490 = vsel %vm443, %v324, 0
  %v493 = vsel %vm443, %v326, 0
  %v496 = vsel %vm443, %v328, 0
  %v499 = vsel %vm443, %v330, 0
  %v502 = vsel %vm443, %v332, 0
  %v505 = vsel %vm443, %v334, 0
  %v508 = vsel %vm443, %v336, 0
  %v511 = vsel %vm443, %v338, 0
  %v514 = vsel %vm443, %v340, 0
  %v517 = vsel %vm443, %v342, 0
  %v520 = vsel %vm443, %v344, 0
  %v523 = vsel %vm443, %v346, 0
  %v526 = vsel %vm443, %v348, 0
  %v529 = vsel %vm443, %v350, 0
  %v532 = vsel %vm443, %v352, 0
  %v535 = vsel %vm443, %v354, 0
  %v538 = vsel %vm443, %v356, 0
  %540 = vmatpush.bf16.msra.mxu0 %v432
  %541 = vmatpush.bf16.msra.mxu0 %v431
  %542 = vmatpush.bf16.msra.mxu0 %v430
  %543 = vmatpush.bf16.msra.mxu0 %v429
  %544 = vmatpush.bf16.msra.mxu0 %v428
  %545 = vmatpush.bf16.msra.mxu0 %v427
  %546 = vmatpush.bf16.msra.mxu0 %v426
  %547 = vmatpush.bf16.msra.mxu0 %v425
  %548 = vmatmul.bf16.gmra.mxu0 %v293
  %v549 = vpop.f32.mrf.mxu0
  %v550 = vadd.f32 %v99, %v549
  %v551 = vpop.f32.mrf.mxu0
  %v552 = vadd.f32 %v99, %v551
  %553 = vmatmul.bf16.gmra.mxu0 %v295
  %v554 = vpop.f32.mrf.mxu0
  %v555 = vadd.f32 %v99, %v554
  %v556 = vpop.f32.mrf.mxu0
  %v557 = vadd.f32 %v99, %v556
  %558 = vmatmul.bf16.gmra.mxu0 %v297
  %v559 = vpop.f32.mrf.mxu0
  %v560 = vadd.f32 %v99, %v559
  %v561 = vpop.f32.mrf.mxu0
  %v562 = vadd.f32 %v99, %v561
  %563 = vmatmul.bf16.gmra.mxu0 %v299
  %v564 = vpop.f32.mrf.mxu0
  %v565 = vadd.f32 %v99, %v564
  %v566 = vpop.f32.mrf.mxu0
  %v567 = vadd.f32 %v99, %v566
  %568 = vmatmul.bf16.gmra.mxu0 %v301
  %v569 = vpop.f32.mrf.mxu0
  %v570 = vadd.f32 %v99, %v569
  %v571 = vpop.f32.mrf.mxu0
  %v572 = vadd.f32 %v99, %v571
  %573 = vmatmul.bf16.gmra.mxu0 %v303
  %v574 = vpop.f32.mrf.mxu0
  %v575 = vadd.f32 %v99, %v574
  %v576 = vpop.f32.mrf.mxu0
  %v577 = vadd.f32 %v99, %v576
  %578 = vmatmul.bf16.gmra.mxu0 %v305
  %v579 = vpop.f32.mrf.mxu0
  %v580 = vadd.f32 %v99, %v579
  %v581 = vpop.f32.mrf.mxu0
  %v582 = vadd.f32 %v99, %v581
  %583 = vmatmul.bf16.gmra.mxu0 %v307
  %v584 = vpop.f32.mrf.mxu0
  %v585 = vadd.f32 %v99, %v584
  %v586 = vpop.f32.mrf.mxu0
  %v587 = vadd.f32 %v99, %v586
  %588 = vmatmul.bf16.gmra.mxu0 %v309
  %v589 = vpop.f32.mrf.mxu0
  %v590 = vadd.f32 %v99, %v589
  %v591 = vpop.f32.mrf.mxu0
  %v592 = vadd.f32 %v99, %v591
  %593 = vmatmul.bf16.gmra.mxu0 %v311
  %v594 = vpop.f32.mrf.mxu0
  %v595 = vadd.f32 %v99, %v594
  %v596 = vpop.f32.mrf.mxu0
  %v597 = vadd.f32 %v99, %v596
  %598 = vmatmul.bf16.gmra.mxu0 %v313
  %v599 = vpop.f32.mrf.mxu0
  %v600 = vadd.f32 %v99, %v599
  %v601 = vpop.f32.mrf.mxu0
  %v602 = vadd.f32 %v99, %v601
  %603 = vmatmul.bf16.gmra.mxu0 %v315
  %v604 = vpop.f32.mrf.mxu0
  %v605 = vadd.f32 %v99, %v604
  %v606 = vpop.f32.mrf.mxu0
  %v607 = vadd.f32 %v99, %v606
  %608 = vmatmul.bf16.gmra.mxu0 %v317
  %v609 = vpop.f32.mrf.mxu0
  %v610 = vadd.f32 %v99, %v609
  %v611 = vpop.f32.mrf.mxu0
  %v612 = vadd.f32 %v99, %v611
  %613 = vmatmul.bf16.gmra.mxu0 %v319
  %v614 = vpop.f32.mrf.mxu0
  %v615 = vadd.f32 %v99, %v614
  %v616 = vpop.f32.mrf.mxu0
  %v617 = vadd.f32 %v99, %v616
  %618 = vmatmul.bf16.gmra.mxu0 %v321
  %v619 = vpop.f32.mrf.mxu0
  %v620 = vadd.f32 %v99, %v619
  %v621 = vpop.f32.mrf.mxu0
  %v622 = vadd.f32 %v99, %v621
  %623 = vmatmul.bf16.gmra.mxu0 %v323
  %v624 = vpop.f32.mrf.mxu0
  %v625 = vadd.f32 %v99, %v624
  %v626 = vpop.f32.mrf.mxu0
  %v627 = vadd.f32 %v99, %v626
  %628 = vmatmul.bf16.gmra.mxu0 %v325
  %v629 = vpop.f32.mrf.mxu0
  %v630 = vadd.f32 %v99, %v629
  %v631 = vpop.f32.mrf.mxu0
  %v632 = vadd.f32 %v99, %v631
  %633 = vmatmul.bf16.gmra.mxu0 %v327
  %v634 = vpop.f32.mrf.mxu0
  %v635 = vadd.f32 %v99, %v634
  %v636 = vpop.f32.mrf.mxu0
  %v637 = vadd.f32 %v99, %v636
  %638 = vmatmul.bf16.gmra.mxu0 %v329
  %v639 = vpop.f32.mrf.mxu0
  %v640 = vadd.f32 %v99, %v639
  %v641 = vpop.f32.mrf.mxu0
  %v642 = vadd.f32 %v99, %v641
  %643 = vmatmul.bf16.gmra.mxu0 %v331
  %v644 = vpop.f32.mrf.mxu0
  %v645 = vadd.f32 %v99, %v644
  %v646 = vpop.f32.mrf.mxu0
  %v647 = vadd.f32 %v99, %v646
  %648 = vmatmul.bf16.gmra.mxu0 %v333
  %v649 = vpop.f32.mrf.mxu0
  %v650 = vadd.f32 %v99, %v649
  %v651 = vpop.f32.mrf.mxu0
  %v652 = vadd.f32 %v99, %v651
  %653 = vmatmul.bf16.gmra.mxu0 %v335
  %v654 = vpop.f32.mrf.mxu0
  %v655 = vadd.f32 %v99, %v654
  %v656 = vpop.f32.mrf.mxu0
  %v657 = vadd.f32 %v99, %v656
  %658 = vmatmul.bf16.gmra.mxu0 %v337
  %v659 = vpop.f32.mrf.mxu0
  %v660 = vadd.f32 %v99, %v659
  %v661 = vpop.f32.mrf.mxu0
  %v662 = vadd.f32 %v99, %v661
  %663 = vmatmul.bf16.gmra.mxu0 %v339
  %v664 = vpop.f32.mrf.mxu0
  %v665 = vadd.f32 %v99, %v664
  %v666 = vpop.f32.mrf.mxu0
  %v667 = vadd.f32 %v99, %v666
  %668 = vmatmul.bf16.gmra.mxu0 %v341
  %v669 = vpop.f32.mrf.mxu0
  %v670 = vadd.f32 %v99, %v669
  %v671 = vpop.f32.mrf.mxu0
  %v672 = vadd.f32 %v99, %v671
  %673 = vmatmul.bf16.gmra.mxu0 %v343
  %v674 = vpop.f32.mrf.mxu0
  %v675 = vadd.f32 %v99, %v674
  %v676 = vpop.f32.mrf.mxu0
  %v677 = vadd.f32 %v99, %v676
  %678 = vmatmul.bf16.gmra.mxu0 %v345
  %v679 = vpop.f32.mrf.mxu0
  %v680 = vadd.f32 %v99, %v679
  %v681 = vpop.f32.mrf.mxu0
  %v682 = vadd.f32 %v99, %v681
  %683 = vmatmul.bf16.gmra.mxu0 %v347
  %v684 = vpop.f32.mrf.mxu0
  %v685 = vadd.f32 %v99, %v684
  %v686 = vpop.f32.mrf.mxu0
  %v687 = vadd.f32 %v99, %v686
  %688 = vmatmul.bf16.gmra.mxu0 %v349
  %v689 = vpop.f32.mrf.mxu0
  %v690 = vadd.f32 %v99, %v689
  %v691 = vpop.f32.mrf.mxu0
  %v692 = vadd.f32 %v99, %v691
  %693 = vmatmul.bf16.gmra.mxu0 %v351
  %v694 = vpop.f32.mrf.mxu0
  %v695 = vadd.f32 %v99, %v694
  %v696 = vpop.f32.mrf.mxu0
  %v697 = vadd.f32 %v99, %v696
  %698 = vmatmul.bf16.gmra.mxu0 %v353
  %v699 = vpop.f32.mrf.mxu0
  %v700 = vadd.f32 %v99, %v699
  %v701 = vpop.f32.mrf.mxu0
  %v702 = vadd.f32 %v99, %v701
  %703 = vmatmul.bf16.gmra.mxu0 %v355
  %v704 = vpop.f32.mrf.mxu0
  %v705 = vadd.f32 %v99, %v704
  %v706 = vpop.f32.mrf.mxu0
  %v707 = vadd.f32 %v99, %v706
  %708 = vdwg.mxu0
  %709 = vmatpush.bf16.msra.mxu0 0
  %710 = vmatpush.bf16.msra.mxu0 0
  %711 = vmatpush.bf16.msra.mxu0 0
  %712 = vmatpush.bf16.msra.mxu0 0
  %713 = vmatpush.bf16.msra.mxu0 0
  %714 = vmatpush.bf16.msra.mxu0 0
  %715 = vmatpush.bf16.msra.mxu0 0
  %716 = vmatpush.bf16.msra.mxu0 %v433
  %717 = vmatmul.bf16.gmra.mxu0 %v445
  %v718 = vpop.f32.mrf.mxu0
  %v719 = vadd.f32 %v550, %v718
  %v720 = vpop.f32.mrf.mxu0
  %v721 = vadd.f32 %v552, %v720
  %722 = vmatmul.bf16.gmra.mxu0 %v448
  %v723 = vpop.f32.mrf.mxu0
  %v724 = vadd.f32 %v555, %v723
  %v725 = vpop.f32.mrf.mxu0
  %v726 = vadd.f32 %v557, %v725
  %727 = vmatmul.bf16.gmra.mxu0 %v451
  %v728 = vpop.f32.mrf.mxu0
  %v729 = vadd.f32 %v560, %v728
  %v730 = vpop.f32.mrf.mxu0
  %v731 = vadd.f32 %v562, %v730
  %732 = vmatmul.bf16.gmra.mxu0 %v454
  %v733 = vpop.f32.mrf.mxu0
  %v734 = vadd.f32 %v565, %v733
  %v735 = vpop.f32.mrf.mxu0
  %v736 = vadd.f32 %v567, %v735
  %737 = vmatmul.bf16.gmra.mxu0 %v457
  %v738 = vpop.f32.mrf.mxu0
  %v739 = vadd.f32 %v570, %v738
  %v740 = vpop.f32.mrf.mxu0
  %v741 = vadd.f32 %v572, %v740
  %742 = vmatmul.bf16.gmra.mxu0 %v460
  %v743 = vpop.f32.mrf.mxu0
  %v744 = vadd.f32 %v575, %v743
  %v745 = vpop.f32.mrf.mxu0
  %v746 = vadd.f32 %v577, %v745
  %747 = vmatmul.bf16.gmra.mxu0 %v463
  %v748 = vpop.f32.mrf.mxu0
  %v749 = vadd.f32 %v580, %v748
  %v750 = vpop.f32.mrf.mxu0
  %v751 = vadd.f32 %v582, %v750
  %752 = vmatmul.bf16.gmra.mxu0 %v466
  %v753 = vpop.f32.mrf.mxu0
  %v754 = vadd.f32 %v585, %v753
  %v755 = vpop.f32.mrf.mxu0
  %v756 = vadd.f32 %v587, %v755
  %757 = vmatmul.bf16.gmra.mxu0 %v469
  %v758 = vpop.f32.mrf.mxu0
  %v759 = vadd.f32 %v590, %v758
  %v760 = vpop.f32.mrf.mxu0
  %v761 = vadd.f32 %v592, %v760
  %762 = vmatmul.bf16.gmra.mxu0 %v472
  %v763 = vpop.f32.mrf.mxu0
  %v764 = vadd.f32 %v595, %v763
  %v765 = vpop.f32.mrf.mxu0
  %v766 = vadd.f32 %v597, %v765
  %767 = vmatmul.bf16.gmra.mxu0 %v475
  %v768 = vpop.f32.mrf.mxu0
  %v769 = vadd.f32 %v600, %v768
  %v770 = vpop.f32.mrf.mxu0
  %v771 = vadd.f32 %v602, %v770
  %772 = vmatmul.bf16.gmra.mxu0 %v478
  %v773 = vpop.f32.mrf.mxu0
  %v774 = vadd.f32 %v605, %v773
  %v775 = vpop.f32.mrf.mxu0
  %v776 = vadd.f32 %v607, %v775
  %777 = vmatmul.bf16.gmra.mxu0 %v481
  %v778 = vpop.f32.mrf.mxu0
  %v779 = vadd.f32 %v610, %v778
  %v780 = vpop.f32.mrf.mxu0
  %v781 = vadd.f32 %v612, %v780
  %782 = vmatmul.bf16.gmra.mxu0 %v484
  %v783 = vpop.f32.mrf.mxu0
  %v784 = vadd.f32 %v615, %v783
  %v785 = vpop.f32.mrf.mxu0
  %v786 = vadd.f32 %v617, %v785
  %787 = vmatmul.bf16.gmra.mxu0 %v487
  %v788 = vpop.f32.mrf.mxu0
  %v789 = vadd.f32 %v620, %v788
  %v790 = vpop.f32.mrf.mxu0
  %v791 = vadd.f32 %v622, %v790
  %792 = vmatmul.bf16.gmra.mxu0 %v490
  %v793 = vpop.f32.mrf.mxu0
  %v794 = vadd.f32 %v625, %v793
  %v795 = vpop.f32.mrf.mxu0
  %v796 = vadd.f32 %v627, %v795
  %797 = vmatmul.bf16.gmra.mxu0 %v493
  %v798 = vpop.f32.mrf.mxu0
  %v799 = vadd.f32 %v630, %v798
  %v800 = vpop.f32.mrf.mxu0
  %v801 = vadd.f32 %v632, %v800
  %802 = vmatmul.bf16.gmra.mxu0 %v496
  %v803 = vpop.f32.mrf.mxu0
  %v804 = vadd.f32 %v635, %v803
  %v805 = vpop.f32.mrf.mxu0
  %v806 = vadd.f32 %v637, %v805
  %807 = vmatmul.bf16.gmra.mxu0 %v499
  %v808 = vpop.f32.mrf.mxu0
  %v809 = vadd.f32 %v640, %v808
  %v810 = vpop.f32.mrf.mxu0
  %v811 = vadd.f32 %v642, %v810
  %812 = vmatmul.bf16.gmra.mxu0 %v502
  %v813 = vpop.f32.mrf.mxu0
  %v814 = vadd.f32 %v645, %v813
  %v815 = vpop.f32.mrf.mxu0
  %v816 = vadd.f32 %v647, %v815
  %817 = vmatmul.bf16.gmra.mxu0 %v505
  %v818 = vpop.f32.mrf.mxu0
  %v819 = vadd.f32 %v650, %v818
  %v820 = vpop.f32.mrf.mxu0
  %v821 = vadd.f32 %v652, %v820
  %822 = vmatmul.bf16.gmra.mxu0 %v508
  %v823 = vpop.f32.mrf.mxu0
  %v824 = vadd.f32 %v655, %v823
  %v825 = vpop.f32.mrf.mxu0
  %v826 = vadd.f32 %v657, %v825
  %827 = vmatmul.bf16.gmra.mxu0 %v511
  %v828 = vpop.f32.mrf.mxu0
  %v829 = vadd.f32 %v660, %v828
  %v830 = vpop.f32.mrf.mxu0
  %v831 = vadd.f32 %v662, %v830
  %832 = vmatmul.bf16.gmra.mxu0 %v514
  %v833 = vpop.f32.mrf.mxu0
  %v834 = vadd.f32 %v665, %v833
  %v835 = vpop.f32.mrf.mxu0
  %v836 = vadd.f32 %v667, %v835
  %837 = vmatmul.bf16.gmra.mxu0 %v517
  %v838 = vpop.f32.mrf.mxu0
  %v839 = vadd.f32 %v670, %v838
  %v840 = vpop.f32.mrf.mxu0
  %v841 = vadd.f32 %v672, %v840
  %842 = vmatmul.bf16.gmra.mxu0 %v520
  %v843 = vpop.f32.mrf.mxu0
  %v844 = vadd.f32 %v675, %v843
  %v845 = vpop.f32.mrf.mxu0
  %v846 = vadd.f32 %v677, %v845
  %847 = vmatmul.bf16.gmra.mxu0 %v523
  %v848 = vpop.f32.mrf.mxu0
  %v849 = vadd.f32 %v680, %v848
  %v850 = vpop.f32.mrf.mxu0
  %v851 = vadd.f32 %v682, %v850
  %852 = vmatmul.bf16.gmra.mxu0 %v526
  %v853 = vpop.f32.mrf.mxu0
  %v854 = vadd.f32 %v685, %v853
  %v855 = vpop.f32.mrf.mxu0
  %v856 = vadd.f32 %v687, %v855
  %857 = vmatmul.bf16.gmra.mxu0 %v529
  %v858 = vpop.f32.mrf.mxu0
  %v859 = vadd.f32 %v690, %v858
  %v860 = vpop.f32.mrf.mxu0
  %v861 = vadd.f32 %v692, %v860
  %862 = vmatmul.bf16.gmra.mxu0 %v532
  %v863 = vpop.f32.mrf.mxu0
  %v864 = vadd.f32 %v695, %v863
  %v865 = vpop.f32.mrf.mxu0
  %v866 = vadd.f32 %v697, %v865
  %867 = vmatmul.bf16.gmra.mxu0 %v535
  %v868 = vpop.f32.mrf.mxu0
  %v869 = vadd.f32 %v700, %v868
  %v870 = vpop.f32.mrf.mxu0
  %v871 = vadd.f32 %v702, %v870
  %872 = vmatmul.bf16.gmra.mxu0 %v538
  %v873 = vpop.f32.mrf.mxu0
  %v874 = vadd.f32 %v705, %v873
  %v875 = vpop.f32.mrf.mxu0
  %v876 = vadd.f32 %v707, %v875
  %877 = vdwg.mxu0
  %v878 = vmax.f32 %v719, 0.0
  %v879 = vmax.f32 %v721, 0.0
  %v880 = vmax.f32 %v724, 0.0
  %v881 = vmax.f32 %v726, 0.0
  %v882 = vmax.f32 %v729, 0.0
  %v883 = vmax.f32 %v731, 0.0
  %v884 = vmax.f32 %v734, 0.0
  %v885 = vmax.f32 %v736, 0.0
  %v886 = vmax.f32 %v739, 0.0
  %v887 = vmax.f32 %v741, 0.0
  %v888 = vmax.f32 %v744, 0.0
  %v889 = vmax.f32 %v746, 0.0
  %v890 = vmax.f32 %v749, 0.0
  %v891 = vmax.f32 %v751, 0.0
  %v892 = vmax.f32 %v754, 0.0
  %v893 = vmax.f32 %v756, 0.0
  %v894 = vmax.f32 %v759, 0.0
  %v895 = vmax.f32 %v761, 0.0
  %v896 = vmax.f32 %v764, 0.0
  %v897 = vmax.f32 %v766, 0.0
  %v898 = vmax.f32 %v769, 0.0
  %v899 = vmax.f32 %v771, 0.0
  %v900 = vmax.f32 %v774, 0.0
  %v901 = vmax.f32 %v776, 0.0
  %v902 = vmax.f32 %v779, 0.0
  %v903 = vmax.f32 %v781, 0.0
  %v904 = vmax.f32 %v784, 0.0
  %v905 = vmax.f32 %v786, 0.0
  %v906 = vmax.f32 %v789, 0.0
  %v907 = vmax.f32 %v791, 0.0
  %v908 = vmax.f32 %v794, 0.0
  %v909 = vmax.f32 %v796, 0.0
  %v910 = vmax.f32 %v799, 0.0
  %v911 = vmax.f32 %v801, 0.0
  %v912 = vmax.f32 %v804, 0.0
  %v913 = vmax.f32 %v806, 0.0
  %v914 = vmax.f32 %v809, 0.0
  %v915 = vmax.f32 %v811, 0.0
  %v916 = vmax.f32 %v814, 0.0
  %v917 = vmax.f32 %v816, 0.0
  %v918 = vmax.f32 %v819, 0.0
  %v919 = vmax.f32 %v821, 0.0
  %v920 = vmax.f32 %v824, 0.0
  %v921 = vmax.f32 %v826, 0.0
  %v922 = vmax.f32 %v829, 0.0
  %v923 = vmax.f32 %v831, 0.0
  %v924 = vmax.f32 %v834, 0.0
  %v925 = vmax.f32 %v836, 0.0
  %v926 = vmax.f32 %v839, 0.0
  %v927 = vmax.f32 %v841, 0.0
  %v928 = vmax.f32 %v844, 0.0
  %v929 = vmax.f32 %v846, 0.0
  %v930 = vmax.f32 %v849, 0.0
  %v931 = vmax.f32 %v851, 0.0
  %v932 = vmax.f32 %v854, 0.0
  %v933 = vmax.f32 %v856, 0.0
  %v934 = vmax.f32 %v859, 0.0
  %v935 = vmax.f32 %v861, 0.0
  %v936 = vmax.f32 %v864, 0.0
  %v937 = vmax.f32 %v866, 0.0
  %v938 = vmax.f32 %v869, 0.0
  %v939 = vmax.f32 %v871, 0.0
  %v940 = vmax.f32 %v874, 0.0
  %v941 = vmax.f32 %v876, 0.0
  %942 = vst.msk [vmem:[%s3] sm:$0xff] %vm443, %v878
  %943 = vst.msk [vmem:[%s3 + $0x8] sm:$0xff] %vm443, %v879
  %944 = vst.msk [vmem:[%s3 + $0x10] sm:$0xff] %vm443, %v880
  %945 = vst.msk [vmem:[%s3 + $0x18] sm:$0xff] %vm443, %v881
  %946 = vst.msk [vmem:[%s3 + $0x20] sm:$0xff] %vm443, %v882
  %947 = vst.msk [vmem:[%s3 + $0x28] sm:$0xff] %vm443, %v883
  %948 = vst.msk [vmem:[%s3 + $0x30] sm:$0xff] %vm443, %v884
  %949 = vst.msk [vmem:[%s3 + $0x38] sm:$0xff] %vm443, %v885
  %950 = vst.msk [vmem:[%s3 + $0x40] sm:$0xff] %vm443, %v886
  %951 = vst.msk [vmem:[%s3 + $0x48] sm:$0xff] %vm443, %v887
  %952 = vst.msk [vmem:[%s3 + $0x50] sm:$0xff] %vm443, %v888
  %953 = vst.msk [vmem:[%s3 + $0x58] sm:$0xff] %vm443, %v889
  %954 = vst.msk [vmem:[%s3 + $0x60] sm:$0xff] %vm443, %v890
  %955 = vst.msk [vmem:[%s3 + $0x68] sm:$0xff] %vm443, %v891
  %956 = vst.msk [vmem:[%s3 + $0x70] sm:$0xff] %vm443, %v892
  %957 = vst.msk [vmem:[%s3 + $0x78] sm:$0xff] %vm443, %v893
  %958 = vst.msk [vmem:[%s3 + $0x80] sm:$0xff] %vm443, %v894
  %959 = vst.msk [vmem:[%s3 + $0x88] sm:$0xff] %vm443, %v895
  %960 = vst.msk [vmem:[%s3 + $0x90] sm:$0xff] %vm443, %v896
  %961 = vst.msk [vmem:[%s3 + $0x98] sm:$0xff] %vm443, %v897
  %962 = vst.msk [vmem:[%s3 + $0xa0] sm:$0xff] %vm443, %v898
  %963 = vst.msk [vmem:[%s3 + $0xa8] sm:$0xff] %vm443, %v899
  %964 = vst.msk [vmem:[%s3 + $0xb0] sm:$0xff] %vm443, %v900
  %965 = vst.msk [vmem:[%s3 + $0xb8] sm:$0xff] %vm443, %v901
  %966 = vst.msk [vmem:[%s3 + $0xc0] sm:$0xff] %vm443, %v902
  %967 = vst.msk [vmem:[%s3 + $0xc8] sm:$0xff] %vm443, %v903
  %968 = vst.msk [vmem:[%s3 + $0xd0] sm:$0xff] %vm443, %v904
  %969 = vst.msk [vmem:[%s3 + $0xd8] sm:$0xff] %vm443, %v905
  %970 = vst.msk [vmem:[%s3 + $0xe0] sm:$0xff] %vm443, %v906
  %971 = vst.msk [vmem:[%s3 + $0xe8] sm:$0xff] %vm443, %v907
  %972 = vst.msk [vmem:[%s3 + $0xf0] sm:$0xff] %vm443, %v908
  %973 = vst.msk [vmem:[%s3 + $0xf8] sm:$0xff] %vm443, %v909
  %974 = vst.msk [vmem:[%s3 + $0x100] sm:$0xff] %vm443, %v910
  %975 = vst.msk [vmem:[%s3 + $0x108] sm:$0xff] %vm443, %v911
  %976 = vst.msk [vmem:[%s3 + $0x110] sm:$0xff] %vm443, %v912
  %977 = vst.msk [vmem:[%s3 + $0x118] sm:$0xff] %vm443, %v913
  %978 = vst.msk [vmem:[%s3 + $0x120] sm:$0xff] %vm443, %v914
  %979 = vst.msk [vmem:[%s3 + $0x128] sm:$0xff] %vm443, %v915
  %980 = vst.msk [vmem:[%s3 + $0x130] sm:$0xff] %vm443, %v916
  %981 = vst.msk [vmem:[%s3 + $0x138] sm:$0xff] %vm443, %v917
  %982 = vst.msk [vmem:[%s3 + $0x140] sm:$0xff] %vm443, %v918
  %983 = vst.msk [vmem:[%s3 + $0x148] sm:$0xff] %vm443, %v919
  %984 = vst.msk [vmem:[%s3 + $0x150] sm:$0xff] %vm443, %v920
  %985 = vst.msk [vmem:[%s3 + $0x158] sm:$0xff] %vm443, %v921
  %986 = vst.msk [vmem:[%s3 + $0x160] sm:$0xff] %vm443, %v922
  %987 = vst.msk [vmem:[%s3 + $0x168] sm:$0xff] %vm443, %v923
  %988 = vst.msk [vmem:[%s3 + $0x170] sm:$0xff] %vm443, %v924
  %989 = vst.msk [vmem:[%s3 + $0x178] sm:$0xff] %vm443, %v925
  %990 = vst.msk [vmem:[%s3 + $0x180] sm:$0xff] %vm443, %v926
  %991 = vst.msk [vmem:[%s3 + $0x188] sm:$0xff] %vm443, %v927
  %992 = vst.msk [vmem:[%s3 + $0x190] sm:$0xff] %vm443, %v928
  %993 = vst.msk [vmem:[%s3 + $0x198] sm:$0xff] %vm443, %v929
  %994 = vst.msk [vmem:[%s3 + $0x1a0] sm:$0xff] %vm443, %v930
  %995 = vst.msk [vmem:[%s3 + $0x1a8] sm:$0xff] %vm443, %v931
  %996 = vst.msk [vmem:[%s3 + $0x1b0] sm:$0xff] %vm443, %v932
  %997 = vst.msk [vmem:[%s3 + $0x1b8] sm:$0xff] %vm443, %v933
  %998 = vst.msk [vmem:[%s3 + $0x1c0] sm:$0xff] %vm443, %v934
  %999 = vst.msk [vmem:[%s3 + $0x1c8] sm:$0xff] %vm443, %v935
  %1000 = vst.msk [vmem:[%s3 + $0x1d0] sm:$0xff] %vm443, %v936
  %1001 = vst.msk [vmem:[%s3 + $0x1d8] sm:$0xff] %vm443, %v937
  %1002 = vst.msk [vmem:[%s3 + $0x1e0] sm:$0xff] %vm443, %v938
  %1003 = vst.msk [vmem:[%s3 + $0x1e8] sm:$0xff] %vm443, %v939
  %1004 = vst.msk [vmem:[%s3 + $0x1f0] sm:$0xff] %vm443, %v940
  %1005 = vst.msk [vmem:[%s3 + $0x1f8] sm:$0xff] %vm443, %v941
  // Predicated region
  $region14: #{confidence_network_forward.16} parent=0 // pred_check
    _
  $region15: #{confidence_network_forward.16} parent=0 // pred_check_branch
    %1007 = sbr.rel (0) target = $region17
  $region16: #{confidence_network_forward.16} parent=0 // pred_region
    _
  $region17: #{confidence_network_forward.16} parent=0 // pred_fallthru
    _
  // Predicated region
  $region18: #{confidence_network_forward.16} parent=0 // pred_check
    _
  $region19: #{confidence_network_forward.16} parent=0 // pred_check_branch
    %1009 = sbr.rel (0) target = $region21
  $region20: #{confidence_network_forward.16} parent=0 // pred_region
    _
  $region21: #{confidence_network_forward.16} parent=0 // pred_fallthru
    _

// kernel: confidence_network_forward.17
$region0: #{confidence_network_forward.17}
  #allocation0 [shape = 'u32[]', space=smem, size = 0x4, offset = 0x4, fixed_abs, tag = 'smem constant byte address 0x4 - core index']
  #allocation1 [shape = 'u32[72,128]{1,0:T(1,128)}', space=vmem, size = 0x9000, scoped, tag = 'internal scratch']
  %s0 = inlined_call_operand.vmem [shape: bf16[512,144], index: 0, kind: input, shape index: {}]
  %s1 = inlined_call_operand.vmem [shape: bf16[144,16], index: 1, kind: input, shape index: {}]
  %s2 = inlined_call_operand.vmem [shape: f32[1,16], index: 2, kind: input, shape index: {}]
  %s3 = inlined_call_operand.vmem [shape: f32[512,16], index: 3, kind: input, shape index: {}]
  %s4 = inlined_call_operand.vmem [shape: f32[512,16], index: 4, kind: output, shape index: {}]
  %s5 = sld [smem:[#allocation0]]
  $region26: #{confidence_network_forward.17} parent=0
    _
  %s7 = ssub.s32 1, %s5
  %s8 = scalar_select 0, %s7, %s5
  // Predicated region
  $region2: #{confidence_network_forward.17} parent=0 // pred_check
    _
  $region3: #{confidence_network_forward.17} parent=0 // pred_check_branch
    %10 = sbr.rel (0) target = $region5
  $region4: #{confidence_network_forward.17} parent=0 // pred_region
    _
  $region5: #{confidence_network_forward.17} parent=0 // pred_fallthru
    _
  // Predicated region
  $region6: #{confidence_network_forward.17} parent=0 // pred_check
    _
  $region7: #{confidence_network_forward.17} parent=0 // pred_check_branch
    %12 = sbr.rel (0) target = $region9
  $region8: #{confidence_network_forward.17} parent=0 // pred_region
    _
  $region9: #{confidence_network_forward.17} parent=0 // pred_fallthru
    _
  // Predicated region
  $region10: #{confidence_network_forward.17} parent=0 // pred_check
    _
  $region11: #{confidence_network_forward.17} parent=0 // pred_check_branch
    %14 = sbr.rel (0) target = $region13
  $region12: #{confidence_network_forward.17} parent=0 // pred_region
    _
  $region13: #{confidence_network_forward.17} parent=0 // pred_fallthru
    _
  // Predicated region
  $region14: #{confidence_network_forward.17} parent=0 // pred_check
    _
  $region15: #{confidence_network_forward.17} parent=0 // pred_check_branch
    %16 = sbr.rel (0) target = $region17
  $region16: #{confidence_network_forward.17} parent=0 // pred_region
    _
  $region17: #{confidence_network_forward.17} parent=0 // pred_fallthru
    _
  %v18 = vld [vmem:[%s0] sm:$0xff]
  %v19 = vld [vmem:[%s0 + $0x8] sm:$0xff]
  %v20 = vld [vmem:[%s0 + $0x10] sm:$0xff]
  %v21 = vld [vmem:[%s0 + $0x18] sm:$0xff]
  %v22 = vld [vmem:[%s0 + $0x20] sm:$0xff]
  %v23 = vld [vmem:[%s0 + $0x28] sm:$0xff]
  %v24 = vld [vmem:[%s0 + $0x30] sm:$0xff]
  %v25 = vld [vmem:[%s0 + $0x38] sm:$0xff]
  %v26 = vld [vmem:[%s0 + $0x40] sm:$0xff]
  %v27 = vld [vmem:[%s0 + $0x48] sm:$0xff]
  %v28 = vld [vmem:[%s0 + $0x50] sm:$0xff]
  %v29 = vld [vmem:[%s0 + $0x58] sm:$0xff]
  %v30 = vld [vmem:[%s0 + $0x60] sm:$0xff]
  %v31 = vld [vmem:[%s0 + $0x68] sm:$0xff]
  %v32 = vld [vmem:[%s0 + $0x70] sm:$0xff]
  %v33 = vld [vmem:[%s0 + $0x78] sm:$0xff]
  %v34 = vld [vmem:[%s0 + $0x80] sm:$0xff]
  %v35 = vld [vmem:[%s0 + $0x88] sm:$0xff]
  %v36 = vld [vmem:[%s0 + $0x90] sm:$0xff]
  %v37 = vld [vmem:[%s0 + $0x98] sm:$0xff]
  %v38 = vld [vmem:[%s0 + $0xa0] sm:$0xff]
  %v39 = vld [vmem:[%s0 + $0xa8] sm:$0xff]
  %v40 = vld [vmem:[%s0 + $0xb0] sm:$0xff]
  %v41 = vld [vmem:[%s0 + $0xb8] sm:$0xff]
  %v42 = vld [vmem:[%s0 + $0xc0] sm:$0xff]
  %v43 = vld [vmem:[%s0 + $0xc8] sm:$0xff]
  %v44 = vld [vmem:[%s0 + $0xd0] sm:$0xff]
  %v45 = vld [vmem:[%s0 + $0xd8] sm:$0xff]
  %v46 = vld [vmem:[%s0 + $0xe0] sm:$0xff]
  %v47 = vld [vmem:[%s0 + $0xe8] sm:$0xff]
  %v48 = vld [vmem:[%s0 + $0xf0] sm:$0xff]
  %v49 = vld [vmem:[%s0 + $0xf8] sm:$0xff]
  %v50 = vld [vmem:[%s0 + $0x100] sm:$0xff]
  %v51 = vld [vmem:[%s0 + $0x108] sm:$0xff]
  %v52 = vld [vmem:[%s0 + $0x110] sm:$0xff]
  %v53 = vld [vmem:[%s0 + $0x118] sm:$0xff]
  %v54 = vld [vmem:[%s0 + $0x120] sm:$0xff]
  %v55 = vld [vmem:[%s0 + $0x128] sm:$0xff]
  %v56 = vld [vmem:[%s0 + $0x130] sm:$0xff]
  %v57 = vld [vmem:[%s0 + $0x138] sm:$0xff]
  %v58 = vld [vmem:[%s0 + $0x140] sm:$0xff]
  %v59 = vld [vmem:[%s0 + $0x148] sm:$0xff]
  %v60 = vld [vmem:[%s0 + $0x150] sm:$0xff]
  %v61 = vld [vmem:[%s0 + $0x158] sm:$0xff]
  %v62 = vld [vmem:[%s0 + $0x160] sm:$0xff]
  %v63 = vld [vmem:[%s0 + $0x168] sm:$0xff]
  %v64 = vld [vmem:[%s0 + $0x170] sm:$0xff]
  %v65 = vld [vmem:[%s0 + $0x178] sm:$0xff]
  %v66 = vld [vmem:[%s0 + $0x180] sm:$0xff]
  %v67 = vld [vmem:[%s0 + $0x188] sm:$0xff]
  %v68 = vld [vmem:[%s0 + $0x190] sm:$0xff]
  %v69 = vld [vmem:[%s0 + $0x198] sm:$0xff]
  %v70 = vld [vmem:[%s0 + $0x1a0] sm:$0xff]
  %v71 = vld [vmem:[%s0 + $0x1a8] sm:$0xff]
  %v72 = vld [vmem:[%s0 + $0x1b0] sm:$0xff]
  %v73 = vld [vmem:[%s0 + $0x1b8] sm:$0xff]
  %v74 = vld [vmem:[%s0 + $0x1c0] sm:$0xff]
  %v75 = vld [vmem:[%s0 + $0x1c8] sm:$0xff]
  %v76 = vld [vmem:[%s0 + $0x1d0] sm:$0xff]
  %v77 = vld [vmem:[%s0 + $0x1d8] sm:$0xff]
  %v78 = vld [vmem:[%s0 + $0x1e0] sm:$0xff]
  %v79 = vld [vmem:[%s0 + $0x1e8] sm:$0xff]
  %v80 = vld [vmem:[%s0 + $0x1f0] sm:$0xff]
  %v81 = vld [vmem:[%s0 + $0x1f8] sm:$0xff]
  %v82 = vld [vmem:[%s1] sm:$0xf]
  %v83 = vld [vmem:[%s1 + $0x4] sm:$0xf]
  %v84 = vld [vmem:[%s1 + $0x8] sm:$0xf]
  %v85 = vld [vmem:[%s1 + $0xc] sm:$0xf]
  %v86 = vld [vmem:[%s1 + $0x10] sm:$0xf]
  %v87 = vld [vmem:[%s1 + $0x14] sm:$0xf]
  %v88 = vld [vmem:[%s1 + $0x18] sm:$0xf]
  %v89 = vld [vmem:[%s1 + $0x1c] sm:$0xf]
  %v90 = vld [vmem:[%s1 + $0x20] sm:$0xf]
  %v91 = vld [vmem:[%s1 + $0x24] sm:$0xf]
  %v92 = vld [vmem:[%s1 + $0x28] sm:$0xf]
  %v93 = vld [vmem:[%s1 + $0x2c] sm:$0xf]
  %v94 = vld [vmem:[%s1 + $0x30] sm:$0xf]
  %v95 = vld [vmem:[%s1 + $0x34] sm:$0xf]
  %v96 = vld [vmem:[%s1 + $0x38] sm:$0xf]
  %v97 = vld [vmem:[%s1 + $0x3c] sm:$0xf]
  %v98 = vld [vmem:[%s1 + $0x40] sm:$0xf]
  %v99 = vld [vmem:[%s1 + $0x44] sm:$0xf]
  %v100 = vld [vmem:[%s2] sm:$0x1]
  %v102 = vperm.slane %v100, 0
  %v168 = vunpack.c.l.b16 %v18
  %v169 = vunpack.c.h.b16 %v18
  %v170 = vunpack.c.l.b16 %v19
  %v171 = vunpack.c.h.b16 %v19
  %v172 = vunpack.c.l.b16 %v20
  %v173 = vunpack.c.h.b16 %v20
  %v174 = vunpack.c.l.b16 %v21
  %v175 = vunpack.c.h.b16 %v21
  %v176 = vunpack.c.l.b16 %v22
  %v177 = vunpack.c.h.b16 %v22
  %v178 = vunpack.c.l.b16 %v23
  %v179 = vunpack.c.h.b16 %v23
  %v180 = vunpack.c.l.b16 %v24
  %v181 = vunpack.c.h.b16 %v24
  %v182 = vunpack.c.l.b16 %v25
  %v183 = vunpack.c.h.b16 %v25
  %v184 = vunpack.c.l.b16 %v26
  %v185 = vunpack.c.h.b16 %v26
  %v186 = vunpack.c.l.b16 %v27
  %v187 = vunpack.c.h.b16 %v27
  %v188 = vunpack.c.l.b16 %v28
  %v189 = vunpack.c.h.b16 %v28
  %v190 = vunpack.c.l.b16 %v29
  %v191 = vunpack.c.h.b16 %v29
  %v192 = vunpack.c.l.b16 %v30
  %v193 = vunpack.c.h.b16 %v30
  %v194 = vunpack.c.l.b16 %v31
  %v195 = vunpack.c.h.b16 %v31
  %v196 = vunpack.c.l.b16 %v32
  %v197 = vunpack.c.h.b16 %v32
  %v198 = vunpack.c.l.b16 %v33
  %v199 = vunpack.c.h.b16 %v33
  %v200 = vunpack.c.l.b16 %v34
  %v201 = vunpack.c.h.b16 %v34
  %v202 = vunpack.c.l.b16 %v35
  %v203 = vunpack.c.h.b16 %v35
  %v204 = vunpack.c.l.b16 %v36
  %v205 = vunpack.c.h.b16 %v36
  %v206 = vunpack.c.l.b16 %v37
  %v207 = vunpack.c.h.b16 %v37
  %v208 = vunpack.c.l.b16 %v38
  %v209 = vunpack.c.h.b16 %v38
  %v210 = vunpack.c.l.b16 %v39
  %v211 = vunpack.c.h.b16 %v39
  %v212 = vunpack.c.l.b16 %v40
  %v213 = vunpack.c.h.b16 %v40
  %v214 = vunpack.c.l.b16 %v41
  %v215 = vunpack.c.h.b16 %v41
  %v216 = vunpack.c.l.b16 %v42
  %v217 = vunpack.c.h.b16 %v42
  %v218 = vunpack.c.l.b16 %v43
  %v219 = vunpack.c.h.b16 %v43
  %v220 = vunpack.c.l.b16 %v44
  %v221 = vunpack.c.h.b16 %v44
  %v222 = vunpack.c.l.b16 %v45
  %v223 = vunpack.c.h.b16 %v45
  %v224 = vunpack.c.l.b16 %v46
  %v225 = vunpack.c.h.b16 %v46
  %v226 = vunpack.c.l.b16 %v47
  %v227 = vunpack.c.h.b16 %v47
  %v228 = vunpack.c.l.b16 %v48
  %v229 = vunpack.c.h.b16 %v48
  %v230 = vunpack.c.l.b16 %v49
  %v231 = vunpack.c.h.b16 %v49
  %v232 = vunpack.c.l.b16 %v50
  %v233 = vunpack.c.h.b16 %v50
  %v234 = vunpack.c.l.b16 %v51
  %v235 = vunpack.c.h.b16 %v51
  %v236 = vunpack.c.l.b16 %v52
  %v237 = vunpack.c.h.b16 %v52
  %v238 = vunpack.c.l.b16 %v53
  %v239 = vunpack.c.h.b16 %v53
  %v240 = vunpack.c.l.b16 %v54
  %v241 = vunpack.c.h.b16 %v54
  %v242 = vunpack.c.l.b16 %v55
  %v243 = vunpack.c.h.b16 %v55
  %v244 = vunpack.c.l.b16 %v56
  %v245 = vunpack.c.h.b16 %v56
  %v246 = vunpack.c.l.b16 %v57
  %v247 = vunpack.c.h.b16 %v57
  %v248 = vunpack.c.l.b16 %v58
  %v249 = vunpack.c.h.b16 %v58
  %v250 = vunpack.c.l.b16 %v59
  %v251 = vunpack.c.h.b16 %v59
  %v252 = vunpack.c.l.b16 %v60
  %v253 = vunpack.c.h.b16 %v60
  %v254 = vunpack.c.l.b16 %v61
  %v255 = vunpack.c.h.b16 %v61
  %v256 = vunpack.c.l.b16 %v62
  %v257 = vunpack.c.h.b16 %v62
  %v258 = vunpack.c.l.b16 %v63
  %v259 = vunpack.c.h.b16 %v63
  %v260 = vunpack.c.l.b16 %v64
  %v261 = vunpack.c.h.b16 %v64
  %v262 = vunpack.c.l.b16 %v65
  %v263 = vunpack.c.h.b16 %v65
  %v264 = vunpack.c.l.b16 %v66
  %v265 = vunpack.c.h.b16 %v66
  %v266 = vunpack.c.l.b16 %v67
  %v267 = vunpack.c.h.b16 %v67
  %v268 = vunpack.c.l.b16 %v68
  %v269 = vunpack.c.h.b16 %v68
  %v270 = vunpack.c.l.b16 %v69
  %v271 = vunpack.c.h.b16 %v69
  %v272 = vunpack.c.l.b16 %v70
  %v273 = vunpack.c.h.b16 %v70
  %v274 = vunpack.c.l.b16 %v71
  %v275 = vunpack.c.h.b16 %v71
  %v276 = vunpack.c.l.b16 %v72
  %v277 = vunpack.c.h.b16 %v72
  %v278 = vunpack.c.l.b16 %v73
  %v279 = vunpack.c.h.b16 %v73
  %v280 = vunpack.c.l.b16 %v74
  %v281 = vunpack.c.h.b16 %v74
  %v282 = vunpack.c.l.b16 %v75
  %v283 = vunpack.c.h.b16 %v75
  %v284 = vunpack.c.l.b16 %v76
  %v285 = vunpack.c.h.b16 %v76
  %v286 = vunpack.c.l.b16 %v77
  %v287 = vunpack.c.h.b16 %v77
  %v288 = vunpack.c.l.b16 %v78
  %v289 = vunpack.c.h.b16 %v78
  %v290 = vunpack.c.l.b16 %v79
  %v291 = vunpack.c.h.b16 %v79
  %v292 = vunpack.c.l.b16 %v80
  %v293 = vunpack.c.h.b16 %v80
  %v294 = vunpack.c.l.b16 %v81
  %v295 = vunpack.c.h.b16 %v81
  %v296 = vpack.c.b16 %v170, %v168
  %v297 = vpack.c.b16 %v171, %v169
  %v298 = vpack.c.b16 %v174, %v172
  %v299 = vpack.c.b16 %v175, %v173
  %v300 = vpack.c.b16 %v178, %v176
  %v301 = vpack.c.b16 %v179, %v177
  %v302 = vpack.c.b16 %v182, %v180
  %v303 = vpack.c.b16 %v183, %v181
  %v304 = vpack.c.b16 %v186, %v184
  %v305 = vpack.c.b16 %v187, %v185
  %v306 = vpack.c.b16 %v190, %v188
  %v307 = vpack.c.b16 %v191, %v189
  %v308 = vpack.c.b16 %v194, %v192
  %v309 = vpack.c.b16 %v195, %v193
  %v310 = vpack.c.b16 %v198, %v196
  %v311 = vpack.c.b16 %v199, %v197
  %v312 = vpack.c.b16 %v202, %v200
  %v313 = vpack.c.b16 %v203, %v201
  %v314 = vpack.c.b16 %v206, %v204
  %v315 = vpack.c.b16 %v207, %v205
  %v316 = vpack.c.b16 %v210, %v208
  %v317 = vpack.c.b16 %v211, %v209
  %v318 = vpack.c.b16 %v214, %v212
  %v319 = vpack.c.b16 %v215, %v213
  %v320 = vpack.c.b16 %v218, %v216
  %v321 = vpack.c.b16 %v219, %v217
  %v322 = vpack.c.b16 %v222, %v220
  %v323 = vpack.c.b16 %v223, %v221
  %v324 = vpack.c.b16 %v226, %v224
  %v325 = vpack.c.b16 %v227, %v225
  %v326 = vpack.c.b16 %v230, %v228
  %v327 = vpack.c.b16 %v231, %v229
  %v328 = vpack.c.b16 %v234, %v232
  %v329 = vpack.c.b16 %v235, %v233
  %v330 = vpack.c.b16 %v238, %v236
  %v331 = vpack.c.b16 %v239, %v237
  %v332 = vpack.c.b16 %v242, %v240
  %v333 = vpack.c.b16 %v243, %v241
  %v334 = vpack.c.b16 %v246, %v244
  %v335 = vpack.c.b16 %v247, %v245
  %v336 = vpack.c.b16 %v250, %v248
  %v337 = vpack.c.b16 %v251, %v249
  %v338 = vpack.c.b16 %v254, %v252
  %v339 = vpack.c.b16 %v255, %v253
  %v340 = vpack.c.b16 %v258, %v256
  %v341 = vpack.c.b16 %v259, %v257
  %v342 = vpack.c.b16 %v262, %v260
  %v343 = vpack.c.b16 %v263, %v261
  %v344 = vpack.c.b16 %v266, %v264
  %v345 = vpack.c.b16 %v267, %v265
  %v346 = vpack.c.b16 %v270, %v268
  %v347 = vpack.c.b16 %v271, %v269
  %v348 = vpack.c.b16 %v274, %v272
  %v349 = vpack.c.b16 %v275, %v273
  %v350 = vpack.c.b16 %v278, %v276
  %v351 = vpack.c.b16 %v279, %v277
  %v352 = vpack.c.b16 %v282, %v280
  %v353 = vpack.c.b16 %v283, %v281
  %v354 = vpack.c.b16 %v286, %v284
  %v355 = vpack.c.b16 %v287, %v285
  %v356 = vpack.c.b16 %v290, %v288
  %v357 = vpack.c.b16 %v291, %v289
  %v358 = vpack.c.b16 %v294, %v292
  %v359 = vpack.c.b16 %v295, %v293
  %v410 = vunpack.c.l.b16 %v82
  %v411 = vunpack.c.l.b16 %v83
  %v412 = vunpack.c.l.b16 %v84
  %v413 = vunpack.c.l.b16 %v85
  %v414 = vunpack.c.l.b16 %v86
  %v415 = vunpack.c.l.b16 %v87
  %v416 = vunpack.c.l.b16 %v88
  %v417 = vunpack.c.l.b16 %v89
  %v418 = vunpack.c.l.b16 %v90
  %v419 = vunpack.c.l.b16 %v91
  %v420 = vunpack.c.l.b16 %v92
  %v421 = vunpack.c.l.b16 %v93
  %v422 = vunpack.c.l.b16 %v94
  %v423 = vunpack.c.l.b16 %v95
  %v424 = vunpack.c.l.b16 %v96
  %v425 = vunpack.c.l.b16 %v97
  %v426 = vunpack.c.l.b16 %v98
  %v427 = vunpack.c.l.b16 %v99
  %v428 = vpack.c.b16 %v411, %v410
  %v429 = vpack.c.b16 %v413, %v412
  %v430 = vpack.c.b16 %v415, %v414
  %v431 = vpack.c.b16 %v417, %v416
  %v432 = vpack.c.b16 %v419, %v418
  %v433 = vpack.c.b16 %v421, %v420
  %v434 = vpack.c.b16 %v423, %v422
  %v435 = vpack.c.b16 %v425, %v424
  %v436 = vpack.c.b16 %v427, %v426
  %vm446 = vcmask 130048
  %v448 = vsel %vm446, %v297, 0
  %v451 = vsel %vm446, %v299, 0
  %v454 = vsel %vm446, %v301, 0
  %v457 = vsel %vm446, %v303, 0
  %v460 = vsel %vm446, %v305, 0
  %v463 = vsel %vm446, %v307, 0
  %v466 = vsel %vm446, %v309, 0
  %v469 = vsel %vm446, %v311, 0
  %v472 = vsel %vm446, %v313, 0
  %v475 = vsel %vm446, %v315, 0
  %v478 = vsel %vm446, %v317, 0
  %v481 = vsel %vm446, %v319, 0
  %v484 = vsel %vm446, %v321, 0
  %v487 = vsel %vm446, %v323, 0
  %v490 = vsel %vm446, %v325, 0
  %v493 = vsel %vm446, %v327, 0
  %v496 = vsel %vm446, %v329, 0
  %v499 = vsel %vm446, %v331, 0
  %v502 = vsel %vm446, %v333, 0
  %v505 = vsel %vm446, %v335, 0
  %v508 = vsel %vm446, %v337, 0
  %v511 = vsel %vm446, %v339, 0
  %v514 = vsel %vm446, %v341, 0
  %v517 = vsel %vm446, %v343, 0
  %v520 = vsel %vm446, %v345, 0
  %v523 = vsel %vm446, %v347, 0
  %v526 = vsel %vm446, %v349, 0
  %v529 = vsel %vm446, %v351, 0
  %v532 = vsel %vm446, %v353, 0
  %v535 = vsel %vm446, %v355, 0
  %v538 = vsel %vm446, %v357, 0
  %v541 = vsel %vm446, %v359, 0
  %543 = vmatpush.bf16.msra.mxu0 %v435
  %544 = vmatpush.bf16.msra.mxu0 %v434
  %545 = vmatpush.bf16.msra.mxu0 %v433
  %546 = vmatpush.bf16.msra.mxu0 %v432
  %547 = vmatpush.bf16.msra.mxu0 %v431
  %548 = vmatpush.bf16.msra.mxu0 %v430
  %549 = vmatpush.bf16.msra.mxu0 %v429
  %550 = vmatpush.bf16.msra.mxu0 %v428
  %551 = vmatmul.bf16.gmra.mxu0 %v296
  %v552 = vpop.f32.mrf.mxu0
  %v553 = vadd.f32 %v102, %v552
  %v554 = vpop.f32.mrf.mxu0
  %v555 = vadd.f32 %v102, %v554
  %556 = vmatmul.bf16.gmra.mxu0 %v298
  %v557 = vpop.f32.mrf.mxu0
  %v558 = vadd.f32 %v102, %v557
  %v559 = vpop.f32.mrf.mxu0
  %v560 = vadd.f32 %v102, %v559
  %561 = vmatmul.bf16.gmra.mxu0 %v300
  %v562 = vpop.f32.mrf.mxu0
  %v563 = vadd.f32 %v102, %v562
  %v564 = vpop.f32.mrf.mxu0
  %v565 = vadd.f32 %v102, %v564
  %566 = vmatmul.bf16.gmra.mxu0 %v302
  %v567 = vpop.f32.mrf.mxu0
  %v568 = vadd.f32 %v102, %v567
  %v569 = vpop.f32.mrf.mxu0
  %v570 = vadd.f32 %v102, %v569
  %571 = vmatmul.bf16.gmra.mxu0 %v304
  %v572 = vpop.f32.mrf.mxu0
  %v573 = vadd.f32 %v102, %v572
  %v574 = vpop.f32.mrf.mxu0
  %v575 = vadd.f32 %v102, %v574
  %576 = vmatmul.bf16.gmra.mxu0 %v306
  %v577 = vpop.f32.mrf.mxu0
  %v578 = vadd.f32 %v102, %v577
  %v579 = vpop.f32.mrf.mxu0
  %v580 = vadd.f32 %v102, %v579
  %581 = vmatmul.bf16.gmra.mxu0 %v308
  %v582 = vpop.f32.mrf.mxu0
  %v583 = vadd.f32 %v102, %v582
  %v584 = vpop.f32.mrf.mxu0
  %v585 = vadd.f32 %v102, %v584
  %586 = vmatmul.bf16.gmra.mxu0 %v310
  %v587 = vpop.f32.mrf.mxu0
  %v588 = vadd.f32 %v102, %v587
  %v589 = vpop.f32.mrf.mxu0
  %v590 = vadd.f32 %v102, %v589
  %591 = vmatmul.bf16.gmra.mxu0 %v312
  %v592 = vpop.f32.mrf.mxu0
  %v593 = vadd.f32 %v102, %v592
  %v594 = vpop.f32.mrf.mxu0
  %v595 = vadd.f32 %v102, %v594
  %596 = vmatmul.bf16.gmra.mxu0 %v314
  %v597 = vpop.f32.mrf.mxu0
  %v598 = vadd.f32 %v102, %v597
  %v599 = vpop.f32.mrf.mxu0
  %v600 = vadd.f32 %v102, %v599
  %601 = vmatmul.bf16.gmra.mxu0 %v316
  %v602 = vpop.f32.mrf.mxu0
  %v603 = vadd.f32 %v102, %v602
  %v604 = vpop.f32.mrf.mxu0
  %v605 = vadd.f32 %v102, %v604
  %606 = vmatmul.bf16.gmra.mxu0 %v318
  %v607 = vpop.f32.mrf.mxu0
  %v608 = vadd.f32 %v102, %v607
  %v609 = vpop.f32.mrf.mxu0
  %v610 = vadd.f32 %v102, %v609
  %611 = vmatmul.bf16.gmra.mxu0 %v320
  %v612 = vpop.f32.mrf.mxu0
  %v613 = vadd.f32 %v102, %v612
  %v614 = vpop.f32.mrf.mxu0
  %v615 = vadd.f32 %v102, %v614
  %616 = vmatmul.bf16.gmra.mxu0 %v322
  %v617 = vpop.f32.mrf.mxu0
  %v618 = vadd.f32 %v102, %v617
  %v619 = vpop.f32.mrf.mxu0
  %v620 = vadd.f32 %v102, %v619
  %621 = vmatmul.bf16.gmra.mxu0 %v324
  %v622 = vpop.f32.mrf.mxu0
  %v623 = vadd.f32 %v102, %v622
  %v624 = vpop.f32.mrf.mxu0
  %v625 = vadd.f32 %v102, %v624
  %626 = vmatmul.bf16.gmra.mxu0 %v326
  %v627 = vpop.f32.mrf.mxu0
  %v628 = vadd.f32 %v102, %v627
  %v629 = vpop.f32.mrf.mxu0
  %v630 = vadd.f32 %v102, %v629
  %631 = vmatmul.bf16.gmra.mxu0 %v328
  %v632 = vpop.f32.mrf.mxu0
  %v633 = vadd.f32 %v102, %v632
  %v634 = vpop.f32.mrf.mxu0
  %v635 = vadd.f32 %v102, %v634
  %636 = vmatmul.bf16.gmra.mxu0 %v330
  %v637 = vpop.f32.mrf.mxu0
  %v638 = vadd.f32 %v102, %v637
  %v639 = vpop.f32.mrf.mxu0
  %v640 = vadd.f32 %v102, %v639
  %641 = vmatmul.bf16.gmra.mxu0 %v332
  %v642 = vpop.f32.mrf.mxu0
  %v643 = vadd.f32 %v102, %v642
  %v644 = vpop.f32.mrf.mxu0
  %v645 = vadd.f32 %v102, %v644
  %646 = vmatmul.bf16.gmra.mxu0 %v334
  %v647 = vpop.f32.mrf.mxu0
  %v648 = vadd.f32 %v102, %v647
  %v649 = vpop.f32.mrf.mxu0
  %v650 = vadd.f32 %v102, %v649
  %651 = vmatmul.bf16.gmra.mxu0 %v336
  %v652 = vpop.f32.mrf.mxu0
  %v653 = vadd.f32 %v102, %v652
  %v654 = vpop.f32.mrf.mxu0
  %v655 = vadd.f32 %v102, %v654
  %656 = vmatmul.bf16.gmra.mxu0 %v338
  %v657 = vpop.f32.mrf.mxu0
  %v658 = vadd.f32 %v102, %v657
  %v659 = vpop.f32.mrf.mxu0
  %v660 = vadd.f32 %v102, %v659
  %661 = vmatmul.bf16.gmra.mxu0 %v340
  %v662 = vpop.f32.mrf.mxu0
  %v663 = vadd.f32 %v102, %v662
  %v664 = vpop.f32.mrf.mxu0
  %v665 = vadd.f32 %v102, %v664
  %666 = vmatmul.bf16.gmra.mxu0 %v342
  %v667 = vpop.f32.mrf.mxu0
  %v668 = vadd.f32 %v102, %v667
  %v669 = vpop.f32.mrf.mxu0
  %v670 = vadd.f32 %v102, %v669
  %671 = vmatmul.bf16.gmra.mxu0 %v344
  %v672 = vpop.f32.mrf.mxu0
  %v673 = vadd.f32 %v102, %v672
  %v674 = vpop.f32.mrf.mxu0
  %v675 = vadd.f32 %v102, %v674
  %676 = vmatmul.bf16.gmra.mxu0 %v346
  %v677 = vpop.f32.mrf.mxu0
  %v678 = vadd.f32 %v102, %v677
  %v679 = vpop.f32.mrf.mxu0
  %v680 = vadd.f32 %v102, %v679
  %681 = vmatmul.bf16.gmra.mxu0 %v348
  %v682 = vpop.f32.mrf.mxu0
  %v683 = vadd.f32 %v102, %v682
  %v684 = vpop.f32.mrf.mxu0
  %v685 = vadd.f32 %v102, %v684
  %686 = vmatmul.bf16.gmra.mxu0 %v350
  %v687 = vpop.f32.mrf.mxu0
  %v688 = vadd.f32 %v102, %v687
  %v689 = vpop.f32.mrf.mxu0
  %v690 = vadd.f32 %v102, %v689
  %691 = vmatmul.bf16.gmra.mxu0 %v352
  %v692 = vpop.f32.mrf.mxu0
  %v693 = vadd.f32 %v102, %v692
  %v694 = vpop.f32.mrf.mxu0
  %v695 = vadd.f32 %v102, %v694
  %696 = vmatmul.bf16.gmra.mxu0 %v354
  %v697 = vpop.f32.mrf.mxu0
  %v698 = vadd.f32 %v102, %v697
  %v699 = vpop.f32.mrf.mxu0
  %v700 = vadd.f32 %v102, %v699
  %701 = vmatmul.bf16.gmra.mxu0 %v356
  %v702 = vpop.f32.mrf.mxu0
  %v703 = vadd.f32 %v102, %v702
  %v704 = vpop.f32.mrf.mxu0
  %v705 = vadd.f32 %v102, %v704
  %706 = vmatmul.bf16.gmra.mxu0 %v358
  %v707 = vpop.f32.mrf.mxu0
  %v708 = vadd.f32 %v102, %v707
  %v709 = vpop.f32.mrf.mxu0
  %v710 = vadd.f32 %v102, %v709
  %711 = vdwg.mxu0
  %712 = vmatpush.bf16.msra.mxu0 0
  %713 = vmatpush.bf16.msra.mxu0 0
  %714 = vmatpush.bf16.msra.mxu0 0
  %715 = vmatpush.bf16.msra.mxu0 0
  %716 = vmatpush.bf16.msra.mxu0 0
  %717 = vmatpush.bf16.msra.mxu0 0
  %718 = vmatpush.bf16.msra.mxu0 0
  %719 = vmatpush.bf16.msra.mxu0 %v436
  %720 = vmatmul.bf16.gmra.mxu0 %v448
  %v721 = vpop.f32.mrf.mxu0
  %v722 = vadd.f32 %v553, %v721
  %v723 = vpop.f32.mrf.mxu0
  %v724 = vadd.f32 %v555, %v723
  %725 = vmatmul.bf16.gmra.mxu0 %v451
  %v726 = vpop.f32.mrf.mxu0
  %v727 = vadd.f32 %v558, %v726
  %v728 = vpop.f32.mrf.mxu0
  %v729 = vadd.f32 %v560, %v728
  %730 = vmatmul.bf16.gmra.mxu0 %v454
  %v731 = vpop.f32.mrf.mxu0
  %v732 = vadd.f32 %v563, %v731
  %v733 = vpop.f32.mrf.mxu0
  %v734 = vadd.f32 %v565, %v733
  %735 = vmatmul.bf16.gmra.mxu0 %v457
  %v736 = vpop.f32.mrf.mxu0
  %v737 = vadd.f32 %v568, %v736
  %v738 = vpop.f32.mrf.mxu0
  %v739 = vadd.f32 %v570, %v738
  %740 = vmatmul.bf16.gmra.mxu0 %v460
  %v741 = vpop.f32.mrf.mxu0
  %v742 = vadd.f32 %v573, %v741
  %v743 = vpop.f32.mrf.mxu0
  %v744 = vadd.f32 %v575, %v743
  %745 = vmatmul.bf16.gmra.mxu0 %v463
  %v746 = vpop.f32.mrf.mxu0
  %v747 = vadd.f32 %v578, %v746
  %v748 = vpop.f32.mrf.mxu0
  %v749 = vadd.f32 %v580, %v748
  %750 = vmatmul.bf16.gmra.mxu0 %v466
  %v751 = vpop.f32.mrf.mxu0
  %v752 = vadd.f32 %v583, %v751
  %v753 = vpop.f32.mrf.mxu0
  %v754 = vadd.f32 %v585, %v753
  %755 = vmatmul.bf16.gmra.mxu0 %v469
  %v756 = vpop.f32.mrf.mxu0
  %v757 = vadd.f32 %v588, %v756
  %v758 = vpop.f32.mrf.mxu0
  %v759 = vadd.f32 %v590, %v758
  %760 = vmatmul.bf16.gmra.mxu0 %v472
  %v761 = vpop.f32.mrf.mxu0
  %v762 = vadd.f32 %v593, %v761
  %v763 = vpop.f32.mrf.mxu0
  %v764 = vadd.f32 %v595, %v763
  %765 = vmatmul.bf16.gmra.mxu0 %v475
  %v766 = vpop.f32.mrf.mxu0
  %v767 = vadd.f32 %v598, %v766
  %v768 = vpop.f32.mrf.mxu0
  %v769 = vadd.f32 %v600, %v768
  %770 = vmatmul.bf16.gmra.mxu0 %v478
  %v771 = vpop.f32.mrf.mxu0
  %v772 = vadd.f32 %v603, %v771
  %v773 = vpop.f32.mrf.mxu0
  %v774 = vadd.f32 %v605, %v773
  %775 = vmatmul.bf16.gmra.mxu0 %v481
  %v776 = vpop.f32.mrf.mxu0
  %v777 = vadd.f32 %v608, %v776
  %v778 = vpop.f32.mrf.mxu0
  %v779 = vadd.f32 %v610, %v778
  %780 = vmatmul.bf16.gmra.mxu0 %v484
  %v781 = vpop.f32.mrf.mxu0
  %v782 = vadd.f32 %v613, %v781
  %v783 = vpop.f32.mrf.mxu0
  %v784 = vadd.f32 %v615, %v783
  %785 = vmatmul.bf16.gmra.mxu0 %v487
  %v786 = vpop.f32.mrf.mxu0
  %v787 = vadd.f32 %v618, %v786
  %v788 = vpop.f32.mrf.mxu0
  %v789 = vadd.f32 %v620, %v788
  %790 = vmatmul.bf16.gmra.mxu0 %v490
  %v791 = vpop.f32.mrf.mxu0
  %v792 = vadd.f32 %v623, %v791
  %v793 = vpop.f32.mrf.mxu0
  %v794 = vadd.f32 %v625, %v793
  %795 = vmatmul.bf16.gmra.mxu0 %v493
  %v796 = vpop.f32.mrf.mxu0
  %v797 = vadd.f32 %v628, %v796
  %v798 = vpop.f32.mrf.mxu0
  %v799 = vadd.f32 %v630, %v798
  %800 = vmatmul.bf16.gmra.mxu0 %v496
  %v801 = vpop.f32.mrf.mxu0
  %v802 = vadd.f32 %v633, %v801
  %v803 = vpop.f32.mrf.mxu0
  %v804 = vadd.f32 %v635, %v803
  %805 = vmatmul.bf16.gmra.mxu0 %v499
  %v806 = vpop.f32.mrf.mxu0
  %v807 = vadd.f32 %v638, %v806
  %v808 = vpop.f32.mrf.mxu0
  %v809 = vadd.f32 %v640, %v808
  %810 = vmatmul.bf16.gmra.mxu0 %v502
  %v811 = vpop.f32.mrf.mxu0
  %v812 = vadd.f32 %v643, %v811
  %v813 = vpop.f32.mrf.mxu0
  %v814 = vadd.f32 %v645, %v813
  %815 = vmatmul.bf16.gmra.mxu0 %v505
  %v816 = vpop.f32.mrf.mxu0
  %v817 = vadd.f32 %v648, %v816
  %v818 = vpop.f32.mrf.mxu0
  %v819 = vadd.f32 %v650, %v818
  %820 = vmatmul.bf16.gmra.mxu0 %v508
  %v821 = vpop.f32.mrf.mxu0
  %v822 = vadd.f32 %v653, %v821
  %v823 = vpop.f32.mrf.mxu0
  %v824 = vadd.f32 %v655, %v823
  %825 = vmatmul.bf16.gmra.mxu0 %v511
  %v826 = vpop.f32.mrf.mxu0
  %v827 = vadd.f32 %v658, %v826
  %v828 = vpop.f32.mrf.mxu0
  %v829 = vadd.f32 %v660, %v828
  %830 = vmatmul.bf16.gmra.mxu0 %v514
  %v831 = vpop.f32.mrf.mxu0
  %v832 = vadd.f32 %v663, %v831
  %v833 = vpop.f32.mrf.mxu0
  %v834 = vadd.f32 %v665, %v833
  %835 = vmatmul.bf16.gmra.mxu0 %v517
  %v836 = vpop.f32.mrf.mxu0
  %v837 = vadd.f32 %v668, %v836
  %v838 = vpop.f32.mrf.mxu0
  %v839 = vadd.f32 %v670, %v838
  %840 = vmatmul.bf16.gmra.mxu0 %v520
  %v841 = vpop.f32.mrf.mxu0
  %v842 = vadd.f32 %v673, %v841
  %v843 = vpop.f32.mrf.mxu0
  %v844 = vadd.f32 %v675, %v843
  %845 = vmatmul.bf16.gmra.mxu0 %v523
  %v846 = vpop.f32.mrf.mxu0
  %v847 = vadd.f32 %v678, %v846
  %v848 = vpop.f32.mrf.mxu0
  %v849 = vadd.f32 %v680, %v848
  %850 = vmatmul.bf16.gmra.mxu0 %v526
  %v851 = vpop.f32.mrf.mxu0
  %v852 = vadd.f32 %v683, %v851
  %v853 = vpop.f32.mrf.mxu0
  %v854 = vadd.f32 %v685, %v853
  %855 = vmatmul.bf16.gmra.mxu0 %v529
  %v856 = vpop.f32.mrf.mxu0
  %v857 = vadd.f32 %v688, %v856
  %v858 = vpop.f32.mrf.mxu0
  %v859 = vadd.f32 %v690, %v858
  %860 = vmatmul.bf16.gmra.mxu0 %v532
  %v861 = vpop.f32.mrf.mxu0
  %v862 = vadd.f32 %v693, %v861
  %v863 = vpop.f32.mrf.mxu0
  %v864 = vadd.f32 %v695, %v863
  %865 = vmatmul.bf16.gmra.mxu0 %v535
  %v866 = vpop.f32.mrf.mxu0
  %v867 = vadd.f32 %v698, %v866
  %v868 = vpop.f32.mrf.mxu0
  %v869 = vadd.f32 %v700, %v868
  %870 = vmatmul.bf16.gmra.mxu0 %v538
  %v871 = vpop.f32.mrf.mxu0
  %v872 = vadd.f32 %v703, %v871
  %v873 = vpop.f32.mrf.mxu0
  %v874 = vadd.f32 %v705, %v873
  %875 = vmatmul.bf16.gmra.mxu0 %v541
  %v876 = vpop.f32.mrf.mxu0
  %v877 = vadd.f32 %v708, %v876
  %v878 = vpop.f32.mrf.mxu0
  %v879 = vadd.f32 %v710, %v878
  %880 = vdwg.mxu0
  %v881 = vld [vmem:[%s3] sm:$0xff]
  %v882 = vld [vmem:[%s3 + $0x8] sm:$0xff]
  %v883 = vld [vmem:[%s3 + $0x10] sm:$0xff]
  %v884 = vld [vmem:[%s3 + $0x18] sm:$0xff]
  %v885 = vld [vmem:[%s3 + $0x20] sm:$0xff]
  %v886 = vld [vmem:[%s3 + $0x28] sm:$0xff]
  %v887 = vld [vmem:[%s3 + $0x30] sm:$0xff]
  %v888 = vld [vmem:[%s3 + $0x38] sm:$0xff]
  %v889 = vld [vmem:[%s3 + $0x40] sm:$0xff]
  %v890 = vld [vmem:[%s3 + $0x48] sm:$0xff]
  %v891 = vld [vmem:[%s3 + $0x50] sm:$0xff]
  %v892 = vld [vmem:[%s3 + $0x58] sm:$0xff]
  %v893 = vld [vmem:[%s3 + $0x60] sm:$0xff]
  %v894 = vld [vmem:[%s3 + $0x68] sm:$0xff]
  %v895 = vld [vmem:[%s3 + $0x70] sm:$0xff]
  %v896 = vld [vmem:[%s3 + $0x78] sm:$0xff]
  %v897 = vld [vmem:[%s3 + $0x80] sm:$0xff]
  %v898 = vld [vmem:[%s3 + $0x88] sm:$0xff]
  %v899 = vld [vmem:[%s3 + $0x90] sm:$0xff]
  %v900 = vld [vmem:[%s3 + $0x98] sm:$0xff]
  %v901 = vld [vmem:[%s3 + $0xa0] sm:$0xff]
  %v902 = vld [vmem:[%s3 + $0xa8] sm:$0xff]
  %v903 = vld [vmem:[%s3 + $0xb0] sm:$0xff]
  %v904 = vld [vmem:[%s3 + $0xb8] sm:$0xff]
  %v905 = vld [vmem:[%s3 + $0xc0] sm:$0xff]
  %v906 = vld [vmem:[%s3 + $0xc8] sm:$0xff]
  %v907 = vld [vmem:[%s3 + $0xd0] sm:$0xff]
  %v908 = vld [vmem:[%s3 + $0xd8] sm:$0xff]
  %v909 = vld [vmem:[%s3 + $0xe0] sm:$0xff]
  %v910 = vld [vmem:[%s3 + $0xe8] sm:$0xff]
  %v911 = vld [vmem:[%s3 + $0xf0] sm:$0xff]
  %v912 = vld [vmem:[%s3 + $0xf8] sm:$0xff]
  %v913 = vld [vmem:[%s3 + $0x100] sm:$0xff]
  %v914 = vld [vmem:[%s3 + $0x108] sm:$0xff]
  %v915 = vld [vmem:[%s3 + $0x110] sm:$0xff]
  %v916 = vld [vmem:[%s3 + $0x118] sm:$0xff]
  %v917 = vld [vmem:[%s3 + $0x120] sm:$0xff]
  %v918 = vld [vmem:[%s3 + $0x128] sm:$0xff]
  %v919 = vld [vmem:[%s3 + $0x130] sm:$0xff]
  %v920 = vld [vmem:[%s3 + $0x138] sm:$0xff]
  %v921 = vld [vmem:[%s3 + $0x140] sm:$0xff]
  %v922 = vld [vmem:[%s3 + $0x148] sm:$0xff]
  %v923 = vld [vmem:[%s3 + $0x150] sm:$0xff]
  %v924 = vld [vmem:[%s3 + $0x158] sm:$0xff]
  %v925 = vld [vmem:[%s3 + $0x160] sm:$0xff]
  %v926 = vld [vmem:[%s3 + $0x168] sm:$0xff]
  %v927 = vld [vmem:[%s3 + $0x170] sm:$0xff]
  %v928 = vld [vmem:[%s3 + $0x178] sm:$0xff]
  %v929 = vld [vmem:[%s3 + $0x180] sm:$0xff]
  %v930 = vld [vmem:[%s3 + $0x188] sm:$0xff]
  %v931 = vld [vmem:[%s3 + $0x190] sm:$0xff]
  %v932 = vld [vmem:[%s3 + $0x198] sm:$0xff]
  %v933 = vld [vmem:[%s3 + $0x1a0] sm:$0xff]
  %v934 = vld [vmem:[%s3 + $0x1a8] sm:$0xff]
  %v935 = vld [vmem:[%s3 + $0x1b0] sm:$0xff]
  %v936 = vld [vmem:[%s3 + $0x1b8] sm:$0xff]
  %v937 = vld [vmem:[%s3 + $0x1c0] sm:$0xff]
  %v938 = vld [vmem:[%s3 + $0x1c8] sm:$0xff]
  %v939 = vld [vmem:[%s3 + $0x1d0] sm:$0xff]
  %v940 = vld [vmem:[%s3 + $0x1d8] sm:$0xff]
  %v941 = vld [vmem:[%s3 + $0x1e0] sm:$0xff]
  %v942 = vld [vmem:[%s3 + $0x1e8] sm:$0xff]
  %v943 = vld [vmem:[%s3 + $0x1f0] sm:$0xff]
  %v944 = vld [vmem:[%s3 + $0x1f8] sm:$0xff]
  %v945 = vadd.f32 %v722, %v881
  %v946 = vadd.f32 %v724, %v882
  %v947 = vadd.f32 %v727, %v883
  %v948 = vadd.f32 %v729, %v884
  %v949 = vadd.f32 %v732, %v885
  %v950 = vadd.f32 %v734, %v886
  %v951 = vadd.f32 %v737, %v887
  %v952 = vadd.f32 %v739, %v888
  %v953 = vadd.f32 %v742, %v889
  %v954 = vadd.f32 %v744, %v890
  %v955 = vadd.f32 %v747, %v891
  %v956 = vadd.f32 %v749, %v892
  %v957 = vadd.f32 %v752, %v893
  %v958 = vadd.f32 %v754, %v894
  %v959 = vadd.f32 %v757, %v895
  %v960 = vadd.f32 %v759, %v896
  %v961 = vadd.f32 %v762, %v897
  %v962 = vadd.f32 %v764, %v898
  %v963 = vadd.f32 %v767, %v899
  %v964 = vadd.f32 %v769, %v900
  %v965 = vadd.f32 %v772, %v901
  %v966 = vadd.f32 %v774, %v902
  %v967 = vadd.f32 %v777, %v903
  %v968 = vadd.f32 %v779, %v904
  %v969 = vadd.f32 %v782, %v905
  %v970 = vadd.f32 %v784, %v906
  %v971 = vadd.f32 %v787, %v907
  %v972 = vadd.f32 %v789, %v908
  %v973 = vadd.f32 %v792, %v909
  %v974 = vadd.f32 %v794, %v910
  %v975 = vadd.f32 %v797, %v911
  %v976 = vadd.f32 %v799, %v912
  %v977 = vadd.f32 %v802, %v913
  %v978 = vadd.f32 %v804, %v914
  %v979 = vadd.f32 %v807, %v915
  %v980 = vadd.f32 %v809, %v916
  %v981 = vadd.f32 %v812, %v917
  %v982 = vadd.f32 %v814, %v918
  %v983 = vadd.f32 %v817, %v919
  %v984 = vadd.f32 %v819, %v920
  %v985 = vadd.f32 %v822, %v921
  %v986 = vadd.f32 %v824, %v922
  %v987 = vadd.f32 %v827, %v923
  %v988 = vadd.f32 %v829, %v924
  %v989 = vadd.f32 %v832, %v925
  %v990 = vadd.f32 %v834, %v926
  %v991 = vadd.f32 %v837, %v927
  %v992 = vadd.f32 %v839, %v928
  %v993 = vadd.f32 %v842, %v929
  %v994 = vadd.f32 %v844, %v930
  %v995 = vadd.f32 %v847, %v931
  %v996 = vadd.f32 %v849, %v932
  %v997 = vadd.f32 %v852, %v933
  %v998 = vadd.f32 %v854, %v934
  %v999 = vadd.f32 %v857, %v935
  %v1000 = vadd.f32 %v859, %v936
  %v1001 = vadd.f32 %v862, %v937
  %v1002 = vadd.f32 %v864, %v938
  %v1003 = vadd.f32 %v867, %v939
  %v1004 = vadd.f32 %v869, %v940
  %v1005 = vadd.f32 %v872, %v941
  %v1006 = vadd.f32 %v874, %v942
  %v1007 = vadd.f32 %v877, %v943
  %v1008 = vadd.f32 %v879, %v944
  %v1009 = vmax.f32 %v945, 0.0
  %v1010 = vmax.f32 %v946, 0.0
  %v1011 = vmax.f32 %v947, 0.0
  %v1012 = vmax.f32 %v948, 0.0
  %v1013 = vmax.f32 %v949, 0.0
  %v1014 = vmax.f32 %v950, 0.0
  %v1015 = vmax.f32 %v951, 0.0
  %v1016 = vmax.f32 %v952, 0.0
  %v1017 = vmax.f32 %v953, 0.0
  %v1018 = vmax.f32 %v954, 0.0
  %v1019 = vmax.f32 %v955, 0.0
  %v1020 = vmax.f32 %v956, 0.0
  %v1021 = vmax.f32 %v957, 0.0
  %v1022 = vmax.f32 %v958, 0.0
  %v1023 = vmax.f32 %v959, 0.0
  %v1024 = vmax.f32 %v960, 0.0
  %v1025 = vmax.f32 %v961, 0.0
  %v1026 = vmax.f32 %v962, 0.0
  %v1027 = vmax.f32 %v963, 0.0
  %v1028 = vmax.f32 %v964, 0.0
  %v1029 = vmax.f32 %v965, 0.0
  %v1030 = vmax.f32 %v966, 0.0
  %v1031 = vmax.f32 %v967, 0.0
  %v1032 = vmax.f32 %v968, 0.0
  %v1033 = vmax.f32 %v969, 0.0
  %v1034 = vmax.f32 %v970, 0.0
  %v1035 = vmax.f32 %v971, 0.0
  %v1036 = vmax.f32 %v972, 0.0
  %v1037 = vmax.f32 %v973, 0.0
  %v1038 = vmax.f32 %v974, 0.0
  %v1039 = vmax.f32 %v975, 0.0
  %v1040 = vmax.f32 %v976, 0.0
  %v1041 = vmax.f32 %v977, 0.0
  %v1042 = vmax.f32 %v978, 0.0
  %v1043 = vmax.f32 %v979, 0.0
  %v1044 = vmax.f32 %v980, 0.0
  %v1045 = vmax.f32 %v981, 0.0
  %v1046 = vmax.f32 %v982, 0.0
  %v1047 = vmax.f32 %v983, 0.0
  %v1048 = vmax.f32 %v984, 0.0
  %v1049 = vmax.f32 %v985, 0.0
  %v1050 = vmax.f32 %v986, 0.0
  %v1051 = vmax.f32 %v987, 0.0
  %v1052 = vmax.f32 %v988, 0.0
  %v1053 = vmax.f32 %v989, 0.0
  %v1054 = vmax.f32 %v990, 0.0
  %v1055 = vmax.f32 %v991, 0.0
  %v1056 = vmax.f32 %v992, 0.0
  %v1057 = vmax.f32 %v993, 0.0
  %v1058 = vmax.f32 %v994, 0.0
  %v1059 = vmax.f32 %v995, 0.0
  %v1060 = vmax.f32 %v996, 0.0
  %v1061 = vmax.f32 %v997, 0.0
  %v1062 = vmax.f32 %v998, 0.0
  %v1063 = vmax.f32 %v999, 0.0
  %v1064 = vmax.f32 %v1000, 0.0
  %v1065 = vmax.f32 %v1001, 0.0
  %v1066 = vmax.f32 %v1002, 0.0
  %v1067 = vmax.f32 %v1003, 0.0
  %v1068 = vmax.f32 %v1004, 0.0
  %v1069 = vmax.f32 %v1005, 0.0
  %v1070 = vmax.f32 %v1006, 0.0
  %v1071 = vmax.f32 %v1007, 0.0
  %v1072 = vmax.f32 %v1008, 0.0
  %1073 = vst.msk [vmem:[%s4] sm:$0xff] %vm446, %v1009
  %1074 = vst.msk [vmem:[%s4 + $0x8] sm:$0xff] %vm446, %v1010
  %1075 = vst.msk [vmem:[%s4 + $0x10] sm:$0xff] %vm446, %v1011
  %1076 = vst.msk [vmem:[%s4 + $0x18] sm:$0xff] %vm446, %v1012
  %1077 = vst.msk [vmem:[%s4 + $0x20] sm:$0xff] %vm446, %v1013
  %1078 = vst.msk [vmem:[%s4 + $0x28] sm:$0xff] %vm446, %v1014
  %1079 = vst.msk [vmem:[%s4 + $0x30] sm:$0xff] %vm446, %v1015
  %1080 = vst.msk [vmem:[%s4 + $0x38] sm:$0xff] %vm446, %v1016
  %1081 = vst.msk [vmem:[%s4 + $0x40] sm:$0xff] %vm446, %v1017
  %1082 = vst.msk [vmem:[%s4 + $0x48] sm:$0xff] %vm446, %v1018
  %1083 = vst.msk [vmem:[%s4 + $0x50] sm:$0xff] %vm446, %v1019
  %1084 = vst.msk [vmem:[%s4 + $0x58] sm:$0xff] %vm446, %v1020
  %1085 = vst.msk [vmem:[%s4 + $0x60] sm:$0xff] %vm446, %v1021
  %1086 = vst.msk [vmem:[%s4 + $0x68] sm:$0xff] %vm446, %v1022
  %1087 = vst.msk [vmem:[%s4 + $0x70] sm:$0xff] %vm446, %v1023
  %1088 = vst.msk [vmem:[%s4 + $0x78] sm:$0xff] %vm446, %v1024
  %1089 = vst.msk [vmem:[%s4 + $0x80] sm:$0xff] %vm446, %v1025
  %1090 = vst.msk [vmem:[%s4 + $0x88] sm:$0xff] %vm446, %v1026
  %1091 = vst.msk [vmem:[%s4 + $0x90] sm:$0xff] %vm446, %v1027
  %1092 = vst.msk [vmem:[%s4 + $0x98] sm:$0xff] %vm446, %v1028
  %1093 = vst.msk [vmem:[%s4 + $0xa0] sm:$0xff] %vm446, %v1029
  %1094 = vst.msk [vmem:[%s4 + $0xa8] sm:$0xff] %vm446, %v1030
  %1095 = vst.msk [vmem:[%s4 + $0xb0] sm:$0xff] %vm446, %v1031
  %1096 = vst.msk [vmem:[%s4 + $0xb8] sm:$0xff] %vm446, %v1032
  %1097 = vst.msk [vmem:[%s4 + $0xc0] sm:$0xff] %vm446, %v1033
  %1098 = vst.msk [vmem:[%s4 + $0xc8] sm:$0xff] %vm446, %v1034
  %1099 = vst.msk [vmem:[%s4 + $0xd0] sm:$0xff] %vm446, %v1035
  %1100 = vst.msk [vmem:[%s4 + $0xd8] sm:$0xff] %vm446, %v1036
  %1101 = vst.msk [vmem:[%s4 + $0xe0] sm:$0xff] %vm446, %v1037
  %1102 = vst.msk [vmem:[%s4 + $0xe8] sm:$0xff] %vm446, %v1038
  %1103 = vst.msk [vmem:[%s4 + $0xf0] sm:$0xff] %vm446, %v1039
  %1104 = vst.msk [vmem:[%s4 + $0xf8] sm:$0xff] %vm446, %v1040
  %1105 = vst.msk [vmem:[%s4 + $0x100] sm:$0xff] %vm446, %v1041
  %1106 = vst.msk [vmem:[%s4 + $0x108] sm:$0xff] %vm446, %v1042
  %1107 = vst.msk [vmem:[%s4 + $0x110] sm:$0xff] %vm446, %v1043
  %1108 = vst.msk [vmem:[%s4 + $0x118] sm:$0xff] %vm446, %v1044
  %1109 = vst.msk [vmem:[%s4 + $0x120] sm:$0xff] %vm446, %v1045
  %1110 = vst.msk [vmem:[%s4 + $0x128] sm:$0xff] %vm446, %v1046
  %1111 = vst.msk [vmem:[%s4 + $0x130] sm:$0xff] %vm446, %v1047
  %1112 = vst.msk [vmem:[%s4 + $0x138] sm:$0xff] %vm446, %v1048
  %1113 = vst.msk [vmem:[%s4 + $0x140] sm:$0xff] %vm446, %v1049
  %1114 = vst.msk [vmem:[%s4 + $0x148] sm:$0xff] %vm446, %v1050
  %1115 = vst.msk [vmem:[%s4 + $0x150] sm:$0xff] %vm446, %v1051
  %1116 = vst.msk [vmem:[%s4 + $0x158] sm:$0xff] %vm446, %v1052
  %1117 = vst.msk [vmem:[%s4 + $0x160] sm:$0xff] %vm446, %v1053
  %1118 = vst.msk [vmem:[%s4 + $0x168] sm:$0xff] %vm446, %v1054
  %1119 = vst.msk [vmem:[%s4 + $0x170] sm:$0xff] %vm446, %v1055
  %1120 = vst.msk [vmem:[%s4 + $0x178] sm:$0xff] %vm446, %v1056
  %1121 = vst.msk [vmem:[%s4 + $0x180] sm:$0xff] %vm446, %v1057
  %1122 = vst.msk [vmem:[%s4 + $0x188] sm:$0xff] %vm446, %v1058
  %1123 = vst.msk [vmem:[%s4 + $0x190] sm:$0xff] %vm446, %v1059
  %1124 = vst.msk [vmem:[%s4 + $0x198] sm:$0xff] %vm446, %v1060
  %1125 = vst.msk [vmem:[%s4 + $0x1a0] sm:$0xff] %vm446, %v1061
  %1126 = vst.msk [vmem:[%s4 + $0x1a8] sm:$0xff] %vm446, %v1062
  %1127 = vst.msk [vmem:[%s4 + $0x1b0] sm:$0xff] %vm446, %v1063
  %1128 = vst.msk [vmem:[%s4 + $0x1b8] sm:$0xff] %vm446, %v1064
  %1129 = vst.msk [vmem:[%s4 + $0x1c0] sm:$0xff] %vm446, %v1065
  %1130 = vst.msk [vmem:[%s4 + $0x1c8] sm:$0xff] %vm446, %v1066
  %1131 = vst.msk [vmem:[%s4 + $0x1d0] sm:$0xff] %vm446, %v1067
  %1132 = vst.msk [vmem:[%s4 + $0x1d8] sm:$0xff] %vm446, %v1068
  %1133 = vst.msk [vmem:[%s4 + $0x1e0] sm:$0xff] %vm446, %v1069
  %1134 = vst.msk [vmem:[%s4 + $0x1e8] sm:$0xff] %vm446, %v1070
  %1135 = vst.msk [vmem:[%s4 + $0x1f0] sm:$0xff] %vm446, %v1071
  %1136 = vst.msk [vmem:[%s4 + $0x1f8] sm:$0xff] %vm446, %v1072
  // Predicated region
  $region18: #{confidence_network_forward.17} parent=0 // pred_check
    _
  $region19: #{confidence_network_forward.17} parent=0 // pred_check_branch
    %1138 = sbr.rel (0) target = $region21
  $region20: #{confidence_network_forward.17} parent=0 // pred_region
    _
  $region21: #{confidence_network_forward.17} parent=0 // pred_fallthru
    _
  // Predicated region
  $region22: #{confidence_network_forward.17} parent=0 // pred_check
    _
  $region23: #{confidence_network_forward.17} parent=0 // pred_check_branch
    %1140 = sbr.rel (0) target = $region25
  $region24: #{confidence_network_forward.17} parent=0 // pred_region
    _
  $region25: #{confidence_network_forward.17} parent=0 // pred_fallthru
    _

// kernel: confidence_network_forward.18
$region0: #{confidence_network_forward.18}
  #allocation0 [shape = 'u32[]', space=smem, size = 0x4, offset = 0x4, fixed_abs, tag = 'smem constant byte address 0x4 - core index']
  #allocation1 [shape = 'u32[72,128]{1,0:T(1,128)}', space=vmem, size = 0x9000, scoped, tag = 'internal scratch']
  %s0 = inlined_call_operand.vmem [shape: bf16[128,144], index: 0, kind: input, shape index: {}]
  %s1 = inlined_call_operand.vmem [shape: bf16[144,32], index: 1, kind: input, shape index: {}]
  %s2 = inlined_call_operand.vmem [shape: f32[1,32], index: 2, kind: input, shape index: {}]
  %s3 = inlined_call_operand.vmem [shape: f32[128,32], index: 3, kind: output, shape index: {}]
  %s4 = sld [smem:[#allocation0]]
  $region22: #{confidence_network_forward.18} parent=0
    _
  %s6 = ssub.s32 1, %s4
  %s7 = scalar_select 0, %s6, %s4
  // Predicated region
  $region2: #{confidence_network_forward.18} parent=0 // pred_check
    _
  $region3: #{confidence_network_forward.18} parent=0 // pred_check_branch
    %9 = sbr.rel (0) target = $region5
  $region4: #{confidence_network_forward.18} parent=0 // pred_region
    _
  $region5: #{confidence_network_forward.18} parent=0 // pred_fallthru
    _
  // Predicated region
  $region6: #{confidence_network_forward.18} parent=0 // pred_check
    _
  $region7: #{confidence_network_forward.18} parent=0 // pred_check_branch
    %11 = sbr.rel (0) target = $region9
  $region8: #{confidence_network_forward.18} parent=0 // pred_region
    _
  $region9: #{confidence_network_forward.18} parent=0 // pred_fallthru
    _
  // Predicated region
  $region10: #{confidence_network_forward.18} parent=0 // pred_check
    _
  $region11: #{confidence_network_forward.18} parent=0 // pred_check_branch
    %13 = sbr.rel (0) target = $region13
  $region12: #{confidence_network_forward.18} parent=0 // pred_region
    _
  $region13: #{confidence_network_forward.18} parent=0 // pred_fallthru
    _
  %v15 = vld [vmem:[%s0] sm:$0xff]
  %v16 = vld [vmem:[%s0 + $0x8] sm:$0xff]
  %v17 = vld [vmem:[%s0 + $0x10] sm:$0xff]
  %v18 = vld [vmem:[%s0 + $0x18] sm:$0xff]
  %v19 = vld [vmem:[%s0 + $0x20] sm:$0xff]
  %v20 = vld [vmem:[%s0 + $0x28] sm:$0xff]
  %v21 = vld [vmem:[%s0 + $0x30] sm:$0xff]
  %v22 = vld [vmem:[%s0 + $0x38] sm:$0xff]
  %v23 = vld [vmem:[%s0 + $0x40] sm:$0xff]
  %v24 = vld [vmem:[%s0 + $0x48] sm:$0xff]
  %v25 = vld [vmem:[%s0 + $0x50] sm:$0xff]
  %v26 = vld [vmem:[%s0 + $0x58] sm:$0xff]
  %v27 = vld [vmem:[%s0 + $0x60] sm:$0xff]
  %v28 = vld [vmem:[%s0 + $0x68] sm:$0xff]
  %v29 = vld [vmem:[%s0 + $0x70] sm:$0xff]
  %v30 = vld [vmem:[%s0 + $0x78] sm:$0xff]
  %v31 = vld [vmem:[%s1] sm:$0xf]
  %v32 = vld [vmem:[%s1 + $0x4] sm:$0xf]
  %v33 = vld [vmem:[%s1 + $0x8] sm:$0xf]
  %v34 = vld [vmem:[%s1 + $0xc] sm:$0xf]
  %v35 = vld [vmem:[%s1 + $0x10] sm:$0xf]
  %v36 = vld [vmem:[%s1 + $0x14] sm:$0xf]
  %v37 = vld [vmem:[%s1 + $0x18] sm:$0xf]
  %v38 = vld [vmem:[%s1 + $0x1c] sm:$0xf]
  %v39 = vld [vmem:[%s1 + $0x20] sm:$0xf]
  %v40 = vld [vmem:[%s1 + $0x24] sm:$0xf]
  %v41 = vld [vmem:[%s1 + $0x28] sm:$0xf]
  %v42 = vld [vmem:[%s1 + $0x2c] sm:$0xf]
  %v43 = vld [vmem:[%s1 + $0x30] sm:$0xf]
  %v44 = vld [vmem:[%s1 + $0x34] sm:$0xf]
  %v45 = vld [vmem:[%s1 + $0x38] sm:$0xf]
  %v46 = vld [vmem:[%s1 + $0x3c] sm:$0xf]
  %v47 = vld [vmem:[%s1 + $0x40] sm:$0xf]
  %v48 = vld [vmem:[%s1 + $0x44] sm:$0xf]
  %v49 = vld [vmem:[%s2] sm:$0x1]
  %v51 = vperm.slane %v49, 0
  %v69 = vunpack.c.l.b16 %v15
  %v70 = vunpack.c.h.b16 %v15
  %v71 = vunpack.c.l.b16 %v16
  %v72 = vunpack.c.h.b16 %v16
  %v73 = vunpack.c.l.b16 %v17
  %v74 = vunpack.c.h.b16 %v17
  %v75 = vunpack.c.l.b16 %v18
  %v76 = vunpack.c.h.b16 %v18
  %v77 = vunpack.c.l.b16 %v19
  %v78 = vunpack.c.h.b16 %v19
  %v79 = vunpack.c.l.b16 %v20
  %v80 = vunpack.c.h.b16 %v20
  %v81 = vunpack.c.l.b16 %v21
  %v82 = vunpack.c.h.b16 %v21
  %v83 = vunpack.c.l.b16 %v22
  %v84 = vunpack.c.h.b16 %v22
  %v85 = vunpack.c.l.b16 %v23
  %v86 = vunpack.c.h.b16 %v23
  %v87 = vunpack.c.l.b16 %v24
  %v88 = vunpack.c.h.b16 %v24
  %v89 = vunpack.c.l.b16 %v25
  %v90 = vunpack.c.h.b16 %v25
  %v91 = vunpack.c.l.b16 %v26
  %v92 = vunpack.c.h.b16 %v26
  %v93 = vunpack.c.l.b16 %v27
  %v94 = vunpack.c.h.b16 %v27
  %v95 = vunpack.c.l.b16 %v28
  %v96 = vunpack.c.h.b16 %v28
  %v97 = vunpack.c.l.b16 %v29
  %v98 = vunpack.c.h.b16 %v29
  %v99 = vunpack.c.l.b16 %v30
  %v100 = vunpack.c.h.b16 %v30
  %v101 = vpack.c.b16 %v71, %v69
  %v102 = vpack.c.b16 %v72, %v70
  %v103 = vpack.c.b16 %v75, %v73
  %v104 = vpack.c.b16 %v76, %v74
  %v105 = vpack.c.b16 %v79, %v77
  %v106 = vpack.c.b16 %v80, %v78
  %v107 = vpack.c.b16 %v83, %v81
  %v108 = vpack.c.b16 %v84, %v82
  %v109 = vpack.c.b16 %v87, %v85
  %v110 = vpack.c.b16 %v88, %v86
  %v111 = vpack.c.b16 %v91, %v89
  %v112 = vpack.c.b16 %v92, %v90
  %v113 = vpack.c.b16 %v95, %v93
  %v114 = vpack.c.b16 %v96, %v94
  %v115 = vpack.c.b16 %v99, %v97
  %v116 = vpack.c.b16 %v100, %v98
  %v143 = vunpack.c.l.b16 %v31
  %v144 = vunpack.c.l.b16 %v32
  %v145 = vunpack.c.l.b16 %v33
  %v146 = vunpack.c.l.b16 %v34
  %v147 = vunpack.c.l.b16 %v35
  %v148 = vunpack.c.l.b16 %v36
  %v149 = vunpack.c.l.b16 %v37
  %v150 = vunpack.c.l.b16 %v38
  %v151 = vunpack.c.l.b16 %v39
  %v152 = vunpack.c.l.b16 %v40
  %v153 = vunpack.c.l.b16 %v41
  %v154 = vunpack.c.l.b16 %v42
  %v155 = vunpack.c.l.b16 %v43
  %v156 = vunpack.c.l.b16 %v44
  %v157 = vunpack.c.l.b16 %v45
  %v158 = vunpack.c.l.b16 %v46
  %v159 = vunpack.c.l.b16 %v47
  %v160 = vunpack.c.l.b16 %v48
  %v161 = vpack.c.b16 %v144, %v143
  %v162 = vpack.c.b16 %v146, %v145
  %v163 = vpack.c.b16 %v148, %v147
  %v164 = vpack.c.b16 %v150, %v149
  %v165 = vpack.c.b16 %v152, %v151
  %v166 = vpack.c.b16 %v154, %v153
  %v167 = vpack.c.b16 %v156, %v155
  %v168 = vpack.c.b16 %v158, %v157
  %v169 = vpack.c.b16 %v160, %v159
  %vm179 = vcmask 130048
  %v181 = vsel %vm179, %v102, 0
  %v184 = vsel %vm179, %v104, 0
  %v187 = vsel %vm179, %v106, 0
  %v190 = vsel %vm179, %v108, 0
  %v193 = vsel %vm179, %v110, 0
  %v196 = vsel %vm179, %v112, 0
  %v199 = vsel %vm179, %v114, 0
  %v202 = vsel %vm179, %v116, 0
  %204 = vmatpush.bf16.msra.mxu0 %v168
  %205 = vmatpush.bf16.msra.mxu0 %v167
  %206 = vmatpush.bf16.msra.mxu0 %v166
  %207 = vmatpush.bf16.msra.mxu0 %v165
  %208 = vmatpush.bf16.msra.mxu0 %v164
  %209 = vmatpush.bf16.msra.mxu0 %v163
  %210 = vmatpush.bf16.msra.mxu0 %v162
  %211 = vmatpush.bf16.msra.mxu0 %v161
  %212 = vmatmul.bf16.gmra.mxu0 %v101
  %v213 = vpop.f32.mrf.mxu0
  %v214 = vadd.f32 %v51, %v213
  %v215 = vpop.f32.mrf.mxu0
  %v216 = vadd.f32 %v51, %v215
  %217 = vmatmul.bf16.gmra.mxu0 %v103
  %v218 = vpop.f32.mrf.mxu0
  %v219 = vadd.f32 %v51, %v218
  %v220 = vpop.f32.mrf.mxu0
  %v221 = vadd.f32 %v51, %v220
  %222 = vmatmul.bf16.gmra.mxu0 %v105
  %v223 = vpop.f32.mrf.mxu0
  %v224 = vadd.f32 %v51, %v223
  %v225 = vpop.f32.mrf.mxu0
  %v226 = vadd.f32 %v51, %v225
  %227 = vmatmul.bf16.gmra.mxu0 %v107
  %v228 = vpop.f32.mrf.mxu0
  %v229 = vadd.f32 %v51, %v228
  %v230 = vpop.f32.mrf.mxu0
  %v231 = vadd.f32 %v51, %v230
  %232 = vmatmul.bf16.gmra.mxu0 %v109
  %v233 = vpop.f32.mrf.mxu0
  %v234 = vadd.f32 %v51, %v233
  %v235 = vpop.f32.mrf.mxu0
  %v236 = vadd.f32 %v51, %v235
  %237 = vmatmul.bf16.gmra.mxu0 %v111
  %v238 = vpop.f32.mrf.mxu0
  %v239 = vadd.f32 %v51, %v238
  %v240 = vpop.f32.mrf.mxu0
  %v241 = vadd.f32 %v51, %v240
  %242 = vmatmul.bf16.gmra.mxu0 %v113
  %v243 = vpop.f32.mrf.mxu0
  %v244 = vadd.f32 %v51, %v243
  %v245 = vpop.f32.mrf.mxu0
  %v246 = vadd.f32 %v51, %v245
  %247 = vmatmul.bf16.gmra.mxu0 %v115
  %v248 = vpop.f32.mrf.mxu0
  %v249 = vadd.f32 %v51, %v248
  %v250 = vpop.f32.mrf.mxu0
  %v251 = vadd.f32 %v51, %v250
  %252 = vdwg.mxu0
  %253 = vmatpush.bf16.msra.mxu0 0
  %254 = vmatpush.bf16.msra.mxu0 0
  %255 = vmatpush.bf16.msra.mxu0 0
  %256 = vmatpush.bf16.msra.mxu0 0
  %257 = vmatpush.bf16.msra.mxu0 0
  %258 = vmatpush.bf16.msra.mxu0 0
  %259 = vmatpush.bf16.msra.mxu0 0
  %260 = vmatpush.bf16.msra.mxu0 %v169
  %261 = vmatmul.bf16.gmra.mxu0 %v181
  %v262 = vpop.f32.mrf.mxu0
  %v263 = vadd.f32 %v214, %v262
  %v264 = vpop.f32.mrf.mxu0
  %v265 = vadd.f32 %v216, %v264
  %266 = vmatmul.bf16.gmra.mxu0 %v184
  %v267 = vpop.f32.mrf.mxu0
  %v268 = vadd.f32 %v219, %v267
  %v269 = vpop.f32.mrf.mxu0
  %v270 = vadd.f32 %v221, %v269
  %271 = vmatmul.bf16.gmra.mxu0 %v187
  %v272 = vpop.f32.mrf.mxu0
  %v273 = vadd.f32 %v224, %v272
  %v274 = vpop.f32.mrf.mxu0
  %v275 = vadd.f32 %v226, %v274
  %276 = vmatmul.bf16.gmra.mxu0 %v190
  %v277 = vpop.f32.mrf.mxu0
  %v278 = vadd.f32 %v229, %v277
  %v279 = vpop.f32.mrf.mxu0
  %v280 = vadd.f32 %v231, %v279
  %281 = vmatmul.bf16.gmra.mxu0 %v193
  %v282 = vpop.f32.mrf.mxu0
  %v283 = vadd.f32 %v234, %v282
  %v284 = vpop.f32.mrf.mxu0
  %v285 = vadd.f32 %v236, %v284
  %286 = vmatmul.bf16.gmra.mxu0 %v196
  %v287 = vpop.f32.mrf.mxu0
  %v288 = vadd.f32 %v239, %v287
  %v289 = vpop.f32.mrf.mxu0
  %v290 = vadd.f32 %v241, %v289
  %291 = vmatmul.bf16.gmra.mxu0 %v199
  %v292 = vpop.f32.mrf.mxu0
  %v293 = vadd.f32 %v244, %v292
  %v294 = vpop.f32.mrf.mxu0
  %v295 = vadd.f32 %v246, %v294
  %296 = vmatmul.bf16.gmra.mxu0 %v202
  %v297 = vpop.f32.mrf.mxu0
  %v298 = vadd.f32 %v249, %v297
  %v299 = vpop.f32.mrf.mxu0
  %v300 = vadd.f32 %v251, %v299
  %301 = vdwg.mxu0
  %v302 = vmax.f32 %v263, 0.0
  %v303 = vmax.f32 %v265, 0.0
  %v304 = vmax.f32 %v268, 0.0
  %v305 = vmax.f32 %v270, 0.0
  %v306 = vmax.f32 %v273, 0.0
  %v307 = vmax.f32 %v275, 0.0
  %v308 = vmax.f32 %v278, 0.0
  %v309 = vmax.f32 %v280, 0.0
  %v310 = vmax.f32 %v283, 0.0
  %v311 = vmax.f32 %v285, 0.0
  %v312 = vmax.f32 %v288, 0.0
  %v313 = vmax.f32 %v290, 0.0
  %v314 = vmax.f32 %v293, 0.0
  %v315 = vmax.f32 %v295, 0.0
  %v316 = vmax.f32 %v298, 0.0
  %v317 = vmax.f32 %v300, 0.0
  %vm318 = vcmask 261120
  %319 = vst.msk [vmem:[%s3] sm:$0xff] %vm318, %v302
  %320 = vst.msk [vmem:[%s3 + $0x8] sm:$0xff] %vm318, %v303
  %321 = vst.msk [vmem:[%s3 + $0x10] sm:$0xff] %vm318, %v304
  %322 = vst.msk [vmem:[%s3 + $0x18] sm:$0xff] %vm318, %v305
  %323 = vst.msk [vmem:[%s3 + $0x20] sm:$0xff] %vm318, %v306
  %324 = vst.msk [vmem:[%s3 + $0x28] sm:$0xff] %vm318, %v307
  %325 = vst.msk [vmem:[%s3 + $0x30] sm:$0xff] %vm318, %v308
  %326 = vst.msk [vmem:[%s3 + $0x38] sm:$0xff] %vm318, %v309
  %327 = vst.msk [vmem:[%s3 + $0x40] sm:$0xff] %vm318, %v310
  %328 = vst.msk [vmem:[%s3 + $0x48] sm:$0xff] %vm318, %v311
  %329 = vst.msk [vmem:[%s3 + $0x50] sm:$0xff] %vm318, %v312
  %330 = vst.msk [vmem:[%s3 + $0x58] sm:$0xff] %vm318, %v313
  %331 = vst.msk [vmem:[%s3 + $0x60] sm:$0xff] %vm318, %v314
  %332 = vst.msk [vmem:[%s3 + $0x68] sm:$0xff] %vm318, %v315
  %333 = vst.msk [vmem:[%s3 + $0x70] sm:$0xff] %vm318, %v316
  %334 = vst.msk [vmem:[%s3 + $0x78] sm:$0xff] %vm318, %v317
  // Predicated region
  $region14: #{confidence_network_forward.18} parent=0 // pred_check
    _
  $region15: #{confidence_network_forward.18} parent=0 // pred_check_branch
    %336 = sbr.rel (0) target = $region17
  $region16: #{confidence_network_forward.18} parent=0 // pred_region
    _
  $region17: #{confidence_network_forward.18} parent=0 // pred_fallthru
    _
  // Predicated region
  $region18: #{confidence_network_forward.18} parent=0 // pred_check
    _
  $region19: #{confidence_network_forward.18} parent=0 // pred_check_branch
    %338 = sbr.rel (0) target = $region21
  $region20: #{confidence_network_forward.18} parent=0 // pred_region
    _
  $region21: #{confidence_network_forward.18} parent=0 // pred_fallthru
    _

// kernel: confidence_network_forward.19
$region0: #{confidence_network_forward.19}
  #allocation0 [shape = 'u32[]', space=smem, size = 0x4, offset = 0x4, fixed_abs, tag = 'smem constant byte address 0x4 - core index']
  #allocation1 [shape = 'u32[72,128]{1,0:T(1,128)}', space=vmem, size = 0x9000, scoped, tag = 'internal scratch']
  %s0 = inlined_call_operand.vmem [shape: bf16[128,16], index: 0, kind: input, shape index: {}]
  %s1 = inlined_call_operand.vmem [shape: bf16[16,32], index: 1, kind: input, shape index: {}]
  %s2 = inlined_call_operand.vmem [shape: f32[1,32], index: 2, kind: input, shape index: {}]
  %s3 = inlined_call_operand.vmem [shape: f32[128,32], index: 3, kind: output, shape index: {}]
  %s4 = sld [smem:[#allocation0]]
  $region22: #{confidence_network_forward.19} parent=0
    _
  %s6 = ssub.s32 1, %s4
  %s7 = scalar_select 0, %s6, %s4
  // Predicated region
  $region2: #{confidence_network_forward.19} parent=0 // pred_check
    _
  $region3: #{confidence_network_forward.19} parent=0 // pred_check_branch
    %9 = sbr.rel (0) target = $region5
  $region4: #{confidence_network_forward.19} parent=0 // pred_region
    _
  $region5: #{confidence_network_forward.19} parent=0 // pred_fallthru
    _
  // Predicated region
  $region6: #{confidence_network_forward.19} parent=0 // pred_check
    _
  $region7: #{confidence_network_forward.19} parent=0 // pred_check_branch
    %11 = sbr.rel (0) target = $region9
  $region8: #{confidence_network_forward.19} parent=0 // pred_region
    _
  $region9: #{confidence_network_forward.19} parent=0 // pred_fallthru
    _
  // Predicated region
  $region10: #{confidence_network_forward.19} parent=0 // pred_check
    _
  $region11: #{confidence_network_forward.19} parent=0 // pred_check_branch
    %13 = sbr.rel (0) target = $region13
  $region12: #{confidence_network_forward.19} parent=0 // pred_region
    _
  $region13: #{confidence_network_forward.19} parent=0 // pred_fallthru
    _
  %v15 = vld [vmem:[%s0] sm:$0xf]
  %v16 = vld [vmem:[%s0 + $0x4] sm:$0xf]
  %v17 = vld [vmem:[%s0 + $0x8] sm:$0xf]
  %v18 = vld [vmem:[%s0 + $0xc] sm:$0xf]
  %v19 = vld [vmem:[%s0 + $0x10] sm:$0xf]
  %v20 = vld [vmem:[%s0 + $0x14] sm:$0xf]
  %v21 = vld [vmem:[%s0 + $0x18] sm:$0xf]
  %v22 = vld [vmem:[%s0 + $0x1c] sm:$0xf]
  %v23 = vld [vmem:[%s0 + $0x20] sm:$0xf]
  %v24 = vld [vmem:[%s0 + $0x24] sm:$0xf]
  %v25 = vld [vmem:[%s0 + $0x28] sm:$0xf]
  %v26 = vld [vmem:[%s0 + $0x2c] sm:$0xf]
  %v27 = vld [vmem:[%s0 + $0x30] sm:$0xf]
  %v28 = vld [vmem:[%s0 + $0x34] sm:$0xf]
  %v29 = vld [vmem:[%s0 + $0x38] sm:$0xf]
  %v30 = vld [vmem:[%s0 + $0x3c] sm:$0xf]
  %v31 = vld [vmem:[%s1] sm:$0xf]
  %v32 = vld [vmem:[%s1 + $0x4] sm:$0xf]
  %v33 = vld [vmem:[%s2] sm:$0x1]
  %v35 = vperm.slane %v33, 0
  %v53 = vunpack.c.l.b16 %v15
  %v54 = vunpack.c.l.b16 %v16
  %v55 = vunpack.c.l.b16 %v17
  %v56 = vunpack.c.l.b16 %v18
  %v57 = vunpack.c.l.b16 %v19
  %v58 = vunpack.c.l.b16 %v20
  %v59 = vunpack.c.l.b16 %v21
  %v60 = vunpack.c.l.b16 %v22
  %v61 = vunpack.c.l.b16 %v23
  %v62 = vunpack.c.l.b16 %v24
  %v63 = vunpack.c.l.b16 %v25
  %v64 = vunpack.c.l.b16 %v26
  %v65 = vunpack.c.l.b16 %v27
  %v66 = vunpack.c.l.b16 %v28
  %v67 = vunpack.c.l.b16 %v29
  %v68 = vunpack.c.l.b16 %v30
  %v69 = vpack.c.b16 %v54, %v53
  %v70 = vpack.c.b16 %v56, %v55
  %v71 = vpack.c.b16 %v58, %v57
  %v72 = vpack.c.b16 %v60, %v59
  %v73 = vpack.c.b16 %v62, %v61
  %v74 = vpack.c.b16 %v64, %v63
  %v75 = vpack.c.b16 %v66, %v65
  %v76 = vpack.c.b16 %v68, %v67
  %v79 = vunpack.c.l.b16 %v31
  %v80 = vunpack.c.l.b16 %v32
  %v81 = vpack.c.b16 %v80, %v79
  %vm83 = vcmask 130048
  %v85 = vsel %vm83, %v69, 0
  %v88 = vsel %vm83, %v70, 0
  %v91 = vsel %vm83, %v71, 0
  %v94 = vsel %vm83, %v72, 0
  %v97 = vsel %vm83, %v73, 0
  %v100 = vsel %vm83, %v74, 0
  %v103 = vsel %vm83, %v75, 0
  %v106 = vsel %vm83, %v76, 0
  %108 = vmatpush.bf16.msra.mxu0 0
  %109 = vmatpush.bf16.msra.mxu0 0
  %110 = vmatpush.bf16.msra.mxu0 0
  %111 = vmatpush.bf16.msra.mxu0 0
  %112 = vmatpush.bf16.msra.mxu0 0
  %113 = vmatpush.bf16.msra.mxu0 0
  %114 = vmatpush.bf16.msra.mxu0 0
  %115 = vmatpush.bf16.msra.mxu0 %v81
  %116 = vmatmul.bf16.gmra.mxu0 %v85
  %v117 = vpop.f32.mrf.mxu0
  %v118 = vadd.f32 %v35, %v117
  %v119 = vpop.f32.mrf.mxu0
  %v120 = vadd.f32 %v35, %v119
  %121 = vmatmul.bf16.gmra.mxu0 %v88
  %v122 = vpop.f32.mrf.mxu0
  %v123 = vadd.f32 %v35, %v122
  %v124 = vpop.f32.mrf.mxu0
  %v125 = vadd.f32 %v35, %v124
  %126 = vmatmul.bf16.gmra.mxu0 %v91
  %v127 = vpop.f32.mrf.mxu0
  %v128 = vadd.f32 %v35, %v127
  %v129 = vpop.f32.mrf.mxu0
  %v130 = vadd.f32 %v35, %v129
  %131 = vmatmul.bf16.gmra.mxu0 %v94
  %v132 = vpop.f32.mrf.mxu0
  %v133 = vadd.f32 %v35, %v132
  %v134 = vpop.f32.mrf.mxu0
  %v135 = vadd.f32 %v35, %v134
  %136 = vmatmul.bf16.gmra.mxu0 %v97
  %v137 = vpop.f32.mrf.mxu0
  %v138 = vadd.f32 %v35, %v137
  %v139 = vpop.f32.mrf.mxu0
  %v140 = vadd.f32 %v35, %v139
  %141 = vmatmul.bf16.gmra.mxu0 %v100
  %v142 = vpop.f32.mrf.mxu0
  %v143 = vadd.f32 %v35, %v142
  %v144 = vpop.f32.mrf.mxu0
  %v145 = vadd.f32 %v35, %v144
  %146 = vmatmul.bf16.gmra.mxu0 %v103
  %v147 = vpop.f32.mrf.mxu0
  %v148 = vadd.f32 %v35, %v147
  %v149 = vpop.f32.mrf.mxu0
  %v150 = vadd.f32 %v35, %v149
  %151 = vmatmul.bf16.gmra.mxu0 %v106
  %v152 = vpop.f32.mrf.mxu0
  %v153 = vadd.f32 %v35, %v152
  %v154 = vpop.f32.mrf.mxu0
  %v155 = vadd.f32 %v35, %v154
  %156 = vdwg.mxu0
  %vm157 = vcmask 261120
  %158 = vst.msk [vmem:[%s3] sm:$0xff] %vm157, %v118
  %159 = vst.msk [vmem:[%s3 + $0x8] sm:$0xff] %vm157, %v120
  %160 = vst.msk [vmem:[%s3 + $0x10] sm:$0xff] %vm157, %v123
  %161 = vst.msk [vmem:[%s3 + $0x18] sm:$0xff] %vm157, %v125
  %162 = vst.msk [vmem:[%s3 + $0x20] sm:$0xff] %vm157, %v128
  %163 = vst.msk [vmem:[%s3 + $0x28] sm:$0xff] %vm157, %v130
  %164 = vst.msk [vmem:[%s3 + $0x30] sm:$0xff] %vm157, %v133
  %165 = vst.msk [vmem:[%s3 + $0x38] sm:$0xff] %vm157, %v135
  %166 = vst.msk [vmem:[%s3 + $0x40] sm:$0xff] %vm157, %v138
  %167 = vst.msk [vmem:[%s3 + $0x48] sm:$0xff] %vm157, %v140
  %168 = vst.msk [vmem:[%s3 + $0x50] sm:$0xff] %vm157, %v143
  %169 = vst.msk [vmem:[%s3 + $0x58] sm:$0xff] %vm157, %v145
  %170 = vst.msk [vmem:[%s3 + $0x60] sm:$0xff] %vm157, %v148
  %171 = vst.msk [vmem:[%s3 + $0x68] sm:$0xff] %vm157, %v150
  %172 = vst.msk [vmem:[%s3 + $0x70] sm:$0xff] %vm157, %v153
  %173 = vst.msk [vmem:[%s3 + $0x78] sm:$0xff] %vm157, %v155
  // Predicated region
  $region14: #{confidence_network_forward.19} parent=0 // pred_check
    _
  $region15: #{confidence_network_forward.19} parent=0 // pred_check_branch
    %175 = sbr.rel (0) target = $region17
  $region16: #{confidence_network_forward.19} parent=0 // pred_region
    _
  $region17: #{confidence_network_forward.19} parent=0 // pred_fallthru
    _
  // Predicated region
  $region18: #{confidence_network_forward.19} parent=0 // pred_check
    _
  $region19: #{confidence_network_forward.19} parent=0 // pred_check_branch
    %177 = sbr.rel (0) target = $region21
  $region20: #{confidence_network_forward.19} parent=0 // pred_region
    _
  $region21: #{confidence_network_forward.19} parent=0 // pred_fallthru
    _

// kernel: confidence_network_forward.20
$region0: #{confidence_network_forward.20}
  #allocation0 [shape = 'u32[]', space=smem, size = 0x4, offset = 0x4, fixed_abs, tag = 'smem constant byte address 0x4 - core index']
  #allocation1 [shape = 'u32[72,128]{1,0:T(1,128)}', space=vmem, size = 0x9000, scoped, tag = 'internal scratch']
  %s0 = inlined_call_operand.vmem [shape: bf16[128,288], index: 0, kind: input, shape index: {}]
  %s1 = inlined_call_operand.vmem [shape: bf16[288,32], index: 1, kind: input, shape index: {}]
  %s2 = inlined_call_operand.vmem [shape: f32[1,32], index: 2, kind: input, shape index: {}]
  %s3 = inlined_call_operand.vmem [shape: f32[128,32], index: 3, kind: input, shape index: {}]
  %s4 = inlined_call_operand.vmem [shape: f32[128,32], index: 4, kind: output, shape index: {}]
  %s5 = sld [smem:[#allocation0]]
  $region26: #{confidence_network_forward.20} parent=0
    _
  %s7 = ssub.s32 1, %s5
  %s8 = scalar_select 0, %s7, %s5
  // Predicated region
  $region2: #{confidence_network_forward.20} parent=0 // pred_check
    _
  $region3: #{confidence_network_forward.20} parent=0 // pred_check_branch
    %10 = sbr.rel (0) target = $region5
  $region4: #{confidence_network_forward.20} parent=0 // pred_region
    _
  $region5: #{confidence_network_forward.20} parent=0 // pred_fallthru
    _
  // Predicated region
  $region6: #{confidence_network_forward.20} parent=0 // pred_check
    _
  $region7: #{confidence_network_forward.20} parent=0 // pred_check_branch
    %12 = sbr.rel (0) target = $region9
  $region8: #{confidence_network_forward.20} parent=0 // pred_region
    _
  $region9: #{confidence_network_forward.20} parent=0 // pred_fallthru
    _
  // Predicated region
  $region10: #{confidence_network_forward.20} parent=0 // pred_check
    _
  $region11: #{confidence_network_forward.20} parent=0 // pred_check_branch
    %14 = sbr.rel (0) target = $region13
  $region12: #{confidence_network_forward.20} parent=0 // pred_region
    _
  $region13: #{confidence_network_forward.20} parent=0 // pred_fallthru
    _
  // Predicated region
  $region14: #{confidence_network_forward.20} parent=0 // pred_check
    _
  $region15: #{confidence_network_forward.20} parent=0 // pred_check_branch
    %16 = sbr.rel (0) target = $region17
  $region16: #{confidence_network_forward.20} parent=0 // pred_region
    _
  $region17: #{confidence_network_forward.20} parent=0 // pred_fallthru
    _
  %v18 = vld [vmem:[%s0] sm:$0xff]
  %v19 = vld [vmem:[%s0 + $0x8] sm:$0xf]
  %v20 = vld [vmem:[%s0 + $0xc] sm:$0xff]
  %v21 = vld [vmem:[%s0 + $0x14] sm:$0xf]
  %v22 = vld [vmem:[%s0 + $0x18] sm:$0xff]
  %v23 = vld [vmem:[%s0 + $0x20] sm:$0xf]
  %v24 = vld [vmem:[%s0 + $0x24] sm:$0xff]
  %v25 = vld [vmem:[%s0 + $0x2c] sm:$0xf]
  %v26 = vld [vmem:[%s0 + $0x30] sm:$0xff]
  %v27 = vld [vmem:[%s0 + $0x38] sm:$0xf]
  %v28 = vld [vmem:[%s0 + $0x3c] sm:$0xff]
  %v29 = vld [vmem:[%s0 + $0x44] sm:$0xf]
  %v30 = vld [vmem:[%s0 + $0x48] sm:$0xff]
  %v31 = vld [vmem:[%s0 + $0x50] sm:$0xf]
  %v32 = vld [vmem:[%s0 + $0x54] sm:$0xff]
  %v33 = vld [vmem:[%s0 + $0x5c] sm:$0xf]
  %v34 = vld [vmem:[%s0 + $0x60] sm:$0xff]
  %v35 = vld [vmem:[%s0 + $0x68] sm:$0xf]
  %v36 = vld [vmem:[%s0 + $0x6c] sm:$0xff]
  %v37 = vld [vmem:[%s0 + $0x74] sm:$0xf]
  %v38 = vld [vmem:[%s0 + $0x78] sm:$0xff]
  %v39 = vld [vmem:[%s0 + $0x80] sm:$0xf]
  %v40 = vld [vmem:[%s0 + $0x84] sm:$0xff]
  %v41 = vld [vmem:[%s0 + $0x8c] sm:$0xf]
  %v42 = vld [vmem:[%s0 + $0x90] sm:$0xff]
  %v43 = vld [vmem:[%s0 + $0x98] sm:$0xf]
  %v44 = vld [vmem:[%s0 + $0x9c] sm:$0xff]
  %v45 = vld [vmem:[%s0 + $0xa4] sm:$0xf]
  %v46 = vld [vmem:[%s0 + $0xa8] sm:$0xff]
  %v47 = vld [vmem:[%s0 + $0xb0] sm:$0xf]
  %v48 = vld [vmem:[%s0 + $0xb4] sm:$0xff]
  %v49 = vld [vmem:[%s0 + $0xbc] sm:$0xf]
  %v50 = vld [vmem:[%s1] sm:$0xf]
  %v51 = vld [vmem:[%s1 + $0x4] sm:$0xf]
  %v52 = vld [vmem:[%s1 + $0x8] sm:$0xf]
  %v53 = vld [vmem:[%s1 + $0xc] sm:$0xf]
  %v54 = vld [vmem:[%s1 + $0x10] sm:$0xf]
  %v55 = vld [vmem:[%s1 + $0x14] sm:$0xf]
  %v56 = vld [vmem:[%s1 + $0x18] sm:$0xf]
  %v57 = vld [vmem:[%s1 + $0x1c] sm:$0xf]
  %v58 = vld [vmem:[%s1 + $0x20] sm:$0xf]
  %v59 = vld [vmem:[%s1 + $0x24] sm:$0xf]
  %v60 = vld [vmem:[%s1 + $0x28] sm:$0xf]
  %v61 = vld [vmem:[%s1 + $0x2c] sm:$0xf]
  %v62 = vld [vmem:[%s1 + $0x30] sm:$0xf]
  %v63 = vld [vmem:[%s1 + $0x34] sm:$0xf]
  %v64 = vld [vmem:[%s1 + $0x38] sm:$0xf]
  %v65 = vld [vmem:[%s1 + $0x3c] sm:$0xf]
  %v66 = vld [vmem:[%s1 + $0x40] sm:$0xf]
  %v67 = vld [vmem:[%s1 + $0x44] sm:$0xf]
  %v68 = vld [vmem:[%s1 + $0x48] sm:$0xf]
  %v69 = vld [vmem:[%s1 + $0x4c] sm:$0xf]
  %v70 = vld [vmem:[%s1 + $0x50] sm:$0xf]
  %v71 = vld [vmem:[%s1 + $0x54] sm:$0xf]
  %v72 = vld [vmem:[%s1 + $0x58] sm:$0xf]
  %v73 = vld [vmem:[%s1 + $0x5c] sm:$0xf]
  %v74 = vld [vmem:[%s1 + $0x60] sm:$0xf]
  %v75 = vld [vmem:[%s1 + $0x64] sm:$0xf]
  %v76 = vld [vmem:[%s1 + $0x68] sm:$0xf]
  %v77 = vld [vmem:[%s1 + $0x6c] sm:$0xf]
  %v78 = vld [vmem:[%s1 + $0x70] sm:$0xf]
  %v79 = vld [vmem:[%s1 + $0x74] sm:$0xf]
  %v80 = vld [vmem:[%s1 + $0x78] sm:$0xf]
  %v81 = vld [vmem:[%s1 + $0x7c] sm:$0xf]
  %v82 = vld [vmem:[%s1 + $0x80] sm:$0xf]
  %v83 = vld [vmem:[%s1 + $0x84] sm:$0xf]
  %v84 = vld [vmem:[%s1 + $0x88] sm:$0xf]
  %v85 = vld [vmem:[%s1 + $0x8c] sm:$0xf]
  %v86 = vld [vmem:[%s2] sm:$0x1]
  %v88 = vperm.slane %v86, 0
  %v122 = vunpack.c.l.b16 %v18
  %v123 = vunpack.c.h.b16 %v18
  %v124 = vunpack.c.l.b16 %v19
  %v125 = vunpack.c.l.b16 %v20
  %v126 = vunpack.c.h.b16 %v20
  %v127 = vunpack.c.l.b16 %v21
  %v128 = vunpack.c.l.b16 %v22
  %v129 = vunpack.c.h.b16 %v22
  %v130 = vunpack.c.l.b16 %v23
  %v131 = vunpack.c.l.b16 %v24
  %v132 = vunpack.c.h.b16 %v24
  %v133 = vunpack.c.l.b16 %v25
  %v134 = vunpack.c.l.b16 %v26
  %v135 = vunpack.c.h.b16 %v26
  %v136 = vunpack.c.l.b16 %v27
  %v137 = vunpack.c.l.b16 %v28
  %v138 = vunpack.c.h.b16 %v28
  %v139 = vunpack.c.l.b16 %v29
  %v140 = vunpack.c.l.b16 %v30
  %v141 = vunpack.c.h.b16 %v30
  %v142 = vunpack.c.l.b16 %v31
  %v143 = vunpack.c.l.b16 %v32
  %v144 = vunpack.c.h.b16 %v32
  %v145 = vunpack.c.l.b16 %v33
  %v146 = vunpack.c.l.b16 %v34
  %v147 = vunpack.c.h.b16 %v34
  %v148 = vunpack.c.l.b16 %v35
  %v149 = vunpack.c.l.b16 %v36
  %v150 = vunpack.c.h.b16 %v36
  %v151 = vunpack.c.l.b16 %v37
  %v152 = vunpack.c.l.b16 %v38
  %v153 = vunpack.c.h.b16 %v38
  %v154 = vunpack.c.l.b16 %v39
  %v155 = vunpack.c.l.b16 %v40
  %v156 = vunpack.c.h.b16 %v40
  %v157 = vunpack.c.l.b16 %v41
  %v158 = vunpack.c.l.b16 %v42
  %v159 = vunpack.c.h.b16 %v42
  %v160 = vunpack.c.l.b16 %v43
  %v161 = vunpack.c.l.b16 %v44
  %v162 = vunpack.c.h.b16 %v44
  %v163 = vunpack.c.l.b16 %v45
  %v164 = vunpack.c.l.b16 %v46
  %v165 = vunpack.c.h.b16 %v46
  %v166 = vunpack.c.l.b16 %v47
  %v167 = vunpack.c.l.b16 %v48
  %v168 = vunpack.c.h.b16 %v48
  %v169 = vunpack.c.l.b16 %v49
  %v170 = vpack.c.b16 %v125, %v122
  %v171 = vpack.c.b16 %v126, %v123
  %v172 = vpack.c.b16 %v127, %v124
  %v173 = vpack.c.b16 %v131, %v128
  %v174 = vpack.c.b16 %v132, %v129
  %v175 = vpack.c.b16 %v133, %v130
  %v176 = vpack.c.b16 %v137, %v134
  %v177 = vpack.c.b16 %v138, %v135
  %v178 = vpack.c.b16 %v139, %v136
  %v179 = vpack.c.b16 %v143, %v140
  %v180 = vpack.c.b16 %v144, %v141
  %v181 = vpack.c.b16 %v145, %v142
  %v182 = vpack.c.b16 %v149, %v146
  %v183 = vpack.c.b16 %v150, %v147
  %v184 = vpack.c.b16 %v151, %v148
  %v185 = vpack.c.b16 %v155, %v152
  %v186 = vpack.c.b16 %v156, %v153
  %v187 = vpack.c.b16 %v157, %v154
  %v188 = vpack.c.b16 %v161, %v158
  %v189 = vpack.c.b16 %v162, %v159
  %v190 = vpack.c.b16 %v163, %v160
  %v191 = vpack.c.b16 %v167, %v164
  %v192 = vpack.c.b16 %v168, %v165
  %v193 = vpack.c.b16 %v169, %v166
  %v246 = vunpack.c.l.b16 %v50
  %v247 = vunpack.c.l.b16 %v51
  %v248 = vunpack.c.l.b16 %v52
  %v249 = vunpack.c.l.b16 %v53
  %v250 = vunpack.c.l.b16 %v54
  %v251 = vunpack.c.l.b16 %v55
  %v252 = vunpack.c.l.b16 %v56
  %v253 = vunpack.c.l.b16 %v57
  %v254 = vunpack.c.l.b16 %v58
  %v255 = vunpack.c.l.b16 %v59
  %v256 = vunpack.c.l.b16 %v60
  %v257 = vunpack.c.l.b16 %v61
  %v258 = vunpack.c.l.b16 %v62
  %v259 = vunpack.c.l.b16 %v63
  %v260 = vunpack.c.l.b16 %v64
  %v261 = vunpack.c.l.b16 %v65
  %v262 = vunpack.c.l.b16 %v66
  %v263 = vunpack.c.l.b16 %v67
  %v264 = vunpack.c.l.b16 %v68
  %v265 = vunpack.c.l.b16 %v69
  %v266 = vunpack.c.l.b16 %v70
  %v267 = vunpack.c.l.b16 %v71
  %v268 = vunpack.c.l.b16 %v72
  %v269 = vunpack.c.l.b16 %v73
  %v270 = vunpack.c.l.b16 %v74
  %v271 = vunpack.c.l.b16 %v75
  %v272 = vunpack.c.l.b16 %v76
  %v273 = vunpack.c.l.b16 %v77
  %v274 = vunpack.c.l.b16 %v78
  %v275 = vunpack.c.l.b16 %v79
  %v276 = vunpack.c.l.b16 %v80
  %v277 = vunpack.c.l.b16 %v81
  %v278 = vunpack.c.l.b16 %v82
  %v279 = vunpack.c.l.b16 %v83
  %v280 = vunpack.c.l.b16 %v84
  %v281 = vunpack.c.l.b16 %v85
  %v282 = vpack.c.b16 %v247, %v246
  %v283 = vpack.c.b16 %v249, %v248
  %v284 = vpack.c.b16 %v251, %v250
  %v285 = vpack.c.b16 %v253, %v252
  %v286 = vpack.c.b16 %v255, %v254
  %v287 = vpack.c.b16 %v257, %v256
  %v288 = vpack.c.b16 %v259, %v258
  %v289 = vpack.c.b16 %v261, %v260
  %v290 = vpack.c.b16 %v263, %v262
  %v291 = vpack.c.b16 %v265, %v264
  %v292 = vpack.c.b16 %v267, %v266
  %v293 = vpack.c.b16 %v269, %v268
  %v294 = vpack.c.b16 %v271, %v270
  %v295 = vpack.c.b16 %v273, %v272
  %v296 = vpack.c.b16 %v275, %v274
  %v297 = vpack.c.b16 %v277, %v276
  %v298 = vpack.c.b16 %v279, %v278
  %v299 = vpack.c.b16 %v281, %v280
  %vm318 = vcmask 261120
  %v320 = vsel %vm318, %v172, 0
  %v323 = vsel %vm318, %v175, 0
  %v326 = vsel %vm318, %v178, 0
  %v329 = vsel %vm318, %v181, 0
  %v332 = vsel %vm318, %v184, 0
  %v335 = vsel %vm318, %v187, 0
  %v338 = vsel %vm318, %v190, 0
  %v341 = vsel %vm318, %v193, 0
  %343 = vmatpush.bf16.msra.mxu0 %v289
  %344 = vmatpush.bf16.msra.mxu0 %v288
  %345 = vmatpush.bf16.msra.mxu0 %v287
  %346 = vmatpush.bf16.msra.mxu0 %v286
  %347 = vmatpush.bf16.msra.mxu0 %v285
  %348 = vmatpush.bf16.msra.mxu0 %v284
  %349 = vmatpush.bf16.msra.mxu0 %v283
  %350 = vmatpush.bf16.msra.mxu0 %v282
  %351 = vmatmul.bf16.gmra.mxu0 %v170
  %v352 = vpop.f32.mrf.mxu0
  %v353 = vadd.f32 %v88, %v352
  %v354 = vpop.f32.mrf.mxu0
  %v355 = vadd.f32 %v88, %v354
  %356 = vmatmul.bf16.gmra.mxu0 %v173
  %v357 = vpop.f32.mrf.mxu0
  %v358 = vadd.f32 %v88, %v357
  %v359 = vpop.f32.mrf.mxu0
  %v360 = vadd.f32 %v88, %v359
  %361 = vmatmul.bf16.gmra.mxu0 %v176
  %v362 = vpop.f32.mrf.mxu0
  %v363 = vadd.f32 %v88, %v362
  %v364 = vpop.f32.mrf.mxu0
  %v365 = vadd.f32 %v88, %v364
  %366 = vmatmul.bf16.gmra.mxu0 %v179
  %v367 = vpop.f32.mrf.mxu0
  %v368 = vadd.f32 %v88, %v367
  %v369 = vpop.f32.mrf.mxu0
  %v370 = vadd.f32 %v88, %v369
  %371 = vmatmul.bf16.gmra.mxu0 %v182
  %v372 = vpop.f32.mrf.mxu0
  %v373 = vadd.f32 %v88, %v372
  %v374 = vpop.f32.mrf.mxu0
  %v375 = vadd.f32 %v88, %v374
  %376 = vmatmul.bf16.gmra.mxu0 %v185
  %v377 = vpop.f32.mrf.mxu0
  %v378 = vadd.f32 %v88, %v377
  %v379 = vpop.f32.mrf.mxu0
  %v380 = vadd.f32 %v88, %v379
  %381 = vmatmul.bf16.gmra.mxu0 %v188
  %v382 = vpop.f32.mrf.mxu0
  %v383 = vadd.f32 %v88, %v382
  %v384 = vpop.f32.mrf.mxu0
  %v385 = vadd.f32 %v88, %v384
  %386 = vmatmul.bf16.gmra.mxu0 %v191
  %v387 = vpop.f32.mrf.mxu0
  %v388 = vadd.f32 %v88, %v387
  %v389 = vpop.f32.mrf.mxu0
  %v390 = vadd.f32 %v88, %v389
  %391 = vdwg.mxu0
  %392 = vmatpush.bf16.msra.mxu0 %v297
  %393 = vmatpush.bf16.msra.mxu0 %v296
  %394 = vmatpush.bf16.msra.mxu0 %v295
  %395 = vmatpush.bf16.msra.mxu0 %v294
  %396 = vmatpush.bf16.msra.mxu0 %v293
  %397 = vmatpush.bf16.msra.mxu0 %v292
  %398 = vmatpush.bf16.msra.mxu0 %v291
  %399 = vmatpush.bf16.msra.mxu0 %v290
  %400 = vmatmul.bf16.gmra.mxu0 %v171
  %v401 = vpop.f32.mrf.mxu0
  %v402 = vadd.f32 %v353, %v401
  %v403 = vpop.f32.mrf.mxu0
  %v404 = vadd.f32 %v355, %v403
  %405 = vmatmul.bf16.gmra.mxu0 %v174
  %v406 = vpop.f32.mrf.mxu0
  %v407 = vadd.f32 %v358, %v406
  %v408 = vpop.f32.mrf.mxu0
  %v409 = vadd.f32 %v360, %v408
  %410 = vmatmul.bf16.gmra.mxu0 %v177
  %v411 = vpop.f32.mrf.mxu0
  %v412 = vadd.f32 %v363, %v411
  %v413 = vpop.f32.mrf.mxu0
  %v414 = vadd.f32 %v365, %v413
  %415 = vmatmul.bf16.gmra.mxu0 %v180
  %v416 = vpop.f32.mrf.mxu0
  %v417 = vadd.f32 %v368, %v416
  %v418 = vpop.f32.mrf.mxu0
  %v419 = vadd.f32 %v370, %v418
  %420 = vmatmul.bf16.gmra.mxu0 %v183
  %v421 = vpop.f32.mrf.mxu0
  %v422 = vadd.f32 %v373, %v421
  %v423 = vpop.f32.mrf.mxu0
  %v424 = vadd.f32 %v375, %v423
  %425 = vmatmul.bf16.gmra.mxu0 %v186
  %v426 = vpop.f32.mrf.mxu0
  %v427 = vadd.f32 %v378, %v426
  %v428 = vpop.f32.mrf.mxu0
  %v429 = vadd.f32 %v380, %v428
  %430 = vmatmul.bf16.gmra.mxu0 %v189
  %v431 = vpop.f32.mrf.mxu0
  %v432 = vadd.f32 %v383, %v431
  %v433 = vpop.f32.mrf.mxu0
  %v434 = vadd.f32 %v385, %v433
  %435 = vmatmul.bf16.gmra.mxu0 %v192
  %v436 = vpop.f32.mrf.mxu0
  %v437 = vadd.f32 %v388, %v436
  %v438 = vpop.f32.mrf.mxu0
  %v439 = vadd.f32 %v390, %v438
  %440 = vdwg.mxu0
  %441 = vmatpush.bf16.msra.mxu0 0
  %442 = vmatpush.bf16.msra.mxu0 0
  %443 = vmatpush.bf16.msra.mxu0 0
  %444 = vmatpush.bf16.msra.mxu0 0
  %445 = vmatpush.bf16.msra.mxu0 0
  %446 = vmatpush.bf16.msra.mxu0 0
  %447 = vmatpush.bf16.msra.mxu0 %v299
  %448 = vmatpush.bf16.msra.mxu0 %v298
  %449 = vmatmul.bf16.gmra.mxu0 %v320
  %v450 = vpop.f32.mrf.mxu0
  %v451 = vadd.f32 %v402, %v450
  %v452 = vpop.f32.mrf.mxu0
  %v453 = vadd.f32 %v404, %v452
  %454 = vmatmul.bf16.gmra.mxu0 %v323
  %v455 = vpop.f32.mrf.mxu0
  %v456 = vadd.f32 %v407, %v455
  %v457 = vpop.f32.mrf.mxu0
  %v458 = vadd.f32 %v409, %v457
  %459 = vmatmul.bf16.gmra.mxu0 %v326
  %v460 = vpop.f32.mrf.mxu0
  %v461 = vadd.f32 %v412, %v460
  %v462 = vpop.f32.mrf.mxu0
  %v463 = vadd.f32 %v414, %v462
  %464 = vmatmul.bf16.gmra.mxu0 %v329
  %v465 = vpop.f32.mrf.mxu0
  %v466 = vadd.f32 %v417, %v465
  %v467 = vpop.f32.mrf.mxu0
  %v468 = vadd.f32 %v419, %v467
  %469 = vmatmul.bf16.gmra.mxu0 %v332
  %v470 = vpop.f32.mrf.mxu0
  %v471 = vadd.f32 %v422, %v470
  %v472 = vpop.f32.mrf.mxu0
  %v473 = vadd.f32 %v424, %v472
  %474 = vmatmul.bf16.gmra.mxu0 %v335
  %v475 = vpop.f32.mrf.mxu0
  %v476 = vadd.f32 %v427, %v475
  %v477 = vpop.f32.mrf.mxu0
  %v478 = vadd.f32 %v429, %v477
  %479 = vmatmul.bf16.gmra.mxu0 %v338
  %v480 = vpop.f32.mrf.mxu0
  %v481 = vadd.f32 %v432, %v480
  %v482 = vpop.f32.mrf.mxu0
  %v483 = vadd.f32 %v434, %v482
  %484 = vmatmul.bf16.gmra.mxu0 %v341
  %v485 = vpop.f32.mrf.mxu0
  %v486 = vadd.f32 %v437, %v485
  %v487 = vpop.f32.mrf.mxu0
  %v488 = vadd.f32 %v439, %v487
  %489 = vdwg.mxu0
  %v490 = vld [vmem:[%s3] sm:$0xff]
  %v491 = vld [vmem:[%s3 + $0x8] sm:$0xff]
  %v492 = vld [vmem:[%s3 + $0x10] sm:$0xff]
  %v493 = vld [vmem:[%s3 + $0x18] sm:$0xff]
  %v494 = vld [vmem:[%s3 + $0x20] sm:$0xff]
  %v495 = vld [vmem:[%s3 + $0x28] sm:$0xff]
  %v496 = vld [vmem:[%s3 + $0x30] sm:$0xff]
  %v497 = vld [vmem:[%s3 + $0x38] sm:$0xff]
  %v498 = vld [vmem:[%s3 + $0x40] sm:$0xff]
  %v499 = vld [vmem:[%s3 + $0x48] sm:$0xff]
  %v500 = vld [vmem:[%s3 + $0x50] sm:$0xff]
  %v501 = vld [vmem:[%s3 + $0x58] sm:$0xff]
  %v502 = vld [vmem:[%s3 + $0x60] sm:$0xff]
  %v503 = vld [vmem:[%s3 + $0x68] sm:$0xff]
  %v504 = vld [vmem:[%s3 + $0x70] sm:$0xff]
  %v505 = vld [vmem:[%s3 + $0x78] sm:$0xff]
  %v506 = vadd.f32 %v451, %v490
  %v507 = vadd.f32 %v453, %v491
  %v508 = vadd.f32 %v456, %v492
  %v509 = vadd.f32 %v458, %v493
  %v510 = vadd.f32 %v461, %v494
  %v511 = vadd.f32 %v463, %v495
  %v512 = vadd.f32 %v466, %v496
  %v513 = vadd.f32 %v468, %v497
  %v514 = vadd.f32 %v471, %v498
  %v515 = vadd.f32 %v473, %v499
  %v516 = vadd.f32 %v476, %v500
  %v517 = vadd.f32 %v478, %v501
  %v518 = vadd.f32 %v481, %v502
  %v519 = vadd.f32 %v483, %v503
  %v520 = vadd.f32 %v486, %v504
  %v521 = vadd.f32 %v488, %v505
  %v522 = vmax.f32 %v506, 0.0
  %v523 = vmax.f32 %v507, 0.0
  %v524 = vmax.f32 %v508, 0.0
  %v525 = vmax.f32 %v509, 0.0
  %v526 = vmax.f32 %v510, 0.0
  %v527 = vmax.f32 %v511, 0.0
  %v528 = vmax.f32 %v512, 0.0
  %v529 = vmax.f32 %v513, 0.0
  %v530 = vmax.f32 %v514, 0.0
  %v531 = vmax.f32 %v515, 0.0
  %v532 = vmax.f32 %v516, 0.0
  %v533 = vmax.f32 %v517, 0.0
  %v534 = vmax.f32 %v518, 0.0
  %v535 = vmax.f32 %v519, 0.0
  %v536 = vmax.f32 %v520, 0.0
  %v537 = vmax.f32 %v521, 0.0
  %538 = vst.msk [vmem:[%s4] sm:$0xff] %vm318, %v522
  %539 = vst.msk [vmem:[%s4 + $0x8] sm:$0xff] %vm318, %v523
  %540 = vst.msk [vmem:[%s4 + $0x10] sm:$0xff] %vm318, %v524
  %541 = vst.msk [vmem:[%s4 + $0x18] sm:$0xff] %vm318, %v525
  %542 = vst.msk [vmem:[%s4 + $0x20] sm:$0xff] %vm318, %v526
  %543 = vst.msk [vmem:[%s4 + $0x28] sm:$0xff] %vm318, %v527
  %544 = vst.msk [vmem:[%s4 + $0x30] sm:$0xff] %vm318, %v528
  %545 = vst.msk [vmem:[%s4 + $0x38] sm:$0xff] %vm318, %v529
  %546 = vst.msk [vmem:[%s4 + $0x40] sm:$0xff] %vm318, %v530
  %547 = vst.msk [vmem:[%s4 + $0x48] sm:$0xff] %vm318, %v531
  %548 = vst.msk [vmem:[%s4 + $0x50] sm:$0xff] %vm318, %v532
  %549 = vst.msk [vmem:[%s4 + $0x58] sm:$0xff] %vm318, %v533
  %550 = vst.msk [vmem:[%s4 + $0x60] sm:$0xff] %vm318, %v534
  %551 = vst.msk [vmem:[%s4 + $0x68] sm:$0xff] %vm318, %v535
  %552 = vst.msk [vmem:[%s4 + $0x70] sm:$0xff] %vm318, %v536
  %553 = vst.msk [vmem:[%s4 + $0x78] sm:$0xff] %vm318, %v537
  // Predicated region
  $region18: #{confidence_network_forward.20} parent=0 // pred_check
    _
  $region19: #{confidence_network_forward.20} parent=0 // pred_check_branch
    %555 = sbr.rel (0) target = $region21
  $region20: #{confidence_network_forward.20} parent=0 // pred_region
    _
  $region21: #{confidence_network_forward.20} parent=0 // pred_fallthru
    _
  // Predicated region
  $region22: #{confidence_network_forward.20} parent=0 // pred_check
    _
  $region23: #{confidence_network_forward.20} parent=0 // pred_check_branch
    %557 = sbr.rel (0) target = $region25
  $region24: #{confidence_network_forward.20} parent=0 // pred_region
    _
  $region25: #{confidence_network_forward.20} parent=0 // pred_fallthru
    _

// kernel: confidence_network_forward.21
$region0: #{confidence_network_forward.21}
  #allocation0 [shape = 'u32[]', space=smem, size = 0x4, offset = 0x4, fixed_abs, tag = 'smem constant byte address 0x4 - core index']
  #allocation1 [shape = 'u32[72,128]{1,0:T(1,128)}', space=vmem, size = 0x9000, scoped, tag = 'internal scratch']
  %s0 = inlined_call_operand.vmem [shape: bf16[32,288], index: 0, kind: input, shape index: {}]
  %s1 = inlined_call_operand.vmem [shape: bf16[288,64], index: 1, kind: input, shape index: {}]
  %s2 = inlined_call_operand.vmem [shape: f32[1,64], index: 2, kind: input, shape index: {}]
  %s3 = inlined_call_operand.vmem [shape: f32[32,64], index: 3, kind: output, shape index: {}]
  %s4 = sld [smem:[#allocation0]]
  $region22: #{confidence_network_forward.21} parent=0
    _
  %s6 = ssub.s32 1, %s4
  %s7 = scalar_select 0, %s6, %s4
  // Predicated region
  $region2: #{confidence_network_forward.21} parent=0 // pred_check
    _
  $region3: #{confidence_network_forward.21} parent=0 // pred_check_branch
    %9 = sbr.rel (0) target = $region5
  $region4: #{confidence_network_forward.21} parent=0 // pred_region
    _
  $region5: #{confidence_network_forward.21} parent=0 // pred_fallthru
    _
  // Predicated region
  $region6: #{confidence_network_forward.21} parent=0 // pred_check
    _
  $region7: #{confidence_network_forward.21} parent=0 // pred_check_branch
    %11 = sbr.rel (0) target = $region9
  $region8: #{confidence_network_forward.21} parent=0 // pred_region
    _
  $region9: #{confidence_network_forward.21} parent=0 // pred_fallthru
    _
  // Predicated region
  $region10: #{confidence_network_forward.21} parent=0 // pred_check
    _
  $region11: #{confidence_network_forward.21} parent=0 // pred_check_branch
    %13 = sbr.rel (0) target = $region13
  $region12: #{confidence_network_forward.21} parent=0 // pred_region
    _
  $region13: #{confidence_network_forward.21} parent=0 // pred_fallthru
    _
  %v15 = vld [vmem:[%s0] sm:$0xff]
  %v16 = vld [vmem:[%s0 + $0x8] sm:$0xf]
  %v17 = vld [vmem:[%s0 + $0xc] sm:$0xff]
  %v18 = vld [vmem:[%s0 + $0x14] sm:$0xf]
  %v19 = vld [vmem:[%s0 + $0x18] sm:$0xff]
  %v20 = vld [vmem:[%s0 + $0x20] sm:$0xf]
  %v21 = vld [vmem:[%s0 + $0x24] sm:$0xff]
  %v22 = vld [vmem:[%s0 + $0x2c] sm:$0xf]
  %v23 = vld [vmem:[%s1] sm:$0xf]
  %v24 = vld [vmem:[%s1 + $0x4] sm:$0xf]
  %v25 = vld [vmem:[%s1 + $0x8] sm:$0xf]
  %v26 = vld [vmem:[%s1 + $0xc] sm:$0xf]
  %v27 = vld [vmem:[%s1 + $0x10] sm:$0xf]
  %v28 = vld [vmem:[%s1 + $0x14] sm:$0xf]
  %v29 = vld [vmem:[%s1 + $0x18] sm:$0xf]
  %v30 = vld [vmem:[%s1 + $0x1c] sm:$0xf]
  %v31 = vld [vmem:[%s1 + $0x20] sm:$0xf]
  %v32 = vld [vmem:[%s1 + $0x24] sm:$0xf]
  %v33 = vld [vmem:[%s1 + $0x28] sm:$0xf]
  %v34 = vld [vmem:[%s1 + $0x2c] sm:$0xf]
  %v35 = vld [vmem:[%s1 + $0x30] sm:$0xf]
  %v36 = vld [vmem:[%s1 + $0x34] sm:$0xf]
  %v37 = vld [vmem:[%s1 + $0x38] sm:$0xf]
  %v38 = vld [vmem:[%s1 + $0x3c] sm:$0xf]
  %v39 = vld [vmem:[%s1 + $0x40] sm:$0xf]
  %v40 = vld [vmem:[%s1 + $0x44] sm:$0xf]
  %v41 = vld [vmem:[%s1 + $0x48] sm:$0xf]
  %v42 = vld [vmem:[%s1 + $0x4c] sm:$0xf]
  %v43 = vld [vmem:[%s1 + $0x50] sm:$0xf]
  %v44 = vld [vmem:[%s1 + $0x54] sm:$0xf]
  %v45 = vld [vmem:[%s1 + $0x58] sm:$0xf]
  %v46 = vld [vmem:[%s1 + $0x5c] sm:$0xf]
  %v47 = vld [vmem:[%s1 + $0x60] sm:$0xf]
  %v48 = vld [vmem:[%s1 + $0x64] sm:$0xf]
  %v49 = vld [vmem:[%s1 + $0x68] sm:$0xf]
  %v50 = vld [vmem:[%s1 + $0x6c] sm:$0xf]
  %v51 = vld [vmem:[%s1 + $0x70] sm:$0xf]
  %v52 = vld [vmem:[%s1 + $0x74] sm:$0xf]
  %v53 = vld [vmem:[%s1 + $0x78] sm:$0xf]
  %v54 = vld [vmem:[%s1 + $0x7c] sm:$0xf]
  %v55 = vld [vmem:[%s1 + $0x80] sm:$0xf]
  %v56 = vld [vmem:[%s1 + $0x84] sm:$0xf]
  %v57 = vld [vmem:[%s1 + $0x88] sm:$0xf]
  %v58 = vld [vmem:[%s1 + $0x8c] sm:$0xf]
  %v59 = vld [vmem:[%s2] sm:$0x1]
  %v61 = vperm.slane %v59, 0
  %v71 = vunpack.c.l.b16 %v15
  %v72 = vunpack.c.h.b16 %v15
  %v73 = vunpack.c.l.b16 %v16
  %v74 = vunpack.c.l.b16 %v17
  %v75 = vunpack.c.h.b16 %v17
  %v76 = vunpack.c.l.b16 %v18
  %v77 = vunpack.c.l.b16 %v19
  %v78 = vunpack.c.h.b16 %v19
  %v79 = vunpack.c.l.b16 %v20
  %v80 = vunpack.c.l.b16 %v21
  %v81 = vunpack.c.h.b16 %v21
  %v82 = vunpack.c.l.b16 %v22
  %v83 = vpack.c.b16 %v74, %v71
  %v84 = vpack.c.b16 %v75, %v72
  %v85 = vpack.c.b16 %v76, %v73
  %v86 = vpack.c.b16 %v80, %v77
  %v87 = vpack.c.b16 %v81, %v78
  %v88 = vpack.c.b16 %v82, %v79
  %v129 = vunpack.c.l.b16 %v23
  %v130 = vunpack.c.l.b16 %v24
  %v131 = vunpack.c.l.b16 %v25
  %v132 = vunpack.c.l.b16 %v26
  %v133 = vunpack.c.l.b16 %v27
  %v134 = vunpack.c.l.b16 %v28
  %v135 = vunpack.c.l.b16 %v29
  %v136 = vunpack.c.l.b16 %v30
  %v137 = vunpack.c.l.b16 %v31
  %v138 = vunpack.c.l.b16 %v32
  %v139 = vunpack.c.l.b16 %v33
  %v140 = vunpack.c.l.b16 %v34
  %v141 = vunpack.c.l.b16 %v35
  %v142 = vunpack.c.l.b16 %v36
  %v143 = vunpack.c.l.b16 %v37
  %v144 = vunpack.c.l.b16 %v38
  %v145 = vunpack.c.l.b16 %v39
  %v146 = vunpack.c.l.b16 %v40
  %v147 = vunpack.c.l.b16 %v41
  %v148 = vunpack.c.l.b16 %v42
  %v149 = vunpack.c.l.b16 %v43
  %v150 = vunpack.c.l.b16 %v44
  %v151 = vunpack.c.l.b16 %v45
  %v152 = vunpack.c.l.b16 %v46
  %v153 = vunpack.c.l.b16 %v47
  %v154 = vunpack.c.l.b16 %v48
  %v155 = vunpack.c.l.b16 %v49
  %v156 = vunpack.c.l.b16 %v50
  %v157 = vunpack.c.l.b16 %v51
  %v158 = vunpack.c.l.b16 %v52
  %v159 = vunpack.c.l.b16 %v53
  %v160 = vunpack.c.l.b16 %v54
  %v161 = vunpack.c.l.b16 %v55
  %v162 = vunpack.c.l.b16 %v56
  %v163 = vunpack.c.l.b16 %v57
  %v164 = vunpack.c.l.b16 %v58
  %v165 = vpack.c.b16 %v130, %v129
  %v166 = vpack.c.b16 %v132, %v131
  %v167 = vpack.c.b16 %v134, %v133
  %v168 = vpack.c.b16 %v136, %v135
  %v169 = vpack.c.b16 %v138, %v137
  %v170 = vpack.c.b16 %v140, %v139
  %v171 = vpack.c.b16 %v142, %v141
  %v172 = vpack.c.b16 %v144, %v143
  %v173 = vpack.c.b16 %v146, %v145
  %v174 = vpack.c.b16 %v148, %v147
  %v175 = vpack.c.b16 %v150, %v149
  %v176 = vpack.c.b16 %v152, %v151
  %v177 = vpack.c.b16 %v154, %v153
  %v178 = vpack.c.b16 %v156, %v155
  %v179 = vpack.c.b16 %v158, %v157
  %v180 = vpack.c.b16 %v160, %v159
  %v181 = vpack.c.b16 %v162, %v161
  %v182 = vpack.c.b16 %v164, %v163
  %vm201 = vcmask 261120
  %v203 = vsel %vm201, %v85, 0
  %v206 = vsel %vm201, %v88, 0
  %208 = vmatpush.bf16.msra.mxu0 %v172
  %209 = vmatpush.bf16.msra.mxu0 %v171
  %210 = vmatpush.bf16.msra.mxu0 %v170
  %211 = vmatpush.bf16.msra.mxu0 %v169
  %212 = vmatpush.bf16.msra.mxu0 %v168
  %213 = vmatpush.bf16.msra.mxu0 %v167
  %214 = vmatpush.bf16.msra.mxu0 %v166
  %215 = vmatpush.bf16.msra.mxu0 %v165
  %216 = vmatmul.bf16.gmra.mxu0 %v83
  %v217 = vpop.f32.mrf.mxu0
  %v218 = vadd.f32 %v61, %v217
  %v219 = vpop.f32.mrf.mxu0
  %v220 = vadd.f32 %v61, %v219
  %221 = vmatmul.bf16.gmra.mxu0 %v86
  %v222 = vpop.f32.mrf.mxu0
  %v223 = vadd.f32 %v61, %v222
  %v224 = vpop.f32.mrf.mxu0
  %v225 = vadd.f32 %v61, %v224
  %226 = vdwg.mxu0
  %227 = vmatpush.bf16.msra.mxu0 %v180
  %228 = vmatpush.bf16.msra.mxu0 %v179
  %229 = vmatpush.bf16.msra.mxu0 %v178
  %230 = vmatpush.bf16.msra.mxu0 %v177
  %231 = vmatpush.bf16.msra.mxu0 %v176
  %232 = vmatpush.bf16.msra.mxu0 %v175
  %233 = vmatpush.bf16.msra.mxu0 %v174
  %234 = vmatpush.bf16.msra.mxu0 %v173
  %235 = vmatmul.bf16.gmra.mxu0 %v84
  %v236 = vpop.f32.mrf.mxu0
  %v237 = vadd.f32 %v218, %v236
  %v238 = vpop.f32.mrf.mxu0
  %v239 = vadd.f32 %v220, %v238
  %240 = vmatmul.bf16.gmra.mxu0 %v87
  %v241 = vpop.f32.mrf.mxu0
  %v242 = vadd.f32 %v223, %v241
  %v243 = vpop.f32.mrf.mxu0
  %v244 = vadd.f32 %v225, %v243
  %245 = vdwg.mxu0
  %246 = vmatpush.bf16.msra.mxu0 0
  %247 = vmatpush.bf16.msra.mxu0 0
  %248 = vmatpush.bf16.msra.mxu0 0
  %249 = vmatpush.bf16.msra.mxu0 0
  %250 = vmatpush.bf16.msra.mxu0 0
  %251 = vmatpush.bf16.msra.mxu0 0
  %252 = vmatpush.bf16.msra.mxu0 %v182
  %253 = vmatpush.bf16.msra.mxu0 %v181
  %254 = vmatmul.bf16.gmra.mxu0 %v203
  %v255 = vpop.f32.mrf.mxu0
  %v256 = vadd.f32 %v237, %v255
  %v257 = vpop.f32.mrf.mxu0
  %v258 = vadd.f32 %v239, %v257
  %259 = vmatmul.bf16.gmra.mxu0 %v206
  %v260 = vpop.f32.mrf.mxu0
  %v261 = vadd.f32 %v242, %v260
  %v262 = vpop.f32.mrf.mxu0
  %v263 = vadd.f32 %v244, %v262
  %264 = vdwg.mxu0
  %v265 = vmax.f32 %v256, 0.0
  %v266 = vmax.f32 %v258, 0.0
  %v267 = vmax.f32 %v261, 0.0
  %v268 = vmax.f32 %v263, 0.0
  %vm269 = vcmask 523264
  %270 = vst.msk [vmem:[%s3] sm:$0xff] %vm269, %v265
  %271 = vst.msk [vmem:[%s3 + $0x8] sm:$0xff] %vm269, %v266
  %272 = vst.msk [vmem:[%s3 + $0x10] sm:$0xff] %vm269, %v267
  %273 = vst.msk [vmem:[%s3 + $0x18] sm:$0xff] %vm269, %v268
  // Predicated region
  $region14: #{confidence_network_forward.21} parent=0 // pred_check
    _
  $region15: #{confidence_network_forward.21} parent=0 // pred_check_branch
    %275 = sbr.rel (0) target = $region17
  $region16: #{confidence_network_forward.21} parent=0 // pred_region
    _
  $region17: #{confidence_network_forward.21} parent=0 // pred_fallthru
    _
  // Predicated region
  $region18: #{confidence_network_forward.21} parent=0 // pred_check
    _
  $region19: #{confidence_network_forward.21} parent=0 // pred_check_branch
    %277 = sbr.rel (0) target = $region21
  $region20: #{confidence_network_forward.21} parent=0 // pred_region
    _
  $region21: #{confidence_network_forward.21} parent=0 // pred_fallthru
    _

// kernel: confidence_network_forward.22
$region0: #{confidence_network_forward.22}
  #allocation0 [shape = 'u32[]', space=smem, size = 0x4, offset = 0x4, fixed_abs, tag = 'smem constant byte address 0x4 - core index']
  #allocation1 [shape = 'u32[72,128]{1,0:T(1,128)}', space=vmem, size = 0x9000, scoped, tag = 'internal scratch']
  %s0 = inlined_call_operand.vmem [shape: bf16[32,32], index: 0, kind: input, shape index: {}]
  %s1 = inlined_call_operand.vmem [shape: bf16[32,64], index: 1, kind: input, shape index: {}]
  %s2 = inlined_call_operand.vmem [shape: f32[1,64], index: 2, kind: input, shape index: {}]
  %s3 = inlined_call_operand.vmem [shape: f32[32,64], index: 3, kind: output, shape index: {}]
  %s4 = sld [smem:[#allocation0]]
  $region22: #{confidence_network_forward.22} parent=0
    _
  %s6 = ssub.s32 1, %s4
  %s7 = scalar_select 0, %s6, %s4
  // Predicated region
  $region2: #{confidence_network_forward.22} parent=0 // pred_check
    _
  $region3: #{confidence_network_forward.22} parent=0 // pred_check_branch
    %9 = sbr.rel (0) target = $region5
  $region4: #{confidence_network_forward.22} parent=0 // pred_region
    _
  $region5: #{confidence_network_forward.22} parent=0 // pred_fallthru
    _
  // Predicated region
  $region6: #{confidence_network_forward.22} parent=0 // pred_check
    _
  $region7: #{confidence_network_forward.22} parent=0 // pred_check_branch
    %11 = sbr.rel (0) target = $region9
  $region8: #{confidence_network_forward.22} parent=0 // pred_region
    _
  $region9: #{confidence_network_forward.22} parent=0 // pred_fallthru
    _
  // Predicated region
  $region10: #{confidence_network_forward.22} parent=0 // pred_check
    _
  $region11: #{confidence_network_forward.22} parent=0 // pred_check_branch
    %13 = sbr.rel (0) target = $region13
  $region12: #{confidence_network_forward.22} parent=0 // pred_region
    _
  $region13: #{confidence_network_forward.22} parent=0 // pred_fallthru
    _
  %v15 = vld [vmem:[%s0] sm:$0xf]
  %v16 = vld [vmem:[%s0 + $0x4] sm:$0xf]
  %v17 = vld [vmem:[%s0 + $0x8] sm:$0xf]
  %v18 = vld [vmem:[%s0 + $0xc] sm:$0xf]
  %v19 = vld [vmem:[%s1] sm:$0xf]
  %v20 = vld [vmem:[%s1 + $0x4] sm:$0xf]
  %v21 = vld [vmem:[%s1 + $0x8] sm:$0xf]
  %v22 = vld [vmem:[%s1 + $0xc] sm:$0xf]
  %v23 = vld [vmem:[%s2] sm:$0x1]
  %v25 = vperm.slane %v23, 0
  %v31 = vunpack.c.l.b16 %v15
  %v32 = vunpack.c.l.b16 %v16
  %v33 = vunpack.c.l.b16 %v17
  %v34 = vunpack.c.l.b16 %v18
  %v35 = vpack.c.b16 %v32, %v31
  %v36 = vpack.c.b16 %v34, %v33
  %v41 = vunpack.c.l.b16 %v19
  %v42 = vunpack.c.l.b16 %v20
  %v43 = vunpack.c.l.b16 %v21
  %v44 = vunpack.c.l.b16 %v22
  %v45 = vpack.c.b16 %v42, %v41
  %v46 = vpack.c.b16 %v44, %v43
  %vm49 = vcmask 261120
  %v51 = vsel %vm49, %v35, 0
  %v54 = vsel %vm49, %v36, 0
  %56 = vmatpush.bf16.msra.mxu0 0
  %57 = vmatpush.bf16.msra.mxu0 0
  %58 = vmatpush.bf16.msra.mxu0 0
  %59 = vmatpush.bf16.msra.mxu0 0
  %60 = vmatpush.bf16.msra.mxu0 0
  %61 = vmatpush.bf16.msra.mxu0 0
  %62 = vmatpush.bf16.msra.mxu0 %v46
  %63 = vmatpush.bf16.msra.mxu0 %v45
  %64 = vmatmul.bf16.gmra.mxu0 %v51
  %v65 = vpop.f32.mrf.mxu0
  %v66 = vadd.f32 %v25, %v65
  %v67 = vpop.f32.mrf.mxu0
  %v68 = vadd.f32 %v25, %v67
  %69 = vmatmul.bf16.gmra.mxu0 %v54
  %v70 = vpop.f32.mrf.mxu0
  %v71 = vadd.f32 %v25, %v70
  %v72 = vpop.f32.mrf.mxu0
  %v73 = vadd.f32 %v25, %v72
  %74 = vdwg.mxu0
  %vm75 = vcmask 523264
  %76 = vst.msk [vmem:[%s3] sm:$0xff] %vm75, %v66
  %77 = vst.msk [vmem:[%s3 + $0x8] sm:$0xff] %vm75, %v68
  %78 = vst.msk [vmem:[%s3 + $0x10] sm:$0xff] %vm75, %v71
  %79 = vst.msk [vmem:[%s3 + $0x18] sm:$0xff] %vm75, %v73
  // Predicated region
  $region14: #{confidence_network_forward.22} parent=0 // pred_check
    _
  $region15: #{confidence_network_forward.22} parent=0 // pred_check_branch
    %81 = sbr.rel (0) target = $region17
  $region16: #{confidence_network_forward.22} parent=0 // pred_region
    _
  $region17: #{confidence_network_forward.22} parent=0 // pred_fallthru
    _
  // Predicated region
  $region18: #{confidence_network_forward.22} parent=0 // pred_check
    _
  $region19: #{confidence_network_forward.22} parent=0 // pred_check_branch
    %83 = sbr.rel (0) target = $region21
  $region20: #{confidence_network_forward.22} parent=0 // pred_region
    _
  $region21: #{confidence_network_forward.22} parent=0 // pred_fallthru
    _

// kernel: confidence_network_forward.23
$region0: #{confidence_network_forward.23}
  #allocation0 [shape = 'u32[]', space=smem, size = 0x4, offset = 0x4, fixed_abs, tag = 'smem constant byte address 0x4 - core index']
  #allocation1 [shape = 'u32[72,128]{1,0:T(1,128)}', space=vmem, size = 0x9000, scoped, tag = 'internal scratch']
  %s0 = inlined_call_operand.vmem [shape: bf16[32,576], index: 0, kind: input, shape index: {}]
  %s1 = inlined_call_operand.vmem [shape: bf16[576,64], index: 1, kind: input, shape index: {}]
  %s2 = inlined_call_operand.vmem [shape: f32[1,64], index: 2, kind: input, shape index: {}]
  %s3 = inlined_call_operand.vmem [shape: f32[32,64], index: 3, kind: input, shape index: {}]
  %s4 = inlined_call_operand.vmem [shape: f32[32,64], index: 4, kind: output, shape index: {}]
  %s5 = sld [smem:[#allocation0]]
  $region26: #{confidence_network_forward.23} parent=0
    _
  %s7 = ssub.s32 1, %s5
  %s8 = scalar_select 0, %s7, %s5
  // Predicated region
  $region2: #{confidence_network_forward.23} parent=0 // pred_check
    _
  $region3: #{confidence_network_forward.23} parent=0 // pred_check_branch
    %10 = sbr.rel (0) target = $region5
  $region4: #{confidence_network_forward.23} parent=0 // pred_region
    _
  $region5: #{confidence_network_forward.23} parent=0 // pred_fallthru
    _
  // Predicated region
  $region6: #{confidence_network_forward.23} parent=0 // pred_check
    _
  $region7: #{confidence_network_forward.23} parent=0 // pred_check_branch
    %12 = sbr.rel (0) target = $region9
  $region8: #{confidence_network_forward.23} parent=0 // pred_region
    _
  $region9: #{confidence_network_forward.23} parent=0 // pred_fallthru
    _
  // Predicated region
  $region10: #{confidence_network_forward.23} parent=0 // pred_check
    _
  $region11: #{confidence_network_forward.23} parent=0 // pred_check_branch
    %14 = sbr.rel (0) target = $region13
  $region12: #{confidence_network_forward.23} parent=0 // pred_region
    _
  $region13: #{confidence_network_forward.23} parent=0 // pred_fallthru
    _
  // Predicated region
  $region14: #{confidence_network_forward.23} parent=0 // pred_check
    _
  $region15: #{confidence_network_forward.23} parent=0 // pred_check_branch
    %16 = sbr.rel (0) target = $region17
  $region16: #{confidence_network_forward.23} parent=0 // pred_region
    _
  $region17: #{confidence_network_forward.23} parent=0 // pred_fallthru
    _
  %v18 = vld [vmem:[%s0] sm:$0xff]
  %v19 = vld [vmem:[%s0 + $0x8] sm:$0xff]
  %v20 = vld [vmem:[%s0 + $0x10] sm:$0xf]
  %v21 = vld [vmem:[%s0 + $0x14] sm:$0xff]
  %v22 = vld [vmem:[%s0 + $0x1c] sm:$0xff]
  %v23 = vld [vmem:[%s0 + $0x24] sm:$0xf]
  %v24 = vld [vmem:[%s0 + $0x28] sm:$0xff]
  %v25 = vld [vmem:[%s0 + $0x30] sm:$0xff]
  %v26 = vld [vmem:[%s0 + $0x38] sm:$0xf]
  %v27 = vld [vmem:[%s0 + $0x3c] sm:$0xff]
  %v28 = vld [vmem:[%s0 + $0x44] sm:$0xff]
  %v29 = vld [vmem:[%s0 + $0x4c] sm:$0xf]
  %v30 = vld [vmem:[%s1] sm:$0xf]
  %v31 = vld [vmem:[%s1 + $0x4] sm:$0xf]
  %v32 = vld [vmem:[%s1 + $0x8] sm:$0xf]
  %v33 = vld [vmem:[%s1 + $0xc] sm:$0xf]
  %v34 = vld [vmem:[%s1 + $0x10] sm:$0xf]
  %v35 = vld [vmem:[%s1 + $0x14] sm:$0xf]
  %v36 = vld [vmem:[%s1 + $0x18] sm:$0xf]
  %v37 = vld [vmem:[%s1 + $0x1c] sm:$0xf]
  %v38 = vld [vmem:[%s1 + $0x20] sm:$0xf]
  %v39 = vld [vmem:[%s1 + $0x24] sm:$0xf]
  %v40 = vld [vmem:[%s1 + $0x28] sm:$0xf]
  %v41 = vld [vmem:[%s1 + $0x2c] sm:$0xf]
  %v42 = vld [vmem:[%s1 + $0x30] sm:$0xf]
  %v43 = vld [vmem:[%s1 + $0x34] sm:$0xf]
  %v44 = vld [vmem:[%s1 + $0x38] sm:$0xf]
  %v45 = vld [vmem:[%s1 + $0x3c] sm:$0xf]
  %v46 = vld [vmem:[%s1 + $0x40] sm:$0xf]
  %v47 = vld [vmem:[%s1 + $0x44] sm:$0xf]
  %v48 = vld [vmem:[%s1 + $0x48] sm:$0xf]
  %v49 = vld [vmem:[%s1 + $0x4c] sm:$0xf]
  %v50 = vld [vmem:[%s1 + $0x50] sm:$0xf]
  %v51 = vld [vmem:[%s1 + $0x54] sm:$0xf]
  %v52 = vld [vmem:[%s1 + $0x58] sm:$0xf]
  %v53 = vld [vmem:[%s1 + $0x5c] sm:$0xf]
  %v54 = vld [vmem:[%s1 + $0x60] sm:$0xf]
  %v55 = vld [vmem:[%s1 + $0x64] sm:$0xf]
  %v56 = vld [vmem:[%s1 + $0x68] sm:$0xf]
  %v57 = vld [vmem:[%s1 + $0x6c] sm:$0xf]
  %v58 = vld [vmem:[%s1 + $0x70] sm:$0xf]
  %v59 = vld [vmem:[%s1 + $0x74] sm:$0xf]
  %v60 = vld [vmem:[%s1 + $0x78] sm:$0xf]
  %v61 = vld [vmem:[%s1 + $0x7c] sm:$0xf]
  %v62 = vld [vmem:[%s1 + $0x80] sm:$0xf]
  %v63 = vld [vmem:[%s1 + $0x84] sm:$0xf]
  %v64 = vld [vmem:[%s1 + $0x88] sm:$0xf]
  %v65 = vld [vmem:[%s1 + $0x8c] sm:$0xf]
  %v66 = vld [vmem:[%s1 + $0x90] sm:$0xf]
  %v67 = vld [vmem:[%s1 + $0x94] sm:$0xf]
  %v68 = vld [vmem:[%s1 + $0x98] sm:$0xf]
  %v69 = vld [vmem:[%s1 + $0x9c] sm:$0xf]
  %v70 = vld [vmem:[%s1 + $0xa0] sm:$0xf]
  %v71 = vld [vmem:[%s1 + $0xa4] sm:$0xf]
  %v72 = vld [vmem:[%s1 + $0xa8] sm:$0xf]
  %v73 = vld [vmem:[%s1 + $0xac] sm:$0xf]
  %v74 = vld [vmem:[%s1 + $0xb0] sm:$0xf]
  %v75 = vld [vmem:[%s1 + $0xb4] sm:$0xf]
  %v76 = vld [vmem:[%s1 + $0xb8] sm:$0xf]
  %v77 = vld [vmem:[%s1 + $0xbc] sm:$0xf]
  %v78 = vld [vmem:[%s1 + $0xc0] sm:$0xf]
  %v79 = vld [vmem:[%s1 + $0xc4] sm:$0xf]
  %v80 = vld [vmem:[%s1 + $0xc8] sm:$0xf]
  %v81 = vld [vmem:[%s1 + $0xcc] sm:$0xf]
  %v82 = vld [vmem:[%s1 + $0xd0] sm:$0xf]
  %v83 = vld [vmem:[%s1 + $0xd4] sm:$0xf]
  %v84 = vld [vmem:[%s1 + $0xd8] sm:$0xf]
  %v85 = vld [vmem:[%s1 + $0xdc] sm:$0xf]
  %v86 = vld [vmem:[%s1 + $0xe0] sm:$0xf]
  %v87 = vld [vmem:[%s1 + $0xe4] sm:$0xf]
  %v88 = vld [vmem:[%s1 + $0xe8] sm:$0xf]
  %v89 = vld [vmem:[%s1 + $0xec] sm:$0xf]
  %v90 = vld [vmem:[%s1 + $0xf0] sm:$0xf]
  %v91 = vld [vmem:[%s1 + $0xf4] sm:$0xf]
  %v92 = vld [vmem:[%s1 + $0xf8] sm:$0xf]
  %v93 = vld [vmem:[%s1 + $0xfc] sm:$0xf]
  %v94 = vld [vmem:[%s1 + $0x100] sm:$0xf]
  %v95 = vld [vmem:[%s1 + $0x104] sm:$0xf]
  %v96 = vld [vmem:[%s1 + $0x108] sm:$0xf]
  %v97 = vld [vmem:[%s1 + $0x10c] sm:$0xf]
  %v98 = vld [vmem:[%s1 + $0x110] sm:$0xf]
  %v99 = vld [vmem:[%s1 + $0x114] sm:$0xf]
  %v100 = vld [vmem:[%s1 + $0x118] sm:$0xf]
  %v101 = vld [vmem:[%s1 + $0x11c] sm:$0xf]
  %v102 = vld [vmem:[%s2] sm:$0x1]
  %v104 = vperm.slane %v102, 0
  %v118 = vunpack.c.l.b16 %v18
  %v119 = vunpack.c.h.b16 %v18
  %v120 = vunpack.c.l.b16 %v19
  %v121 = vunpack.c.h.b16 %v19
  %v122 = vunpack.c.l.b16 %v20
  %v123 = vunpack.c.l.b16 %v21
  %v124 = vunpack.c.h.b16 %v21
  %v125 = vunpack.c.l.b16 %v22
  %v126 = vunpack.c.h.b16 %v22
  %v127 = vunpack.c.l.b16 %v23
  %v128 = vunpack.c.l.b16 %v24
  %v129 = vunpack.c.h.b16 %v24
  %v130 = vunpack.c.l.b16 %v25
  %v131 = vunpack.c.h.b16 %v25
  %v132 = vunpack.c.l.b16 %v26
  %v133 = vunpack.c.l.b16 %v27
  %v134 = vunpack.c.h.b16 %v27
  %v135 = vunpack.c.l.b16 %v28
  %v136 = vunpack.c.h.b16 %v28
  %v137 = vunpack.c.l.b16 %v29
  %v138 = vpack.c.b16 %v123, %v118
  %v139 = vpack.c.b16 %v124, %v119
  %v140 = vpack.c.b16 %v125, %v120
  %v141 = vpack.c.b16 %v126, %v121
  %v142 = vpack.c.b16 %v127, %v122
  %v143 = vpack.c.b16 %v133, %v128
  %v144 = vpack.c.b16 %v134, %v129
  %v145 = vpack.c.b16 %v135, %v130
  %v146 = vpack.c.b16 %v136, %v131
  %v147 = vpack.c.b16 %v137, %v132
  %v228 = vunpack.c.l.b16 %v30
  %v229 = vunpack.c.l.b16 %v31
  %v230 = vunpack.c.l.b16 %v32
  %v231 = vunpack.c.l.b16 %v33
  %v232 = vunpack.c.l.b16 %v34
  %v233 = vunpack.c.l.b16 %v35
  %v234 = vunpack.c.l.b16 %v36
  %v235 = vunpack.c.l.b16 %v37
  %v236 = vunpack.c.l.b16 %v38
  %v237 = vunpack.c.l.b16 %v39
  %v238 = vunpack.c.l.b16 %v40
  %v239 = vunpack.c.l.b16 %v41
  %v240 = vunpack.c.l.b16 %v42
  %v241 = vunpack.c.l.b16 %v43
  %v242 = vunpack.c.l.b16 %v44
  %v243 = vunpack.c.l.b16 %v45
  %v244 = vunpack.c.l.b16 %v46
  %v245 = vunpack.c.l.b16 %v47
  %v246 = vunpack.c.l.b16 %v48
  %v247 = vunpack.c.l.b16 %v49
  %v248 = vunpack.c.l.b16 %v50
  %v249 = vunpack.c.l.b16 %v51
  %v250 = vunpack.c.l.b16 %v52
  %v251 = vunpack.c.l.b16 %v53
  %v252 = vunpack.c.l.b16 %v54
  %v253 = vunpack.c.l.b16 %v55
  %v254 = vunpack.c.l.b16 %v56
  %v255 = vunpack.c.l.b16 %v57
  %v256 = vunpack.c.l.b16 %v58
  %v257 = vunpack.c.l.b16 %v59
  %v258 = vunpack.c.l.b16 %v60
  %v259 = vunpack.c.l.b16 %v61
  %v260 = vunpack.c.l.b16 %v62
  %v261 = vunpack.c.l.b16 %v63
  %v262 = vunpack.c.l.b16 %v64
  %v263 = vunpack.c.l.b16 %v65
  %v264 = vunpack.c.l.b16 %v66
  %v265 = vunpack.c.l.b16 %v67
  %v266 = vunpack.c.l.b16 %v68
  %v267 = vunpack.c.l.b16 %v69
  %v268 = vunpack.c.l.b16 %v70
  %v269 = vunpack.c.l.b16 %v71
  %v270 = vunpack.c.l.b16 %v72
  %v271 = vunpack.c.l.b16 %v73
  %v272 = vunpack.c.l.b16 %v74
  %v273 = vunpack.c.l.b16 %v75
  %v274 = vunpack.c.l.b16 %v76
  %v275 = vunpack.c.l.b16 %v77
  %v276 = vunpack.c.l.b16 %v78
  %v277 = vunpack.c.l.b16 %v79
  %v278 = vunpack.c.l.b16 %v80
  %v279 = vunpack.c.l.b16 %v81
  %v280 = vunpack.c.l.b16 %v82
  %v281 = vunpack.c.l.b16 %v83
  %v282 = vunpack.c.l.b16 %v84
  %v283 = vunpack.c.l.b16 %v85
  %v284 = vunpack.c.l.b16 %v86
  %v285 = vunpack.c.l.b16 %v87
  %v286 = vunpack.c.l.b16 %v88
  %v287 = vunpack.c.l.b16 %v89
  %v288 = vunpack.c.l.b16 %v90
  %v289 = vunpack.c.l.b16 %v91
  %v290 = vunpack.c.l.b16 %v92
  %v291 = vunpack.c.l.b16 %v93
  %v292 = vunpack.c.l.b16 %v94
  %v293 = vunpack.c.l.b16 %v95
  %v294 = vunpack.c.l.b16 %v96
  %v295 = vunpack.c.l.b16 %v97
  %v296 = vunpack.c.l.b16 %v98
  %v297 = vunpack.c.l.b16 %v99
  %v298 = vunpack.c.l.b16 %v100
  %v299 = vunpack.c.l.b16 %v101
  %v300 = vpack.c.b16 %v229, %v228
  %v301 = vpack.c.b16 %v231, %v230
  %v302 = vpack.c.b16 %v233, %v232
  %v303 = vpack.c.b16 %v235, %v234
  %v304 = vpack.c.b16 %v237, %v236
  %v305 = vpack.c.b16 %v239, %v238
  %v306 = vpack.c.b16 %v241, %v240
  %v307 = vpack.c.b16 %v243, %v242
  %v308 = vpack.c.b16 %v245, %v244
  %v309 = vpack.c.b16 %v247, %v246
  %v310 = vpack.c.b16 %v249, %v248
  %v311 = vpack.c.b16 %v251, %v250
  %v312 = vpack.c.b16 %v253, %v252
  %v313 = vpack.c.b16 %v255, %v254
  %v314 = vpack.c.b16 %v257, %v256
  %v315 = vpack.c.b16 %v259, %v258
  %v316 = vpack.c.b16 %v261, %v260
  %v317 = vpack.c.b16 %v263, %v262
  %v318 = vpack.c.b16 %v265, %v264
  %v319 = vpack.c.b16 %v267, %v266
  %v320 = vpack.c.b16 %v269, %v268
  %v321 = vpack.c.b16 %v271, %v270
  %v322 = vpack.c.b16 %v273, %v272
  %v323 = vpack.c.b16 %v275, %v274
  %v324 = vpack.c.b16 %v277, %v276
  %v325 = vpack.c.b16 %v279, %v278
  %v326 = vpack.c.b16 %v281, %v280
  %v327 = vpack.c.b16 %v283, %v282
  %v328 = vpack.c.b16 %v285, %v284
  %v329 = vpack.c.b16 %v287, %v286
  %v330 = vpack.c.b16 %v289, %v288
  %v331 = vpack.c.b16 %v291, %v290
  %v332 = vpack.c.b16 %v293, %v292
  %v333 = vpack.c.b16 %v295, %v294
  %v334 = vpack.c.b16 %v297, %v296
  %v335 = vpack.c.b16 %v299, %v298
  %vm372 = vcmask 523264
  %v374 = vsel %vm372, %v142, 0
  %v377 = vsel %vm372, %v147, 0
  %379 = vmatpush.bf16.msra.mxu0 %v307
  %380 = vmatpush.bf16.msra.mxu0 %v306
  %381 = vmatpush.bf16.msra.mxu0 %v305
  %382 = vmatpush.bf16.msra.mxu0 %v304
  %383 = vmatpush.bf16.msra.mxu0 %v303
  %384 = vmatpush.bf16.msra.mxu0 %v302
  %385 = vmatpush.bf16.msra.mxu0 %v301
  %386 = vmatpush.bf16.msra.mxu0 %v300
  %387 = vmatmul.bf16.gmra.mxu0 %v138
  %v388 = vpop.f32.mrf.mxu0
  %v389 = vadd.f32 %v104, %v388
  %v390 = vpop.f32.mrf.mxu0
  %v391 = vadd.f32 %v104, %v390
  %392 = vmatmul.bf16.gmra.mxu0 %v143
  %v393 = vpop.f32.mrf.mxu0
  %v394 = vadd.f32 %v104, %v393
  %v395 = vpop.f32.mrf.mxu0
  %v396 = vadd.f32 %v104, %v395
  %397 = vdwg.mxu0
  %398 = vmatpush.bf16.msra.mxu0 %v315
  %399 = vmatpush.bf16.msra.mxu0 %v314
  %400 = vmatpush.bf16.msra.mxu0 %v313
  %401 = vmatpush.bf16.msra.mxu0 %v312
  %402 = vmatpush.bf16.msra.mxu0 %v311
  %403 = vmatpush.bf16.msra.mxu0 %v310
  %404 = vmatpush.bf16.msra.mxu0 %v309
  %405 = vmatpush.bf16.msra.mxu0 %v308
  %406 = vmatmul.bf16.gmra.mxu0 %v139
  %v407 = vpop.f32.mrf.mxu0
  %v408 = vadd.f32 %v389, %v407
  %v409 = vpop.f32.mrf.mxu0
  %v410 = vadd.f32 %v391, %v409
  %411 = vmatmul.bf16.gmra.mxu0 %v144
  %v412 = vpop.f32.mrf.mxu0
  %v413 = vadd.f32 %v394, %v412
  %v414 = vpop.f32.mrf.mxu0
  %v415 = vadd.f32 %v396, %v414
  %416 = vdwg.mxu0
  %417 = vmatpush.bf16.msra.mxu0 %v323
  %418 = vmatpush.bf16.msra.mxu0 %v322
  %419 = vmatpush.bf16.msra.mxu0 %v321
  %420 = vmatpush.bf16.msra.mxu0 %v320
  %421 = vmatpush.bf16.msra.mxu0 %v319
  %422 = vmatpush.bf16.msra.mxu0 %v318
  %423 = vmatpush.bf16.msra.mxu0 %v317
  %424 = vmatpush.bf16.msra.mxu0 %v316
  %425 = vmatmul.bf16.gmra.mxu0 %v140
  %v426 = vpop.f32.mrf.mxu0
  %v427 = vadd.f32 %v408, %v426
  %v428 = vpop.f32.mrf.mxu0
  %v429 = vadd.f32 %v410, %v428
  %430 = vmatmul.bf16.gmra.mxu0 %v145
  %v431 = vpop.f32.mrf.mxu0
  %v432 = vadd.f32 %v413, %v431
  %v433 = vpop.f32.mrf.mxu0
  %v434 = vadd.f32 %v415, %v433
  %435 = vdwg.mxu0
  %436 = vmatpush.bf16.msra.mxu0 %v331
  %437 = vmatpush.bf16.msra.mxu0 %v330
  %438 = vmatpush.bf16.msra.mxu0 %v329
  %439 = vmatpush.bf16.msra.mxu0 %v328
  %440 = vmatpush.bf16.msra.mxu0 %v327
  %441 = vmatpush.bf16.msra.mxu0 %v326
  %442 = vmatpush.bf16.msra.mxu0 %v325
  %443 = vmatpush.bf16.msra.mxu0 %v324
  %444 = vmatmul.bf16.gmra.mxu0 %v141
  %v445 = vpop.f32.mrf.mxu0
  %v446 = vadd.f32 %v427, %v445
  %v447 = vpop.f32.mrf.mxu0
  %v448 = vadd.f32 %v429, %v447
  %449 = vmatmul.bf16.gmra.mxu0 %v146
  %v450 = vpop.f32.mrf.mxu0
  %v451 = vadd.f32 %v432, %v450
  %v452 = vpop.f32.mrf.mxu0
  %v453 = vadd.f32 %v434, %v452
  %454 = vdwg.mxu0
  %455 = vmatpush.bf16.msra.mxu0 0
  %456 = vmatpush.bf16.msra.mxu0 0
  %457 = vmatpush.bf16.msra.mxu0 0
  %458 = vmatpush.bf16.msra.mxu0 0
  %459 = vmatpush.bf16.msra.mxu0 %v335
  %460 = vmatpush.bf16.msra.mxu0 %v334
  %461 = vmatpush.bf16.msra.mxu0 %v333
  %462 = vmatpush.bf16.msra.mxu0 %v332
  %463 = vmatmul.bf16.gmra.mxu0 %v374
  %v464 = vpop.f32.mrf.mxu0
  %v465 = vadd.f32 %v446, %v464
  %v466 = vpop.f32.mrf.mxu0
  %v467 = vadd.f32 %v448, %v466
  %468 = vmatmul.bf16.gmra.mxu0 %v377
  %v469 = vpop.f32.mrf.mxu0
  %v470 = vadd.f32 %v451, %v469
  %v471 = vpop.f32.mrf.mxu0
  %v472 = vadd.f32 %v453, %v471
  %473 = vdwg.mxu0
  %v474 = vld [vmem:[%s3] sm:$0xff]
  %v475 = vld [vmem:[%s3 + $0x8] sm:$0xff]
  %v476 = vld [vmem:[%s3 + $0x10] sm:$0xff]
  %v477 = vld [vmem:[%s3 + $0x18] sm:$0xff]
  %v478 = vadd.f32 %v465, %v474
  %v479 = vadd.f32 %v467, %v475
  %v480 = vadd.f32 %v470, %v476
  %v481 = vadd.f32 %v472, %v477
  %v482 = vmax.f32 %v478, 0.0
  %v483 = vmax.f32 %v479, 0.0
  %v484 = vmax.f32 %v480, 0.0
  %v485 = vmax.f32 %v481, 0.0
  %486 = vst.msk [vmem:[%s4] sm:$0xff] %vm372, %v482
  %487 = vst.msk [vmem:[%s4 + $0x8] sm:$0xff] %vm372, %v483
  %488 = vst.msk [vmem:[%s4 + $0x10] sm:$0xff] %vm372, %v484
  %489 = vst.msk [vmem:[%s4 + $0x18] sm:$0xff] %vm372, %v485
  // Predicated region
  $region18: #{confidence_network_forward.23} parent=0 // pred_check
    _
  $region19: #{confidence_network_forward.23} parent=0 // pred_check_branch
    %491 = sbr.rel (0) target = $region21
  $region20: #{confidence_network_forward.23} parent=0 // pred_region
    _
  $region21: #{confidence_network_forward.23} parent=0 // pred_fallthru
    _
  // Predicated region
  $region22: #{confidence_network_forward.23} parent=0 // pred_check
    _
  $region23: #{confidence_network_forward.23} parent=0 // pred_check_branch
    %493 = sbr.rel (0) target = $region25
  $region24: #{confidence_network_forward.23} parent=0 // pred_region
    _
  $region25: #{confidence_network_forward.23} parent=0 // pred_fallthru
    _

// kernel: confidence_network_forward.24
$region0: #{confidence_network_forward.24}
  #allocation0 [shape = 'u32[]', space=smem, size = 0x4, offset = 0x4, fixed_abs, tag = 'smem constant byte address 0x4 - core index']
  #allocation1 [shape = 'u32[72,128]{1,0:T(1,128)}', space=vmem, size = 0x9000, scoped, tag = 'internal scratch']
  %s0 = inlined_call_operand.vmem [shape: bf16[8,576], index: 0, kind: input, shape index: {}]
  %s1 = inlined_call_operand.vmem [shape: bf16[576,128], index: 1, kind: input, shape index: {}]
  %s2 = inlined_call_operand.vmem [shape: f32[1,128], index: 2, kind: input, shape index: {}]
  %s3 = inlined_call_operand.vmem [shape: f32[8,128], index: 3, kind: output, shape index: {}]
  %s4 = sld [smem:[#allocation0]]
  $region22: #{confidence_network_forward.24} parent=0
    _
  %s6 = ssub.s32 1, %s4
  %s7 = scalar_select 0, %s6, %s4
  // Predicated region
  $region2: #{confidence_network_forward.24} parent=0 // pred_check
    _
  $region3: #{confidence_network_forward.24} parent=0 // pred_check_branch
    %9 = sbr.rel (0) target = $region5
  $region4: #{confidence_network_forward.24} parent=0 // pred_region
    _
  $region5: #{confidence_network_forward.24} parent=0 // pred_fallthru
    _
  // Predicated region
  $region6: #{confidence_network_forward.24} parent=0 // pred_check
    _
  $region7: #{confidence_network_forward.24} parent=0 // pred_check_branch
    %11 = sbr.rel (0) target = $region9
  $region8: #{confidence_network_forward.24} parent=0 // pred_region
    _
  $region9: #{confidence_network_forward.24} parent=0 // pred_fallthru
    _
  // Predicated region
  $region10: #{confidence_network_forward.24} parent=0 // pred_check
    _
  $region11: #{confidence_network_forward.24} parent=0 // pred_check_branch
    %13 = sbr.rel (0) target = $region13
  $region12: #{confidence_network_forward.24} parent=0 // pred_region
    _
  $region13: #{confidence_network_forward.24} parent=0 // pred_fallthru
    _
  %v15 = vld [vmem:[%s0] sm:$0xff]
  %v16 = vld [vmem:[%s0 + $0x8] sm:$0xff]
  %v17 = vld [vmem:[%s0 + $0x10] sm:$0xf]
  %v18 = vld [vmem:[%s1] sm:$0xf]
  %v19 = vld [vmem:[%s1 + $0x4] sm:$0xf]
  %v20 = vld [vmem:[%s1 + $0x8] sm:$0xf]
  %v21 = vld [vmem:[%s1 + $0xc] sm:$0xf]
  %v22 = vld [vmem:[%s1 + $0x10] sm:$0xf]
  %v23 = vld [vmem:[%s1 + $0x14] sm:$0xf]
  %v24 = vld [vmem:[%s1 + $0x18] sm:$0xf]
  %v25 = vld [vmem:[%s1 + $0x1c] sm:$0xf]
  %v26 = vld [vmem:[%s1 + $0x20] sm:$0xf]
  %v27 = vld [vmem:[%s1 + $0x24] sm:$0xf]
  %v28 = vld [vmem:[%s1 + $0x28] sm:$0xf]
  %v29 = vld [vmem:[%s1 + $0x2c] sm:$0xf]
  %v30 = vld [vmem:[%s1 + $0x30] sm:$0xf]
  %v31 = vld [vmem:[%s1 + $0x34] sm:$0xf]
  %v32 = vld [vmem:[%s1 + $0x38] sm:$0xf]
  %v33 = vld [vmem:[%s1 + $0x3c] sm:$0xf]
  %v34 = vld [vmem:[%s1 + $0x40] sm:$0xf]
  %v35 = vld [vmem:[%s1 + $0x44] sm:$0xf]
  %v36 = vld [vmem:[%s1 + $0x48] sm:$0xf]
  %v37 = vld [vmem:[%s1 + $0x4c] sm:$0xf]
  %v38 = vld [vmem:[%s1 + $0x50] sm:$0xf]
  %v39 = vld [vmem:[%s1 + $0x54] sm:$0xf]
  %v40 = vld [vmem:[%s1 + $0x58] sm:$0xf]
  %v41 = vld [vmem:[%s1 + $0x5c] sm:$0xf]
  %v42 = vld [vmem:[%s1 + $0x60] sm:$0xf]
  %v43 = vld [vmem:[%s1 + $0x64] sm:$0xf]
  %v44 = vld [vmem:[%s1 + $0x68] sm:$0xf]
  %v45 = vld [vmem:[%s1 + $0x6c] sm:$0xf]
  %v46 = vld [vmem:[%s1 + $0x70] sm:$0xf]
  %v47 = vld [vmem:[%s1 + $0x74] sm:$0xf]
  %v48 = vld [vmem:[%s1 + $0x78] sm:$0xf]
  %v49 = vld [vmem:[%s1 + $0x7c] sm:$0xf]
  %v50 = vld [vmem:[%s1 + $0x80] sm:$0xf]
  %v51 = vld [vmem:[%s1 + $0x84] sm:$0xf]
  %v52 = vld [vmem:[%s1 + $0x88] sm:$0xf]
  %v53 = vld [vmem:[%s1 + $0x8c] sm:$0xf]
  %v54 = vld [vmem:[%s1 + $0x90] sm:$0xf]
  %v55 = vld [vmem:[%s1 + $0x94] sm:$0xf]
  %v56 = vld [vmem:[%s1 + $0x98] sm:$0xf]
  %v57 = vld [vmem:[%s1 + $0x9c] sm:$0xf]
  %v58 = vld [vmem:[%s1 + $0xa0] sm:$0xf]
  %v59 = vld [vmem:[%s1 + $0xa4] sm:$0xf]
  %v60 = vld [vmem:[%s1 + $0xa8] sm:$0xf]
  %v61 = vld [vmem:[%s1 + $0xac] sm:$0xf]
  %v62 = vld [vmem:[%s1 + $0xb0] sm:$0xf]
  %v63 = vld [vmem:[%s1 + $0xb4] sm:$0xf]
  %v64 = vld [vmem:[%s1 + $0xb8] sm:$0xf]
  %v65 = vld [vmem:[%s1 + $0xbc] sm:$0xf]
  %v66 = vld [vmem:[%s1 + $0xc0] sm:$0xf]
  %v67 = vld [vmem:[%s1 + $0xc4] sm:$0xf]
  %v68 = vld [vmem:[%s1 + $0xc8] sm:$0xf]
  %v69 = vld [vmem:[%s1 + $0xcc] sm:$0xf]
  %v70 = vld [vmem:[%s1 + $0xd0] sm:$0xf]
  %v71 = vld [vmem:[%s1 + $0xd4] sm:$0xf]
  %v72 = vld [vmem:[%s1 + $0xd8] sm:$0xf]
  %v73 = vld [vmem:[%s1 + $0xdc] sm:$0xf]
  %v74 = vld [vmem:[%s1 + $0xe0] sm:$0xf]
  %v75 = vld [vmem:[%s1 + $0xe4] sm:$0xf]
  %v76 = vld [vmem:[%s1 + $0xe8] sm:$0xf]
  %v77 = vld [vmem:[%s1 + $0xec] sm:$0xf]
  %v78 = vld [vmem:[%s1 + $0xf0] sm:$0xf]
  %v79 = vld [vmem:[%s1 + $0xf4] sm:$0xf]
  %v80 = vld [vmem:[%s1 + $0xf8] sm:$0xf]
  %v81 = vld [vmem:[%s1 + $0xfc] sm:$0xf]
  %v82 = vld [vmem:[%s1 + $0x100] sm:$0xf]
  %v83 = vld [vmem:[%s1 + $0x104] sm:$0xf]
  %v84 = vld [vmem:[%s1 + $0x108] sm:$0xf]
  %v85 = vld [vmem:[%s1 + $0x10c] sm:$0xf]
  %v86 = vld [vmem:[%s1 + $0x110] sm:$0xf]
  %v87 = vld [vmem:[%s1 + $0x114] sm:$0xf]
  %v88 = vld [vmem:[%s1 + $0x118] sm:$0xf]
  %v89 = vld [vmem:[%s1 + $0x11c] sm:$0xf]
  %v90 = vld [vmem:[%s2] sm:$0x1]
  %v92 = vperm.slane %v90, 0
  %v97 = vunpack.c.l.b16 %v15
  %v98 = vunpack.c.h.b16 %v15
  %v99 = vunpack.c.l.b16 %v16
  %v100 = vunpack.c.h.b16 %v16
  %v101 = vunpack.c.l.b16 %v17
  %v102 = vpack.c.b16 %v97, %v97
  %v103 = vpack.c.b16 %v98, %v98
  %v104 = vpack.c.b16 %v99, %v99
  %v105 = vpack.c.b16 %v100, %v100
  %v106 = vpack.c.b16 %v101, %v101
  %v183 = vunpack.c.l.b16 %v18
  %v184 = vunpack.c.l.b16 %v19
  %v185 = vunpack.c.l.b16 %v20
  %v186 = vunpack.c.l.b16 %v21
  %v187 = vunpack.c.l.b16 %v22
  %v188 = vunpack.c.l.b16 %v23
  %v189 = vunpack.c.l.b16 %v24
  %v190 = vunpack.c.l.b16 %v25
  %v191 = vunpack.c.l.b16 %v26
  %v192 = vunpack.c.l.b16 %v27
  %v193 = vunpack.c.l.b16 %v28
  %v194 = vunpack.c.l.b16 %v29
  %v195 = vunpack.c.l.b16 %v30
  %v196 = vunpack.c.l.b16 %v31
  %v197 = vunpack.c.l.b16 %v32
  %v198 = vunpack.c.l.b16 %v33
  %v199 = vunpack.c.l.b16 %v34
  %v200 = vunpack.c.l.b16 %v35
  %v201 = vunpack.c.l.b16 %v36
  %v202 = vunpack.c.l.b16 %v37
  %v203 = vunpack.c.l.b16 %v38
  %v204 = vunpack.c.l.b16 %v39
  %v205 = vunpack.c.l.b16 %v40
  %v206 = vunpack.c.l.b16 %v41
  %v207 = vunpack.c.l.b16 %v42
  %v208 = vunpack.c.l.b16 %v43
  %v209 = vunpack.c.l.b16 %v44
  %v210 = vunpack.c.l.b16 %v45
  %v211 = vunpack.c.l.b16 %v46
  %v212 = vunpack.c.l.b16 %v47
  %v213 = vunpack.c.l.b16 %v48
  %v214 = vunpack.c.l.b16 %v49
  %v215 = vunpack.c.l.b16 %v50
  %v216 = vunpack.c.l.b16 %v51
  %v217 = vunpack.c.l.b16 %v52
  %v218 = vunpack.c.l.b16 %v53
  %v219 = vunpack.c.l.b16 %v54
  %v220 = vunpack.c.l.b16 %v55
  %v221 = vunpack.c.l.b16 %v56
  %v222 = vunpack.c.l.b16 %v57
  %v223 = vunpack.c.l.b16 %v58
  %v224 = vunpack.c.l.b16 %v59
  %v225 = vunpack.c.l.b16 %v60
  %v226 = vunpack.c.l.b16 %v61
  %v227 = vunpack.c.l.b16 %v62
  %v228 = vunpack.c.l.b16 %v63
  %v229 = vunpack.c.l.b16 %v64
  %v230 = vunpack.c.l.b16 %v65
  %v231 = vunpack.c.l.b16 %v66
  %v232 = vunpack.c.l.b16 %v67
  %v233 = vunpack.c.l.b16 %v68
  %v234 = vunpack.c.l.b16 %v69
  %v235 = vunpack.c.l.b16 %v70
  %v236 = vunpack.c.l.b16 %v71
  %v237 = vunpack.c.l.b16 %v72
  %v238 = vunpack.c.l.b16 %v73
  %v239 = vunpack.c.l.b16 %v74
  %v240 = vunpack.c.l.b16 %v75
  %v241 = vunpack.c.l.b16 %v76
  %v242 = vunpack.c.l.b16 %v77
  %v243 = vunpack.c.l.b16 %v78
  %v244 = vunpack.c.l.b16 %v79
  %v245 = vunpack.c.l.b16 %v80
  %v246 = vunpack.c.l.b16 %v81
  %v247 = vunpack.c.l.b16 %v82
  %v248 = vunpack.c.l.b16 %v83
  %v249 = vunpack.c.l.b16 %v84
  %v250 = vunpack.c.l.b16 %v85
  %v251 = vunpack.c.l.b16 %v86
  %v252 = vunpack.c.l.b16 %v87
  %v253 = vunpack.c.l.b16 %v88
  %v254 = vunpack.c.l.b16 %v89
  %v255 = vpack.c.b16 %v184, %v183
  %v256 = vpack.c.b16 %v186, %v185
  %v257 = vpack.c.b16 %v188, %v187
  %v258 = vpack.c.b16 %v190, %v189
  %v259 = vpack.c.b16 %v192, %v191
  %v260 = vpack.c.b16 %v194, %v193
  %v261 = vpack.c.b16 %v196, %v195
  %v262 = vpack.c.b16 %v198, %v197
  %v263 = vpack.c.b16 %v200, %v199
  %v264 = vpack.c.b16 %v202, %v201
  %v265 = vpack.c.b16 %v204, %v203
  %v266 = vpack.c.b16 %v206, %v205
  %v267 = vpack.c.b16 %v208, %v207
  %v268 = vpack.c.b16 %v210, %v209
  %v269 = vpack.c.b16 %v212, %v211
  %v270 = vpack.c.b16 %v214, %v213
  %v271 = vpack.c.b16 %v216, %v215
  %v272 = vpack.c.b16 %v218, %v217
  %v273 = vpack.c.b16 %v220, %v219
  %v274 = vpack.c.b16 %v222, %v221
  %v275 = vpack.c.b16 %v224, %v223
  %v276 = vpack.c.b16 %v226, %v225
  %v277 = vpack.c.b16 %v228, %v227
  %v278 = vpack.c.b16 %v230, %v229
  %v279 = vpack.c.b16 %v232, %v231
  %v280 = vpack.c.b16 %v234, %v233
  %v281 = vpack.c.b16 %v236, %v235
  %v282 = vpack.c.b16 %v238, %v237
  %v283 = vpack.c.b16 %v240, %v239
  %v284 = vpack.c.b16 %v242, %v241
  %v285 = vpack.c.b16 %v244, %v243
  %v286 = vpack.c.b16 %v246, %v245
  %v287 = vpack.c.b16 %v248, %v247
  %v288 = vpack.c.b16 %v250, %v249
  %v289 = vpack.c.b16 %v252, %v251
  %v290 = vpack.c.b16 %v254, %v253
  %vm327 = vcmask 523264
  %v329 = vsel %vm327, %v106, 0
  %331 = vmatpush.bf16.msra.mxu0 %v262
  %332 = vmatpush.bf16.msra.mxu0 %v261
  %333 = vmatpush.bf16.msra.mxu0 %v260
  %334 = vmatpush.bf16.msra.mxu0 %v259
  %335 = vmatpush.bf16.msra.mxu0 %v258
  %336 = vmatpush.bf16.msra.mxu0 %v257
  %337 = vmatpush.bf16.msra.mxu0 %v256
  %338 = vmatpush.bf16.msra.mxu0 %v255
  %339 = vmatmul.bf16.gmra.mxu0 %v102
  %v340 = vpop.f32.mrf.mxu0
  %v341 = vadd.f32 %v92, %v340
  %v342 = vpop.f32.mrf.mxu0
  %343 = vdwg.mxu0
  %344 = vmatpush.bf16.msra.mxu0 %v270
  %345 = vmatpush.bf16.msra.mxu0 %v269
  %346 = vmatpush.bf16.msra.mxu0 %v268
  %347 = vmatpush.bf16.msra.mxu0 %v267
  %348 = vmatpush.bf16.msra.mxu0 %v266
  %349 = vmatpush.bf16.msra.mxu0 %v265
  %350 = vmatpush.bf16.msra.mxu0 %v264
  %351 = vmatpush.bf16.msra.mxu0 %v263
  %352 = vmatmul.bf16.gmra.mxu0 %v103
  %v353 = vpop.f32.mrf.mxu0
  %v354 = vadd.f32 %v341, %v353
  %v355 = vpop.f32.mrf.mxu0
  %356 = vdwg.mxu0
  %357 = vmatpush.bf16.msra.mxu0 %v278
  %358 = vmatpush.bf16.msra.mxu0 %v277
  %359 = vmatpush.bf16.msra.mxu0 %v276
  %360 = vmatpush.bf16.msra.mxu0 %v275
  %361 = vmatpush.bf16.msra.mxu0 %v274
  %362 = vmatpush.bf16.msra.mxu0 %v273
  %363 = vmatpush.bf16.msra.mxu0 %v272
  %364 = vmatpush.bf16.msra.mxu0 %v271
  %365 = vmatmul.bf16.gmra.mxu0 %v104
  %v366 = vpop.f32.mrf.mxu0
  %v367 = vadd.f32 %v354, %v366
  %v368 = vpop.f32.mrf.mxu0
  %369 = vdwg.mxu0
  %370 = vmatpush.bf16.msra.mxu0 %v286
  %371 = vmatpush.bf16.msra.mxu0 %v285
  %372 = vmatpush.bf16.msra.mxu0 %v284
  %373 = vmatpush.bf16.msra.mxu0 %v283
  %374 = vmatpush.bf16.msra.mxu0 %v282
  %375 = vmatpush.bf16.msra.mxu0 %v281
  %376 = vmatpush.bf16.msra.mxu0 %v280
  %377 = vmatpush.bf16.msra.mxu0 %v279
  %378 = vmatmul.bf16.gmra.mxu0 %v105
  %v379 = vpop.f32.mrf.mxu0
  %v380 = vadd.f32 %v367, %v379
  %v381 = vpop.f32.mrf.mxu0
  %382 = vdwg.mxu0
  %383 = vmatpush.bf16.msra.mxu0 0
  %384 = vmatpush.bf16.msra.mxu0 0
  %385 = vmatpush.bf16.msra.mxu0 0
  %386 = vmatpush.bf16.msra.mxu0 0
  %387 = vmatpush.bf16.msra.mxu0 %v290
  %388 = vmatpush.bf16.msra.mxu0 %v289
  %389 = vmatpush.bf16.msra.mxu0 %v288
  %390 = vmatpush.bf16.msra.mxu0 %v287
  %391 = vmatmul.bf16.gmra.mxu0 %v329
  %v392 = vpop.f32.mrf.mxu0
  %v393 = vadd.f32 %v380, %v392
  %v394 = vpop.f32.mrf.mxu0
  %395 = vdwg.mxu0
  %v396 = vmax.f32 %v393, 0.0
  %397 = vst [vmem:[%s3] sm:$0xff] %v396
  // Predicated region
  $region14: #{confidence_network_forward.24} parent=0 // pred_check
    _
  $region15: #{confidence_network_forward.24} parent=0 // pred_check_branch
    %399 = sbr.rel (0) target = $region17
  $region16: #{confidence_network_forward.24} parent=0 // pred_region
    _
  $region17: #{confidence_network_forward.24} parent=0 // pred_fallthru
    _
  // Predicated region
  $region18: #{confidence_network_forward.24} parent=0 // pred_check
    _
  $region19: #{confidence_network_forward.24} parent=0 // pred_check_branch
    %401 = sbr.rel (0) target = $region21
  $region20: #{confidence_network_forward.24} parent=0 // pred_region
    _
  $region21: #{confidence_network_forward.24} parent=0 // pred_fallthru
    _

// kernel: confidence_network_forward.25
$region0: #{confidence_network_forward.25}
  #allocation0 [shape = 'u32[]', space=smem, size = 0x4, offset = 0x4, fixed_abs, tag = 'smem constant byte address 0x4 - core index']
  #allocation1 [shape = 'u32[72,128]{1,0:T(1,128)}', space=vmem, size = 0x9000, scoped, tag = 'internal scratch']
  %s0 = inlined_call_operand.vmem [shape: bf16[8,64], index: 0, kind: input, shape index: {}]
  %s1 = inlined_call_operand.vmem [shape: bf16[64,128], index: 1, kind: input, shape index: {}]
  %s2 = inlined_call_operand.vmem [shape: f32[1,128], index: 2, kind: input, shape index: {}]
  %s3 = inlined_call_operand.vmem [shape: f32[8,128], index: 3, kind: output, shape index: {}]
  %s4 = sld [smem:[#allocation0]]
  $region22: #{confidence_network_forward.25} parent=0
    _
  %s6 = ssub.s32 1, %s4
  %s7 = scalar_select 0, %s6, %s4
  // Predicated region
  $region2: #{confidence_network_forward.25} parent=0 // pred_check
    _
  $region3: #{confidence_network_forward.25} parent=0 // pred_check_branch
    %9 = sbr.rel (0) target = $region5
  $region4: #{confidence_network_forward.25} parent=0 // pred_region
    _
  $region5: #{confidence_network_forward.25} parent=0 // pred_fallthru
    _
  // Predicated region
  $region6: #{confidence_network_forward.25} parent=0 // pred_check
    _
  $region7: #{confidence_network_forward.25} parent=0 // pred_check_branch
    %11 = sbr.rel (0) target = $region9
  $region8: #{confidence_network_forward.25} parent=0 // pred_region
    _
  $region9: #{confidence_network_forward.25} parent=0 // pred_fallthru
    _
  // Predicated region
  $region10: #{confidence_network_forward.25} parent=0 // pred_check
    _
  $region11: #{confidence_network_forward.25} parent=0 // pred_check_branch
    %13 = sbr.rel (0) target = $region13
  $region12: #{confidence_network_forward.25} parent=0 // pred_region
    _
  $region13: #{confidence_network_forward.25} parent=0 // pred_fallthru
    _
  %v15 = vld [vmem:[%s0] sm:$0xf]
  %v16 = vld [vmem:[%s1] sm:$0xf]
  %v17 = vld [vmem:[%s1 + $0x4] sm:$0xf]
  %v18 = vld [vmem:[%s1 + $0x8] sm:$0xf]
  %v19 = vld [vmem:[%s1 + $0xc] sm:$0xf]
  %v20 = vld [vmem:[%s1 + $0x10] sm:$0xf]
  %v21 = vld [vmem:[%s1 + $0x14] sm:$0xf]
  %v22 = vld [vmem:[%s1 + $0x18] sm:$0xf]
  %v23 = vld [vmem:[%s1 + $0x1c] sm:$0xf]
  %v24 = vld [vmem:[%s2] sm:$0x1]
  %v26 = vperm.slane %v24, 0
  %v36 = vunpack.c.l.b16 %v16
  %v37 = vunpack.c.l.b16 %v17
  %v38 = vunpack.c.l.b16 %v18
  %v39 = vunpack.c.l.b16 %v19
  %v40 = vunpack.c.l.b16 %v20
  %v41 = vunpack.c.l.b16 %v21
  %v42 = vunpack.c.l.b16 %v22
  %v43 = vunpack.c.l.b16 %v23
  %v44 = vpack.c.b16 %v37, %v36
  %v45 = vpack.c.b16 %v39, %v38
  %v46 = vpack.c.b16 %v41, %v40
  %v47 = vpack.c.b16 %v43, %v42
  %vm52 = vcmask 523264
  %v54 = vsel %vm52, %v15, 0
  %56 = vmatpush.bf16.msra.mxu0 0
  %57 = vmatpush.bf16.msra.mxu0 0
  %58 = vmatpush.bf16.msra.mxu0 0
  %59 = vmatpush.bf16.msra.mxu0 0
  %60 = vmatpush.bf16.msra.mxu0 %v47
  %61 = vmatpush.bf16.msra.mxu0 %v46
  %62 = vmatpush.bf16.msra.mxu0 %v45
  %63 = vmatpush.bf16.msra.mxu0 %v44
  %64 = vmatmul.bf16.gmra.mxu0 %v54
  %v65 = vpop.f32.mrf.mxu0
  %v66 = vadd.f32 %v26, %v65
  %v67 = vpop.f32.mrf.mxu0
  %68 = vdwg.mxu0
  %69 = vst [vmem:[%s3] sm:$0xff] %v66
  // Predicated region
  $region14: #{confidence_network_forward.25} parent=0 // pred_check
    _
  $region15: #{confidence_network_forward.25} parent=0 // pred_check_branch
    %71 = sbr.rel (0) target = $region17
  $region16: #{confidence_network_forward.25} parent=0 // pred_region
    _
  $region17: #{confidence_network_forward.25} parent=0 // pred_fallthru
    _
  // Predicated region
  $region18: #{confidence_network_forward.25} parent=0 // pred_check
    _
  $region19: #{confidence_network_forward.25} parent=0 // pred_check_branch
    %73 = sbr.rel (0) target = $region21
  $region20: #{confidence_network_forward.25} parent=0 // pred_region
    _
  $region21: #{confidence_network_forward.25} parent=0 // pred_fallthru
    _

// kernel: confidence_network_forward.26
$region0: #{confidence_network_forward.26}
  #allocation0 [shape = 'u32[]', space=smem, size = 0x4, offset = 0x4, fixed_abs, tag = 'smem constant byte address 0x4 - core index']
  #allocation1 [shape = 'u32[72,128]{1,0:T(1,128)}', space=vmem, size = 0x9000, scoped, tag = 'internal scratch']
  %s0 = inlined_call_operand.vmem [shape: bf16[8,1152], index: 0, kind: input, shape index: {}]
  %s1 = inlined_call_operand.vmem [shape: bf16[1152,128], index: 1, kind: input, shape index: {}]
  %s2 = inlined_call_operand.vmem [shape: f32[1,128], index: 2, kind: input, shape index: {}]
  %s3 = inlined_call_operand.vmem [shape: f32[8,128], index: 3, kind: input, shape index: {}]
  %s4 = inlined_call_operand.vmem [shape: f32[8,128], index: 4, kind: output, shape index: {}]
  %s5 = sld [smem:[#allocation0]]
  $region26: #{confidence_network_forward.26} parent=0
    _
  %s7 = ssub.s32 1, %s5
  %s8 = scalar_select 0, %s7, %s5
  // Predicated region
  $region2: #{confidence_network_forward.26} parent=0 // pred_check
    _
  $region3: #{confidence_network_forward.26} parent=0 // pred_check_branch
    %10 = sbr.rel (0) target = $region5
  $region4: #{confidence_network_forward.26} parent=0 // pred_region
    _
  $region5: #{confidence_network_forward.26} parent=0 // pred_fallthru
    _
  // Predicated region
  $region6: #{confidence_network_forward.26} parent=0 // pred_check
    _
  $region7: #{confidence_network_forward.26} parent=0 // pred_check_branch
    %12 = sbr.rel (0) target = $region9
  $region8: #{confidence_network_forward.26} parent=0 // pred_region
    _
  $region9: #{confidence_network_forward.26} parent=0 // pred_fallthru
    _
  // Predicated region
  $region10: #{confidence_network_forward.26} parent=0 // pred_check
    _
  $region11: #{confidence_network_forward.26} parent=0 // pred_check_branch
    %14 = sbr.rel (0) target = $region13
  $region12: #{confidence_network_forward.26} parent=0 // pred_region
    _
  $region13: #{confidence_network_forward.26} parent=0 // pred_fallthru
    _
  // Predicated region
  $region14: #{confidence_network_forward.26} parent=0 // pred_check
    _
  $region15: #{confidence_network_forward.26} parent=0 // pred_check_branch
    %16 = sbr.rel (0) target = $region17
  $region16: #{confidence_network_forward.26} parent=0 // pred_region
    _
  $region17: #{confidence_network_forward.26} parent=0 // pred_fallthru
    _
  %v17 = vld [vmem:[%s0] sm:$0xff]
  %v18 = vld [vmem:[%s0 + $0x8] sm:$0xff]
  %v19 = vld [vmem:[%s0 + $0x10] sm:$0xff]
  %v20 = vld [vmem:[%s0 + $0x18] sm:$0xff]
  %v21 = vld [vmem:[%s0 + $0x20] sm:$0xf]
  %v22 = vld [vmem:[%s1] sm:$0xf]
  %v23 = vld [vmem:[%s1 + $0x4] sm:$0xf]
  %v24 = vld [vmem:[%s1 + $0x8] sm:$0xf]
  %v25 = vld [vmem:[%s1 + $0xc] sm:$0xf]
  %v26 = vld [vmem:[%s1 + $0x10] sm:$0xf]
  %v27 = vld [vmem:[%s1 + $0x14] sm:$0xf]
  %v28 = vld [vmem:[%s1 + $0x18] sm:$0xf]
  %v29 = vld [vmem:[%s1 + $0x1c] sm:$0xf]
  %v30 = vld [vmem:[%s1 + $0x20] sm:$0xf]
  %v31 = vld [vmem:[%s1 + $0x24] sm:$0xf]
  %v32 = vld [vmem:[%s1 + $0x28] sm:$0xf]
  %v33 = vld [vmem:[%s1 + $0x2c] sm:$0xf]
  %v34 = vld [vmem:[%s1 + $0x30] sm:$0xf]
  %v35 = vld [vmem:[%s1 + $0x34] sm:$0xf]
  %v36 = vld [vmem:[%s1 + $0x38] sm:$0xf]
  %v37 = vld [vmem:[%s1 + $0x3c] sm:$0xf]
  %v38 = vld [vmem:[%s1 + $0x40] sm:$0xf]
  %v39 = vld [vmem:[%s1 + $0x44] sm:$0xf]
  %v40 = vld [vmem:[%s1 + $0x48] sm:$0xf]
  %v41 = vld [vmem:[%s1 + $0x4c] sm:$0xf]
  %v42 = vld [vmem:[%s1 + $0x50] sm:$0xf]
  %v43 = vld [vmem:[%s1 + $0x54] sm:$0xf]
  %v44 = vld [vmem:[%s1 + $0x58] sm:$0xf]
  %v45 = vld [vmem:[%s1 + $0x5c] sm:$0xf]
  %v46 = vld [vmem:[%s1 + $0x60] sm:$0xf]
  %v47 = vld [vmem:[%s1 + $0x64] sm:$0xf]
  %v48 = vld [vmem:[%s1 + $0x68] sm:$0xf]
  %v49 = vld [vmem:[%s1 + $0x6c] sm:$0xf]
  %v50 = vld [vmem:[%s1 + $0x70] sm:$0xf]
  %v51 = vld [vmem:[%s1 + $0x74] sm:$0xf]
  %v52 = vld [vmem:[%s1 + $0x78] sm:$0xf]
  %v53 = vld [vmem:[%s1 + $0x7c] sm:$0xf]
  %v54 = vld [vmem:[%s1 + $0x80] sm:$0xf]
  %v55 = vld [vmem:[%s1 + $0x84] sm:$0xf]
  %v56 = vld [vmem:[%s1 + $0x88] sm:$0xf]
  %v57 = vld [vmem:[%s1 + $0x8c] sm:$0xf]
  %v58 = vld [vmem:[%s1 + $0x90] sm:$0xf]
  %v59 = vld [vmem:[%s1 + $0x94] sm:$0xf]
  %v60 = vld [vmem:[%s1 + $0x98] sm:$0xf]
  %v61 = vld [vmem:[%s1 + $0x9c] sm:$0xf]
  %v62 = vld [vmem:[%s1 + $0xa0] sm:$0xf]
  %v63 = vld [vmem:[%s1 + $0xa4] sm:$0xf]
  %v64 = vld [vmem:[%s1 + $0xa8] sm:$0xf]
  %v65 = vld [vmem:[%s1 + $0xac] sm:$0xf]
  %v66 = vld [vmem:[%s1 + $0xb0] sm:$0xf]
  %v67 = vld [vmem:[%s1 + $0xb4] sm:$0xf]
  %v68 = vld [vmem:[%s1 + $0xb8] sm:$0xf]
  %v69 = vld [vmem:[%s1 + $0xbc] sm:$0xf]
  %v70 = vld [vmem:[%s1 + $0xc0] sm:$0xf]
  %v71 = vld [vmem:[%s1 + $0xc4] sm:$0xf]
  %v72 = vld [vmem:[%s1 + $0xc8] sm:$0xf]
  %v73 = vld [vmem:[%s1 + $0xcc] sm:$0xf]
  %v74 = vld [vmem:[%s1 + $0xd0] sm:$0xf]
  %v75 = vld [vmem:[%s1 + $0xd4] sm:$0xf]
  %v76 = vld [vmem:[%s1 + $0xd8] sm:$0xf]
  %v77 = vld [vmem:[%s1 + $0xdc] sm:$0xf]
  %v78 = vld [vmem:[%s1 + $0xe0] sm:$0xf]
  %v79 = vld [vmem:[%s1 + $0xe4] sm:$0xf]
  %v80 = vld [vmem:[%s1 + $0xe8] sm:$0xf]
  %v81 = vld [vmem:[%s1 + $0xec] sm:$0xf]
  %v82 = vld [vmem:[%s1 + $0xf0] sm:$0xf]
  %v83 = vld [vmem:[%s1 + $0xf4] sm:$0xf]
  %v84 = vld [vmem:[%s1 + $0xf8] sm:$0xf]
  %v85 = vld [vmem:[%s1 + $0xfc] sm:$0xf]
  %v86 = vld [vmem:[%s1 + $0x100] sm:$0xf]
  %v87 = vld [vmem:[%s1 + $0x104] sm:$0xf]
  %v88 = vld [vmem:[%s1 + $0x108] sm:$0xf]
  %v89 = vld [vmem:[%s1 + $0x10c] sm:$0xf]
  %v90 = vld [vmem:[%s1 + $0x110] sm:$0xf]
  %v91 = vld [vmem:[%s1 + $0x114] sm:$0xf]
  %v92 = vld [vmem:[%s1 + $0x118] sm:$0xf]
  %v93 = vld [vmem:[%s1 + $0x11c] sm:$0xf]
  %v94 = vld [vmem:[%s1 + $0x120] sm:$0xf]
  %v95 = vld [vmem:[%s1 + $0x124] sm:$0xf]
  %v96 = vld [vmem:[%s1 + $0x128] sm:$0xf]
  %v97 = vld [vmem:[%s1 + $0x12c] sm:$0xf]
  %v98 = vld [vmem:[%s1 + $0x130] sm:$0xf]
  %v99 = vld [vmem:[%s1 + $0x134] sm:$0xf]
  %v100 = vld [vmem:[%s1 + $0x138] sm:$0xf]
  %v101 = vld [vmem:[%s1 + $0x13c] sm:$0xf]
  %v102 = vld [vmem:[%s1 + $0x140] sm:$0xf]
  %v103 = vld [vmem:[%s1 + $0x144] sm:$0xf]
  %v104 = vld [vmem:[%s1 + $0x148] sm:$0xf]
  %v105 = vld [vmem:[%s1 + $0x14c] sm:$0xf]
  %v106 = vld [vmem:[%s1 + $0x150] sm:$0xf]
  %v107 = vld [vmem:[%s1 + $0x154] sm:$0xf]
  %v108 = vld [vmem:[%s1 + $0x158] sm:$0xf]
  %v109 = vld [vmem:[%s1 + $0x15c] sm:$0xf]
  %v110 = vld [vmem:[%s1 + $0x160] sm:$0xf]
  %v111 = vld [vmem:[%s1 + $0x164] sm:$0xf]
  %v112 = vld [vmem:[%s1 + $0x168] sm:$0xf]
  %v113 = vld [vmem:[%s1 + $0x16c] sm:$0xf]
  %v114 = vld [vmem:[%s1 + $0x170] sm:$0xf]
  %v115 = vld [vmem:[%s1 + $0x174] sm:$0xf]
  %v116 = vld [vmem:[%s1 + $0x178] sm:$0xf]
  %v117 = vld [vmem:[%s1 + $0x17c] sm:$0xf]
  %v118 = vld [vmem:[%s1 + $0x180] sm:$0xf]
  %v119 = vld [vmem:[%s1 + $0x184] sm:$0xf]
  %v120 = vld [vmem:[%s1 + $0x188] sm:$0xf]
  %v121 = vld [vmem:[%s1 + $0x18c] sm:$0xf]
  %v122 = vld [vmem:[%s1 + $0x190] sm:$0xf]
  %v123 = vld [vmem:[%s1 + $0x194] sm:$0xf]
  %v124 = vld [vmem:[%s1 + $0x198] sm:$0xf]
  %v125 = vld [vmem:[%s1 + $0x19c] sm:$0xf]
  %v126 = vld [vmem:[%s1 + $0x1a0] sm:$0xf]
  %v127 = vld [vmem:[%s1 + $0x1a4] sm:$0xf]
  %v128 = vld [vmem:[%s1 + $0x1a8] sm:$0xf]
  %v129 = vld [vmem:[%s1 + $0x1ac] sm:$0xf]
  %v130 = vld [vmem:[%s1 + $0x1b0] sm:$0xf]
  %v131 = vld [vmem:[%s1 + $0x1b4] sm:$0xf]
  %v132 = vld [vmem:[%s1 + $0x1b8] sm:$0xf]
  %v133 = vld [vmem:[%s1 + $0x1bc] sm:$0xf]
  %v134 = vld [vmem:[%s1 + $0x1c0] sm:$0xf]
  %v135 = vld [vmem:[%s1 + $0x1c4] sm:$0xf]
  %v136 = vld [vmem:[%s1 + $0x1c8] sm:$0xf]
  %v137 = vld [vmem:[%s1 + $0x1cc] sm:$0xf]
  %v138 = vld [vmem:[%s1 + $0x1d0] sm:$0xf]
  %v139 = vld [vmem:[%s1 + $0x1d4] sm:$0xf]
  %v140 = vld [vmem:[%s1 + $0x1d8] sm:$0xf]
  %v141 = vld [vmem:[%s1 + $0x1dc] sm:$0xf]
  %v142 = vld [vmem:[%s1 + $0x1e0] sm:$0xf]
  %v143 = vld [vmem:[%s1 + $0x1e4] sm:$0xf]
  %v144 = vld [vmem:[%s1 + $0x1e8] sm:$0xf]
  %v145 = vld [vmem:[%s1 + $0x1ec] sm:$0xf]
  %v146 = vld [vmem:[%s1 + $0x1f0] sm:$0xf]
  %v147 = vld [vmem:[%s1 + $0x1f4] sm:$0xf]
  %v148 = vld [vmem:[%s1 + $0x1f8] sm:$0xf]
  %v149 = vld [vmem:[%s1 + $0x1fc] sm:$0xf]
  %v150 = vld [vmem:[%s1 + $0x200] sm:$0xf]
  %v151 = vld [vmem:[%s1 + $0x204] sm:$0xf]
  %v152 = vld [vmem:[%s1 + $0x208] sm:$0xf]
  %v153 = vld [vmem:[%s1 + $0x20c] sm:$0xf]
  %v154 = vld [vmem:[%s1 + $0x210] sm:$0xf]
  %v155 = vld [vmem:[%s1 + $0x214] sm:$0xf]
  %v156 = vld [vmem:[%s1 + $0x218] sm:$0xf]
  %v157 = vld [vmem:[%s1 + $0x21c] sm:$0xf]
  %v158 = vld [vmem:[%s1 + $0x220] sm:$0xf]
  %v159 = vld [vmem:[%s1 + $0x224] sm:$0xf]
  %v160 = vld [vmem:[%s1 + $0x228] sm:$0xf]
  %v161 = vld [vmem:[%s1 + $0x22c] sm:$0xf]
  %v162 = vld [vmem:[%s1 + $0x230] sm:$0xf]
  %v163 = vld [vmem:[%s1 + $0x234] sm:$0xf]
  %v164 = vld [vmem:[%s1 + $0x238] sm:$0xf]
  %v165 = vld [vmem:[%s1 + $0x23c] sm:$0xf]
  %v166 = vld [vmem:[%s2] sm:$0x1]
  %v168 = vperm.slane %v166, 0
  %v175 = vunpack.c.l.b16 %v17
  %v176 = vunpack.c.h.b16 %v17
  %v177 = vunpack.c.l.b16 %v18
  %v178 = vunpack.c.h.b16 %v18
  %v179 = vunpack.c.l.b16 %v19
  %v180 = vunpack.c.h.b16 %v19
  %v181 = vunpack.c.l.b16 %v20
  %v182 = vunpack.c.h.b16 %v20
  %v183 = vunpack.c.l.b16 %v21
  %v184 = vpack.c.b16 %v175, %v175
  %v185 = vpack.c.b16 %v176, %v176
  %v186 = vpack.c.b16 %v177, %v177
  %v187 = vpack.c.b16 %v178, %v178
  %v188 = vpack.c.b16 %v179, %v179
  %v189 = vpack.c.b16 %v180, %v180
  %v190 = vpack.c.b16 %v181, %v181
  %v191 = vpack.c.b16 %v182, %v182
  %v192 = vpack.c.b16 %v183, %v183
  %v346 = vunpack.c.l.b16 %v22
  %v347 = vunpack.c.l.b16 %v23
  %v348 = vunpack.c.l.b16 %v24
  %v349 = vunpack.c.l.b16 %v25
  %v350 = vunpack.c.l.b16 %v26
  %v351 = vunpack.c.l.b16 %v27
  %v352 = vunpack.c.l.b16 %v28
  %v353 = vunpack.c.l.b16 %v29
  %v354 = vunpack.c.l.b16 %v30
  %v355 = vunpack.c.l.b16 %v31
  %v356 = vunpack.c.l.b16 %v32
  %v357 = vunpack.c.l.b16 %v33
  %v358 = vunpack.c.l.b16 %v34
  %v359 = vunpack.c.l.b16 %v35
  %v360 = vunpack.c.l.b16 %v36
  %v361 = vunpack.c.l.b16 %v37
  %v362 = vunpack.c.l.b16 %v38
  %v363 = vunpack.c.l.b16 %v39
  %v364 = vunpack.c.l.b16 %v40
  %v365 = vunpack.c.l.b16 %v41
  %v366 = vunpack.c.l.b16 %v42
  %v367 = vunpack.c.l.b16 %v43
  %v368 = vunpack.c.l.b16 %v44
  %v369 = vunpack.c.l.b16 %v45
  %v370 = vunpack.c.l.b16 %v46
  %v371 = vunpack.c.l.b16 %v47
  %v372 = vunpack.c.l.b16 %v48
  %v373 = vunpack.c.l.b16 %v49
  %v374 = vunpack.c.l.b16 %v50
  %v375 = vunpack.c.l.b16 %v51
  %v376 = vunpack.c.l.b16 %v52
  %v377 = vunpack.c.l.b16 %v53
  %v378 = vunpack.c.l.b16 %v54
  %v379 = vunpack.c.l.b16 %v55
  %v380 = vunpack.c.l.b16 %v56
  %v381 = vunpack.c.l.b16 %v57
  %v382 = vunpack.c.l.b16 %v58
  %v383 = vunpack.c.l.b16 %v59
  %v384 = vunpack.c.l.b16 %v60
  %v385 = vunpack.c.l.b16 %v61
  %v386 = vunpack.c.l.b16 %v62
  %v387 = vunpack.c.l.b16 %v63
  %v388 = vunpack.c.l.b16 %v64
  %v389 = vunpack.c.l.b16 %v65
  %v390 = vunpack.c.l.b16 %v66
  %v391 = vunpack.c.l.b16 %v67
  %v392 = vunpack.c.l.b16 %v68
  %v393 = vunpack.c.l.b16 %v69
  %v394 = vunpack.c.l.b16 %v70
  %v395 = vunpack.c.l.b16 %v71
  %v396 = vunpack.c.l.b16 %v72
  %v397 = vunpack.c.l.b16 %v73
  %v398 = vunpack.c.l.b16 %v74
  %v399 = vunpack.c.l.b16 %v75
  %v400 = vunpack.c.l.b16 %v76
  %v401 = vunpack.c.l.b16 %v77
  %v402 = vunpack.c.l.b16 %v78
  %v403 = vunpack.c.l.b16 %v79
  %v404 = vunpack.c.l.b16 %v80
  %v405 = vunpack.c.l.b16 %v81
  %v406 = vunpack.c.l.b16 %v82
  %v407 = vunpack.c.l.b16 %v83
  %v408 = vunpack.c.l.b16 %v84
  %v409 = vunpack.c.l.b16 %v85
  %v410 = vunpack.c.l.b16 %v86
  %v411 = vunpack.c.l.b16 %v87
  %v412 = vunpack.c.l.b16 %v88
  %v413 = vunpack.c.l.b16 %v89
  %v414 = vunpack.c.l.b16 %v90
  %v415 = vunpack.c.l.b16 %v91
  %v416 = vunpack.c.l.b16 %v92
  %v417 = vunpack.c.l.b16 %v93
  %v418 = vunpack.c.l.b16 %v94
  %v419 = vunpack.c.l.b16 %v95
  %v420 = vunpack.c.l.b16 %v96
  %v421 = vunpack.c.l.b16 %v97
  %v422 = vunpack.c.l.b16 %v98
  %v423 = vunpack.c.l.b16 %v99
  %v424 = vunpack.c.l.b16 %v100
  %v425 = vunpack.c.l.b16 %v101
  %v426 = vunpack.c.l.b16 %v102
  %v427 = vunpack.c.l.b16 %v103
  %v428 = vunpack.c.l.b16 %v104
  %v429 = vunpack.c.l.b16 %v105
  %v430 = vunpack.c.l.b16 %v106
  %v431 = vunpack.c.l.b16 %v107
  %v432 = vunpack.c.l.b16 %v108
  %v433 = vunpack.c.l.b16 %v109
  %v434 = vunpack.c.l.b16 %v110
  %v435 = vunpack.c.l.b16 %v111
  %v436 = vunpack.c.l.b16 %v112
  %v437 = vunpack.c.l.b16 %v113
  %v438 = vunpack.c.l.b16 %v114
  %v439 = vunpack.c.l.b16 %v115
  %v440 = vunpack.c.l.b16 %v116
  %v441 = vunpack.c.l.b16 %v117
  %v442 = vunpack.c.l.b16 %v118
  %v443 = vunpack.c.l.b16 %v119
  %v444 = vunpack.c.l.b16 %v120
  %v445 = vunpack.c.l.b16 %v121
  %v446 = vunpack.c.l.b16 %v122
  %v447 = vunpack.c.l.b16 %v123
  %v448 = vunpack.c.l.b16 %v124
  %v449 = vunpack.c.l.b16 %v125
  %v450 = vunpack.c.l.b16 %v126
  %v451 = vunpack.c.l.b16 %v127
  %v452 = vunpack.c.l.b16 %v128
  %v453 = vunpack.c.l.b16 %v129
  %v454 = vunpack.c.l.b16 %v130
  %v455 = vunpack.c.l.b16 %v131
  %v456 = vunpack.c.l.b16 %v132
  %v457 = vunpack.c.l.b16 %v133
  %v458 = vunpack.c.l.b16 %v134
  %v459 = vunpack.c.l.b16 %v135
  %v460 = vunpack.c.l.b16 %v136
  %v461 = vunpack.c.l.b16 %v137
  %v462 = vunpack.c.l.b16 %v138
  %v463 = vunpack.c.l.b16 %v139
  %v464 = vunpack.c.l.b16 %v140
  %v465 = vunpack.c.l.b16 %v141
  %v466 = vunpack.c.l.b16 %v142
  %v467 = vunpack.c.l.b16 %v143
  %v468 = vunpack.c.l.b16 %v144
  %v469 = vunpack.c.l.b16 %v145
  %v470 = vunpack.c.l.b16 %v146
  %v471 = vunpack.c.l.b16 %v147
  %v472 = vunpack.c.l.b16 %v148
  %v473 = vunpack.c.l.b16 %v149
  %v474 = vunpack.c.l.b16 %v150
  %v475 = vunpack.c.l.b16 %v151
  %v476 = vunpack.c.l.b16 %v152
  %v477 = vunpack.c.l.b16 %v153
  %v478 = vunpack.c.l.b16 %v154
  %v479 = vunpack.c.l.b16 %v155
  %v480 = vunpack.c.l.b16 %v156
  %v481 = vunpack.c.l.b16 %v157
  %v482 = vunpack.c.l.b16 %v158
  %v483 = vunpack.c.l.b16 %v159
  %v484 = vunpack.c.l.b16 %v160
  %v485 = vunpack.c.l.b16 %v161
  %v486 = vunpack.c.l.b16 %v162
  %v487 = vunpack.c.l.b16 %v163
  %v488 = vunpack.c.l.b16 %v164
  %v489 = vunpack.c.l.b16 %v165
  %v490 = vpack.c.b16 %v347, %v346
  %v491 = vpack.c.b16 %v349, %v348
  %v492 = vpack.c.b16 %v351, %v350
  %v493 = vpack.c.b16 %v353, %v352
  %v494 = vpack.c.b16 %v355, %v354
  %v495 = vpack.c.b16 %v357, %v356
  %v496 = vpack.c.b16 %v359, %v358
  %v497 = vpack.c.b16 %v361, %v360
  %v498 = vpack.c.b16 %v363, %v362
  %v499 = vpack.c.b16 %v365, %v364
  %v500 = vpack.c.b16 %v367, %v366
  %v501 = vpack.c.b16 %v369, %v368
  %v502 = vpack.c.b16 %v371, %v370
  %v503 = vpack.c.b16 %v373, %v372
  %v504 = vpack.c.b16 %v375, %v374
  %v505 = vpack.c.b16 %v377, %v376
  %v506 = vpack.c.b16 %v379, %v378
  %v507 = vpack.c.b16 %v381, %v380
  %v508 = vpack.c.b16 %v383, %v382
  %v509 = vpack.c.b16 %v385, %v384
  %v510 = vpack.c.b16 %v387, %v386
  %v511 = vpack.c.b16 %v389, %v388
  %v512 = vpack.c.b16 %v391, %v390
  %v513 = vpack.c.b16 %v393, %v392
  %v514 = vpack.c.b16 %v395, %v394
  %v515 = vpack.c.b16 %v397, %v396
  %v516 = vpack.c.b16 %v399, %v398
  %v517 = vpack.c.b16 %v401, %v400
  %v518 = vpack.c.b16 %v403, %v402
  %v519 = vpack.c.b16 %v405, %v404
  %v520 = vpack.c.b16 %v407, %v406
  %v521 = vpack.c.b16 %v409, %v408
  %v522 = vpack.c.b16 %v411, %v410
  %v523 = vpack.c.b16 %v413, %v412
  %v524 = vpack.c.b16 %v415, %v414
  %v525 = vpack.c.b16 %v417, %v416
  %v526 = vpack.c.b16 %v419, %v418
  %v527 = vpack.c.b16 %v421, %v420
  %v528 = vpack.c.b16 %v423, %v422
  %v529 = vpack.c.b16 %v425, %v424
  %v530 = vpack.c.b16 %v427, %v426
  %v531 = vpack.c.b16 %v429, %v428
  %v532 = vpack.c.b16 %v431, %v430
  %v533 = vpack.c.b16 %v433, %v432
  %v534 = vpack.c.b16 %v435, %v434
  %v535 = vpack.c.b16 %v437, %v436
  %v536 = vpack.c.b16 %v439, %v438
  %v537 = vpack.c.b16 %v441, %v440
  %v538 = vpack.c.b16 %v443, %v442
  %v539 = vpack.c.b16 %v445, %v444
  %v540 = vpack.c.b16 %v447, %v446
  %v541 = vpack.c.b16 %v449, %v448
  %v542 = vpack.c.b16 %v451, %v450
  %v543 = vpack.c.b16 %v453, %v452
  %v544 = vpack.c.b16 %v455, %v454
  %v545 = vpack.c.b16 %v457, %v456
  %v546 = vpack.c.b16 %v459, %v458
  %v547 = vpack.c.b16 %v461, %v460
  %v548 = vpack.c.b16 %v463, %v462
  %v549 = vpack.c.b16 %v465, %v464
  %v550 = vpack.c.b16 %v467, %v466
  %v551 = vpack.c.b16 %v469, %v468
  %v552 = vpack.c.b16 %v471, %v470
  %v553 = vpack.c.b16 %v473, %v472
  %v554 = vpack.c.b16 %v475, %v474
  %v555 = vpack.c.b16 %v477, %v476
  %v556 = vpack.c.b16 %v479, %v478
  %v557 = vpack.c.b16 %v481, %v480
  %v558 = vpack.c.b16 %v483, %v482
  %v559 = vpack.c.b16 %v485, %v484
  %v560 = vpack.c.b16 %v487, %v486
  %v561 = vpack.c.b16 %v489, %v488
  %634 = vmatpush.bf16.msra.mxu0 %v497
  %635 = vmatpush.bf16.msra.mxu0 %v496
  %636 = vmatpush.bf16.msra.mxu0 %v495
  %637 = vmatpush.bf16.msra.mxu0 %v494
  %638 = vmatpush.bf16.msra.mxu0 %v493
  %639 = vmatpush.bf16.msra.mxu0 %v492
  %640 = vmatpush.bf16.msra.mxu0 %v491
  %641 = vmatpush.bf16.msra.mxu0 %v490
  %642 = vmatmul.bf16.gmra.mxu0 %v184
  %v643 = vpop.f32.mrf.mxu0
  %v644 = vadd.f32 %v168, %v643
  %v645 = vpop.f32.mrf.mxu0
  %646 = vdwg.mxu0
  %647 = vmatpush.bf16.msra.mxu0 %v505
  %648 = vmatpush.bf16.msra.mxu0 %v504
  %649 = vmatpush.bf16.msra.mxu0 %v503
  %650 = vmatpush.bf16.msra.mxu0 %v502
  %651 = vmatpush.bf16.msra.mxu0 %v501
  %652 = vmatpush.bf16.msra.mxu0 %v500
  %653 = vmatpush.bf16.msra.mxu0 %v499
  %654 = vmatpush.bf16.msra.mxu0 %v498
  %655 = vmatmul.bf16.gmra.mxu0 %v185
  %v656 = vpop.f32.mrf.mxu0
  %v657 = vadd.f32 %v644, %v656
  %v658 = vpop.f32.mrf.mxu0
  %659 = vdwg.mxu0
  %660 = vmatpush.bf16.msra.mxu0 %v513
  %661 = vmatpush.bf16.msra.mxu0 %v512
  %662 = vmatpush.bf16.msra.mxu0 %v511
  %663 = vmatpush.bf16.msra.mxu0 %v510
  %664 = vmatpush.bf16.msra.mxu0 %v509
  %665 = vmatpush.bf16.msra.mxu0 %v508
  %666 = vmatpush.bf16.msra.mxu0 %v507
  %667 = vmatpush.bf16.msra.mxu0 %v506
  %668 = vmatmul.bf16.gmra.mxu0 %v186
  %v669 = vpop.f32.mrf.mxu0
  %v670 = vadd.f32 %v657, %v669
  %v671 = vpop.f32.mrf.mxu0
  %672 = vdwg.mxu0
  %673 = vmatpush.bf16.msra.mxu0 %v521
  %674 = vmatpush.bf16.msra.mxu0 %v520
  %675 = vmatpush.bf16.msra.mxu0 %v519
  %676 = vmatpush.bf16.msra.mxu0 %v518
  %677 = vmatpush.bf16.msra.mxu0 %v517
  %678 = vmatpush.bf16.msra.mxu0 %v516
  %679 = vmatpush.bf16.msra.mxu0 %v515
  %680 = vmatpush.bf16.msra.mxu0 %v514
  %681 = vmatmul.bf16.gmra.mxu0 %v187
  %v682 = vpop.f32.mrf.mxu0
  %v683 = vadd.f32 %v670, %v682
  %v684 = vpop.f32.mrf.mxu0
  %685 = vdwg.mxu0
  %686 = vmatpush.bf16.msra.mxu0 %v529
  %687 = vmatpush.bf16.msra.mxu0 %v528
  %688 = vmatpush.bf16.msra.mxu0 %v527
  %689 = vmatpush.bf16.msra.mxu0 %v526
  %690 = vmatpush.bf16.msra.mxu0 %v525
  %691 = vmatpush.bf16.msra.mxu0 %v524
  %692 = vmatpush.bf16.msra.mxu0 %v523
  %693 = vmatpush.bf16.msra.mxu0 %v522
  %694 = vmatmul.bf16.gmra.mxu0 %v188
  %v695 = vpop.f32.mrf.mxu0
  %v696 = vadd.f32 %v683, %v695
  %v697 = vpop.f32.mrf.mxu0
  %698 = vdwg.mxu0
  %699 = vmatpush.bf16.msra.mxu0 %v537
  %700 = vmatpush.bf16.msra.mxu0 %v536
  %701 = vmatpush.bf16.msra.mxu0 %v535
  %702 = vmatpush.bf16.msra.mxu0 %v534
  %703 = vmatpush.bf16.msra.mxu0 %v533
  %704 = vmatpush.bf16.msra.mxu0 %v532
  %705 = vmatpush.bf16.msra.mxu0 %v531
  %706 = vmatpush.bf16.msra.mxu0 %v530
  %707 = vmatmul.bf16.gmra.mxu0 %v189
  %v708 = vpop.f32.mrf.mxu0
  %v709 = vadd.f32 %v696, %v708
  %v710 = vpop.f32.mrf.mxu0
  %711 = vdwg.mxu0
  %712 = vmatpush.bf16.msra.mxu0 %v545
  %713 = vmatpush.bf16.msra.mxu0 %v544
  %714 = vmatpush.bf16.msra.mxu0 %v543
  %715 = vmatpush.bf16.msra.mxu0 %v542
  %716 = vmatpush.bf16.msra.mxu0 %v541
  %717 = vmatpush.bf16.msra.mxu0 %v540
  %718 = vmatpush.bf16.msra.mxu0 %v539
  %719 = vmatpush.bf16.msra.mxu0 %v538
  %720 = vmatmul.bf16.gmra.mxu0 %v190
  %v721 = vpop.f32.mrf.mxu0
  %v722 = vadd.f32 %v709, %v721
  %v723 = vpop.f32.mrf.mxu0
  %724 = vdwg.mxu0
  %725 = vmatpush.bf16.msra.mxu0 %v553
  %726 = vmatpush.bf16.msra.mxu0 %v552
  %727 = vmatpush.bf16.msra.mxu0 %v551
  %728 = vmatpush.bf16.msra.mxu0 %v550
  %729 = vmatpush.bf16.msra.mxu0 %v549
  %730 = vmatpush.bf16.msra.mxu0 %v548
  %731 = vmatpush.bf16.msra.mxu0 %v547
  %732 = vmatpush.bf16.msra.mxu0 %v546
  %733 = vmatmul.bf16.gmra.mxu0 %v191
  %v734 = vpop.f32.mrf.mxu0
  %v735 = vadd.f32 %v722, %v734
  %v736 = vpop.f32.mrf.mxu0
  %737 = vdwg.mxu0
  %738 = vmatpush.bf16.msra.mxu0 %v561
  %739 = vmatpush.bf16.msra.mxu0 %v560
  %740 = vmatpush.bf16.msra.mxu0 %v559
  %741 = vmatpush.bf16.msra.mxu0 %v558
  %742 = vmatpush.bf16.msra.mxu0 %v557
  %743 = vmatpush.bf16.msra.mxu0 %v556
  %744 = vmatpush.bf16.msra.mxu0 %v555
  %745 = vmatpush.bf16.msra.mxu0 %v554
  %746 = vmatmul.bf16.gmra.mxu0 %v192
  %v747 = vpop.f32.mrf.mxu0
  %v748 = vadd.f32 %v735, %v747
  %v749 = vpop.f32.mrf.mxu0
  %750 = vdwg.mxu0
  %v751 = vld [vmem:[%s3] sm:$0xff]
  %v752 = vadd.f32 %v748, %v751
  %v753 = vmax.f32 %v752, 0.0
  %754 = vst [vmem:[%s4] sm:$0xff] %v753
  // Predicated region
  $region18: #{confidence_network_forward.26} parent=0 // pred_check
    _
  $region19: #{confidence_network_forward.26} parent=0 // pred_check_branch
    %756 = sbr.rel (0) target = $region21
  $region20: #{confidence_network_forward.26} parent=0 // pred_region
    _
  $region21: #{confidence_network_forward.26} parent=0 // pred_fallthru
    _
  // Predicated region
  $region22: #{confidence_network_forward.26} parent=0 // pred_check
    _
  $region23: #{confidence_network_forward.26} parent=0 // pred_check_branch
    %758 = sbr.rel (0) target = $region25
  $region24: #{confidence_network_forward.26} parent=0 // pred_region
    _
  $region25: #{confidence_network_forward.26} parent=0 // pred_fallthru
    _

// kernel: confidence_network_forward.27
$region0: #{confidence_network_forward.27}
  #allocation0 [shape = 'u32[]', space=smem, size = 0x4, offset = 0x4, fixed_abs, tag = 'smem constant byte address 0x4 - core index']
  #allocation1 [shape = 'u32[72,128]{1,0:T(1,128)}', space=vmem, size = 0x9000, scoped, tag = 'internal scratch']
  #allocation2 [shape = 'f32[1,1]{1,0:T(1,128)S(1)}', space=vmem, size = 0x200, scoped, tag = 'scoped memory for confidence_network_forward.27']
  %s0 = inlined_call_operand.vmem [shape: f32[2,4,128], index: 0, kind: input, shape index: {}]
  %s1 = inlined_call_operand.vmem [shape: f32[128,42], index: 1, kind: input, shape index: {}]
  %s2 = inlined_call_operand.vmem [shape: f32[1,42], index: 2, kind: input, shape index: {}]
  %s3 = inlined_call_operand.vmem [shape: f32[42,1], index: 3, kind: input, shape index: {}]
  %s4 = inlined_call_operand.<no memory space> [shape: f32[1,1], index: 4, kind: input, shape index: {}]
  %s5 = inlined_call_operand.hbm [shape: f32[2,10], index: 5, kind: output, shape index: {0}]
  %s6 = inlined_call_operand.vmem [shape: f32[2,1], index: 6, kind: output, shape index: {1}]
  %7 = xla_tuple %s5, %s6
  %s8 = sld [smem:[#allocation0]]
  $region38: #{confidence_network_forward.27} parent=0
    _
  %s10 = ssub.s32 1, %s8
  %s11 = scalar_select 0, %s10, %s8
  %v12 = vstv %s4
  %13 = vst [vmem:[#allocation2] sm:$0x1] %v12
  $region1: #{confidence_network_forward.27} parent=0
    #allocation3 [shape = 'u8[1024]{0}', space=vmem, size = 0x400, scoped, tag = 'output window, operand 0, single buffered']
    #allocation4 [shape = 's32[1]{0}', space=sflag, size = 0x4, scoped, tag = 'scoped memory for confidence_network_forward.27']
    %14 = vsyncpa [#allocation4], 0
    // Predicated region
    $region2: #{confidence_network_forward.27} parent=1 // pred_check
      _
    $region3: #{confidence_network_forward.27} parent=1 // pred_check_branch
      %16 = sbr.rel (0) target = $region5
    $region4: #{confidence_network_forward.27} parent=1 // pred_region
      _
    $region5: #{confidence_network_forward.27} parent=1 // pred_fallthru
      _
    // Predicated region
    $region6: #{confidence_network_forward.27} parent=1 // pred_check
      _
    $region7: #{confidence_network_forward.27} parent=1 // pred_check_branch
      %18 = sbr.rel (0) target = $region9
    $region8: #{confidence_network_forward.27} parent=1 // pred_region
      _
    $region9: #{confidence_network_forward.27} parent=1 // pred_fallthru
      _
    // Predicated region
    $region10: #{confidence_network_forward.27} parent=1 // pred_check
      _
    $region11: #{confidence_network_forward.27} parent=1 // pred_check_branch
      %20 = sbr.rel (0) target = $region13
    $region12: #{confidence_network_forward.27} parent=1 // pred_region
      _
    $region13: #{confidence_network_forward.27} parent=1 // pred_fallthru
      _
    // Predicated region
    $region14: #{confidence_network_forward.27} parent=1 // pred_check
      _
    $region15: #{confidence_network_forward.27} parent=1 // pred_check_branch
      %22 = sbr.rel (0) target = $region17
    $region16: #{confidence_network_forward.27} parent=1 // pred_region
      _
    $region17: #{confidence_network_forward.27} parent=1 // pred_fallthru
      _
    // Predicated region
    $region18: #{confidence_network_forward.27} parent=1 // pred_check
      _
    $region19: #{confidence_network_forward.27} parent=1 // pred_check_branch
      %24 = sbr.rel (0) target = $region21
    $region20: #{confidence_network_forward.27} parent=1 // pred_region
      _
    $region21: #{confidence_network_forward.27} parent=1 // pred_fallthru
      _
    %v25 = vld [vmem:[%s0] sm:$0xf]
    %v26 = vld [vmem:[%s0 + $0x4] sm:$0xf]
    %vm27 = vcmask 1043456
    %v28 = vsel %vm27, %v25, 0.0
    %v29 = vrot.slane %v28, 4
    %v30 = vadd.f32 %v28, %v29
    %v31 = vrot.slane %v30, 2
    %v32 = vadd.f32 %v30, %v31
    %v33 = vrot.slane %v32, 1
    %v34 = vadd.f32 %v32, %v33
    %v35 = vsel %vm27, %v26, 0.0
    %v36 = vrot.slane %v35, 4
    %v37 = vadd.f32 %v35, %v36
    %v38 = vrot.slane %v37, 2
    %v39 = vadd.f32 %v37, %v38
    %v40 = vrot.slane %v39, 1
    %v41 = vadd.f32 %v39, %v40
    %v42 = vrcp.pop 4.0
    %v43 = vmul.f32 4.0, %v42
    %v44 = vsub.f32 1.0, %v43
    %v45 = vmul.f32 %v42, %v44
    %v46 = vadd.f32 %v42, %v45
    %vm47 = vweird.f32 %v42
    %v48 = vsel %vm47, %v42, %v46
    %v49 = vmul.f32 %v34, %v48
    %v50 = vmul.f32 %v41, %v48
    %v51 = vld [vmem:[%s1] sm:$0xff]
    %v52 = vld [vmem:[%s1 + $0x8] sm:$0xff]
    %v53 = vld [vmem:[%s1 + $0x10] sm:$0xff]
    %v54 = vld [vmem:[%s1 + $0x18] sm:$0xff]
    %v55 = vld [vmem:[%s1 + $0x20] sm:$0xff]
    %v56 = vld [vmem:[%s1 + $0x28] sm:$0xff]
    %v57 = vld [vmem:[%s1 + $0x30] sm:$0xff]
    %v58 = vld [vmem:[%s1 + $0x38] sm:$0xff]
    %v59 = vld [vmem:[%s1 + $0x40] sm:$0xff]
    %v60 = vld [vmem:[%s1 + $0x48] sm:$0xff]
    %v61 = vld [vmem:[%s1 + $0x50] sm:$0xff]
    %v62 = vld [vmem:[%s1 + $0x58] sm:$0xff]
    %v63 = vld [vmem:[%s1 + $0x60] sm:$0xff]
    %v64 = vld [vmem:[%s1 + $0x68] sm:$0xff]
    %v65 = vld [vmem:[%s1 + $0x70] sm:$0xff]
    %v66 = vld [vmem:[%s1 + $0x78] sm:$0xff]
    %v67 = vld [vmem:[%s2] sm:$0x1]
    %v69 = vperm.slane %v67, 0
    %vm73 = vcmask 1041409
    %v74 = vsel %vm73, %v50, %v49
    %76 = vmatpush.msra.mxu0 %v66
    %77 = vmatpush.msra.mxu0 %v65
    %78 = vmatpush.msra.mxu0 %v64
    %79 = vmatpush.msra.mxu0 %v63
    %80 = vmatpush.msra.mxu0 %v62
    %81 = vmatpush.msra.mxu0 %v61
    %82 = vmatpush.msra.mxu0 %v60
    %83 = vmatpush.msra.mxu0 %v59
    %84 = vmatpush.msra.mxu0 %v58
    %85 = vmatpush.msra.mxu0 %v57
    %86 = vmatpush.msra.mxu0 %v56
    %87 = vmatpush.msra.mxu0 %v55
    %88 = vmatpush.msra.mxu0 %v54
    %89 = vmatpush.msra.mxu0 %v53
    %90 = vmatpush.msra.mxu0 %v52
    %91 = vmatpush.msra.mxu0 %v51
    %92 = vmatmul.f32.gmra.mxu0 %v74
    %v93 = vpop.f32.mrf.mxu0
    %v94 = vadd.f32 %v69, %v93
    %95 = vdwg.mxu0
    %vm96 = vcmask 74752
    %97 = vst.msk [vmem:[#allocation3] sm:$0x3] %vm96, %v94
    %v98 = vmax.f32 %v94, 0.0
    %v99 = vld [vmem:[%s3] sm:$0xff]
    %v100 = vld [vmem:[%s3 + $0x8] sm:$0xff]
    %v101 = vld [vmem:[%s3 + $0x10] sm:$0xff]
    %v102 = vld [vmem:[%s3 + $0x18] sm:$0xff]
    %v103 = vld [vmem:[%s3 + $0x20] sm:$0xff]
    %v104 = vld [vmem:[%s3 + $0x28] sm:$0x3]
    %v105 = vld [vmem:[#allocation2] sm:$0x1]
    %v107 = vperm.slane %v105, 0
    %vm109 = vcmask 343040
    %v111 = vsel %vm109, %v98, 0
    %vm113 = vcmask 1041408
    %v115 = vsel %vm113, %v104, 0
    %117 = vmatpush.msra.mxu0 0.0
    %118 = vmatpush.msra.mxu0 0.0
    %119 = vmatpush.msra.mxu0 0.0
    %120 = vmatpush.msra.mxu0 0.0
    %121 = vmatpush.msra.mxu0 0.0
    %122 = vmatpush.msra.mxu0 0.0
    %123 = vmatpush.msra.mxu0 0.0
    %124 = vmatpush.msra.mxu0 0.0
    %125 = vmatpush.msra.mxu0 0.0
    %126 = vmatpush.msra.mxu0 0.0
    %127 = vmatpush.msra.mxu0 %v115
    %128 = vmatpush.msra.mxu0 %v103
    %129 = vmatpush.msra.mxu0 %v102
    %130 = vmatpush.msra.mxu0 %v101
    %131 = vmatpush.msra.mxu0 %v100
    %132 = vmatpush.msra.mxu0 %v99
    %133 = vmatmul.f32.gmra.mxu0 %v111
    %v134 = vpop.f32.mrf.mxu0
    %v135 = vadd.f32 %v107, %v134
    %136 = vdwg.mxu0
    %vm137 = vcmask 1024
    %138 = vst.msk [vmem:[%s6] sm:$0x3] %vm137, %v135
    // Predicated region
    $region22: #{confidence_network_forward.27} parent=1 // pred_check
      _
    $region23: #{confidence_network_forward.27} parent=1 // pred_check_branch
      %140 = sbr.rel (0) target = $region25
    $region24: #{confidence_network_forward.27} parent=1 // pred_region
      %142 = vsyncadd [#allocation4], 0
      %s144 = sshll.u32 [#allocation3], 4
      %s145 = int_to_ptr.vmem [resolvable:$true] %s144
      %s146 = sshll.u32 %s5, 4
      %s147 = int_to_ptr.hbm [resolvable:$true] %s146
      %149 = dma.vmem_to_hbm [thread:$0]  %s145, 32, %s147, [#allocation4]
    $region25: #{confidence_network_forward.27} parent=1 // pred_fallthru
      _
    // Predicated region
    $region26: #{confidence_network_forward.27} parent=1 // pred_check
      _
    $region27: #{confidence_network_forward.27} parent=1 // pred_check_branch
      %151 = sbr.rel (0) target = $region29
    $region28: #{confidence_network_forward.27} parent=1 // pred_region
      _
    $region29: #{confidence_network_forward.27} parent=1 // pred_fallthru
      _
    // Predicated region
    $region30: #{confidence_network_forward.27} parent=1 // pred_check
      _
    $region31: #{confidence_network_forward.27} parent=1 // pred_check_branch
      %153 = sbr.rel (0) target = $region33
    $region32: #{confidence_network_forward.27} parent=1 // pred_region
      %155 = dma.done [#allocation4], 32
    $region33: #{confidence_network_forward.27} parent=1 // pred_fallthru
      _
    // Predicated region
    $region34: #{confidence_network_forward.27} parent=1 // pred_check
      _
    $region35: #{confidence_network_forward.27} parent=1 // pred_check_branch
      %157 = sbr.rel (0) target = $region37
    $region36: #{confidence_network_forward.27} parent=1 // pred_region
      _
    $region37: #{confidence_network_forward.27} parent=1 // pred_fallthru
      _
    %158 = vsyncpa [#allocation4], 1

</llo_original>
